<compile_context>
chip_gen: v7x
topology: tpu7x:2x2x1
jax: 0.10.0
libtpu: 0.0.40
codegen_flags: <defaults>
</compile_context>

<pallas_src>
from functools import partial

import numpy as np

import jax
import jax.numpy as jnp
from jax.experimental import pallas as pl
from jax.experimental.pallas import tpu as pltpu

BN_EPS = 1e-5
LANE = 128
TM = 512          # row tile (review: 512-1024)
TK = 256          # contraction tile (review: 256-512); TK divides TM
VMEM_LIMIT = 48 * 1024 * 1024   # < v7x 64 MiB physical, > default scoped limits


def _round_up(v, m):
    return (v + m - 1) // m * m


# ----------------------------------------------------------------------------
# Kernels
# ----------------------------------------------------------------------------
def _linear_kernel(x_ref, w_ref, b_ref, o_ref):
    o_ref[...] = (
        jnp.dot(x_ref[...], w_ref[...], preferred_element_type=jnp.float32)
        + b_ref[...]
    ).astype(o_ref.dtype)


def _gcn_layer_kernel(cidx_ref, cnt_ref,                # scalar-prefetch (SMEM)
                      scal_ref,                         # SMEM: [0.2, beta, layer_weight]
                      a_ref, xk_ref,                    # bf16 A tile, bf16 X contraction rows
                      xprev_ref, xin_ref, accin_ref,    # bf16 / bf16 / f32 row tiles
                      w_ref, b_ref,                     # BN-folded W (bf16) / bias (f32)
                      xnew_ref, accout_ref,             # outputs: bf16 x_new, f32 acc
                      agg_ref):                         # VMEM f32 scratch (TM, hp)
    i = pl.program_id(0)
    k = pl.program_id(1)

    @pl.when(k == 0)
    def _():
        agg_ref[...] = jnp.zeros_like(agg_ref)

    # Block-sparse tiled aggregation: only the non-zero A column blocks of this
    # row block contribute; padded steps (k >= cnt[i]) are skipped (and their
    # DMA is deduplicated because cidx repeats the last valid block index).
    @pl.when(k < cnt_ref[i])
    def _():
        agg_ref[...] += jnp.dot(a_ref[...], xk_ref[...],
                                preferred_element_type=jnp.float32)

    @pl.when(k == pl.num_programs(1) - 1)
    def _():
        # Dense epilogue on the resident row tile (BN folded into W/b):
        # bf16 MXU operands, f32 accumulation.
        h = jnp.dot(agg_ref[...].astype(jnp.bfloat16), w_ref[...],
                    preferred_element_type=jnp.float32) + b_ref[...]
        h = jnp.maximum(h, 0.0)  # ReLU (dropout is identity in eval mode)
        x_new = (h
                 + scal_ref[0] * xin_ref[...].astype(jnp.float32)
                 + scal_ref[1] * xprev_ref[...].astype(jnp.float32))
        xnew_ref[...] = x_new.astype(jnp.bfloat16)          # consumed bf16 next layer
        accout_ref[...] = accin_ref[...] + scal_ref[2] * x_new  # keep acc in f32


def _out_kernel(x_ref, w_ref, b_ref, o_ref):
    logits = jnp.dot(x_ref[...].astype(jnp.bfloat16), w_ref[...],
                     preferred_element_type=jnp.float32) + b_ref[...]
    m = jnp.max(logits, axis=-1, keepdims=True)
    s = logits - m
    lse = jnp.log(jnp.sum(jnp.exp(s), axis=-1, keepdims=True))
    o_ref[...] = s - lse


# ----------------------------------------------------------------------------
# pallas_call wrappers
# ----------------------------------------------------------------------------
def _linear(x, w, b):
    n, f = x.shape
    h = w.shape[1]
    return pl.pallas_call(
        _linear_kernel,
        out_shape=jax.ShapeDtypeStruct((n, h), jnp.bfloat16),
        grid=(n // TM,),
        in_specs=[pl.BlockSpec((TM, f), lambda i: (i, 0)),
                  pl.BlockSpec((f, h), lambda i: (0, 0)),
                  pl.BlockSpec((1, h), lambda i: (0, 0))],
        out_specs=pl.BlockSpec((TM, h), lambda i: (i, 0)),
        compiler_params=pltpu.CompilerParams(
            dimension_semantics=("parallel",),
            vmem_limit_bytes=VMEM_LIMIT),
    )(x, w, b)


def _gcn_layer(a_bf16, x_bf16, x_in_bf16, acc, w_bf16, b_f32, scal, cidx, cnt):
    n = a_bf16.shape[0]
    hp = acc.shape[1]
    rb = n // TM
    kmax = cidx.shape[0] // rb            # cidx is flattened (rb * kmax,)

    a_map = lambda i, k, cidx, cnt: (i, cidx[i * kmax + k])
    xk_map = lambda i, k, cidx, cnt: (cidx[i * kmax + k], 0)
    row_map = lambda i, k, *_: (i, 0)
    rep_map = lambda i, k, *_: (0, 0)

    nblk = rb * kmax                      # upper bound on DMA'd A blocks
    cost = pl.CostEstimate(
        flops=2 * nblk * TM * TK * hp + 2 * n * hp * hp,
        transcendentals=0,
        bytes_accessed=(nblk * (TM * TK + TK * hp) * 2   # A tiles + X contraction (bf16)
                        + 3 * n * hp * 2                 # x_prev, x_input, x_new (bf16)
                        + 2 * n * hp * 4                 # acc in / acc out (f32)
                        + hp * hp * 2 + hp * 4))         # W (bf16), bias (f32)

    grid_spec = pltpu.PrefetchScalarGridSpec(
        num_scalar_prefetch=2,            # cidx, cnt -> SMEM, drive the index_maps
        grid=(rb, kmax),
        in_specs=[
            pl.BlockSpec(memory_space=pltpu.MemorySpace.SMEM),  # scal (3,)
            pl.BlockSpec((TM, TK), a_map),                      # A_hat tile (bf16)
            pl.BlockSpec((TK, hp), xk_map),                     # X contraction rows (bf16)
            pl.BlockSpec((TM, hp), row_map),                    # X row tile (0.7 residual, bf16)
            pl.BlockSpec((TM, hp), row_map),                    # x_input row tile (bf16)
            pl.BlockSpec((TM, hp), row_map),                    # acc in row tile (f32)
            pl.BlockSpec((hp, hp), rep_map),                    # BN-folded W (bf16)
            pl.BlockSpec((1, hp), rep_map),                     # BN-folded bias (f32)
        ],
        out_specs=(pl.BlockSpec((TM, hp), row_map),             # x_new (bf16)
                   pl.BlockSpec((TM, hp), row_map)),            # acc out (f32)
        scratch_shapes=[pltpu.VMEM((TM, hp), jnp.float32)],
    )
    return pl.pallas_call(
        _gcn_layer_kernel,
        grid_spec=grid_spec,
        out_shape=(jax.ShapeDtypeStruct((n, hp), jnp.bfloat16),
                   jax.ShapeDtypeStruct((n, hp), jnp.float32)),
        compiler_params=pltpu.CompilerParams(
            dimension_semantics=("parallel", "arbitrary"),
            vmem_limit_bytes=VMEM_LIMIT),
        cost_estimate=cost,
    )(cidx, cnt, scal, a_bf16, x_bf16, x_bf16, x_in_bf16, acc, w_bf16, b_f32)


def _out_proj(x, w, b):
    n, hp = x.shape
    cp = w.shape[1]
    return pl.pallas_call(
        _out_kernel,
        out_shape=jax.ShapeDtypeStruct((n, cp), jnp.float32),
        grid=(n // TM,),
        in_specs=[pl.BlockSpec((TM, hp), lambda i: (i, 0)),
                  pl.BlockSpec((hp, cp), lambda i: (0, 0)),
                  pl.BlockSpec((1, cp), lambda i: (0, 0))],
        out_specs=pl.BlockSpec((TM, cp), lambda i: (i, 0)),
        compiler_params=pltpu.CompilerParams(
            dimension_semantics=("parallel",),
            vmem_limit_bytes=VMEM_LIMIT),
    )(x, w, b)


# ----------------------------------------------------------------------------
# One-time preprocessing (hoisted out of the per-call forward)
# ----------------------------------------------------------------------------
def preprocess_graph(a_hat):
    """Pad A_hat to a multiple of TM, extract the non-zero (row-block, col-block)
    pattern for block-sparse aggregation, and cast the values to bfloat16."""
    n = a_hat.shape[0]
    np_ = _round_up(n, TM)
    a_np = np.zeros((np_, np_), np.float32)
    a_np[:n, :n] = np.asarray(a_hat, np.float32)

    rb, cb = np_ // TM, np_ // TK
    nz = a_np.reshape(rb, TM, cb, TK).any(axis=(1, 3))       # (rb, cb) block pattern
    cnt = nz.sum(axis=1).astype(np.int32)                    # (rb,)
    kmax = max(int(cnt.max()), 1)
    cidx = np.zeros((rb, kmax), np.int32)
    for i in range(rb):
        nzi = np.nonzero(nz[i])[0].astype(np.int32)
        if cnt[i] > 0:
            cidx[i, :cnt[i]] = nzi
            cidx[i, cnt[i]:] = nzi[-1]   # repeat last valid block -> skipped steps re-use the tile
    return (jnp.asarray(a_np, jnp.bfloat16),
            jnp.asarray(cidx.reshape(-1)),                   # flat 1-D -> compact SMEM
            jnp.asarray(cnt))


def preprocess_params(params):
    """Fold eval-mode BatchNorm into the conv weights/bias, pad everything to
    lane multiples, and cast the matmul operands to bfloat16 (one-time)."""
    f, hidden = params["in_w"].shape
    num_classes = params["out_w"].shape[1]
    fp = _round_up(f, LANE)
    hp = _round_up(hidden, LANE)
    cp = _round_up(num_classes, LANE)

    scale = params["gamma"] * jax.lax.rsqrt(params["rvar"] + BN_EPS)          # (L, H)
    w_fold = params["conv_w"] * scale[:, None, :]                              # (L, H, H)
    b_fold = (params["conv_b"] - params["rmean"]) * scale + params["beta"]     # (L, H)

    return {
        "in_w": jnp.pad(params["in_w"], ((0, fp - f), (0, hp - hidden))).astype(jnp.bfloat16),
        "in_b": jnp.pad(params["in_b"].reshape(1, -1), ((0, 0), (0, hp - hidden))),
        "conv_w": jnp.pad(w_fold, ((0, 0), (0, hp - hidden), (0, hp - hidden))).astype(jnp.bfloat16),
        "conv_b": jnp.pad(b_fold, ((0, 0), (0, hp - hidden))),
        "out_w": jnp.pad(params["out_w"], ((0, hp - hidden), (0, cp - num_classes))).astype(jnp.bfloat16),
        # padded class columns get -1e9 bias so the in-kernel log_softmax ignores them
        "out_b": jnp.pad(params["out_b"].reshape(1, -1),
                         ((0, 0), (0, cp - num_classes)), constant_values=-1e9),
        "res_w": jax.nn.softmax(params["res_w"]).astype(jnp.float32),
    }


# ----------------------------------------------------------------------------
# Forward pass
# ----------------------------------------------------------------------------
@partial(jax.jit, static_argnames=("num_classes",))
def gcn_res_forward(x, a_bf16, cidx, cnt, prep, *, num_classes):
    n, f = x.shape
    np_ = a_bf16.shape[0]
    fp, hp = prep["in_w"].shape
    num_layers = prep["conv_w"].shape[0]

    # Padded rows of the activations end up holding the broadcast bias, which is
    # harmless: the matching A_hat columns are exactly zero, so they never reach
    # a real row (block-skipping is based on A's pattern, never on X content).
    x_p = jnp.pad(x, ((0, np_ - n), (0, fp - f))).astype(jnp.bfloat16)

    # ---- input_fc (bf16 activations consumed by every layer) ----
    x_cur = _linear(x_p, prep["in_w"], prep["in_b"])
    x_input = x_cur
    acc = jnp.zeros((np_, hp), jnp.float32)

    # ---- residual GCN layers (one block-sparse tiled pallas_call per layer) ----
    for i in range(num_layers):
        beta = 0.0 if i == 0 else 0.7
        scal = jnp.stack([jnp.float32(0.2), jnp.float32(beta), prep["res_w"][i]])
        x_cur, acc = _gcn_layer(a_bf16, x_cur, x_input, acc,
                                prep["conv_w"][i],
                                prep["conv_b"][i].reshape(1, -1),
                                scal, cidx, cnt)

    # ---- out_fc + log_softmax (lane-dense, padded classes masked via -1e9 bias) ----
    out_p = _out_proj(acc, prep["out_w"], prep["out_b"])
    return out_p[:n, :num_classes]


# ----------------------------------------------------------------------------
# Pure-JAX f32 reference (original module order, unfused BN, dense A)
# ----------------------------------------------------------------------------
def gcn_res_reference(x, a_hat, params):
    num_layers = params["conv_w"].shape[0]
    x = x @ params["in_w"] + params["in_b"]
    x_input = x
    layer_out = []
    for i in range(num_layers):
        h = a_hat @ (x @ params["conv_w"][i]) + params["conv_b"][i]
        h = (h - params["rmean"][i]) * jax.lax.rsqrt(params["rvar"][i] + BN_EPS)
        h = h * params["gamma"][i] + params["beta"][i]
        h = jnp.maximum(h, 0.0)
        if i == 0:
            x = h + 0.2 * x_input
        else:
            x = h + 0.2 * x_input + 0.7 * layer_out[i - 1]
        layer_out.append(x)
    w = jax.nn.softmax(params["res_w"])
    out = sum(w[i] * layer_out[i] for i in range(num_layers))
    logits = out @ params["out_w"] + params["out_b"]
    return jax.nn.log_softmax(logits, axis=1)


# ----------------------------------------------------------------------------
# Data / params
# ----------------------------------------------------------------------------
def build_normalized_adjacency(n, bandwidth=80):
    """Dense GCN-normalized banded adjacency D^-1/2 (A + I) D^-1/2 (symmetric).
    The band structure leaves some (row-block, col-block) tiles all-zero so the
    toy run also exercises the block-skip path of the aggregation kernel."""
    idx = jnp.arange(n)
    a = (jnp.abs(idx[:, None] - idx[None, :]) <= bandwidth).astype(jnp.float32)
    deg = jnp.sum(a, axis=1)
    d_inv_sqrt = 1.0 / jnp.sqrt(deg)
    return a * d_inv_sqrt[:, None] * d_inv_sqrt[None, :]


def init_params(key, num_features, hidden, num_classes, num_layers):
    ks = jax.random.split(key, 10)
    s_in = 1.0 / jnp.sqrt(jnp.float32(num_features))
    s_h = 1.0 / jnp.sqrt(jnp.float32(hidden))
    return {
        "in_w": jax.random.normal(ks[0], (num_features, hidden), jnp.float32) * s_in,
        "in_b": jnp.zeros((hidden,), jnp.float32),
        "conv_w": jax.random.normal(ks[1], (num_layers, hidden, hidden), jnp.float32) * s_h,
        "conv_b": jnp.zeros((num_layers, hidden), jnp.float32),
        "gamma": 1.0 + 0.1 * jax.random.normal(ks[2], (num_layers, hidden), jnp.float32),
        "beta": 0.1 * jax.random.normal(ks[3], (num_layers, hidden), jnp.float32),
        "rmean": 0.1 * jax.random.normal(ks[4], (num_layers, hidden), jnp.float32),
        "rvar": 1.0 + 0.1 * jax.random.uniform(ks[5], (num_layers, hidden), jnp.float32),
        "res_w": jax.random.normal(ks[6], (num_layers,), jnp.float32),
        "out_w": jax.random.normal(ks[7], (hidden, num_classes), jnp.float32) * s_h,
        "out_b": jnp.zeros((num_classes,), jnp.float32),
    }


if __name__ == "__main__":
    # Small shapes consistent with the module; N=600 pads to 1024 -> 2 row blocks
    # x 4 column blocks, with some all-zero A blocks (band graph) to exercise the
    # block-sparse skip path.
    N, NUM_FEATURES, HIDDEN, NUM_CLASSES, NUM_LAYERS = 600, 48, 64, 16, 6

    key = jax.random.PRNGKey(0)
    k_x, k_par = jax.random.split(key, 2)

    x = jax.random.normal(k_x, (N, NUM_FEATURES), jnp.float32)
    a_hat = build_normalized_adjacency(N, bandwidth=80)
    params = init_params(k_par, NUM_FEATURES, HIDDEN, NUM_CLASSES, NUM_LAYERS)

    # One-time preprocessing (hoisted out of the forward pass).
    a_bf16, cidx, cnt = preprocess_graph(a_hat)
    prep = preprocess_params(params)

    out = jax.block_until_ready(
        gcn_res_forward(x, a_bf16, cidx, cnt, prep, num_classes=NUM_CLASSES))
    ref = jax.block_until_ready(gcn_res_reference(x, a_hat, params))

    assert out.shape == (N, NUM_CLASSES)
    assert bool(jnp.all(jnp.isfinite(out)))
    # log_softmax rows should exponentiate-sum to ~1 (padded classes contribute 0)
    assert bool(jnp.allclose(jnp.sum(jnp.exp(out), axis=1), 1.0, atol=1e-4))
    # bf16 A / X / W / residual streams across 6 layers vs an all-f32 reference:
    # loose but bug-catching tolerances (structural bugs -> O(1)+ log-prob errors).
    max_diff = float(jnp.max(jnp.abs(out - ref)))
    mean_diff = float(jnp.mean(jnp.abs(out - ref)))
    assert max_diff < 0.4, f"max |kernel - f32 reference| too large: {max_diff}"
    assert mean_diff < 0.08, f"mean |kernel - f32 reference| too large: {mean_diff}"

    print("KERNEL_OK")
</pallas_src>

<mosaic_0001>
module attributes {stable_mosaic.version = 11 : i64} {
  func.func @_linear_kernel(%arg0: i32, %arg1: memref<512x128xbf16, #tpu.memory_space<vmem>>, %arg2: memref<128x128xbf16, #tpu.memory_space<vmem>>, %arg3: memref<1x128xf32, #tpu.memory_space<vmem>>, %arg4: memref<512x128xbf16, #tpu.memory_space<vmem>>) attributes {dimension_semantics = [#tpu.dimension_semantics<parallel>], iteration_bounds = array<i64: 2>, scalar_prefetch = 0 : i64, scratch_operands = 0 : i64, tpu.core_type = #tpu.core_type<tc>, window_params = [{transform_indices = @transform_0, window_bounds = array<i64: 512, 128>}, {pipeline_mode = #tpu.pipeline_mode<synchronous>, transform_indices = @transform_1, window_bounds = array<i64: 128, 128>}, {pipeline_mode = #tpu.pipeline_mode<synchronous>, transform_indices = @transform_2, window_bounds = array<i64: 1, 128>}, {transform_indices = @transform_3, window_bounds = array<i64: 512, 128>}]} {
    %c0 = arith.constant 0 : index
    %c0_0 = arith.constant 0 : index
    %0 = vector.load %arg1[%c0, %c0_0] : memref<512x128xbf16, #tpu.memory_space<vmem>>, vector<512x128xbf16>
    %c0_1 = arith.constant 0 : index
    %c0_2 = arith.constant 0 : index
    %1 = vector.load %arg2[%c0_1, %c0_2] : memref<128x128xbf16, #tpu.memory_space<vmem>>, vector<128x128xbf16>
    %cst = arith.constant dense<0.000000e+00> : vector<512x128xf32>
    %2 = tpu.matmul %0, %1, %cst {dimension_numbers = #tpu.dot_dimension_numbers<[1], [0], [0], [1], [0, 0, 1, 1], [], []>} : vector<512x128xbf16>, vector<128x128xbf16>, vector<512x128xf32> -> vector<512x128xf32>
    %c0_3 = arith.constant 0 : index
    %c0_4 = arith.constant 0 : index
    %3 = vector.load %arg3[%c0_3, %c0_4] : memref<1x128xf32, #tpu.memory_space<vmem>>, vector<1x128xf32>
    %4 = vector.broadcast %3 : vector<1x128xf32> to vector<512x128xf32>
    %5 = arith.addf %2, %4 : vector<512x128xf32>
    %6 = arith.truncf %5 : vector<512x128xf32> to vector<512x128xbf16>
    %c0_5 = arith.constant 0 : index
    %c0_6 = arith.constant 0 : index
    %7 = vector.load %arg4[%c0_5, %c0_6] : memref<512x128xbf16, #tpu.memory_space<vmem>>, vector<512x128xbf16>
    tpu.vector_store %arg4[%c0_5, %c0_6], %6 {strides = array<i32>} : memref<512x128xbf16, #tpu.memory_space<vmem>>, vector<512x128xbf16>,
    return
  }
  func.func @transform_0(%arg0: i32) -> (i32, i32) {
    %c0_i32 = arith.constant 0 : i32
    %c0_i32_0 = arith.constant 0 : i32
    return %arg0, %c0_i32 : i32, i32
  }
  func.func @transform_1(%arg0: i32) -> (i32, i32) {
    %c0_i32 = arith.constant 0 : i32
    %c0_i32_0 = arith.constant 0 : i32
    %c0_i32_1 = arith.constant 0 : i32
    return %c0_i32, %c0_i32_0 : i32, i32
  }
  func.func @transform_2(%arg0: i32) -> (i32, i32) {
    %c0_i32 = arith.constant 0 : i32
    %c0_i32_0 = arith.constant 0 : i32
    %c0_i32_1 = arith.constant 0 : i32
    return %c0_i32, %c0_i32_0 : i32, i32
  }
  func.func @transform_3(%arg0: i32) -> (i32, i32) {
    %c0_i32 = arith.constant 0 : i32
    %c0_i32_0 = arith.constant 0 : i32
    return %arg0, %c0_i32 : i32, i32
  }
}

module attributes {stable_mosaic.version = 11 : i64} {
  func.func @_gcn_layer_kernel(%arg0: i32, %arg1: i32, %arg2: memref<6xi32, #tpu.memory_space<smem>>, %arg3: memref<2xi32, #tpu.memory_space<smem>>, %arg4: memref<3xf32, #tpu.memory_space<smem>>, %arg5: memref<512x256xbf16, #tpu.memory_space<vmem>>, %arg6: memref<256x128xbf16, #tpu.memory_space<vmem>>, %arg7: memref<512x128xbf16, #tpu.memory_space<vmem>>, %arg8: memref<512x128xbf16, #tpu.memory_space<vmem>>, %arg9: memref<512x128xf32, #tpu.memory_space<vmem>>, %arg10: memref<128x128xbf16, #tpu.memory_space<vmem>>, %arg11: memref<1x128xf32, #tpu.memory_space<vmem>>, %arg12: memref<512x128xbf16, #tpu.memory_space<vmem>>, %arg13: memref<512x128xf32, #tpu.memory_space<vmem>>, %arg14: memref<512x128xf32, #tpu.memory_space<vmem>>) attributes {dimension_semantics = [#tpu.dimension_semantics<parallel>, #tpu.dimension_semantics<arbitrary>], iteration_bounds = array<i64: 2, 3>, scalar_prefetch = 2 : i64, scratch_operands = 1 : i64, tpu.core_type = #tpu.core_type<tc>, window_params = [{transform_indices = @transform_0, window_bounds = array<i64: 3>}, {transform_indices = @transform_1, window_bounds = array<i64: 512, 256>}, {transform_indices = @transform_2, window_bounds = array<i64: 256, 128>}, {transform_indices = @transform_3, window_bounds = array<i64: 512, 128>}, {transform_indices = @transform_4, window_bounds = array<i64: 512, 128>}, {transform_indices = @transform_5, window_bounds = array<i64: 512, 128>}, {pipeline_mode = #tpu.pipeline_mode<synchronous>, transform_indices = @transform_6, window_bounds = array<i64: 128, 128>}, {pipeline_mode = #tpu.pipeline_mode<synchronous>, transform_indices = @transform_7, window_bounds = array<i64: 1, 128>}, {transform_indices = @transform_8, window_bounds = array<i64: 512, 128>}, {transform_indices = @transform_9, window_bounds = array<i64: 512, 128>}]} {
    %c0_i32 = arith.constant 0 : i32
    %0 = arith.cmpi eq, %arg1, %c0_i32 : i32
    %1 = arith.extui %0 : i1 to i32
    %c0_i32_0 = arith.constant 0 : i32
    %2 = arith.cmpi ne, %1, %c0_i32_0 : i32
    scf.if %2 {
      %cst = arith.constant 0.000000e+00 : f32
      %11 = vector.broadcast %cst : f32 to vector<512x128xf32>
      %c0 = arith.constant 0 : index
      %c0_3 = arith.constant 0 : index
      %12 = vector.load %arg14[%c0, %c0_3] : memref<512x128xf32, #tpu.memory_space<vmem>>, vector<512x128xf32>
      tpu.vector_store %arg14[%c0, %c0_3], %11 {strides = array<i32>} : memref<512x128xf32, #tpu.memory_space<vmem>>, vector<512x128xf32>,
    } else {
    }
    %3 = arith.index_cast %arg0 : i32 to index
    %4 = memref.load %arg3[%3] : memref<2xi32, #tpu.memory_space<smem>>
    %5 = arith.cmpi slt, %arg1, %4 : i32
    %6 = arith.extui %5 : i1 to i32
    %c0_i32_1 = arith.constant 0 : i32
    %7 = arith.cmpi ne, %6, %c0_i32_1 : i32
    scf.if %7 {
      %c0 = arith.constant 0 : index
      %c0_3 = arith.constant 0 : index
      %11 = vector.load %arg14[%c0, %c0_3] : memref<512x128xf32, #tpu.memory_space<vmem>>, vector<512x128xf32>
      %c0_4 = arith.constant 0 : index
      %c0_5 = arith.constant 0 : index
      %12 = vector.load %arg5[%c0_4, %c0_5] : memref<512x256xbf16, #tpu.memory_space<vmem>>, vector<512x256xbf16>
      %c0_6 = arith.constant 0 : index
      %c0_7 = arith.constant 0 : index
      %13 = vector.load %arg6[%c0_6, %c0_7] : memref<256x128xbf16, #tpu.memory_space<vmem>>, vector<256x128xbf16>
      %cst = arith.constant dense<0.000000e+00> : vector<512x128xf32>
      %14 = tpu.matmul %12, %13, %cst {dimension_numbers = #tpu.dot_dimension_numbers<[1], [0], [0], [1], [0, 0, 1, 1], [], []>} : vector<512x256xbf16>, vector<256x128xbf16>, vector<512x128xf32> -> vector<512x128xf32>
      %15 = arith.addf %11, %14 : vector<512x128xf32>
      %c0_8 = arith.constant 0 : index
      %c0_9 = arith.constant 0 : index
      %16 = vector.load %arg14[%c0_8, %c0_9] : memref<512x128xf32, #tpu.memory_space<vmem>>, vector<512x128xf32>
      tpu.vector_store %arg14[%c0_8, %c0_9], %15 {strides = array<i32>} : memref<512x128xf32, #tpu.memory_space<vmem>>, vector<512x128xf32>,
    } else {
    }
    %c2_i32 = arith.constant 2 : i32
    %8 = arith.cmpi eq, %arg1, %c2_i32 : i32
    %9 = arith.extui %8 : i1 to i32
    %c0_i32_2 = arith.constant 0 : i32
    %10 = arith.cmpi ne, %9, %c0_i32_2 : i32
    scf.if %10 {
      %c0 = arith.constant 0 : index
      %c0_3 = arith.constant 0 : index
      %11 = vector.load %arg14[%c0, %c0_3] : memref<512x128xf32, #tpu.memory_space<vmem>>, vector<512x128xf32>
      %12 = arith.truncf %11 : vector<512x128xf32> to vector<512x128xbf16>
      %c0_4 = arith.constant 0 : index
      %c0_5 = arith.constant 0 : index
      %13 = vector.load %arg10[%c0_4, %c0_5] : memref<128x128xbf16, #tpu.memory_space<vmem>>, vector<128x128xbf16>
      %cst = arith.constant dense<0.000000e+00> : vector<512x128xf32>
      %14 = tpu.matmul %12, %13, %cst {dimension_numbers = #tpu.dot_dimension_numbers<[1], [0], [0], [1], [0, 0, 1, 1], [], []>} : vector<512x128xbf16>, vector<128x128xbf16>, vector<512x128xf32> -> vector<512x128xf32>
      %c0_6 = arith.constant 0 : index
      %c0_7 = arith.constant 0 : index
      %15 = vector.load %arg11[%c0_6, %c0_7] : memref<1x128xf32, #tpu.memory_space<vmem>>, vector<1x128xf32>
      %16 = vector.broadcast %15 : vector<1x128xf32> to vector<512x128xf32>
      %17 = arith.addf %14, %16 : vector<512x128xf32>
      %cst_8 = arith.constant 0.000000e+00 : f32
      %18 = vector.broadcast %cst_8 : f32 to vector<512x128xf32>
      %19 = arith.maximumf %17, %18 : vector<512x128xf32>
      %c0_9 = arith.constant 0 : index
      %20 = memref.load %arg4[%c0_9] : memref<3xf32, #tpu.memory_space<smem>>
      %c0_10 = arith.constant 0 : index
      %c0_11 = arith.constant 0 : index
      %21 = vector.load %arg8[%c0_10, %c0_11] : memref<512x128xbf16, #tpu.memory_space<vmem>>, vector<512x128xbf16>
      %22 = arith.extf %21 : vector<512x128xbf16> to vector<512x128xf32>
      %23 = vector.broadcast %20 : f32 to vector<512x128xf32>
      %24 = arith.mulf %23, %22 : vector<512x128xf32>
      %25 = arith.addf %19, %24 : vector<512x128xf32>
      %c1 = arith.constant 1 : index
      %26 = memref.load %arg4[%c1] : memref<3xf32, #tpu.memory_space<smem>>
      %c0_12 = arith.constant 0 : index
      %c0_13 = arith.constant 0 : index
      %27 = vector.load %arg7[%c0_12, %c0_13] : memref<512x128xbf16, #tpu.memory_space<vmem>>, vector<512x128xbf16>
      %28 = arith.extf %27 : vector<512x128xbf16> to vector<512x128xf32>
      %29 = vector.broadcast %26 : f32 to vector<512x128xf32>
      %30 = arith.mulf %29, %28 : vector<512x128xf32>
      %31 = arith.addf %25, %30 : vector<512x128xf32>
      %32 = arith.truncf %31 : vector<512x128xf32> to vector<512x128xbf16>
      %c0_14 = arith.constant 0 : index
      %c0_15 = arith.constant 0 : index
      %33 = vector.load %arg12[%c0_14, %c0_15] : memref<512x128xbf16, #tpu.memory_space<vmem>>, vector<512x128xbf16>
      tpu.vector_store %arg12[%c0_14, %c0_15], %32 {strides = array<i32>} : memref<512x128xbf16, #tpu.memory_space<vmem>>, vector<512x128xbf16>,
      %c0_16 = arith.constant 0 : index
      %c0_17 = arith.constant 0 : index
      %34 = vector.load %arg9[%c0_16, %c0_17] : memref<512x128xf32, #tpu.memory_space<vmem>>, vector<512x128xf32>
      %c2 = arith.constant 2 : index
      %35 = memref.load %arg4[%c2] : memref<3xf32, #tpu.memory_space<smem>>
      %36 = vector.broadcast %35 : f32 to vector<512x128xf32>
      %37 = arith.mulf %36, %31 : vector<512x128xf32>
      %38 = arith.addf %34, %37 : vector<512x128xf32>
      %c0_18 = arith.constant 0 : index
      %c0_19 = arith.constant 0 : index
      %39 = vector.load %arg13[%c0_18, %c0_19] : memref<512x128xf32, #tpu.memory_space<vmem>>, vector<512x128xf32>
      tpu.vector_store %arg13[%c0_18, %c0_19], %38 {strides = array<i32>} : memref<512x128xf32, #tpu.memory_space<vmem>>, vector<512x128xf32>,
    } else {
    }
    return
  }
  func.func @transform_0(%arg0: i32, %arg1: i32, %arg2: memref<6xi32, #tpu.memory_space<smem>>, %arg3: memref<2xi32, #tpu.memory_space<smem>>) -> i32 {
    %c0_i32 = arith.constant 0 : i32
    %c0_i32_0 = arith.constant 0 : i32
    return %c0_i32 : i32
  }
  func.func @transform_1(%arg0: i32, %arg1: i32, %arg2: memref<6xi32, #tpu.memory_space<smem>>, %arg3: memref<2xi32, #tpu.memory_space<smem>>) -> (i32, i32) {
    %c3_i32 = arith.constant 3 : i32
    %0 = arith.muli %arg0, %c3_i32 : i32
    %1 = arith.addi %0, %arg1 : i32
    %2 = arith.index_cast %1 : i32 to index
    %3 = memref.load %arg2[%2] : memref<6xi32, #tpu.memory_space<smem>>
    %c0_i32 = arith.constant 0 : i32
    return %arg0, %3 : i32, i32
  }
  func.func @transform_2(%arg0: i32, %arg1: i32, %arg2: memref<6xi32, #tpu.memory_space<smem>>, %arg3: memref<2xi32, #tpu.memory_space<smem>>) -> (i32, i32) {
    %c3_i32 = arith.constant 3 : i32
    %0 = arith.muli %arg0, %c3_i32 : i32
    %1 = arith.addi %0, %arg1 : i32
    %2 = arith.index_cast %1 : i32 to index
    %3 = memref.load %arg2[%2] : memref<6xi32, #tpu.memory_space<smem>>
    %c0_i32 = arith.constant 0 : i32
    %c0_i32_0 = arith.constant 0 : i32
    return %3, %c0_i32 : i32, i32
  }
  func.func @transform_3(%arg0: i32, %arg1: i32, %arg2: memref<6xi32, #tpu.memory_space<smem>>, %arg3: memref<2xi32, #tpu.memory_space<smem>>) -> (i32, i32) {
    %c0_i32 = arith.constant 0 : i32
    %c0_i32_0 = arith.constant 0 : i32
    return %arg0, %c0_i32 : i32, i32
  }
  func.func @transform_4(%arg0: i32, %arg1: i32, %arg2: memref<6xi32, #tpu.memory_space<smem>>, %arg3: memref<2xi32, #tpu.memory_space<smem>>) -> (i32, i32) {
    %c0_i32 = arith.constant 0 : i32
    %c0_i32_0 = arith.constant 0 : i32
    return %arg0, %c0_i32 : i32, i32
  }
  func.func @transform_5(%arg0: i32, %arg1: i32, %arg2: memref<6xi32, #tpu.memory_space<smem>>, %arg3: memref<2xi32, #tpu.memory_space<smem>>) -> (i32, i32) {
    %c0_i32 = arith.constant 0 : i32
    %c0_i32_0 = arith.constant 0 : i32
    return %arg0, %c0_i32 : i32, i32
  }
  func.func @transform_6(%arg0: i32, %arg1: i32, %arg2: memref<6xi32, #tpu.memory_space<smem>>, %arg3: memref<2xi32, #tpu.memory_space<smem>>) -> (i32, i32) {
    %c0_i32 = arith.constant 0 : i32
    %c0_i32_0 = arith.constant 0 : i32
    %c0_i32_1 = arith.constant 0 : i32
    return %c0_i32, %c0_i32_0 : i32, i32
  }
  func.func @transform_7(%arg0: i32, %arg1: i32, %arg2: memref<6xi32, #tpu.memory_space<smem>>, %arg3: memref<2xi32, #tpu.memory_space<smem>>) -> (i32, i32) {
    %c0_i32 = arith.constant 0 : i32
    %c0_i32_0 = arith.constant 0 : i32
    %c0_i32_1 = arith.constant 0 : i32
    return %c0_i32, %c0_i32_0 : i32, i32
  }
  func.func @transform_8(%arg0: i32, %arg1: i32, %arg2: memref<6xi32, #tpu.memory_space<smem>>, %arg3: memref<2xi32, #tpu.memory_space<smem>>) -> (i32, i32) {
    %c0_i32 = arith.constant 0 : i32
    %c0_i32_0 = arith.constant 0 : i32
    return %arg0, %c0_i32 : i32, i32
  }
  func.func @transform_9(%arg0: i32, %arg1: i32, %arg2: memref<6xi32, #tpu.memory_space<smem>>, %arg3: memref<2xi32, #tpu.memory_space<smem>>) -> (i32, i32) {
    %c0_i32 = arith.constant 0 : i32
    %c0_i32_0 = arith.constant 0 : i32
    return %arg0, %c0_i32 : i32, i32
  }
}

module attributes {stable_mosaic.version = 11 : i64} {
  func.func @_out_kernel(%arg0: i32, %arg1: memref<512x128xf32, #tpu.memory_space<vmem>>, %arg2: memref<128x128xbf16, #tpu.memory_space<vmem>>, %arg3: memref<1x128xf32, #tpu.memory_space<vmem>>, %arg4: memref<512x128xf32, #tpu.memory_space<vmem>>) attributes {dimension_semantics = [#tpu.dimension_semantics<parallel>], iteration_bounds = array<i64: 2>, scalar_prefetch = 0 : i64, scratch_operands = 0 : i64, tpu.core_type = #tpu.core_type<tc>, window_params = [{transform_indices = @transform_0, window_bounds = array<i64: 512, 128>}, {pipeline_mode = #tpu.pipeline_mode<synchronous>, transform_indices = @transform_1, window_bounds = array<i64: 128, 128>}, {pipeline_mode = #tpu.pipeline_mode<synchronous>, transform_indices = @transform_2, window_bounds = array<i64: 1, 128>}, {transform_indices = @transform_3, window_bounds = array<i64: 512, 128>}]} {
    %c0 = arith.constant 0 : index
    %c0_0 = arith.constant 0 : index
    %0 = vector.load %arg1[%c0, %c0_0] : memref<512x128xf32, #tpu.memory_space<vmem>>, vector<512x128xf32>
    %1 = arith.truncf %0 : vector<512x128xf32> to vector<512x128xbf16>
    %c0_1 = arith.constant 0 : index
    %c0_2 = arith.constant 0 : index
    %2 = vector.load %arg2[%c0_1, %c0_2] : memref<128x128xbf16, #tpu.memory_space<vmem>>, vector<128x128xbf16>
    %cst = arith.constant dense<0.000000e+00> : vector<512x128xf32>
    %3 = tpu.matmul %1, %2, %cst {dimension_numbers = #tpu.dot_dimension_numbers<[1], [0], [0], [1], [0, 0, 1, 1], [], []>} : vector<512x128xbf16>, vector<128x128xbf16>, vector<512x128xf32> -> vector<512x128xf32>
    %c0_3 = arith.constant 0 : index
    %c0_4 = arith.constant 0 : index
    %4 = vector.load %arg3[%c0_3, %c0_4] : memref<1x128xf32, #tpu.memory_space<vmem>>, vector<1x128xf32>
    %5 = vector.broadcast %4 : vector<1x128xf32> to vector<512x128xf32>
    %6 = arith.addf %3, %5 : vector<512x128xf32>
    %cst_5 = arith.constant dense<0xFF800000> : vector<512xf32>
    %7 = vector.multi_reduction <maximumf>, %6, %cst_5 [1] : vector<512x128xf32> to vector<512xf32>
    %8 = vector.shape_cast %7 : vector<512xf32> to vector<512x1xf32>
    %9 = vector.broadcast %8 : vector<512x1xf32> to vector<512x128xf32>
    %10 = arith.subf %6, %9 : vector<512x128xf32>
    %11 = math.exp %10 : vector<512x128xf32>
    %cst_6 = arith.constant dense<0.000000e+00> : vector<512xf32>
    %12 = vector.multi_reduction <add>, %11, %cst_6 [1] : vector<512x128xf32> to vector<512xf32>
    %13 = vector.shape_cast %12 : vector<512xf32> to vector<512x1xf32>
    %14 = math.log %13 : vector<512x1xf32>
    %15 = vector.broadcast %14 : vector<512x1xf32> to vector<512x128xf32>
    %16 = arith.subf %10, %15 : vector<512x128xf32>
    %c0_7 = arith.constant 0 : index
    %c0_8 = arith.constant 0 : index
    %17 = vector.load %arg4[%c0_7, %c0_8] : memref<512x128xf32, #tpu.memory_space<vmem>>, vector<512x128xf32>
    tpu.vector_store %arg4[%c0_7, %c0_8], %16 {strides = array<i32>} : memref<512x128xf32, #tpu.memory_space<vmem>>, vector<512x128xf32>,
    return
  }
  func.func @transform_0(%arg0: i32) -> (i32, i32) {
    %c0_i32 = arith.constant 0 : i32
    %c0_i32_0 = arith.constant 0 : i32
    return %arg0, %c0_i32 : i32, i32
  }
  func.func @transform_1(%arg0: i32) -> (i32, i32) {
    %c0_i32 = arith.constant 0 : i32
    %c0_i32_0 = arith.constant 0 : i32
    %c0_i32_1 = arith.constant 0 : i32
    return %c0_i32, %c0_i32_0 : i32, i32
  }
  func.func @transform_2(%arg0: i32) -> (i32, i32) {
    %c0_i32 = arith.constant 0 : i32
    %c0_i32_0 = arith.constant 0 : i32
    %c0_i32_1 = arith.constant 0 : i32
    return %c0_i32, %c0_i32_0 : i32, i32
  }
  func.func @transform_3(%arg0: i32) -> (i32, i32) {
    %c0_i32 = arith.constant 0 : i32
    %c0_i32_0 = arith.constant 0 : i32
    return %arg0, %c0_i32 : i32, i32
  }
}

module attributes {stable_mosaic.version = 11 : i64} {
  func.func @_gcn_layer_kernel(%arg0: i32, %arg1: i32, %arg2: memref<6xi32, #tpu.memory_space<smem>>, %arg3: memref<2xi32, #tpu.memory_space<smem>>, %arg4: memref<3xf32, #tpu.memory_space<smem>>, %arg5: memref<512x256xbf16, #tpu.memory_space<vmem>>, %arg6: memref<256x128xbf16, #tpu.memory_space<vmem>>, %arg7: memref<512x128xbf16, #tpu.memory_space<vmem>>, %arg8: memref<512x128xbf16, #tpu.memory_space<vmem>>, %arg9: memref<512x128xf32, #tpu.memory_space<vmem>>, %arg10: memref<128x128xbf16, #tpu.memory_space<vmem>>, %arg11: memref<1x128xf32, #tpu.memory_space<vmem>>, %arg12: memref<512x128xbf16, #tpu.memory_space<vmem>>, %arg13: memref<512x128xf32, #tpu.memory_space<vmem>>, %arg14: memref<512x128xf32, #tpu.memory_space<vmem>>) attributes {dimension_semantics = [#tpu.dimension_semantics<parallel>, #tpu.dimension_semantics<arbitrary>], iteration_bounds = array<i64: 2, 3>, scalar_prefetch = 2 : i64, scratch_operands = 1 : i64, tpu.core_type = #tpu.core_type<tc>, window_params = [{transform_indices = @transform_0, window_bounds = array<i64: 3>}, {transform_indices = @transform_1, window_bounds = array<i64: 512, 256>}, {transform_indices = @transform_2, window_bounds = array<i64: 256, 128>}, {transform_indices = @transform_3, window_bounds = array<i64: 512, 128>}, {transform_indices = @transform_4, window_bounds = array<i64: 512, 128>}, {transform_indices = @transform_5, window_bounds = array<i64: 512, 128>}, {pipeline_mode = #tpu.pipeline_mode<synchronous>, transform_indices = @transform_6, window_bounds = array<i64: 128, 128>}, {pipeline_mode = #tpu.pipeline_mode<synchronous>, transform_indices = @transform_7, window_bounds = array<i64: 1, 128>}, {transform_indices = @transform_8, window_bounds = array<i64: 512, 128>}, {transform_indices = @transform_9, window_bounds = array<i64: 512, 128>}]} {
    %c0_i32 = arith.constant 0 : i32
    %0 = arith.cmpi eq, %arg1, %c0_i32 : i32
    %1 = arith.extui %0 : i1 to i32
    %c0_i32_0 = arith.constant 0 : i32
    %2 = arith.cmpi ne, %1, %c0_i32_0 : i32
    scf.if %2 {
      %cst = arith.constant 0.000000e+00 : f32
      %11 = vector.broadcast %cst : f32 to vector<512x128xf32>
      %c0 = arith.constant 0 : index
      %c0_3 = arith.constant 0 : index
      %12 = vector.load %arg14[%c0, %c0_3] : memref<512x128xf32, #tpu.memory_space<vmem>>, vector<512x128xf32>
      tpu.vector_store %arg14[%c0, %c0_3], %11 {strides = array<i32>} : memref<512x128xf32, #tpu.memory_space<vmem>>, vector<512x128xf32>,
    } else {
    }
    %3 = arith.index_cast %arg0 : i32 to index
    %4 = memref.load %arg3[%3] : memref<2xi32, #tpu.memory_space<smem>>
    %5 = arith.cmpi slt, %arg1, %4 : i32
    %6 = arith.extui %5 : i1 to i32
    %c0_i32_1 = arith.constant 0 : i32
    %7 = arith.cmpi ne, %6, %c0_i32_1 : i32
    scf.if %7 {
      %c0 = arith.constant 0 : index
      %c0_3 = arith.constant 0 : index
      %11 = vector.load %arg14[%c0, %c0_3] : memref<512x128xf32, #tpu.memory_space<vmem>>, vector<512x128xf32>
      %c0_4 = arith.constant 0 : index
      %c0_5 = arith.constant 0 : index
      %12 = vector.load %arg5[%c0_4, %c0_5] : memref<512x256xbf16, #tpu.memory_space<vmem>>, vector<512x256xbf16>
      %c0_6 = arith.constant 0 : index
      %c0_7 = arith.constant 0 : index
      %13 = vector.load %arg6[%c0_6, %c0_7] : memref<256x128xbf16, #tpu.memory_space<vmem>>, vector<256x128xbf16>
      %cst = arith.constant dense<0.000000e+00> : vector<512x128xf32>
      %14 = tpu.matmul %12, %13, %cst {dimension_numbers = #tpu.dot_dimension_numbers<[1], [0], [0], [1], [0, 0, 1, 1], [], []>} : vector<512x256xbf16>, vector<256x128xbf16>, vector<512x128xf32> -> vector<512x128xf32>
      %15 = arith.addf %11, %14 : vector<512x128xf32>
      %c0_8 = arith.constant 0 : index
      %c0_9 = arith.constant 0 : index
      %16 = vector.load %arg14[%c0_8, %c0_9] : memref<512x128xf32, #tpu.memory_space<vmem>>, vector<512x128xf32>
      tpu.vector_store %arg14[%c0_8, %c0_9], %15 {strides = array<i32>} : memref<512x128xf32, #tpu.memory_space<vmem>>, vector<512x128xf32>,
    } else {
    }
    %c2_i32 = arith.constant 2 : i32
    %8 = arith.cmpi eq, %arg1, %c2_i32 : i32
    %9 = arith.extui %8 : i1 to i32
    %c0_i32_2 = arith.constant 0 : i32
    %10 = arith.cmpi ne, %9, %c0_i32_2 : i32
    scf.if %10 {
      %c0 = arith.constant 0 : index
      %c0_3 = arith.constant 0 : index
      %11 = vector.load %arg14[%c0, %c0_3] : memref<512x128xf32, #tpu.memory_space<vmem>>, vector<512x128xf32>
      %12 = arith.truncf %11 : vector<512x128xf32> to vector<512x128xbf16>
      %c0_4 = arith.constant 0 : index
      %c0_5 = arith.constant 0 : index
      %13 = vector.load %arg10[%c0_4, %c0_5] : memref<128x128xbf16, #tpu.memory_space<vmem>>, vector<128x128xbf16>
      %cst = arith.constant dense<0.000000e+00> : vector<512x128xf32>
      %14 = tpu.matmul %12, %13, %cst {dimension_numbers = #tpu.dot_dimension_numbers<[1], [0], [0], [1], [0, 0, 1, 1], [], []>} : vector<512x128xbf16>, vector<128x128xbf16>, vector<512x128xf32> -> vector<512x128xf32>
      %c0_6 = arith.constant 0 : index
      %c0_7 = arith.constant 0 : index
      %15 = vector.load %arg11[%c0_6, %c0_7] : memref<1x128xf32, #tpu.memory_space<vmem>>, vector<1x128xf32>
      %16 = vector.broadcast %15 : vector<1x128xf32> to vector<512x128xf32>
      %17 = arith.addf %14, %16 : vector<512x128xf32>
      %cst_8 = arith.constant 0.000000e+00 : f32
      %18 = vector.broadcast %cst_8 : f32 to vector<512x128xf32>
      %19 = arith.maximumf %17, %18 : vector<512x128xf32>
      %c0_9 = arith.constant 0 : index
      %20 = memref.load %arg4[%c0_9] : memref<3xf32, #tpu.memory_space<smem>>
      %c0_10 = arith.constant 0 : index
      %c0_11 = arith.constant 0 : index
      %21 = vector.load %arg8[%c0_10, %c0_11] : memref<512x128xbf16, #tpu.memory_space<vmem>>, vector<512x128xbf16>
      %22 = arith.extf %21 : vector<512x128xbf16> to vector<512x128xf32>
      %23 = vector.broadcast %20 : f32 to vector<512x128xf32>
      %24 = arith.mulf %23, %22 : vector<512x128xf32>
      %25 = arith.addf %19, %24 : vector<512x128xf32>
      %c1 = arith.constant 1 : index
      %26 = memref.load %arg4[%c1] : memref<3xf32, #tpu.memory_space<smem>>
      %c0_12 = arith.constant 0 : index
      %c0_13 = arith.constant 0 : index
      %27 = vector.load %arg7[%c0_12, %c0_13] : memref<512x128xbf16, #tpu.memory_space<vmem>>, vector<512x128xbf16>
      %28 = arith.extf %27 : vector<512x128xbf16> to vector<512x128xf32>
      %29 = vector.broadcast %26 : f32 to vector<512x128xf32>
      %30 = arith.mulf %29, %28 : vector<512x128xf32>
      %31 = arith.addf %25, %30 : vector<512x128xf32>
      %32 = arith.truncf %31 : vector<512x128xf32> to vector<512x128xbf16>
      %c0_14 = arith.constant 0 : index
      %c0_15 = arith.constant 0 : index
      %33 = vector.load %arg12[%c0_14, %c0_15] : memref<512x128xbf16, #tpu.memory_space<vmem>>, vector<512x128xbf16>
      tpu.vector_store %arg12[%c0_14, %c0_15], %32 {strides = array<i32>} : memref<512x128xbf16, #tpu.memory_space<vmem>>, vector<512x128xbf16>,
      %c0_16 = arith.constant 0 : index
      %c0_17 = arith.constant 0 : index
      %34 = vector.load %arg9[%c0_16, %c0_17] : memref<512x128xf32, #tpu.memory_space<vmem>>, vector<512x128xf32>
      %c2 = arith.constant 2 : index
      %35 = memref.load %arg4[%c2] : memref<3xf32, #tpu.memory_space<smem>>
      %36 = vector.broadcast %35 : f32 to vector<512x128xf32>
      %37 = arith.mulf %36, %31 : vector<512x128xf32>
      %38 = arith.addf %34, %37 : vector<512x128xf32>
      %c0_18 = arith.constant 0 : index
      %c0_19 = arith.constant 0 : index
      %39 = vector.load %arg13[%c0_18, %c0_19] : memref<512x128xf32, #tpu.memory_space<vmem>>, vector<512x128xf32>
      tpu.vector_store %arg13[%c0_18, %c0_19], %38 {strides = array<i32>} : memref<512x128xf32, #tpu.memory_space<vmem>>, vector<512x128xf32>,
    } else {
    }
    return
  }
  func.func @transform_0(%arg0: i32, %arg1: i32, %arg2: memref<6xi32, #tpu.memory_space<smem>>, %arg3: memref<2xi32, #tpu.memory_space<smem>>) -> i32 {
    %c0_i32 = arith.constant 0 : i32
    %c0_i32_0 = arith.constant 0 : i32
    return %c0_i32 : i32
  }
  func.func @transform_1(%arg0: i32, %arg1: i32, %arg2: memref<6xi32, #tpu.memory_space<smem>>, %arg3: memref<2xi32, #tpu.memory_space<smem>>) -> (i32, i32) {
    %c3_i32 = arith.constant 3 : i32
    %0 = arith.muli %arg0, %c3_i32 : i32
    %1 = arith.addi %0, %arg1 : i32
    %2 = arith.index_cast %1 : i32 to index
    %3 = memref.load %arg2[%2] : memref<6xi32, #tpu.memory_space<smem>>
    %c0_i32 = arith.constant 0 : i32
    return %arg0, %3 : i32, i32
  }
  func.func @transform_2(%arg0: i32, %arg1: i32, %arg2: memref<6xi32, #tpu.memory_space<smem>>, %arg3: memref<2xi32, #tpu.memory_space<smem>>) -> (i32, i32) {
    %c3_i32 = arith.constant 3 : i32
    %0 = arith.muli %arg0, %c3_i32 : i32
    %1 = arith.addi %0, %arg1 : i32
    %2 = arith.index_cast %1 : i32 to index
    %3 = memref.load %arg2[%2] : memref<6xi32, #tpu.memory_space<smem>>
    %c0_i32 = arith.constant 0 : i32
    %c0_i32_0 = arith.constant 0 : i32
    return %3, %c0_i32 : i32, i32
  }
  func.func @transform_3(%arg0: i32, %arg1: i32, %arg2: memref<6xi32, #tpu.memory_space<smem>>, %arg3: memref<2xi32, #tpu.memory_space<smem>>) -> (i32, i32) {
    %c0_i32 = arith.constant 0 : i32
    %c0_i32_0 = arith.constant 0 : i32
    return %arg0, %c0_i32 : i32, i32
  }
  func.func @transform_4(%arg0: i32, %arg1: i32, %arg2: memref<6xi32, #tpu.memory_space<smem>>, %arg3: memref<2xi32, #tpu.memory_space<smem>>) -> (i32, i32) {
    %c0_i32 = arith.constant 0 : i32
    %c0_i32_0 = arith.constant 0 : i32
    return %arg0, %c0_i32 : i32, i32
  }
  func.func @transform_5(%arg0: i32, %arg1: i32, %arg2: memref<6xi32, #tpu.memory_space<smem>>, %arg3: memref<2xi32, #tpu.memory_space<smem>>) -> (i32, i32) {
    %c0_i32 = arith.constant 0 : i32
    %c0_i32_0 = arith.constant 0 : i32
    return %arg0, %c0_i32 : i32, i32
  }
  func.func @transform_6(%arg0: i32, %arg1: i32, %arg2: memref<6xi32, #tpu.memory_space<smem>>, %arg3: memref<2xi32, #tpu.memory_space<smem>>) -> (i32, i32) {
    %c0_i32 = arith.constant 0 : i32
    %c0_i32_0 = arith.constant 0 : i32
    %c0_i32_1 = arith.constant 0 : i32
    return %c0_i32, %c0_i32_0 : i32, i32
  }
  func.func @transform_7(%arg0: i32, %arg1: i32, %arg2: memref<6xi32, #tpu.memory_space<smem>>, %arg3: memref<2xi32, #tpu.memory_space<smem>>) -> (i32, i32) {
    %c0_i32 = arith.constant 0 : i32
    %c0_i32_0 = arith.constant 0 : i32
    %c0_i32_1 = arith.constant 0 : i32
    return %c0_i32, %c0_i32_0 : i32, i32
  }
  func.func @transform_8(%arg0: i32, %arg1: i32, %arg2: memref<6xi32, #tpu.memory_space<smem>>, %arg3: memref<2xi32, #tpu.memory_space<smem>>) -> (i32, i32) {
    %c0_i32 = arith.constant 0 : i32
    %c0_i32_0 = arith.constant 0 : i32
    return %arg0, %c0_i32 : i32, i32
  }
  func.func @transform_9(%arg0: i32, %arg1: i32, %arg2: memref<6xi32, #tpu.memory_space<smem>>, %arg3: memref<2xi32, #tpu.memory_space<smem>>) -> (i32, i32) {
    %c0_i32 = arith.constant 0 : i32
    %c0_i32_0 = arith.constant 0 : i32
    return %arg0, %c0_i32 : i32, i32
  }
}

</mosaic_0001>

<llo_original>
// kernel: gcn_res_forward.8
$region0: #{gcn_res_forward.8}
  #allocation0 [shape = 'u32[]', space=smem, size = 0x4, offset = 0x4, fixed_abs, tag = 'smem constant byte address 0x4 - core index']
  #allocation1 [shape = 'u32[144,128]{1,0:T(1,128)}', space=vmem, size = 0x12000, scoped, tag = 'internal scratch']
  %s0 = inlined_call_operand.vmem [shape: bf16[1024,128], index: 0, kind: input, shape index: {}]
  %s1 = inlined_call_operand.hbm [shape: bf16[128,128], index: 1, kind: input, shape index: {}]
  %s2 = inlined_call_operand.hbm [shape: f32[1,128], index: 2, kind: input, shape index: {}]
  %s3 = inlined_call_operand.vmem [shape: bf16[1024,128], index: 3, kind: output, shape index: {}]
  %s4 = sld [smem:[#allocation0]]
  $region53: #{gcn_res_forward.8} parent=0
    _
  %s6 = ssub.s32 1, %s4
  %s7 = scalar_select 0, %s6, %s4
  $region1: #{gcn_res_forward.8} parent=0
    #allocation2 [shape = 'u8[32768]{0}', space=vmem, size = 0x8000, scoped, tag = 'input window, operand 1, single buffered']
    #allocation3 [shape = 's32[2]{0}', space=sflag, size = 0x8, scoped, tag = 'scoped memory for gcn_res_forward.8']
    #allocation4 [shape = 'u8[512]{0}', space=vmem, size = 0x400, scoped, tag = 'input window, operand 2, single buffered']
    #allocation5 [shape = 's32[1]{0}', space=sflag, size = 0x4, scoped, tag = 'scoped memory for gcn_res_forward.8']
    %8 = vsyncpa [#allocation3], 0
    %9 = vsyncpa [#allocation5], 0
    loop: start=0, step=1, limit=4
    $region2: #{gcn_res_forward.8} parent=1 // loop_pre_header
      _
    $region3: #{gcn_res_forward.8} parent=1 // loop_header
      %s11 = sphi 0, %s15
      %p12 = scmp.ge.s32.totalorder %s11, 4
      %s21 = sphi 0, %s23
      %s24 = sphi 0, %s21
      %s25 = sphi 0, %s24
      %s41 = sphi 0, %s25
      %s45 = sphi 0, %s45
      %s47 = sphi 0, %s45
      %s48 = sphi 0, %s47
      %s62 = sphi 0, %s48
      %s66 = sphi 0, %s66
      %s68 = sphi 0, %s66
      %s69 = sphi 0, %s68
      %s83 = sphi 0, %s69
      %s89 = sphi 0, %s91
      %s92 = sphi 0, %s89
      %s93 = sphi 0, %s92
      %s109 = sphi 0, %s93
    $region4: #{gcn_res_forward.8} parent=1 // loop_header_branch
      %14 = sbr.rel (%p12) target = $region8
    $region5: #{gcn_res_forward.8} parent=1 // loop_body
      %s16 = ssub.s32 %s11, 1
      %s17 = ssub.s32 %s11, 2
      %s18 = sadd.s32 %s11, 1
      %s19 = ssub.s32 %s11, %s18
      %p20 = scmp.eq.s32.totalorder %s19, 0
      %s22 = sadd.s32 %s21, 1
      %s23 = scalar_select %p20, %s21, %s22
      %p26 = pneg %p20
      %p27 = scmp.eq.s32.totalorder %s11, 1
      %p28 = por %p26, %p27
      %p29 = scmp.ne.s32.totalorder %s21, %s24
      %p30 = scmp.eq.s32.totalorder %s11, 0
      %p31 = por %p29, %p30
      %p32 = scmp.ne.s32.totalorder %s21, %s24
      %p33 = scmp.eq.s32.totalorder %s16, 1
      %p34 = por %p32, %p33
      %p35 = scmp.ne.s32.totalorder %s24, %s25
      %p36 = scmp.eq.s32.totalorder %s16, 0
      %p37 = por %p35, %p36
      %p38 = scmp.ne.s32.totalorder %s24, %s25
      %p39 = scmp.eq.s32.totalorder %s17, 1
      %p40 = por %p38, %p39
      %p42 = scmp.ne.s32.totalorder %s25, %s41
      %p43 = scmp.eq.s32.totalorder %s17, 0
      %p44 = por %p42, %p43
      %s46 = sadd.s32 %s45, 1
      %p49 = scmp.eq.s32.totalorder %s11, 1
      %p50 = scmp.ne.s32.totalorder %s45, %s47
      %p51 = scmp.eq.s32.totalorder %s11, 0
      %p52 = por %p50, %p51
      %p53 = scmp.ne.s32.totalorder %s45, %s47
      %p54 = scmp.eq.s32.totalorder %s16, 1
      %p55 = por %p53, %p54
      %p56 = scmp.ne.s32.totalorder %s47, %s48
      %p57 = scmp.eq.s32.totalorder %s16, 0
      %p58 = por %p56, %p57
      %p59 = scmp.ne.s32.totalorder %s47, %s48
      %p60 = scmp.eq.s32.totalorder %s17, 1
      %p61 = por %p59, %p60
      %p63 = scmp.ne.s32.totalorder %s48, %s62
      %p64 = scmp.eq.s32.totalorder %s17, 0
      %p65 = por %p63, %p64
      %s67 = sadd.s32 %s66, 1
      %p70 = scmp.eq.s32.totalorder %s11, 1
      %p71 = scmp.ne.s32.totalorder %s66, %s68
      %p72 = scmp.eq.s32.totalorder %s11, 0
      %p73 = por %p71, %p72
      %p74 = scmp.ne.s32.totalorder %s66, %s68
      %p75 = scmp.eq.s32.totalorder %s16, 1
      %p76 = por %p74, %p75
      %p77 = scmp.ne.s32.totalorder %s68, %s69
      %p78 = scmp.eq.s32.totalorder %s16, 0
      %p79 = por %p77, %p78
      %p80 = scmp.ne.s32.totalorder %s68, %s69
      %p81 = scmp.eq.s32.totalorder %s17, 1
      %p82 = por %p80, %p81
      %p84 = scmp.ne.s32.totalorder %s69, %s83
      %p85 = scmp.eq.s32.totalorder %s17, 0
      %p86 = por %p84, %p85
      %s87 = ssub.s32 %s11, %s18
      %p88 = scmp.eq.s32.totalorder %s87, 0
      %s90 = sadd.s32 %s89, 1
      %s91 = scalar_select %p88, %s89, %s90
      %p94 = pneg %p88
      %p95 = scmp.eq.s32.totalorder %s11, 1
      %p96 = por %p94, %p95
      %p97 = scmp.ne.s32.totalorder %s89, %s92
      %p98 = scmp.eq.s32.totalorder %s11, 0
      %p99 = por %p97, %p98
      %p100 = scmp.ne.s32.totalorder %s89, %s92
      %p101 = scmp.eq.s32.totalorder %s16, 1
      %p102 = por %p100, %p101
      %p103 = scmp.ne.s32.totalorder %s92, %s93
      %p104 = scmp.eq.s32.totalorder %s16, 0
      %p105 = por %p103, %p104
      %p106 = scmp.ne.s32.totalorder %s92, %s93
      %p107 = scmp.eq.s32.totalorder %s17, 1
      %p108 = por %p106, %p107
      %p110 = scmp.ne.s32.totalorder %s93, %s109
      %p111 = scmp.eq.s32.totalorder %s17, 0
      %p112 = por %p110, %p111
      %p113 = scmp.le.s32.totalorder 1, %s11
      %p114 = scmp.lt.s32.totalorder %s11, 3
      %p115 = pnand %p113, %p114
      %p116 = pneg %p115
      // Predicated region
      $region9: #{gcn_res_forward.8} parent=5 // pred_check
        _
      $region10: #{gcn_res_forward.8} parent=5 // pred_check_branch
        %118 = sbr.rel (%p115) target = $region12
      $region11: #{gcn_res_forward.8} parent=5 // pred_region
        %s119 = ssub.s32 %s11, 1
        // Predicated region
        $region13: #{gcn_res_forward.8} parent=11 // pred_check
          %p120 = pneg %p58
        $region14: #{gcn_res_forward.8} parent=11 // pred_check_branch
          %122 = sbr.rel (%p120) target = $region16
        $region15: #{gcn_res_forward.8} parent=11 // pred_region
          %s124 = ssub.s32 1024, 1024
          %125 = vsyncadd [#allocation3], %s124
          %s126 = sshll.u32 [#allocation2], 4
          %s127 = int_to_ptr.vmem [resolvable:$true] %s126
          %132 = dma.hbm_to_vmem [thread:$0]  %s1, 1024, %s127, [#allocation3], 64, 64, 4
        $region16: #{gcn_res_forward.8} parent=11 // pred_fallthru
          _
        // Predicated region
        $region17: #{gcn_res_forward.8} parent=11 // pred_check
          %p133 = pneg %p79
        $region18: #{gcn_res_forward.8} parent=11 // pred_check_branch
          %135 = sbr.rel (%p133) target = $region20
        $region19: #{gcn_res_forward.8} parent=11 // pred_region
          %s137 = ssub.s32 16, 16
          %138 = vsyncadd [#allocation5], %s137
          %s140 = sshll.u32 [#allocation4], 4
          %s141 = int_to_ptr.vmem [resolvable:$true] %s140
          %143 = dma.hbm_to_vmem [thread:$0]  %s2, 16, %s141, [#allocation5]
        $region20: #{gcn_res_forward.8} parent=11 // pred_fallthru
          _
      $region12: #{gcn_res_forward.8} parent=5 // pred_fallthru
        _
      %p144 = scmp.lt.s32.totalorder %s11, 2
      // Predicated region
      $region21: #{gcn_res_forward.8} parent=5 // pred_check
        %p145 = pneg %p144
      $region22: #{gcn_res_forward.8} parent=5 // pred_check_branch
        %147 = sbr.rel (%p145) target = $region24
      $region23: #{gcn_res_forward.8} parent=5 // pred_region
        // Predicated region
        $region25: #{gcn_res_forward.8} parent=23 // pred_check
          %p148 = pneg %p31
        $region26: #{gcn_res_forward.8} parent=23 // pred_check_branch
          %150 = sbr.rel (%p148) target = $region28
        $region27: #{gcn_res_forward.8} parent=23 // pred_region
          %s151 = smul.u32 64, %s11
          %p152 = scmp.lt.s32.totalorder %s151, 127
          %s153 = scalar_select %p152, %s151, 127
          %s154 = smul.addr %s153, 4
          %s155 = scalar_lea.vmem %s0, %s154
          %s156 = smul.u32 64, %s11
        $region28: #{gcn_res_forward.8} parent=23 // pred_fallthru
          _
      $region24: #{gcn_res_forward.8} parent=5 // pred_fallthru
        _
      %p157 = scmp.le.s32.totalorder 1, %s11
      %p158 = scmp.lt.s32.totalorder %s11, 3
      %p159 = pnand %p157, %p158
      %p160 = pneg %p159
      // Predicated region
      $region29: #{gcn_res_forward.8} parent=5 // pred_check
        _
      $region30: #{gcn_res_forward.8} parent=5 // pred_check_branch
        %162 = sbr.rel (%p159) target = $region32
      $region31: #{gcn_res_forward.8} parent=5 // pred_region
        %s163 = ssub.s32 %s11, 1
        // Predicated region
        $region33: #{gcn_res_forward.8} parent=31 // pred_check
          %p164 = pneg %p58
        $region34: #{gcn_res_forward.8} parent=31 // pred_check_branch
          %166 = sbr.rel (%p164) target = $region36
        $region35: #{gcn_res_forward.8} parent=31 // pred_region
          %167 = dma.done [#allocation3], 1024
        $region36: #{gcn_res_forward.8} parent=31 // pred_fallthru
          _
        // Predicated region
        $region37: #{gcn_res_forward.8} parent=31 // pred_check
          %p168 = pneg %p79
        $region38: #{gcn_res_forward.8} parent=31 // pred_check_branch
          %170 = sbr.rel (%p168) target = $region40
        $region39: #{gcn_res_forward.8} parent=31 // pred_region
          %171 = dma.done [#allocation5], 16
        $region40: #{gcn_res_forward.8} parent=31 // pred_fallthru
          _
        %s172 = smul.u32 64, %s16
        %p173 = scmp.lt.s32.totalorder %s172, 127
        %s174 = scalar_select %p173, %s172, 127
        %s175 = smul.addr %s174, 4
        %s176 = scalar_lea.vmem %s0, %s175
        %p177 = pneg %p37
        %p178 = pneg %p34
        %p179 = pneg %p58
        %p180 = pneg %p55
        %p181 = pneg %p79
        %p182 = pneg %p76
        %p183 = pneg %p105
        %p184 = pneg %p102
        %s185 = smul.u32 64, %s16
        %p186 = scmp.lt.s32.totalorder %s185, 127
        %s187 = scalar_select %p186, %s185, 127
        %s188 = smul.addr %s187, 4
        %s189 = scalar_lea.vmem %s3, %s188
        %s190 = smul.u32 64, %s16
        %p191 = scmp.lt.s32.totalorder %s190, 127
        %s192 = scalar_select %p191, %s190, 127
        %s193 = smul.addr %s192, 4
        %s194 = scalar_lea.vmem %s0, %s193
        %s195 = smul.u32 64, %s16
        %s196 = smul.u32 64, %s16
        %p197 = scmp.lt.s32.totalorder %s196, 127
        %s198 = scalar_select %p197, %s196, 127
        %s199 = smul.addr %s198, 4
        %s200 = scalar_lea.vmem %s3, %s199
        %s201 = smul.u32 64, %s16
        %v203 = vld [vmem:[%s194] sm:$0xf]
        %v204 = vld [vmem:[%s194 + $0x4] sm:$0xf]
        %v205 = vld [vmem:[%s194 + $0x8] sm:$0xf]
        %v206 = vld [vmem:[%s194 + $0xc] sm:$0xf]
        %v207 = vld [vmem:[%s194 + $0x10] sm:$0xf]
        %v208 = vld [vmem:[%s194 + $0x14] sm:$0xf]
        %v209 = vld [vmem:[%s194 + $0x18] sm:$0xf]
        %v210 = vld [vmem:[%s194 + $0x1c] sm:$0xf]
        %v211 = vld [vmem:[%s194 + $0x20] sm:$0xf]
        %v212 = vld [vmem:[%s194 + $0x24] sm:$0xf]
        %v213 = vld [vmem:[%s194 + $0x28] sm:$0xf]
        %v214 = vld [vmem:[%s194 + $0x2c] sm:$0xf]
        %v215 = vld [vmem:[%s194 + $0x30] sm:$0xf]
        %v216 = vld [vmem:[%s194 + $0x34] sm:$0xf]
        %v217 = vld [vmem:[%s194 + $0x38] sm:$0xf]
        %v218 = vld [vmem:[%s194 + $0x3c] sm:$0xf]
        %v219 = vld [vmem:[%s194 + $0x40] sm:$0xf]
        %v220 = vld [vmem:[%s194 + $0x44] sm:$0xf]
        %v221 = vld [vmem:[%s194 + $0x48] sm:$0xf]
        %v222 = vld [vmem:[%s194 + $0x4c] sm:$0xf]
        %v223 = vld [vmem:[%s194 + $0x50] sm:$0xf]
        %v224 = vld [vmem:[%s194 + $0x54] sm:$0xf]
        %v225 = vld [vmem:[%s194 + $0x58] sm:$0xf]
        %v226 = vld [vmem:[%s194 + $0x5c] sm:$0xf]
        %v227 = vld [vmem:[%s194 + $0x60] sm:$0xf]
        %v228 = vld [vmem:[%s194 + $0x64] sm:$0xf]
        %v229 = vld [vmem:[%s194 + $0x68] sm:$0xf]
        %v230 = vld [vmem:[%s194 + $0x6c] sm:$0xf]
        %v231 = vld [vmem:[%s194 + $0x70] sm:$0xf]
        %v232 = vld [vmem:[%s194 + $0x74] sm:$0xf]
        %v233 = vld [vmem:[%s194 + $0x78] sm:$0xf]
        %v234 = vld [vmem:[%s194 + $0x7c] sm:$0xf]
        %v235 = vld [vmem:[%s194 + $0x80] sm:$0xf]
        %v236 = vld [vmem:[%s194 + $0x84] sm:$0xf]
        %v237 = vld [vmem:[%s194 + $0x88] sm:$0xf]
        %v238 = vld [vmem:[%s194 + $0x8c] sm:$0xf]
        %v239 = vld [vmem:[%s194 + $0x90] sm:$0xf]
        %v240 = vld [vmem:[%s194 + $0x94] sm:$0xf]
        %v241 = vld [vmem:[%s194 + $0x98] sm:$0xf]
        %v242 = vld [vmem:[%s194 + $0x9c] sm:$0xf]
        %v243 = vld [vmem:[%s194 + $0xa0] sm:$0xf]
        %v244 = vld [vmem:[%s194 + $0xa4] sm:$0xf]
        %v245 = vld [vmem:[%s194 + $0xa8] sm:$0xf]
        %v246 = vld [vmem:[%s194 + $0xac] sm:$0xf]
        %v247 = vld [vmem:[%s194 + $0xb0] sm:$0xf]
        %v248 = vld [vmem:[%s194 + $0xb4] sm:$0xf]
        %v249 = vld [vmem:[%s194 + $0xb8] sm:$0xf]
        %v250 = vld [vmem:[%s194 + $0xbc] sm:$0xf]
        %v251 = vld [vmem:[%s194 + $0xc0] sm:$0xf]
        %v252 = vld [vmem:[%s194 + $0xc4] sm:$0xf]
        %v253 = vld [vmem:[%s194 + $0xc8] sm:$0xf]
        %v254 = vld [vmem:[%s194 + $0xcc] sm:$0xf]
        %v255 = vld [vmem:[%s194 + $0xd0] sm:$0xf]
        %v256 = vld [vmem:[%s194 + $0xd4] sm:$0xf]
        %v257 = vld [vmem:[%s194 + $0xd8] sm:$0xf]
        %v258 = vld [vmem:[%s194 + $0xdc] sm:$0xf]
        %v259 = vld [vmem:[%s194 + $0xe0] sm:$0xf]
        %v260 = vld [vmem:[%s194 + $0xe4] sm:$0xf]
        %v261 = vld [vmem:[%s194 + $0xe8] sm:$0xf]
        %v262 = vld [vmem:[%s194 + $0xec] sm:$0xf]
        %v263 = vld [vmem:[%s194 + $0xf0] sm:$0xf]
        %v264 = vld [vmem:[%s194 + $0xf4] sm:$0xf]
        %v265 = vld [vmem:[%s194 + $0xf8] sm:$0xf]
        %v266 = vld [vmem:[%s194 + $0xfc] sm:$0xf]
        %v267 = vld [vmem:[#allocation2] sm:$0xf]
        %v268 = vld [vmem:[#allocation2 + $0x4] sm:$0xf]
        %v269 = vld [vmem:[#allocation2 + $0x8] sm:$0xf]
        %v270 = vld [vmem:[#allocation2 + $0xc] sm:$0xf]
        %v271 = vld [vmem:[#allocation2 + $0x10] sm:$0xf]
        %v272 = vld [vmem:[#allocation2 + $0x14] sm:$0xf]
        %v273 = vld [vmem:[#allocation2 + $0x18] sm:$0xf]
        %v274 = vld [vmem:[#allocation2 + $0x1c] sm:$0xf]
        %v275 = vld [vmem:[#allocation2 + $0x20] sm:$0xf]
        %v276 = vld [vmem:[#allocation2 + $0x24] sm:$0xf]
        %v277 = vld [vmem:[#allocation2 + $0x28] sm:$0xf]
        %v278 = vld [vmem:[#allocation2 + $0x2c] sm:$0xf]
        %v279 = vld [vmem:[#allocation2 + $0x30] sm:$0xf]
        %v280 = vld [vmem:[#allocation2 + $0x34] sm:$0xf]
        %v281 = vld [vmem:[#allocation2 + $0x38] sm:$0xf]
        %v282 = vld [vmem:[#allocation2 + $0x3c] sm:$0xf]
        %v283 = vld [vmem:[#allocation4] sm:$0x1]
        %v285 = vlaneseq
        %v286 = vshrl.u32 %v285, 7
        %v287 = vsub.s32 0, %v286
        %v288 = vrot.slane %v283, %v287
        %v354 = vunpack.c.l.b16 %v203
        %v355 = vunpack.c.l.b16 %v204
        %v356 = vunpack.c.l.b16 %v205
        %v357 = vunpack.c.l.b16 %v206
        %v358 = vunpack.c.l.b16 %v207
        %v359 = vunpack.c.l.b16 %v208
        %v360 = vunpack.c.l.b16 %v209
        %v361 = vunpack.c.l.b16 %v210
        %v362 = vunpack.c.l.b16 %v211
        %v363 = vunpack.c.l.b16 %v212
        %v364 = vunpack.c.l.b16 %v213
        %v365 = vunpack.c.l.b16 %v214
        %v366 = vunpack.c.l.b16 %v215
        %v367 = vunpack.c.l.b16 %v216
        %v368 = vunpack.c.l.b16 %v217
        %v369 = vunpack.c.l.b16 %v218
        %v370 = vunpack.c.l.b16 %v219
        %v371 = vunpack.c.l.b16 %v220
        %v372 = vunpack.c.l.b16 %v221
        %v373 = vunpack.c.l.b16 %v222
        %v374 = vunpack.c.l.b16 %v223
        %v375 = vunpack.c.l.b16 %v224
        %v376 = vunpack.c.l.b16 %v225
        %v377 = vunpack.c.l.b16 %v226
        %v378 = vunpack.c.l.b16 %v227
        %v379 = vunpack.c.l.b16 %v228
        %v380 = vunpack.c.l.b16 %v229
        %v381 = vunpack.c.l.b16 %v230
        %v382 = vunpack.c.l.b16 %v231
        %v383 = vunpack.c.l.b16 %v232
        %v384 = vunpack.c.l.b16 %v233
        %v385 = vunpack.c.l.b16 %v234
        %v386 = vunpack.c.l.b16 %v235
        %v387 = vunpack.c.l.b16 %v236
        %v388 = vunpack.c.l.b16 %v237
        %v389 = vunpack.c.l.b16 %v238
        %v390 = vunpack.c.l.b16 %v239
        %v391 = vunpack.c.l.b16 %v240
        %v392 = vunpack.c.l.b16 %v241
        %v393 = vunpack.c.l.b16 %v242
        %v394 = vunpack.c.l.b16 %v243
        %v395 = vunpack.c.l.b16 %v244
        %v396 = vunpack.c.l.b16 %v245
        %v397 = vunpack.c.l.b16 %v246
        %v398 = vunpack.c.l.b16 %v247
        %v399 = vunpack.c.l.b16 %v248
        %v400 = vunpack.c.l.b16 %v249
        %v401 = vunpack.c.l.b16 %v250
        %v402 = vunpack.c.l.b16 %v251
        %v403 = vunpack.c.l.b16 %v252
        %v404 = vunpack.c.l.b16 %v253
        %v405 = vunpack.c.l.b16 %v254
        %v406 = vunpack.c.l.b16 %v255
        %v407 = vunpack.c.l.b16 %v256
        %v408 = vunpack.c.l.b16 %v257
        %v409 = vunpack.c.l.b16 %v258
        %v410 = vunpack.c.l.b16 %v259
        %v411 = vunpack.c.l.b16 %v260
        %v412 = vunpack.c.l.b16 %v261
        %v413 = vunpack.c.l.b16 %v262
        %v414 = vunpack.c.l.b16 %v263
        %v415 = vunpack.c.l.b16 %v264
        %v416 = vunpack.c.l.b16 %v265
        %v417 = vunpack.c.l.b16 %v266
        %v418 = vpack.c.b16 %v355, %v354
        %v419 = vpack.c.b16 %v357, %v356
        %v420 = vpack.c.b16 %v359, %v358
        %v421 = vpack.c.b16 %v361, %v360
        %v422 = vpack.c.b16 %v363, %v362
        %v423 = vpack.c.b16 %v365, %v364
        %v424 = vpack.c.b16 %v367, %v366
        %v425 = vpack.c.b16 %v369, %v368
        %v426 = vpack.c.b16 %v371, %v370
        %v427 = vpack.c.b16 %v373, %v372
        %v428 = vpack.c.b16 %v375, %v374
        %v429 = vpack.c.b16 %v377, %v376
        %v430 = vpack.c.b16 %v379, %v378
        %v431 = vpack.c.b16 %v381, %v380
        %v432 = vpack.c.b16 %v383, %v382
        %v433 = vpack.c.b16 %v385, %v384
        %v434 = vpack.c.b16 %v387, %v386
        %v435 = vpack.c.b16 %v389, %v388
        %v436 = vpack.c.b16 %v391, %v390
        %v437 = vpack.c.b16 %v393, %v392
        %v438 = vpack.c.b16 %v395, %v394
        %v439 = vpack.c.b16 %v397, %v396
        %v440 = vpack.c.b16 %v399, %v398
        %v441 = vpack.c.b16 %v401, %v400
        %v442 = vpack.c.b16 %v403, %v402
        %v443 = vpack.c.b16 %v405, %v404
        %v444 = vpack.c.b16 %v407, %v406
        %v445 = vpack.c.b16 %v409, %v408
        %v446 = vpack.c.b16 %v411, %v410
        %v447 = vpack.c.b16 %v413, %v412
        %v448 = vpack.c.b16 %v415, %v414
        %v449 = vpack.c.b16 %v417, %v416
        %v498 = vunpack.c.l.b16 %v267
        %v499 = vunpack.c.l.b16 %v268
        %v500 = vunpack.c.l.b16 %v269
        %v501 = vunpack.c.l.b16 %v270
        %v502 = vunpack.c.l.b16 %v271
        %v503 = vunpack.c.l.b16 %v272
        %v504 = vunpack.c.l.b16 %v273
        %v505 = vunpack.c.l.b16 %v274
        %v506 = vunpack.c.l.b16 %v275
        %v507 = vunpack.c.l.b16 %v276
        %v508 = vunpack.c.l.b16 %v277
        %v509 = vunpack.c.l.b16 %v278
        %v510 = vunpack.c.l.b16 %v279
        %v511 = vunpack.c.l.b16 %v280
        %v512 = vunpack.c.l.b16 %v281
        %v513 = vunpack.c.l.b16 %v282
        %v514 = vpack.c.b16 %v499, %v498
        %v515 = vpack.c.b16 %v501, %v500
        %v516 = vpack.c.b16 %v503, %v502
        %v517 = vpack.c.b16 %v505, %v504
        %v518 = vpack.c.b16 %v507, %v506
        %v519 = vpack.c.b16 %v509, %v508
        %v520 = vpack.c.b16 %v511, %v510
        %v521 = vpack.c.b16 %v513, %v512
        %530 = vmatprep.subr.bf16.mxu0 0
        %531 = vmatpush1.bf16.msra.mxu0 %v514
        %532 = vmatprep.subr.bf16.mxu0 0
        %533 = vmatpush1.bf16.msra.mxu0 %v515
        %534 = vmatprep.subr.bf16.mxu0 0
        %535 = vmatpush1.bf16.msra.mxu0 %v516
        %536 = vmatprep.subr.bf16.mxu0 0
        %537 = vmatpush1.bf16.msra.mxu0 %v517
        %538 = vmatprep.subr.bf16.mxu0 0
        %539 = vmatpush1.bf16.msra.mxu0 %v518
        %540 = vmatprep.subr.bf16.mxu0 0
        %541 = vmatpush1.bf16.msra.mxu0 %v519
        %542 = vmatprep.subr.bf16.mxu0 0
        %543 = vmatpush1.bf16.msra.mxu0 %v520
        %544 = vmatprep.subr.bf16.mxu0 0
        %545 = vmatpush1.bf16.msra.mxu0 %v521
        %546 = vmatprep.subr.bf16.mxu0 0
        %547 = vmatpush1.bf16.msra.mxu0 0
        %548 = vmatprep.subr.bf16.mxu0 0
        %549 = vmatpush1.bf16.msra.mxu0 0
        %550 = vmatprep.subr.bf16.mxu0 0
        %551 = vmatpush1.bf16.msra.mxu0 0
        %552 = vmatprep.subr.bf16.mxu0 0
        %553 = vmatpush1.bf16.msra.mxu0 0
        %554 = vmatprep.subr.bf16.mxu0 0
        %555 = vmatpush1.bf16.msra.mxu0 0
        %556 = vmatprep.subr.bf16.mxu0 0
        %557 = vmatpush1.bf16.msra.mxu0 0
        %558 = vmatprep.subr.bf16.mxu0 0
        %559 = vmatpush1.bf16.msra.mxu0 0
        %560 = vmatprep.subr.bf16.mxu0 0
        %561 = vmatpush1.bf16.msra.mxu0 0
        %562 = vmatprep.mubr.bf16.mxu0 0
        %563 = vmatmul.mubr.bf16.gmra.mrb[0].mxu0 %v418
        %v564 = vpop.f32.mrb[0].mxu0
        %v565 = vadd.f32 %v288, %v564
        %v566 = vpop.f32.mrb[0].mxu0
        %v567 = vpop.f32.mrb[0].mxu0
        %v568 = vadd.f32 %v288, %v567
        %v569 = vpop.f32.mrb[0].mxu0
        %570 = vmatprep.mubr.bf16.mxu0 0
        %571 = vmatmul.mubr.bf16.gmra.mrb[0].mxu0 %v419
        %v572 = vpop.f32.mrb[0].mxu0
        %v573 = vadd.f32 %v288, %v572
        %v574 = vpop.f32.mrb[0].mxu0
        %v575 = vpop.f32.mrb[0].mxu0
        %v576 = vadd.f32 %v288, %v575
        %v577 = vpop.f32.mrb[0].mxu0
        %578 = vmatprep.mubr.bf16.mxu0 0
        %579 = vmatmul.mubr.bf16.gmra.mrb[0].mxu0 %v420
        %v580 = vpop.f32.mrb[0].mxu0
        %v581 = vadd.f32 %v288, %v580
        %v582 = vpop.f32.mrb[0].mxu0
        %v583 = vpop.f32.mrb[0].mxu0
        %v584 = vadd.f32 %v288, %v583
        %v585 = vpop.f32.mrb[0].mxu0
        %586 = vmatprep.mubr.bf16.mxu0 0
        %587 = vmatmul.mubr.bf16.gmra.mrb[0].mxu0 %v421
        %v588 = vpop.f32.mrb[0].mxu0
        %v589 = vadd.f32 %v288, %v588
        %v590 = vpop.f32.mrb[0].mxu0
        %v591 = vpop.f32.mrb[0].mxu0
        %v592 = vadd.f32 %v288, %v591
        %v593 = vpop.f32.mrb[0].mxu0
        %594 = vmatprep.mubr.bf16.mxu0 0
        %595 = vmatmul.mubr.bf16.gmra.mrb[0].mxu0 %v422
        %v596 = vpop.f32.mrb[0].mxu0
        %v597 = vadd.f32 %v288, %v596
        %v598 = vpop.f32.mrb[0].mxu0
        %v599 = vpop.f32.mrb[0].mxu0
        %v600 = vadd.f32 %v288, %v599
        %v601 = vpop.f32.mrb[0].mxu0
        %602 = vmatprep.mubr.bf16.mxu0 0
        %603 = vmatmul.mubr.bf16.gmra.mrb[0].mxu0 %v423
        %v604 = vpop.f32.mrb[0].mxu0
        %v605 = vadd.f32 %v288, %v604
        %v606 = vpop.f32.mrb[0].mxu0
        %v607 = vpop.f32.mrb[0].mxu0
        %v608 = vadd.f32 %v288, %v607
        %v609 = vpop.f32.mrb[0].mxu0
        %610 = vmatprep.mubr.bf16.mxu0 0
        %611 = vmatmul.mubr.bf16.gmra.mrb[0].mxu0 %v424
        %v612 = vpop.f32.mrb[0].mxu0
        %v613 = vadd.f32 %v288, %v612
        %v614 = vpop.f32.mrb[0].mxu0
        %v615 = vpop.f32.mrb[0].mxu0
        %v616 = vadd.f32 %v288, %v615
        %v617 = vpop.f32.mrb[0].mxu0
        %618 = vmatprep.mubr.bf16.mxu0 0
        %619 = vmatmul.mubr.bf16.gmra.mrb[0].mxu0 %v425
        %v620 = vpop.f32.mrb[0].mxu0
        %v621 = vadd.f32 %v288, %v620
        %v622 = vpop.f32.mrb[0].mxu0
        %v623 = vpop.f32.mrb[0].mxu0
        %v624 = vadd.f32 %v288, %v623
        %v625 = vpop.f32.mrb[0].mxu0
        %626 = vmatprep.mubr.bf16.mxu0 0
        %627 = vmatmul.mubr.bf16.gmra.mrb[0].mxu0 %v426
        %v628 = vpop.f32.mrb[0].mxu0
        %v629 = vadd.f32 %v288, %v628
        %v630 = vpop.f32.mrb[0].mxu0
        %v631 = vpop.f32.mrb[0].mxu0
        %v632 = vadd.f32 %v288, %v631
        %v633 = vpop.f32.mrb[0].mxu0
        %634 = vmatprep.mubr.bf16.mxu0 0
        %635 = vmatmul.mubr.bf16.gmra.mrb[0].mxu0 %v427
        %v636 = vpop.f32.mrb[0].mxu0
        %v637 = vadd.f32 %v288, %v636
        %v638 = vpop.f32.mrb[0].mxu0
        %v639 = vpop.f32.mrb[0].mxu0
        %v640 = vadd.f32 %v288, %v639
        %v641 = vpop.f32.mrb[0].mxu0
        %642 = vmatprep.mubr.bf16.mxu0 0
        %643 = vmatmul.mubr.bf16.gmra.mrb[0].mxu0 %v428
        %v644 = vpop.f32.mrb[0].mxu0
        %v645 = vadd.f32 %v288, %v644
        %v646 = vpop.f32.mrb[0].mxu0
        %v647 = vpop.f32.mrb[0].mxu0
        %v648 = vadd.f32 %v288, %v647
        %v649 = vpop.f32.mrb[0].mxu0
        %650 = vmatprep.mubr.bf16.mxu0 0
        %651 = vmatmul.mubr.bf16.gmra.mrb[0].mxu0 %v429
        %v652 = vpop.f32.mrb[0].mxu0
        %v653 = vadd.f32 %v288, %v652
        %v654 = vpop.f32.mrb[0].mxu0
        %v655 = vpop.f32.mrb[0].mxu0
        %v656 = vadd.f32 %v288, %v655
        %v657 = vpop.f32.mrb[0].mxu0
        %658 = vmatprep.mubr.bf16.mxu0 0
        %659 = vmatmul.mubr.bf16.gmra.mrb[0].mxu0 %v430
        %v660 = vpop.f32.mrb[0].mxu0
        %v661 = vadd.f32 %v288, %v660
        %v662 = vpop.f32.mrb[0].mxu0
        %v663 = vpop.f32.mrb[0].mxu0
        %v664 = vadd.f32 %v288, %v663
        %v665 = vpop.f32.mrb[0].mxu0
        %666 = vmatprep.mubr.bf16.mxu0 0
        %667 = vmatmul.mubr.bf16.gmra.mrb[0].mxu0 %v431
        %v668 = vpop.f32.mrb[0].mxu0
        %v669 = vadd.f32 %v288, %v668
        %v670 = vpop.f32.mrb[0].mxu0
        %v671 = vpop.f32.mrb[0].mxu0
        %v672 = vadd.f32 %v288, %v671
        %v673 = vpop.f32.mrb[0].mxu0
        %674 = vmatprep.mubr.bf16.mxu0 0
        %675 = vmatmul.mubr.bf16.gmra.mrb[0].mxu0 %v432
        %v676 = vpop.f32.mrb[0].mxu0
        %v677 = vadd.f32 %v288, %v676
        %v678 = vpop.f32.mrb[0].mxu0
        %v679 = vpop.f32.mrb[0].mxu0
        %v680 = vadd.f32 %v288, %v679
        %v681 = vpop.f32.mrb[0].mxu0
        %682 = vmatprep.mubr.bf16.mxu0 0
        %683 = vmatmul.mubr.bf16.gmra.mrb[0].mxu0 %v433
        %v684 = vpop.f32.mrb[0].mxu0
        %v685 = vadd.f32 %v288, %v684
        %v686 = vpop.f32.mrb[0].mxu0
        %v687 = vpop.f32.mrb[0].mxu0
        %v688 = vadd.f32 %v288, %v687
        %v689 = vpop.f32.mrb[0].mxu0
        %690 = vmatprep.mubr.bf16.mxu0 0
        %691 = vmatmul.mubr.bf16.gmra.mrb[0].mxu0 %v434
        %v692 = vpop.f32.mrb[0].mxu0
        %v693 = vadd.f32 %v288, %v692
        %v694 = vpop.f32.mrb[0].mxu0
        %v695 = vpop.f32.mrb[0].mxu0
        %v696 = vadd.f32 %v288, %v695
        %v697 = vpop.f32.mrb[0].mxu0
        %698 = vmatprep.mubr.bf16.mxu0 0
        %699 = vmatmul.mubr.bf16.gmra.mrb[0].mxu0 %v435
        %v700 = vpop.f32.mrb[0].mxu0
        %v701 = vadd.f32 %v288, %v700
        %v702 = vpop.f32.mrb[0].mxu0
        %v703 = vpop.f32.mrb[0].mxu0
        %v704 = vadd.f32 %v288, %v703
        %v705 = vpop.f32.mrb[0].mxu0
        %706 = vmatprep.mubr.bf16.mxu0 0
        %707 = vmatmul.mubr.bf16.gmra.mrb[0].mxu0 %v436
        %v708 = vpop.f32.mrb[0].mxu0
        %v709 = vadd.f32 %v288, %v708
        %v710 = vpop.f32.mrb[0].mxu0
        %v711 = vpop.f32.mrb[0].mxu0
        %v712 = vadd.f32 %v288, %v711
        %v713 = vpop.f32.mrb[0].mxu0
        %714 = vmatprep.mubr.bf16.mxu0 0
        %715 = vmatmul.mubr.bf16.gmra.mrb[0].mxu0 %v437
        %v716 = vpop.f32.mrb[0].mxu0
        %v717 = vadd.f32 %v288, %v716
        %v718 = vpop.f32.mrb[0].mxu0
        %v719 = vpop.f32.mrb[0].mxu0
        %v720 = vadd.f32 %v288, %v719
        %v721 = vpop.f32.mrb[0].mxu0
        %722 = vmatprep.mubr.bf16.mxu0 0
        %723 = vmatmul.mubr.bf16.gmra.mrb[0].mxu0 %v438
        %v724 = vpop.f32.mrb[0].mxu0
        %v725 = vadd.f32 %v288, %v724
        %v726 = vpop.f32.mrb[0].mxu0
        %v727 = vpop.f32.mrb[0].mxu0
        %v728 = vadd.f32 %v288, %v727
        %v729 = vpop.f32.mrb[0].mxu0
        %730 = vmatprep.mubr.bf16.mxu0 0
        %731 = vmatmul.mubr.bf16.gmra.mrb[0].mxu0 %v439
        %v732 = vpop.f32.mrb[0].mxu0
        %v733 = vadd.f32 %v288, %v732
        %v734 = vpop.f32.mrb[0].mxu0
        %v735 = vpop.f32.mrb[0].mxu0
        %v736 = vadd.f32 %v288, %v735
        %v737 = vpop.f32.mrb[0].mxu0
        %738 = vmatprep.mubr.bf16.mxu0 0
        %739 = vmatmul.mubr.bf16.gmra.mrb[0].mxu0 %v440
        %v740 = vpop.f32.mrb[0].mxu0
        %v741 = vadd.f32 %v288, %v740
        %v742 = vpop.f32.mrb[0].mxu0
        %v743 = vpop.f32.mrb[0].mxu0
        %v744 = vadd.f32 %v288, %v743
        %v745 = vpop.f32.mrb[0].mxu0
        %746 = vmatprep.mubr.bf16.mxu0 0
        %747 = vmatmul.mubr.bf16.gmra.mrb[0].mxu0 %v441
        %v748 = vpop.f32.mrb[0].mxu0
        %v749 = vadd.f32 %v288, %v748
        %v750 = vpop.f32.mrb[0].mxu0
        %v751 = vpop.f32.mrb[0].mxu0
        %v752 = vadd.f32 %v288, %v751
        %v753 = vpop.f32.mrb[0].mxu0
        %754 = vmatprep.mubr.bf16.mxu0 0
        %755 = vmatmul.mubr.bf16.gmra.mrb[0].mxu0 %v442
        %v756 = vpop.f32.mrb[0].mxu0
        %v757 = vadd.f32 %v288, %v756
        %v758 = vpop.f32.mrb[0].mxu0
        %v759 = vpop.f32.mrb[0].mxu0
        %v760 = vadd.f32 %v288, %v759
        %v761 = vpop.f32.mrb[0].mxu0
        %762 = vmatprep.mubr.bf16.mxu0 0
        %763 = vmatmul.mubr.bf16.gmra.mrb[0].mxu0 %v443
        %v764 = vpop.f32.mrb[0].mxu0
        %v765 = vadd.f32 %v288, %v764
        %v766 = vpop.f32.mrb[0].mxu0
        %v767 = vpop.f32.mrb[0].mxu0
        %v768 = vadd.f32 %v288, %v767
        %v769 = vpop.f32.mrb[0].mxu0
        %770 = vmatprep.mubr.bf16.mxu0 0
        %771 = vmatmul.mubr.bf16.gmra.mrb[0].mxu0 %v444
        %v772 = vpop.f32.mrb[0].mxu0
        %v773 = vadd.f32 %v288, %v772
        %v774 = vpop.f32.mrb[0].mxu0
        %v775 = vpop.f32.mrb[0].mxu0
        %v776 = vadd.f32 %v288, %v775
        %v777 = vpop.f32.mrb[0].mxu0
        %778 = vmatprep.mubr.bf16.mxu0 0
        %779 = vmatmul.mubr.bf16.gmra.mrb[0].mxu0 %v445
        %v780 = vpop.f32.mrb[0].mxu0
        %v781 = vadd.f32 %v288, %v780
        %v782 = vpop.f32.mrb[0].mxu0
        %v783 = vpop.f32.mrb[0].mxu0
        %v784 = vadd.f32 %v288, %v783
        %v785 = vpop.f32.mrb[0].mxu0
        %786 = vmatprep.mubr.bf16.mxu0 0
        %787 = vmatmul.mubr.bf16.gmra.mrb[0].mxu0 %v446
        %v788 = vpop.f32.mrb[0].mxu0
        %v789 = vadd.f32 %v288, %v788
        %v790 = vpop.f32.mrb[0].mxu0
        %v791 = vpop.f32.mrb[0].mxu0
        %v792 = vadd.f32 %v288, %v791
        %v793 = vpop.f32.mrb[0].mxu0
        %794 = vmatprep.mubr.bf16.mxu0 0
        %795 = vmatmul.mubr.bf16.gmra.mrb[0].mxu0 %v447
        %v796 = vpop.f32.mrb[0].mxu0
        %v797 = vadd.f32 %v288, %v796
        %v798 = vpop.f32.mrb[0].mxu0
        %v799 = vpop.f32.mrb[0].mxu0
        %v800 = vadd.f32 %v288, %v799
        %v801 = vpop.f32.mrb[0].mxu0
        %802 = vmatprep.mubr.bf16.mxu0 0
        %803 = vmatmul.mubr.bf16.gmra.mrb[0].mxu0 %v448
        %v804 = vpop.f32.mrb[0].mxu0
        %v805 = vadd.f32 %v288, %v804
        %v806 = vpop.f32.mrb[0].mxu0
        %v807 = vpop.f32.mrb[0].mxu0
        %v808 = vadd.f32 %v288, %v807
        %v809 = vpop.f32.mrb[0].mxu0
        %810 = vmatprep.mubr.bf16.mxu0 0
        %811 = vmatmul.mubr.bf16.gmra.mrb[0].mxu0 %v449
        %v812 = vpop.f32.mrb[0].mxu0
        %v813 = vadd.f32 %v288, %v812
        %v814 = vpop.f32.mrb[0].mxu0
        %v815 = vpop.f32.mrb[0].mxu0
        %v816 = vadd.f32 %v288, %v815
        %v817 = vpop.f32.mrb[0].mxu0
        %818 = vdwg.mxu0
        %v819 = vpack.c.bf16 %v568, %v565
        %v820 = vpack.c.bf16 %v576, %v573
        %v821 = vpack.c.bf16 %v584, %v581
        %v822 = vpack.c.bf16 %v592, %v589
        %v823 = vpack.c.bf16 %v600, %v597
        %v824 = vpack.c.bf16 %v608, %v605
        %v825 = vpack.c.bf16 %v616, %v613
        %v826 = vpack.c.bf16 %v624, %v621
        %v827 = vpack.c.bf16 %v632, %v629
        %v828 = vpack.c.bf16 %v640, %v637
        %v829 = vpack.c.bf16 %v648, %v645
        %v830 = vpack.c.bf16 %v656, %v653
        %v831 = vpack.c.bf16 %v664, %v661
        %v832 = vpack.c.bf16 %v672, %v669
        %v833 = vpack.c.bf16 %v680, %v677
        %v834 = vpack.c.bf16 %v688, %v685
        %v835 = vpack.c.bf16 %v696, %v693
        %v836 = vpack.c.bf16 %v704, %v701
        %v837 = vpack.c.bf16 %v712, %v709
        %v838 = vpack.c.bf16 %v720, %v717
        %v839 = vpack.c.bf16 %v728, %v725
        %v840 = vpack.c.bf16 %v736, %v733
        %v841 = vpack.c.bf16 %v744, %v741
        %v842 = vpack.c.bf16 %v752, %v749
        %v843 = vpack.c.bf16 %v760, %v757
        %v844 = vpack.c.bf16 %v768, %v765
        %v845 = vpack.c.bf16 %v776, %v773
        %v846 = vpack.c.bf16 %v784, %v781
        %v847 = vpack.c.bf16 %v792, %v789
        %v848 = vpack.c.bf16 %v800, %v797
        %v849 = vpack.c.bf16 %v808, %v805
        %v850 = vpack.c.bf16 %v816, %v813
        %v883 = vunpack.c.l.b16 %v819
        %v884 = vunpack.c.h.b16 %v819
        %v885 = vunpack.c.l.b16 %v820
        %v886 = vunpack.c.h.b16 %v820
        %v887 = vunpack.c.l.b16 %v821
        %v888 = vunpack.c.h.b16 %v821
        %v889 = vunpack.c.l.b16 %v822
        %v890 = vunpack.c.h.b16 %v822
        %v891 = vunpack.c.l.b16 %v823
        %v892 = vunpack.c.h.b16 %v823
        %v893 = vunpack.c.l.b16 %v824
        %v894 = vunpack.c.h.b16 %v824
        %v895 = vunpack.c.l.b16 %v825
        %v896 = vunpack.c.h.b16 %v825
        %v897 = vunpack.c.l.b16 %v826
        %v898 = vunpack.c.h.b16 %v826
        %v899 = vunpack.c.l.b16 %v827
        %v900 = vunpack.c.h.b16 %v827
        %v901 = vunpack.c.l.b16 %v828
        %v902 = vunpack.c.h.b16 %v828
        %v903 = vunpack.c.l.b16 %v829
        %v904 = vunpack.c.h.b16 %v829
        %v905 = vunpack.c.l.b16 %v830
        %v906 = vunpack.c.h.b16 %v830
        %v907 = vunpack.c.l.b16 %v831
        %v908 = vunpack.c.h.b16 %v831
        %v909 = vunpack.c.l.b16 %v832
        %v910 = vunpack.c.h.b16 %v832
        %v911 = vunpack.c.l.b16 %v833
        %v912 = vunpack.c.h.b16 %v833
        %v913 = vunpack.c.l.b16 %v834
        %v914 = vunpack.c.h.b16 %v834
        %v915 = vunpack.c.l.b16 %v835
        %v916 = vunpack.c.h.b16 %v835
        %v917 = vunpack.c.l.b16 %v836
        %v918 = vunpack.c.h.b16 %v836
        %v919 = vunpack.c.l.b16 %v837
        %v920 = vunpack.c.h.b16 %v837
        %v921 = vunpack.c.l.b16 %v838
        %v922 = vunpack.c.h.b16 %v838
        %v923 = vunpack.c.l.b16 %v839
        %v924 = vunpack.c.h.b16 %v839
        %v925 = vunpack.c.l.b16 %v840
        %v926 = vunpack.c.h.b16 %v840
        %v927 = vunpack.c.l.b16 %v841
        %v928 = vunpack.c.h.b16 %v841
        %v929 = vunpack.c.l.b16 %v842
        %v930 = vunpack.c.h.b16 %v842
        %v931 = vunpack.c.l.b16 %v843
        %v932 = vunpack.c.h.b16 %v843
        %v933 = vunpack.c.l.b16 %v844
        %v934 = vunpack.c.h.b16 %v844
        %v935 = vunpack.c.l.b16 %v845
        %v936 = vunpack.c.h.b16 %v845
        %v937 = vunpack.c.l.b16 %v846
        %v938 = vunpack.c.h.b16 %v846
        %v939 = vunpack.c.l.b16 %v847
        %v940 = vunpack.c.h.b16 %v847
        %v941 = vunpack.c.l.b16 %v848
        %v942 = vunpack.c.h.b16 %v848
        %v943 = vunpack.c.l.b16 %v849
        %v944 = vunpack.c.h.b16 %v849
        %v945 = vunpack.c.l.b16 %v850
        %v946 = vunpack.c.h.b16 %v850
        %v947 = vpack.c.b16 %v883, %v883
        %v948 = vpack.c.b16 %v884, %v884
        %v949 = vpack.c.b16 %v885, %v885
        %v950 = vpack.c.b16 %v886, %v886
        %v951 = vpack.c.b16 %v887, %v887
        %v952 = vpack.c.b16 %v888, %v888
        %v953 = vpack.c.b16 %v889, %v889
        %v954 = vpack.c.b16 %v890, %v890
        %v955 = vpack.c.b16 %v891, %v891
        %v956 = vpack.c.b16 %v892, %v892
        %v957 = vpack.c.b16 %v893, %v893
        %v958 = vpack.c.b16 %v894, %v894
        %v959 = vpack.c.b16 %v895, %v895
        %v960 = vpack.c.b16 %v896, %v896
        %v961 = vpack.c.b16 %v897, %v897
        %v962 = vpack.c.b16 %v898, %v898
        %v963 = vpack.c.b16 %v899, %v899
        %v964 = vpack.c.b16 %v900, %v900
        %v965 = vpack.c.b16 %v901, %v901
        %v966 = vpack.c.b16 %v902, %v902
        %v967 = vpack.c.b16 %v903, %v903
        %v968 = vpack.c.b16 %v904, %v904
        %v969 = vpack.c.b16 %v905, %v905
        %v970 = vpack.c.b16 %v906, %v906
        %v971 = vpack.c.b16 %v907, %v907
        %v972 = vpack.c.b16 %v908, %v908
        %v973 = vpack.c.b16 %v909, %v909
        %v974 = vpack.c.b16 %v910, %v910
        %v975 = vpack.c.b16 %v911, %v911
        %v976 = vpack.c.b16 %v912, %v912
        %v977 = vpack.c.b16 %v913, %v913
        %v978 = vpack.c.b16 %v914, %v914
        %v979 = vpack.c.b16 %v915, %v915
        %v980 = vpack.c.b16 %v916, %v916
        %v981 = vpack.c.b16 %v917, %v917
        %v982 = vpack.c.b16 %v918, %v918
        %v983 = vpack.c.b16 %v919, %v919
        %v984 = vpack.c.b16 %v920, %v920
        %v985 = vpack.c.b16 %v921, %v921
        %v986 = vpack.c.b16 %v922, %v922
        %v987 = vpack.c.b16 %v923, %v923
        %v988 = vpack.c.b16 %v924, %v924
        %v989 = vpack.c.b16 %v925, %v925
        %v990 = vpack.c.b16 %v926, %v926
        %v991 = vpack.c.b16 %v927, %v927
        %v992 = vpack.c.b16 %v928, %v928
        %v993 = vpack.c.b16 %v929, %v929
        %v994 = vpack.c.b16 %v930, %v930
        %v995 = vpack.c.b16 %v931, %v931
        %v996 = vpack.c.b16 %v932, %v932
        %v997 = vpack.c.b16 %v933, %v933
        %v998 = vpack.c.b16 %v934, %v934
        %v999 = vpack.c.b16 %v935, %v935
        %v1000 = vpack.c.b16 %v936, %v936
        %v1001 = vpack.c.b16 %v937, %v937
        %v1002 = vpack.c.b16 %v938, %v938
        %v1003 = vpack.c.b16 %v939, %v939
        %v1004 = vpack.c.b16 %v940, %v940
        %v1005 = vpack.c.b16 %v941, %v941
        %v1006 = vpack.c.b16 %v942, %v942
        %v1007 = vpack.c.b16 %v943, %v943
        %v1008 = vpack.c.b16 %v944, %v944
        %v1009 = vpack.c.b16 %v945, %v945
        %v1010 = vpack.c.b16 %v946, %v946
        %1075 = vst [vmem:[%s200] sm:$0xf] %v947
        %1076 = vst [vmem:[%s200 + $0x4] sm:$0xf] %v948
        %1077 = vst [vmem:[%s200 + $0x8] sm:$0xf] %v949
        %1078 = vst [vmem:[%s200 + $0xc] sm:$0xf] %v950
        %1079 = vst [vmem:[%s200 + $0x10] sm:$0xf] %v951
        %1080 = vst [vmem:[%s200 + $0x14] sm:$0xf] %v952
        %1081 = vst [vmem:[%s200 + $0x18] sm:$0xf] %v953
        %1082 = vst [vmem:[%s200 + $0x1c] sm:$0xf] %v954
        %1083 = vst [vmem:[%s200 + $0x20] sm:$0xf] %v955
        %1084 = vst [vmem:[%s200 + $0x24] sm:$0xf] %v956
        %1085 = vst [vmem:[%s200 + $0x28] sm:$0xf] %v957
        %1086 = vst [vmem:[%s200 + $0x2c] sm:$0xf] %v958
        %1087 = vst [vmem:[%s200 + $0x30] sm:$0xf] %v959
        %1088 = vst [vmem:[%s200 + $0x34] sm:$0xf] %v960
        %1089 = vst [vmem:[%s200 + $0x38] sm:$0xf] %v961
        %1090 = vst [vmem:[%s200 + $0x3c] sm:$0xf] %v962
        %1091 = vst [vmem:[%s200 + $0x40] sm:$0xf] %v963
        %1092 = vst [vmem:[%s200 + $0x44] sm:$0xf] %v964
        %1093 = vst [vmem:[%s200 + $0x48] sm:$0xf] %v965
        %1094 = vst [vmem:[%s200 + $0x4c] sm:$0xf] %v966
        %1095 = vst [vmem:[%s200 + $0x50] sm:$0xf] %v967
        %1096 = vst [vmem:[%s200 + $0x54] sm:$0xf] %v968
        %1097 = vst [vmem:[%s200 + $0x58] sm:$0xf] %v969
        %1098 = vst [vmem:[%s200 + $0x5c] sm:$0xf] %v970
        %1099 = vst [vmem:[%s200 + $0x60] sm:$0xf] %v971
        %1100 = vst [vmem:[%s200 + $0x64] sm:$0xf] %v972
        %1101 = vst [vmem:[%s200 + $0x68] sm:$0xf] %v973
        %1102 = vst [vmem:[%s200 + $0x6c] sm:$0xf] %v974
        %1103 = vst [vmem:[%s200 + $0x70] sm:$0xf] %v975
        %1104 = vst [vmem:[%s200 + $0x74] sm:$0xf] %v976
        %1105 = vst [vmem:[%s200 + $0x78] sm:$0xf] %v977
        %1106 = vst [vmem:[%s200 + $0x7c] sm:$0xf] %v978
        %1107 = vst [vmem:[%s200 + $0x80] sm:$0xf] %v979
        %1108 = vst [vmem:[%s200 + $0x84] sm:$0xf] %v980
        %1109 = vst [vmem:[%s200 + $0x88] sm:$0xf] %v981
        %1110 = vst [vmem:[%s200 + $0x8c] sm:$0xf] %v982
        %1111 = vst [vmem:[%s200 + $0x90] sm:$0xf] %v983
        %1112 = vst [vmem:[%s200 + $0x94] sm:$0xf] %v984
        %1113 = vst [vmem:[%s200 + $0x98] sm:$0xf] %v985
        %1114 = vst [vmem:[%s200 + $0x9c] sm:$0xf] %v986
        %1115 = vst [vmem:[%s200 + $0xa0] sm:$0xf] %v987
        %1116 = vst [vmem:[%s200 + $0xa4] sm:$0xf] %v988
        %1117 = vst [vmem:[%s200 + $0xa8] sm:$0xf] %v989
        %1118 = vst [vmem:[%s200 + $0xac] sm:$0xf] %v990
        %1119 = vst [vmem:[%s200 + $0xb0] sm:$0xf] %v991
        %1120 = vst [vmem:[%s200 + $0xb4] sm:$0xf] %v992
        %1121 = vst [vmem:[%s200 + $0xb8] sm:$0xf] %v993
        %1122 = vst [vmem:[%s200 + $0xbc] sm:$0xf] %v994
        %1123 = vst [vmem:[%s200 + $0xc0] sm:$0xf] %v995
        %1124 = vst [vmem:[%s200 + $0xc4] sm:$0xf] %v996
        %1125 = vst [vmem:[%s200 + $0xc8] sm:$0xf] %v997
        %1126 = vst [vmem:[%s200 + $0xcc] sm:$0xf] %v998
        %1127 = vst [vmem:[%s200 + $0xd0] sm:$0xf] %v999
        %1128 = vst [vmem:[%s200 + $0xd4] sm:$0xf] %v1000
        %1129 = vst [vmem:[%s200 + $0xd8] sm:$0xf] %v1001
        %1130 = vst [vmem:[%s200 + $0xdc] sm:$0xf] %v1002
        %1131 = vst [vmem:[%s200 + $0xe0] sm:$0xf] %v1003
        %1132 = vst [vmem:[%s200 + $0xe4] sm:$0xf] %v1004
        %1133 = vst [vmem:[%s200 + $0xe8] sm:$0xf] %v1005
        %1134 = vst [vmem:[%s200 + $0xec] sm:$0xf] %v1006
        %1135 = vst [vmem:[%s200 + $0xf0] sm:$0xf] %v1007
        %1136 = vst [vmem:[%s200 + $0xf4] sm:$0xf] %v1008
        %1137 = vst [vmem:[%s200 + $0xf8] sm:$0xf] %v1009
        %1138 = vst [vmem:[%s200 + $0xfc] sm:$0xf] %v1010
        %s1139 = smul.u32 64, %s16
        %p1140 = scmp.lt.s32.totalorder %s1139, 127
        %s1141 = scalar_select %p1140, %s1139, 127
        %s1142 = smul.addr %s1141, 4
        %s1143 = scalar_lea.vmem %s3, %s1142
        // Predicated region
        $region41: #{gcn_res_forward.8} parent=31 // pred_check
          %p1144 = pneg %p102
        $region42: #{gcn_res_forward.8} parent=31 // pred_check_branch
          %1146 = sbr.rel (%p1144) target = $region44
        $region43: #{gcn_res_forward.8} parent=31 // pred_region
          %s1147 = smul.u32 64, %s16
        $region44: #{gcn_res_forward.8} parent=31 // pred_fallthru
          _
      $region32: #{gcn_res_forward.8} parent=5 // pred_fallthru
        _
      %p1148 = scmp.le.s32.totalorder 2, %s11
      // Predicated region
      $region45: #{gcn_res_forward.8} parent=5 // pred_check
        %p1149 = pneg %p1148
      $region46: #{gcn_res_forward.8} parent=5 // pred_check_branch
        %1151 = sbr.rel (%p1149) target = $region48
      $region47: #{gcn_res_forward.8} parent=5 // pred_region
        %s1152 = ssub.s32 %s11, 2
        // Predicated region
        $region49: #{gcn_res_forward.8} parent=47 // pred_check
          %p1153 = pneg %p108
        $region50: #{gcn_res_forward.8} parent=47 // pred_check_branch
          %1155 = sbr.rel (%p1153) target = $region52
        $region51: #{gcn_res_forward.8} parent=47 // pred_region
          %s1156 = smul.u32 64, %s17
          %p1157 = scmp.lt.s32.totalorder %s1156, 127
          %s1158 = scalar_select %p1157, %s1156, 127
          %s1159 = smul.addr %s1158, 4
          %s1160 = scalar_lea.vmem %s3, %s1159
        $region52: #{gcn_res_forward.8} parent=47 // pred_fallthru
          _
      $region48: #{gcn_res_forward.8} parent=5 // pred_fallthru
        _
    $region6: #{gcn_res_forward.8} parent=1 // loop_footer
      %s15 = sadd.s32 1, %s11
    $region7: #{gcn_res_forward.8} parent=1 // loop_footer_branch
      %10 = sbr.rel target = $region3
    $region8: #{gcn_res_forward.8} parent=1 // loop_exit
      _
    %1161 = vsyncpa [#allocation3], 1
    %s1162 = scalar_lea.sflag [#allocation3], 1
    %1163 = vsyncpa %s1162, 1
    %1164 = vsyncpa [#allocation5], 1

// kernel: gcn_res_forward.15
$region0: #{gcn_res_forward.15}
  #allocation0 [shape = 'u32[]', space=smem, size = 0x4, offset = 0x4, fixed_abs, tag = 'smem constant byte address 0x4 - core index']
  #allocation1 [shape = 'u32[144,128]{1,0:T(1,128)}', space=vmem, size = 0x12000, scoped, tag = 'internal scratch']
  %s0 = inlined_call_operand.vmem [shape: f32[1024,128], index: 0, kind: input, shape index: {}]
  %s1 = inlined_call_operand.vmem [shape: bf16[128,128], index: 1, kind: input, shape index: {}]
  %s2 = inlined_call_operand.vmem [shape: f32[1,128], index: 2, kind: input, shape index: {}]
  %s3 = inlined_call_operand.vmem [shape: f32[1024,128], index: 3, kind: output, shape index: {}]
  %s4 = sld [smem:[#allocation0]]
  $region45: #{gcn_res_forward.15} parent=0
    _
  %s6 = ssub.s32 1, %s4
  %s7 = scalar_select 0, %s6, %s4
  loop: start=0, step=1, limit=4
  $region2: #{gcn_res_forward.15} parent=0 // loop_pre_header
    _
  $region3: #{gcn_res_forward.15} parent=0 // loop_header
    %s9 = sphi 0, %s13
    %p10 = scmp.ge.s32.totalorder %s9, 4
    %s19 = sphi 0, %s21
    %s22 = sphi 0, %s19
    %s23 = sphi 0, %s22
    %s39 = sphi 0, %s23
    %s43 = sphi 0, %s43
    %s45 = sphi 0, %s43
    %s46 = sphi 0, %s45
    %s60 = sphi 0, %s46
    %s64 = sphi 0, %s64
    %s66 = sphi 0, %s64
    %s67 = sphi 0, %s66
    %s81 = sphi 0, %s67
    %s87 = sphi 0, %s89
    %s90 = sphi 0, %s87
    %s91 = sphi 0, %s90
    %s107 = sphi 0, %s91
  $region4: #{gcn_res_forward.15} parent=0 // loop_header_branch
    %12 = sbr.rel (%p10) target = $region8
  $region5: #{gcn_res_forward.15} parent=0 // loop_body
    %s14 = ssub.s32 %s9, 1
    %s15 = ssub.s32 %s9, 2
    %s16 = sadd.s32 %s9, 1
    %s17 = ssub.s32 %s9, %s16
    %p18 = scmp.eq.s32.totalorder %s17, 0
    %s20 = sadd.s32 %s19, 1
    %s21 = scalar_select %p18, %s19, %s20
    %p24 = pneg %p18
    %p25 = scmp.eq.s32.totalorder %s9, 1
    %p26 = por %p24, %p25
    %p27 = scmp.ne.s32.totalorder %s19, %s22
    %p28 = scmp.eq.s32.totalorder %s9, 0
    %p29 = por %p27, %p28
    %p30 = scmp.ne.s32.totalorder %s19, %s22
    %p31 = scmp.eq.s32.totalorder %s14, 1
    %p32 = por %p30, %p31
    %p33 = scmp.ne.s32.totalorder %s22, %s23
    %p34 = scmp.eq.s32.totalorder %s14, 0
    %p35 = por %p33, %p34
    %p36 = scmp.ne.s32.totalorder %s22, %s23
    %p37 = scmp.eq.s32.totalorder %s15, 1
    %p38 = por %p36, %p37
    %p40 = scmp.ne.s32.totalorder %s23, %s39
    %p41 = scmp.eq.s32.totalorder %s15, 0
    %p42 = por %p40, %p41
    %s44 = sadd.s32 %s43, 1
    %p47 = scmp.eq.s32.totalorder %s9, 1
    %p48 = scmp.ne.s32.totalorder %s43, %s45
    %p49 = scmp.eq.s32.totalorder %s9, 0
    %p50 = por %p48, %p49
    %p51 = scmp.ne.s32.totalorder %s43, %s45
    %p52 = scmp.eq.s32.totalorder %s14, 1
    %p53 = por %p51, %p52
    %p54 = scmp.ne.s32.totalorder %s45, %s46
    %p55 = scmp.eq.s32.totalorder %s14, 0
    %p56 = por %p54, %p55
    %p57 = scmp.ne.s32.totalorder %s45, %s46
    %p58 = scmp.eq.s32.totalorder %s15, 1
    %p59 = por %p57, %p58
    %p61 = scmp.ne.s32.totalorder %s46, %s60
    %p62 = scmp.eq.s32.totalorder %s15, 0
    %p63 = por %p61, %p62
    %s65 = sadd.s32 %s64, 1
    %p68 = scmp.eq.s32.totalorder %s9, 1
    %p69 = scmp.ne.s32.totalorder %s64, %s66
    %p70 = scmp.eq.s32.totalorder %s9, 0
    %p71 = por %p69, %p70
    %p72 = scmp.ne.s32.totalorder %s64, %s66
    %p73 = scmp.eq.s32.totalorder %s14, 1
    %p74 = por %p72, %p73
    %p75 = scmp.ne.s32.totalorder %s66, %s67
    %p76 = scmp.eq.s32.totalorder %s14, 0
    %p77 = por %p75, %p76
    %p78 = scmp.ne.s32.totalorder %s66, %s67
    %p79 = scmp.eq.s32.totalorder %s15, 1
    %p80 = por %p78, %p79
    %p82 = scmp.ne.s32.totalorder %s67, %s81
    %p83 = scmp.eq.s32.totalorder %s15, 0
    %p84 = por %p82, %p83
    %s85 = ssub.s32 %s9, %s16
    %p86 = scmp.eq.s32.totalorder %s85, 0
    %s88 = sadd.s32 %s87, 1
    %s89 = scalar_select %p86, %s87, %s88
    %p92 = pneg %p86
    %p93 = scmp.eq.s32.totalorder %s9, 1
    %p94 = por %p92, %p93
    %p95 = scmp.ne.s32.totalorder %s87, %s90
    %p96 = scmp.eq.s32.totalorder %s9, 0
    %p97 = por %p95, %p96
    %p98 = scmp.ne.s32.totalorder %s87, %s90
    %p99 = scmp.eq.s32.totalorder %s14, 1
    %p100 = por %p98, %p99
    %p101 = scmp.ne.s32.totalorder %s90, %s91
    %p102 = scmp.eq.s32.totalorder %s14, 0
    %p103 = por %p101, %p102
    %p104 = scmp.ne.s32.totalorder %s90, %s91
    %p105 = scmp.eq.s32.totalorder %s15, 1
    %p106 = por %p104, %p105
    %p108 = scmp.ne.s32.totalorder %s91, %s107
    %p109 = scmp.eq.s32.totalorder %s15, 0
    %p110 = por %p108, %p109
    %p111 = scmp.le.s32.totalorder 1, %s9
    %p112 = scmp.lt.s32.totalorder %s9, 3
    %p113 = pnand %p111, %p112
    %p114 = pneg %p113
    // Predicated region
    $region9: #{gcn_res_forward.15} parent=5 // pred_check
      _
    $region10: #{gcn_res_forward.15} parent=5 // pred_check_branch
      %116 = sbr.rel (%p113) target = $region12
    $region11: #{gcn_res_forward.15} parent=5 // pred_region
      %s117 = ssub.s32 %s9, 1
      // Predicated region
      $region13: #{gcn_res_forward.15} parent=11 // pred_check
        %p118 = pneg %p56
      $region14: #{gcn_res_forward.15} parent=11 // pred_check_branch
        %120 = sbr.rel (%p118) target = $region16
      $region15: #{gcn_res_forward.15} parent=11 // pred_region
        _
      $region16: #{gcn_res_forward.15} parent=11 // pred_fallthru
        _
      // Predicated region
      $region17: #{gcn_res_forward.15} parent=11 // pred_check
        %p121 = pneg %p77
      $region18: #{gcn_res_forward.15} parent=11 // pred_check_branch
        %123 = sbr.rel (%p121) target = $region20
      $region19: #{gcn_res_forward.15} parent=11 // pred_region
        _
      $region20: #{gcn_res_forward.15} parent=11 // pred_fallthru
        _
    $region12: #{gcn_res_forward.15} parent=5 // pred_fallthru
      _
    %p124 = scmp.lt.s32.totalorder %s9, 2
    // Predicated region
    $region21: #{gcn_res_forward.15} parent=5 // pred_check
      %p125 = pneg %p124
    $region22: #{gcn_res_forward.15} parent=5 // pred_check_branch
      %127 = sbr.rel (%p125) target = $region24
    $region23: #{gcn_res_forward.15} parent=5 // pred_region
      // Predicated region
      $region25: #{gcn_res_forward.15} parent=23 // pred_check
        %p128 = pneg %p29
      $region26: #{gcn_res_forward.15} parent=23 // pred_check_branch
        %130 = sbr.rel (%p128) target = $region28
      $region27: #{gcn_res_forward.15} parent=23 // pred_region
        %s131 = smul.u32 64, %s9
        %p132 = scmp.lt.s32.totalorder %s131, 127
        %s133 = scalar_select %p132, %s131, 127
        %s134 = smul.addr %s133, 8
        %s135 = scalar_lea.vmem %s0, %s134
        %s136 = smul.u32 64, %s9
      $region28: #{gcn_res_forward.15} parent=23 // pred_fallthru
        _
    $region24: #{gcn_res_forward.15} parent=5 // pred_fallthru
      _
    %p137 = scmp.le.s32.totalorder 1, %s9
    %p138 = scmp.lt.s32.totalorder %s9, 3
    %p139 = pnand %p137, %p138
    %p140 = pneg %p139
    // Predicated region
    $region29: #{gcn_res_forward.15} parent=5 // pred_check
      _
    $region30: #{gcn_res_forward.15} parent=5 // pred_check_branch
      %142 = sbr.rel (%p139) target = $region32
    $region31: #{gcn_res_forward.15} parent=5 // pred_region
      %s143 = ssub.s32 %s9, 1
      %s144 = smul.u32 64, %s14
      %p145 = scmp.lt.s32.totalorder %s144, 127
      %s146 = scalar_select %p145, %s144, 127
      %s147 = smul.addr %s146, 8
      %s148 = scalar_lea.vmem %s0, %s147
      %p149 = pneg %p35
      %p150 = pneg %p32
      %p151 = pneg %p56
      %p152 = pneg %p53
      %p153 = pneg %p77
      %p154 = pneg %p74
      %p155 = pneg %p103
      %p156 = pneg %p100
      %s157 = smul.u32 64, %s14
      %p158 = scmp.lt.s32.totalorder %s157, 127
      %s159 = scalar_select %p158, %s157, 127
      %s160 = smul.addr %s159, 8
      %s161 = scalar_lea.vmem %s3, %s160
      %s162 = smul.u32 64, %s14
      %p163 = scmp.lt.s32.totalorder %s162, 127
      %s164 = scalar_select %p163, %s162, 127
      %s165 = smul.addr %s164, 8
      %s166 = scalar_lea.vmem %s0, %s165
      %s167 = smul.u32 64, %s14
      %s168 = smul.u32 64, %s14
      %p169 = scmp.lt.s32.totalorder %s168, 127
      %s170 = scalar_select %p169, %s168, 127
      %s171 = smul.addr %s170, 8
      %s172 = scalar_lea.vmem %s3, %s171
      %s173 = smul.u32 64, %s14
      %v175 = vld [vmem:[%s166] sm:$0xff]
      %v176 = vld [vmem:[%s166 + $0x8] sm:$0xff]
      %v177 = vld [vmem:[%s166 + $0x10] sm:$0xff]
      %v178 = vld [vmem:[%s166 + $0x18] sm:$0xff]
      %v179 = vld [vmem:[%s166 + $0x20] sm:$0xff]
      %v180 = vld [vmem:[%s166 + $0x28] sm:$0xff]
      %v181 = vld [vmem:[%s166 + $0x30] sm:$0xff]
      %v182 = vld [vmem:[%s166 + $0x38] sm:$0xff]
      %v183 = vld [vmem:[%s166 + $0x40] sm:$0xff]
      %v184 = vld [vmem:[%s166 + $0x48] sm:$0xff]
      %v185 = vld [vmem:[%s166 + $0x50] sm:$0xff]
      %v186 = vld [vmem:[%s166 + $0x58] sm:$0xff]
      %v187 = vld [vmem:[%s166 + $0x60] sm:$0xff]
      %v188 = vld [vmem:[%s166 + $0x68] sm:$0xff]
      %v189 = vld [vmem:[%s166 + $0x70] sm:$0xff]
      %v190 = vld [vmem:[%s166 + $0x78] sm:$0xff]
      %v191 = vld [vmem:[%s166 + $0x80] sm:$0xff]
      %v192 = vld [vmem:[%s166 + $0x88] sm:$0xff]
      %v193 = vld [vmem:[%s166 + $0x90] sm:$0xff]
      %v194 = vld [vmem:[%s166 + $0x98] sm:$0xff]
      %v195 = vld [vmem:[%s166 + $0xa0] sm:$0xff]
      %v196 = vld [vmem:[%s166 + $0xa8] sm:$0xff]
      %v197 = vld [vmem:[%s166 + $0xb0] sm:$0xff]
      %v198 = vld [vmem:[%s166 + $0xb8] sm:$0xff]
      %v199 = vld [vmem:[%s166 + $0xc0] sm:$0xff]
      %v200 = vld [vmem:[%s166 + $0xc8] sm:$0xff]
      %v201 = vld [vmem:[%s166 + $0xd0] sm:$0xff]
      %v202 = vld [vmem:[%s166 + $0xd8] sm:$0xff]
      %v203 = vld [vmem:[%s166 + $0xe0] sm:$0xff]
      %v204 = vld [vmem:[%s166 + $0xe8] sm:$0xff]
      %v205 = vld [vmem:[%s166 + $0xf0] sm:$0xff]
      %v206 = vld [vmem:[%s166 + $0xf8] sm:$0xff]
      %v207 = vld [vmem:[%s166 + $0x100] sm:$0xff]
      %v208 = vld [vmem:[%s166 + $0x108] sm:$0xff]
      %v209 = vld [vmem:[%s166 + $0x110] sm:$0xff]
      %v210 = vld [vmem:[%s166 + $0x118] sm:$0xff]
      %v211 = vld [vmem:[%s166 + $0x120] sm:$0xff]
      %v212 = vld [vmem:[%s166 + $0x128] sm:$0xff]
      %v213 = vld [vmem:[%s166 + $0x130] sm:$0xff]
      %v214 = vld [vmem:[%s166 + $0x138] sm:$0xff]
      %v215 = vld [vmem:[%s166 + $0x140] sm:$0xff]
      %v216 = vld [vmem:[%s166 + $0x148] sm:$0xff]
      %v217 = vld [vmem:[%s166 + $0x150] sm:$0xff]
      %v218 = vld [vmem:[%s166 + $0x158] sm:$0xff]
      %v219 = vld [vmem:[%s166 + $0x160] sm:$0xff]
      %v220 = vld [vmem:[%s166 + $0x168] sm:$0xff]
      %v221 = vld [vmem:[%s166 + $0x170] sm:$0xff]
      %v222 = vld [vmem:[%s166 + $0x178] sm:$0xff]
      %v223 = vld [vmem:[%s166 + $0x180] sm:$0xff]
      %v224 = vld [vmem:[%s166 + $0x188] sm:$0xff]
      %v225 = vld [vmem:[%s166 + $0x190] sm:$0xff]
      %v226 = vld [vmem:[%s166 + $0x198] sm:$0xff]
      %v227 = vld [vmem:[%s166 + $0x1a0] sm:$0xff]
      %v228 = vld [vmem:[%s166 + $0x1a8] sm:$0xff]
      %v229 = vld [vmem:[%s166 + $0x1b0] sm:$0xff]
      %v230 = vld [vmem:[%s166 + $0x1b8] sm:$0xff]
      %v231 = vld [vmem:[%s166 + $0x1c0] sm:$0xff]
      %v232 = vld [vmem:[%s166 + $0x1c8] sm:$0xff]
      %v233 = vld [vmem:[%s166 + $0x1d0] sm:$0xff]
      %v234 = vld [vmem:[%s166 + $0x1d8] sm:$0xff]
      %v235 = vld [vmem:[%s166 + $0x1e0] sm:$0xff]
      %v236 = vld [vmem:[%s166 + $0x1e8] sm:$0xff]
      %v237 = vld [vmem:[%s166 + $0x1f0] sm:$0xff]
      %v238 = vld [vmem:[%s166 + $0x1f8] sm:$0xff]
      %v239 = vpack.c.bf16 %v176, %v175
      %v240 = vpack.c.bf16 %v178, %v177
      %v241 = vpack.c.bf16 %v180, %v179
      %v242 = vpack.c.bf16 %v182, %v181
      %v243 = vpack.c.bf16 %v184, %v183
      %v244 = vpack.c.bf16 %v186, %v185
      %v245 = vpack.c.bf16 %v188, %v187
      %v246 = vpack.c.bf16 %v190, %v189
      %v247 = vpack.c.bf16 %v192, %v191
      %v248 = vpack.c.bf16 %v194, %v193
      %v249 = vpack.c.bf16 %v196, %v195
      %v250 = vpack.c.bf16 %v198, %v197
      %v251 = vpack.c.bf16 %v200, %v199
      %v252 = vpack.c.bf16 %v202, %v201
      %v253 = vpack.c.bf16 %v204, %v203
      %v254 = vpack.c.bf16 %v206, %v205
      %v255 = vpack.c.bf16 %v208, %v207
      %v256 = vpack.c.bf16 %v210, %v209
      %v257 = vpack.c.bf16 %v212, %v211
      %v258 = vpack.c.bf16 %v214, %v213
      %v259 = vpack.c.bf16 %v216, %v215
      %v260 = vpack.c.bf16 %v218, %v217
      %v261 = vpack.c.bf16 %v220, %v219
      %v262 = vpack.c.bf16 %v222, %v221
      %v263 = vpack.c.bf16 %v224, %v223
      %v264 = vpack.c.bf16 %v226, %v225
      %v265 = vpack.c.bf16 %v228, %v227
      %v266 = vpack.c.bf16 %v230, %v229
      %v267 = vpack.c.bf16 %v232, %v231
      %v268 = vpack.c.bf16 %v234, %v233
      %v269 = vpack.c.bf16 %v236, %v235
      %v270 = vpack.c.bf16 %v238, %v237
      %v271 = vld [vmem:[%s1] sm:$0xf]
      %v272 = vld [vmem:[%s1 + $0x4] sm:$0xf]
      %v273 = vld [vmem:[%s1 + $0x8] sm:$0xf]
      %v274 = vld [vmem:[%s1 + $0xc] sm:$0xf]
      %v275 = vld [vmem:[%s1 + $0x10] sm:$0xf]
      %v276 = vld [vmem:[%s1 + $0x14] sm:$0xf]
      %v277 = vld [vmem:[%s1 + $0x18] sm:$0xf]
      %v278 = vld [vmem:[%s1 + $0x1c] sm:$0xf]
      %v279 = vld [vmem:[%s1 + $0x20] sm:$0xf]
      %v280 = vld [vmem:[%s1 + $0x24] sm:$0xf]
      %v281 = vld [vmem:[%s1 + $0x28] sm:$0xf]
      %v282 = vld [vmem:[%s1 + $0x2c] sm:$0xf]
      %v283 = vld [vmem:[%s1 + $0x30] sm:$0xf]
      %v284 = vld [vmem:[%s1 + $0x34] sm:$0xf]
      %v285 = vld [vmem:[%s1 + $0x38] sm:$0xf]
      %v286 = vld [vmem:[%s1 + $0x3c] sm:$0xf]
      %v287 = vld [vmem:[%s2] sm:$0x1]
      %v289 = vlaneseq
      %v290 = vshrl.u32 %v289, 7
      %v291 = vsub.s32 0, %v290
      %v292 = vrot.slane %v287, %v291
      %v310 = vunpack.c.l.b16 %v271
      %v311 = vunpack.c.l.b16 %v272
      %v312 = vunpack.c.l.b16 %v273
      %v313 = vunpack.c.l.b16 %v274
      %v314 = vunpack.c.l.b16 %v275
      %v315 = vunpack.c.l.b16 %v276
      %v316 = vunpack.c.l.b16 %v277
      %v317 = vunpack.c.l.b16 %v278
      %v318 = vunpack.c.l.b16 %v279
      %v319 = vunpack.c.l.b16 %v280
      %v320 = vunpack.c.l.b16 %v281
      %v321 = vunpack.c.l.b16 %v282
      %v322 = vunpack.c.l.b16 %v283
      %v323 = vunpack.c.l.b16 %v284
      %v324 = vunpack.c.l.b16 %v285
      %v325 = vunpack.c.l.b16 %v286
      %v326 = vpack.c.b16 %v311, %v310
      %v327 = vpack.c.b16 %v313, %v312
      %v328 = vpack.c.b16 %v315, %v314
      %v329 = vpack.c.b16 %v317, %v316
      %v330 = vpack.c.b16 %v319, %v318
      %v331 = vpack.c.b16 %v321, %v320
      %v332 = vpack.c.b16 %v323, %v322
      %v333 = vpack.c.b16 %v325, %v324
      %342 = vmatprep.subr.bf16.mxu0 0
      %343 = vmatpush1.bf16.msra.mxu0 %v326
      %344 = vmatprep.subr.bf16.mxu0 0
      %345 = vmatpush1.bf16.msra.mxu0 %v327
      %346 = vmatprep.subr.bf16.mxu0 0
      %347 = vmatpush1.bf16.msra.mxu0 %v328
      %348 = vmatprep.subr.bf16.mxu0 0
      %349 = vmatpush1.bf16.msra.mxu0 %v329
      %350 = vmatprep.subr.bf16.mxu0 0
      %351 = vmatpush1.bf16.msra.mxu0 %v330
      %352 = vmatprep.subr.bf16.mxu0 0
      %353 = vmatpush1.bf16.msra.mxu0 %v331
      %354 = vmatprep.subr.bf16.mxu0 0
      %355 = vmatpush1.bf16.msra.mxu0 %v332
      %356 = vmatprep.subr.bf16.mxu0 0
      %357 = vmatpush1.bf16.msra.mxu0 %v333
      %358 = vmatprep.subr.bf16.mxu0 0
      %359 = vmatpush1.bf16.msra.mxu0 0
      %360 = vmatprep.subr.bf16.mxu0 0
      %361 = vmatpush1.bf16.msra.mxu0 0
      %362 = vmatprep.subr.bf16.mxu0 0
      %363 = vmatpush1.bf16.msra.mxu0 0
      %364 = vmatprep.subr.bf16.mxu0 0
      %365 = vmatpush1.bf16.msra.mxu0 0
      %366 = vmatprep.subr.bf16.mxu0 0
      %367 = vmatpush1.bf16.msra.mxu0 0
      %368 = vmatprep.subr.bf16.mxu0 0
      %369 = vmatpush1.bf16.msra.mxu0 0
      %370 = vmatprep.subr.bf16.mxu0 0
      %371 = vmatpush1.bf16.msra.mxu0 0
      %372 = vmatprep.subr.bf16.mxu0 0
      %373 = vmatpush1.bf16.msra.mxu0 0
      %374 = vmatprep.mubr.bf16.mxu0 0
      %375 = vmatmul.mubr.bf16.gmra.mrb[0].mxu0 %v239
      %v376 = vpop.f32.mrb[0].mxu0
      %v377 = vadd.f32 %v292, %v376
      %v378 = vpop.f32.mrb[0].mxu0
      %v379 = vpop.f32.mrb[0].mxu0
      %v380 = vadd.f32 %v292, %v379
      %v381 = vpop.f32.mrb[0].mxu0
      %382 = vmatprep.mubr.bf16.mxu0 0
      %383 = vmatmul.mubr.bf16.gmra.mrb[0].mxu0 %v240
      %v384 = vpop.f32.mrb[0].mxu0
      %v385 = vadd.f32 %v292, %v384
      %v386 = vpop.f32.mrb[0].mxu0
      %v387 = vpop.f32.mrb[0].mxu0
      %v388 = vadd.f32 %v292, %v387
      %v389 = vpop.f32.mrb[0].mxu0
      %390 = vmatprep.mubr.bf16.mxu0 0
      %391 = vmatmul.mubr.bf16.gmra.mrb[0].mxu0 %v241
      %v392 = vpop.f32.mrb[0].mxu0
      %v393 = vadd.f32 %v292, %v392
      %v394 = vpop.f32.mrb[0].mxu0
      %v395 = vpop.f32.mrb[0].mxu0
      %v396 = vadd.f32 %v292, %v395
      %v397 = vpop.f32.mrb[0].mxu0
      %398 = vmatprep.mubr.bf16.mxu0 0
      %399 = vmatmul.mubr.bf16.gmra.mrb[0].mxu0 %v242
      %v400 = vpop.f32.mrb[0].mxu0
      %v401 = vadd.f32 %v292, %v400
      %v402 = vpop.f32.mrb[0].mxu0
      %v403 = vpop.f32.mrb[0].mxu0
      %v404 = vadd.f32 %v292, %v403
      %v405 = vpop.f32.mrb[0].mxu0
      %406 = vmatprep.mubr.bf16.mxu0 0
      %407 = vmatmul.mubr.bf16.gmra.mrb[0].mxu0 %v243
      %v408 = vpop.f32.mrb[0].mxu0
      %v409 = vadd.f32 %v292, %v408
      %v410 = vpop.f32.mrb[0].mxu0
      %v411 = vpop.f32.mrb[0].mxu0
      %v412 = vadd.f32 %v292, %v411
      %v413 = vpop.f32.mrb[0].mxu0
      %414 = vmatprep.mubr.bf16.mxu0 0
      %415 = vmatmul.mubr.bf16.gmra.mrb[0].mxu0 %v244
      %v416 = vpop.f32.mrb[0].mxu0
      %v417 = vadd.f32 %v292, %v416
      %v418 = vpop.f32.mrb[0].mxu0
      %v419 = vpop.f32.mrb[0].mxu0
      %v420 = vadd.f32 %v292, %v419
      %v421 = vpop.f32.mrb[0].mxu0
      %422 = vmatprep.mubr.bf16.mxu0 0
      %423 = vmatmul.mubr.bf16.gmra.mrb[0].mxu0 %v245
      %v424 = vpop.f32.mrb[0].mxu0
      %v425 = vadd.f32 %v292, %v424
      %v426 = vpop.f32.mrb[0].mxu0
      %v427 = vpop.f32.mrb[0].mxu0
      %v428 = vadd.f32 %v292, %v427
      %v429 = vpop.f32.mrb[0].mxu0
      %430 = vmatprep.mubr.bf16.mxu0 0
      %431 = vmatmul.mubr.bf16.gmra.mrb[0].mxu0 %v246
      %v432 = vpop.f32.mrb[0].mxu0
      %v433 = vadd.f32 %v292, %v432
      %v434 = vpop.f32.mrb[0].mxu0
      %v435 = vpop.f32.mrb[0].mxu0
      %v436 = vadd.f32 %v292, %v435
      %v437 = vpop.f32.mrb[0].mxu0
      %438 = vmatprep.mubr.bf16.mxu0 0
      %439 = vmatmul.mubr.bf16.gmra.mrb[0].mxu0 %v247
      %v440 = vpop.f32.mrb[0].mxu0
      %v441 = vadd.f32 %v292, %v440
      %v442 = vpop.f32.mrb[0].mxu0
      %v443 = vpop.f32.mrb[0].mxu0
      %v444 = vadd.f32 %v292, %v443
      %v445 = vpop.f32.mrb[0].mxu0
      %446 = vmatprep.mubr.bf16.mxu0 0
      %447 = vmatmul.mubr.bf16.gmra.mrb[0].mxu0 %v248
      %v448 = vpop.f32.mrb[0].mxu0
      %v449 = vadd.f32 %v292, %v448
      %v450 = vpop.f32.mrb[0].mxu0
      %v451 = vpop.f32.mrb[0].mxu0
      %v452 = vadd.f32 %v292, %v451
      %v453 = vpop.f32.mrb[0].mxu0
      %454 = vmatprep.mubr.bf16.mxu0 0
      %455 = vmatmul.mubr.bf16.gmra.mrb[0].mxu0 %v249
      %v456 = vpop.f32.mrb[0].mxu0
      %v457 = vadd.f32 %v292, %v456
      %v458 = vpop.f32.mrb[0].mxu0
      %v459 = vpop.f32.mrb[0].mxu0
      %v460 = vadd.f32 %v292, %v459
      %v461 = vpop.f32.mrb[0].mxu0
      %462 = vmatprep.mubr.bf16.mxu0 0
      %463 = vmatmul.mubr.bf16.gmra.mrb[0].mxu0 %v250
      %v464 = vpop.f32.mrb[0].mxu0
      %v465 = vadd.f32 %v292, %v464
      %v466 = vpop.f32.mrb[0].mxu0
      %v467 = vpop.f32.mrb[0].mxu0
      %v468 = vadd.f32 %v292, %v467
      %v469 = vpop.f32.mrb[0].mxu0
      %470 = vmatprep.mubr.bf16.mxu0 0
      %471 = vmatmul.mubr.bf16.gmra.mrb[0].mxu0 %v251
      %v472 = vpop.f32.mrb[0].mxu0
      %v473 = vadd.f32 %v292, %v472
      %v474 = vpop.f32.mrb[0].mxu0
      %v475 = vpop.f32.mrb[0].mxu0
      %v476 = vadd.f32 %v292, %v475
      %v477 = vpop.f32.mrb[0].mxu0
      %478 = vmatprep.mubr.bf16.mxu0 0
      %479 = vmatmul.mubr.bf16.gmra.mrb[0].mxu0 %v252
      %v480 = vpop.f32.mrb[0].mxu0
      %v481 = vadd.f32 %v292, %v480
      %v482 = vpop.f32.mrb[0].mxu0
      %v483 = vpop.f32.mrb[0].mxu0
      %v484 = vadd.f32 %v292, %v483
      %v485 = vpop.f32.mrb[0].mxu0
      %486 = vmatprep.mubr.bf16.mxu0 0
      %487 = vmatmul.mubr.bf16.gmra.mrb[0].mxu0 %v253
      %v488 = vpop.f32.mrb[0].mxu0
      %v489 = vadd.f32 %v292, %v488
      %v490 = vpop.f32.mrb[0].mxu0
      %v491 = vpop.f32.mrb[0].mxu0
      %v492 = vadd.f32 %v292, %v491
      %v493 = vpop.f32.mrb[0].mxu0
      %494 = vmatprep.mubr.bf16.mxu0 0
      %495 = vmatmul.mubr.bf16.gmra.mrb[0].mxu0 %v254
      %v496 = vpop.f32.mrb[0].mxu0
      %v497 = vadd.f32 %v292, %v496
      %v498 = vpop.f32.mrb[0].mxu0
      %v499 = vpop.f32.mrb[0].mxu0
      %v500 = vadd.f32 %v292, %v499
      %v501 = vpop.f32.mrb[0].mxu0
      %502 = vmatprep.mubr.bf16.mxu0 0
      %503 = vmatmul.mubr.bf16.gmra.mrb[0].mxu0 %v255
      %v504 = vpop.f32.mrb[0].mxu0
      %v505 = vadd.f32 %v292, %v504
      %v506 = vpop.f32.mrb[0].mxu0
      %v507 = vpop.f32.mrb[0].mxu0
      %v508 = vadd.f32 %v292, %v507
      %v509 = vpop.f32.mrb[0].mxu0
      %510 = vmatprep.mubr.bf16.mxu0 0
      %511 = vmatmul.mubr.bf16.gmra.mrb[0].mxu0 %v256
      %v512 = vpop.f32.mrb[0].mxu0
      %v513 = vadd.f32 %v292, %v512
      %v514 = vpop.f32.mrb[0].mxu0
      %v515 = vpop.f32.mrb[0].mxu0
      %v516 = vadd.f32 %v292, %v515
      %v517 = vpop.f32.mrb[0].mxu0
      %518 = vmatprep.mubr.bf16.mxu0 0
      %519 = vmatmul.mubr.bf16.gmra.mrb[0].mxu0 %v257
      %v520 = vpop.f32.mrb[0].mxu0
      %v521 = vadd.f32 %v292, %v520
      %v522 = vpop.f32.mrb[0].mxu0
      %v523 = vpop.f32.mrb[0].mxu0
      %v524 = vadd.f32 %v292, %v523
      %v525 = vpop.f32.mrb[0].mxu0
      %526 = vmatprep.mubr.bf16.mxu0 0
      %527 = vmatmul.mubr.bf16.gmra.mrb[0].mxu0 %v258
      %v528 = vpop.f32.mrb[0].mxu0
      %v529 = vadd.f32 %v292, %v528
      %v530 = vpop.f32.mrb[0].mxu0
      %v531 = vpop.f32.mrb[0].mxu0
      %v532 = vadd.f32 %v292, %v531
      %v533 = vpop.f32.mrb[0].mxu0
      %534 = vmatprep.mubr.bf16.mxu0 0
      %535 = vmatmul.mubr.bf16.gmra.mrb[0].mxu0 %v259
      %v536 = vpop.f32.mrb[0].mxu0
      %v537 = vadd.f32 %v292, %v536
      %v538 = vpop.f32.mrb[0].mxu0
      %v539 = vpop.f32.mrb[0].mxu0
      %v540 = vadd.f32 %v292, %v539
      %v541 = vpop.f32.mrb[0].mxu0
      %542 = vmatprep.mubr.bf16.mxu0 0
      %543 = vmatmul.mubr.bf16.gmra.mrb[0].mxu0 %v260
      %v544 = vpop.f32.mrb[0].mxu0
      %v545 = vadd.f32 %v292, %v544
      %v546 = vpop.f32.mrb[0].mxu0
      %v547 = vpop.f32.mrb[0].mxu0
      %v548 = vadd.f32 %v292, %v547
      %v549 = vpop.f32.mrb[0].mxu0
      %550 = vmatprep.mubr.bf16.mxu0 0
      %551 = vmatmul.mubr.bf16.gmra.mrb[0].mxu0 %v261
      %v552 = vpop.f32.mrb[0].mxu0
      %v553 = vadd.f32 %v292, %v552
      %v554 = vpop.f32.mrb[0].mxu0
      %v555 = vpop.f32.mrb[0].mxu0
      %v556 = vadd.f32 %v292, %v555
      %v557 = vpop.f32.mrb[0].mxu0
      %558 = vmatprep.mubr.bf16.mxu0 0
      %559 = vmatmul.mubr.bf16.gmra.mrb[0].mxu0 %v262
      %v560 = vpop.f32.mrb[0].mxu0
      %v561 = vadd.f32 %v292, %v560
      %v562 = vpop.f32.mrb[0].mxu0
      %v563 = vpop.f32.mrb[0].mxu0
      %v564 = vadd.f32 %v292, %v563
      %v565 = vpop.f32.mrb[0].mxu0
      %566 = vmatprep.mubr.bf16.mxu0 0
      %567 = vmatmul.mubr.bf16.gmra.mrb[0].mxu0 %v263
      %v568 = vpop.f32.mrb[0].mxu0
      %v569 = vadd.f32 %v292, %v568
      %v570 = vpop.f32.mrb[0].mxu0
      %v571 = vpop.f32.mrb[0].mxu0
      %v572 = vadd.f32 %v292, %v571
      %v573 = vpop.f32.mrb[0].mxu0
      %574 = vmatprep.mubr.bf16.mxu0 0
      %575 = vmatmul.mubr.bf16.gmra.mrb[0].mxu0 %v264
      %v576 = vpop.f32.mrb[0].mxu0
      %v577 = vadd.f32 %v292, %v576
      %v578 = vpop.f32.mrb[0].mxu0
      %v579 = vpop.f32.mrb[0].mxu0
      %v580 = vadd.f32 %v292, %v579
      %v581 = vpop.f32.mrb[0].mxu0
      %582 = vmatprep.mubr.bf16.mxu0 0
      %583 = vmatmul.mubr.bf16.gmra.mrb[0].mxu0 %v265
      %v584 = vpop.f32.mrb[0].mxu0
      %v585 = vadd.f32 %v292, %v584
      %v586 = vpop.f32.mrb[0].mxu0
      %v587 = vpop.f32.mrb[0].mxu0
      %v588 = vadd.f32 %v292, %v587
      %v589 = vpop.f32.mrb[0].mxu0
      %590 = vmatprep.mubr.bf16.mxu0 0
      %591 = vmatmul.mubr.bf16.gmra.mrb[0].mxu0 %v266
      %v592 = vpop.f32.mrb[0].mxu0
      %v593 = vadd.f32 %v292, %v592
      %v594 = vpop.f32.mrb[0].mxu0
      %v595 = vpop.f32.mrb[0].mxu0
      %v596 = vadd.f32 %v292, %v595
      %v597 = vpop.f32.mrb[0].mxu0
      %598 = vmatprep.mubr.bf16.mxu0 0
      %599 = vmatmul.mubr.bf16.gmra.mrb[0].mxu0 %v267
      %v600 = vpop.f32.mrb[0].mxu0
      %v601 = vadd.f32 %v292, %v600
      %v602 = vpop.f32.mrb[0].mxu0
      %v603 = vpop.f32.mrb[0].mxu0
      %v604 = vadd.f32 %v292, %v603
      %v605 = vpop.f32.mrb[0].mxu0
      %606 = vmatprep.mubr.bf16.mxu0 0
      %607 = vmatmul.mubr.bf16.gmra.mrb[0].mxu0 %v268
      %v608 = vpop.f32.mrb[0].mxu0
      %v609 = vadd.f32 %v292, %v608
      %v610 = vpop.f32.mrb[0].mxu0
      %v611 = vpop.f32.mrb[0].mxu0
      %v612 = vadd.f32 %v292, %v611
      %v613 = vpop.f32.mrb[0].mxu0
      %614 = vmatprep.mubr.bf16.mxu0 0
      %615 = vmatmul.mubr.bf16.gmra.mrb[0].mxu0 %v269
      %v616 = vpop.f32.mrb[0].mxu0
      %v617 = vadd.f32 %v292, %v616
      %v618 = vpop.f32.mrb[0].mxu0
      %v619 = vpop.f32.mrb[0].mxu0
      %v620 = vadd.f32 %v292, %v619
      %v621 = vpop.f32.mrb[0].mxu0
      %622 = vmatprep.mubr.bf16.mxu0 0
      %623 = vmatmul.mubr.bf16.gmra.mrb[0].mxu0 %v270
      %v624 = vpop.f32.mrb[0].mxu0
      %v625 = vadd.f32 %v292, %v624
      %v626 = vpop.f32.mrb[0].mxu0
      %v627 = vpop.f32.mrb[0].mxu0
      %v628 = vadd.f32 %v292, %v627
      %v629 = vpop.f32.mrb[0].mxu0
      %630 = vdwg.mxu0
      %631 = vmax.xlane.f32.xlu0 %v377
      %v632 = vpop.xlane.xlu0 %631
      %633 = vmax.xlane.f32.xlu0 %v380
      %v634 = vpop.xlane.xlu0 %633
      %635 = vmax.xlane.f32.xlu0 %v385
      %v636 = vpop.xlane.xlu0 %635
      %637 = vmax.xlane.f32.xlu0 %v388
      %v638 = vpop.xlane.xlu0 %637
      %639 = vmax.xlane.f32.xlu0 %v393
      %v640 = vpop.xlane.xlu0 %639
      %641 = vmax.xlane.f32.xlu0 %v396
      %v642 = vpop.xlane.xlu0 %641
      %643 = vmax.xlane.f32.xlu0 %v401
      %v644 = vpop.xlane.xlu0 %643
      %645 = vmax.xlane.f32.xlu0 %v404
      %v646 = vpop.xlane.xlu0 %645
      %647 = vmax.xlane.f32.xlu0 %v409
      %v648 = vpop.xlane.xlu0 %647
      %649 = vmax.xlane.f32.xlu0 %v412
      %v650 = vpop.xlane.xlu0 %649
      %651 = vmax.xlane.f32.xlu0 %v417
      %v652 = vpop.xlane.xlu0 %651
      %653 = vmax.xlane.f32.xlu0 %v420
      %v654 = vpop.xlane.xlu0 %653
      %655 = vmax.xlane.f32.xlu0 %v425
      %v656 = vpop.xlane.xlu0 %655
      %657 = vmax.xlane.f32.xlu0 %v428
      %v658 = vpop.xlane.xlu0 %657
      %659 = vmax.xlane.f32.xlu0 %v433
      %v660 = vpop.xlane.xlu0 %659
      %661 = vmax.xlane.f32.xlu0 %v436
      %v662 = vpop.xlane.xlu0 %661
      %663 = vmax.xlane.f32.xlu0 %v441
      %v664 = vpop.xlane.xlu0 %663
      %665 = vmax.xlane.f32.xlu0 %v444
      %v666 = vpop.xlane.xlu0 %665
      %667 = vmax.xlane.f32.xlu0 %v449
      %v668 = vpop.xlane.xlu0 %667
      %669 = vmax.xlane.f32.xlu0 %v452
      %v670 = vpop.xlane.xlu0 %669
      %671 = vmax.xlane.f32.xlu0 %v457
      %v672 = vpop.xlane.xlu0 %671
      %673 = vmax.xlane.f32.xlu0 %v460
      %v674 = vpop.xlane.xlu0 %673
      %675 = vmax.xlane.f32.xlu0 %v465
      %v676 = vpop.xlane.xlu0 %675
      %677 = vmax.xlane.f32.xlu0 %v468
      %v678 = vpop.xlane.xlu0 %677
      %679 = vmax.xlane.f32.xlu0 %v473
      %v680 = vpop.xlane.xlu0 %679
      %681 = vmax.xlane.f32.xlu0 %v476
      %v682 = vpop.xlane.xlu0 %681
      %683 = vmax.xlane.f32.xlu0 %v481
      %v684 = vpop.xlane.xlu0 %683
      %685 = vmax.xlane.f32.xlu0 %v484
      %v686 = vpop.xlane.xlu0 %685
      %687 = vmax.xlane.f32.xlu0 %v489
      %v688 = vpop.xlane.xlu0 %687
      %689 = vmax.xlane.f32.xlu0 %v492
      %v690 = vpop.xlane.xlu0 %689
      %691 = vmax.xlane.f32.xlu0 %v497
      %v692 = vpop.xlane.xlu0 %691
      %693 = vmax.xlane.f32.xlu0 %v500
      %v694 = vpop.xlane.xlu0 %693
      %695 = vmax.xlane.f32.xlu0 %v505
      %v696 = vpop.xlane.xlu0 %695
      %697 = vmax.xlane.f32.xlu0 %v508
      %v698 = vpop.xlane.xlu0 %697
      %699 = vmax.xlane.f32.xlu0 %v513
      %v700 = vpop.xlane.xlu0 %699
      %701 = vmax.xlane.f32.xlu0 %v516
      %v702 = vpop.xlane.xlu0 %701
      %703 = vmax.xlane.f32.xlu0 %v521
      %v704 = vpop.xlane.xlu0 %703
      %705 = vmax.xlane.f32.xlu0 %v524
      %v706 = vpop.xlane.xlu0 %705
      %707 = vmax.xlane.f32.xlu0 %v529
      %v708 = vpop.xlane.xlu0 %707
      %709 = vmax.xlane.f32.xlu0 %v532
      %v710 = vpop.xlane.xlu0 %709
      %711 = vmax.xlane.f32.xlu0 %v537
      %v712 = vpop.xlane.xlu0 %711
      %713 = vmax.xlane.f32.xlu0 %v540
      %v714 = vpop.xlane.xlu0 %713
      %715 = vmax.xlane.f32.xlu0 %v545
      %v716 = vpop.xlane.xlu0 %715
      %717 = vmax.xlane.f32.xlu0 %v548
      %v718 = vpop.xlane.xlu0 %717
      %719 = vmax.xlane.f32.xlu0 %v553
      %v720 = vpop.xlane.xlu0 %719
      %721 = vmax.xlane.f32.xlu0 %v556
      %v722 = vpop.xlane.xlu0 %721
      %723 = vmax.xlane.f32.xlu0 %v561
      %v724 = vpop.xlane.xlu0 %723
      %725 = vmax.xlane.f32.xlu0 %v564
      %v726 = vpop.xlane.xlu0 %725
      %727 = vmax.xlane.f32.xlu0 %v569
      %v728 = vpop.xlane.xlu0 %727
      %729 = vmax.xlane.f32.xlu0 %v572
      %v730 = vpop.xlane.xlu0 %729
      %731 = vmax.xlane.f32.xlu0 %v577
      %v732 = vpop.xlane.xlu0 %731
      %733 = vmax.xlane.f32.xlu0 %v580
      %v734 = vpop.xlane.xlu0 %733
      %735 = vmax.xlane.f32.xlu0 %v585
      %v736 = vpop.xlane.xlu0 %735
      %737 = vmax.xlane.f32.xlu0 %v588
      %v738 = vpop.xlane.xlu0 %737
      %739 = vmax.xlane.f32.xlu0 %v593
      %v740 = vpop.xlane.xlu0 %739
      %741 = vmax.xlane.f32.xlu0 %v596
      %v742 = vpop.xlane.xlu0 %741
      %743 = vmax.xlane.f32.xlu0 %v601
      %v744 = vpop.xlane.xlu0 %743
      %745 = vmax.xlane.f32.xlu0 %v604
      %v746 = vpop.xlane.xlu0 %745
      %747 = vmax.xlane.f32.xlu0 %v609
      %v748 = vpop.xlane.xlu0 %747
      %749 = vmax.xlane.f32.xlu0 %v612
      %v750 = vpop.xlane.xlu0 %749
      %751 = vmax.xlane.f32.xlu0 %v617
      %v752 = vpop.xlane.xlu0 %751
      %753 = vmax.xlane.f32.xlu0 %v620
      %v754 = vpop.xlane.xlu0 %753
      %755 = vmax.xlane.f32.xlu0 %v625
      %v756 = vpop.xlane.xlu0 %755
      %757 = vmax.xlane.f32.xlu0 %v628
      %v758 = vpop.xlane.xlu0 %757
      %v759 = vsub.f32 %v377, %v632
      %v760 = vsub.f32 %v380, %v634
      %v761 = vsub.f32 %v385, %v636
      %v762 = vsub.f32 %v388, %v638
      %v763 = vsub.f32 %v393, %v640
      %v764 = vsub.f32 %v396, %v642
      %v765 = vsub.f32 %v401, %v644
      %v766 = vsub.f32 %v404, %v646
      %v767 = vsub.f32 %v409, %v648
      %v768 = vsub.f32 %v412, %v650
      %v769 = vsub.f32 %v417, %v652
      %v770 = vsub.f32 %v420, %v654
      %v771 = vsub.f32 %v425, %v656
      %v772 = vsub.f32 %v428, %v658
      %v773 = vsub.f32 %v433, %v660
      %v774 = vsub.f32 %v436, %v662
      %v775 = vsub.f32 %v441, %v664
      %v776 = vsub.f32 %v444, %v666
      %v777 = vsub.f32 %v449, %v668
      %v778 = vsub.f32 %v452, %v670
      %v779 = vsub.f32 %v457, %v672
      %v780 = vsub.f32 %v460, %v674
      %v781 = vsub.f32 %v465, %v676
      %v782 = vsub.f32 %v468, %v678
      %v783 = vsub.f32 %v473, %v680
      %v784 = vsub.f32 %v476, %v682
      %v785 = vsub.f32 %v481, %v684
      %v786 = vsub.f32 %v484, %v686
      %v787 = vsub.f32 %v489, %v688
      %v788 = vsub.f32 %v492, %v690
      %v789 = vsub.f32 %v497, %v692
      %v790 = vsub.f32 %v500, %v694
      %v791 = vsub.f32 %v505, %v696
      %v792 = vsub.f32 %v508, %v698
      %v793 = vsub.f32 %v513, %v700
      %v794 = vsub.f32 %v516, %v702
      %v795 = vsub.f32 %v521, %v704
      %v796 = vsub.f32 %v524, %v706
      %v797 = vsub.f32 %v529, %v708
      %v798 = vsub.f32 %v532, %v710
      %v799 = vsub.f32 %v537, %v712
      %v800 = vsub.f32 %v540, %v714
      %v801 = vsub.f32 %v545, %v716
      %v802 = vsub.f32 %v548, %v718
      %v803 = vsub.f32 %v553, %v720
      %v804 = vsub.f32 %v556, %v722
      %v805 = vsub.f32 %v561, %v724
      %v806 = vsub.f32 %v564, %v726
      %v807 = vsub.f32 %v569, %v728
      %v808 = vsub.f32 %v572, %v730
      %v809 = vsub.f32 %v577, %v732
      %v810 = vsub.f32 %v580, %v734
      %v811 = vsub.f32 %v585, %v736
      %v812 = vsub.f32 %v588, %v738
      %v813 = vsub.f32 %v593, %v740
      %v814 = vsub.f32 %v596, %v742
      %v815 = vsub.f32 %v601, %v744
      %v816 = vsub.f32 %v604, %v746
      %v817 = vsub.f32 %v609, %v748
      %v818 = vsub.f32 %v612, %v750
      %v819 = vsub.f32 %v617, %v752
      %v820 = vsub.f32 %v620, %v754
      %v821 = vsub.f32 %v625, %v756
      %v822 = vsub.f32 %v628, %v758
      %v823 = vmul.f32 %v759, 1.442695
      %v824 = vpow.pop %v823
      %v825 = vmul.f32 %v760, 1.442695
      %v826 = vpow.pop %v825
      %v827 = vmul.f32 %v761, 1.442695
      %v828 = vpow.pop %v827
      %v829 = vmul.f32 %v762, 1.442695
      %v830 = vpow.pop %v829
      %v831 = vmul.f32 %v763, 1.442695
      %v832 = vpow.pop %v831
      %v833 = vmul.f32 %v764, 1.442695
      %v834 = vpow.pop %v833
      %v835 = vmul.f32 %v765, 1.442695
      %v836 = vpow.pop %v835
      %v837 = vmul.f32 %v766, 1.442695
      %v838 = vpow.pop %v837
      %v839 = vmul.f32 %v767, 1.442695
      %v840 = vpow.pop %v839
      %v841 = vmul.f32 %v768, 1.442695
      %v842 = vpow.pop %v841
      %v843 = vmul.f32 %v769, 1.442695
      %v844 = vpow.pop %v843
      %v845 = vmul.f32 %v770, 1.442695
      %v846 = vpow.pop %v845
      %v847 = vmul.f32 %v771, 1.442695
      %v848 = vpow.pop %v847
      %v849 = vmul.f32 %v772, 1.442695
      %v850 = vpow.pop %v849
      %v851 = vmul.f32 %v773, 1.442695
      %v852 = vpow.pop %v851
      %v853 = vmul.f32 %v774, 1.442695
      %v854 = vpow.pop %v853
      %v855 = vmul.f32 %v775, 1.442695
      %v856 = vpow.pop %v855
      %v857 = vmul.f32 %v776, 1.442695
      %v858 = vpow.pop %v857
      %v859 = vmul.f32 %v777, 1.442695
      %v860 = vpow.pop %v859
      %v861 = vmul.f32 %v778, 1.442695
      %v862 = vpow.pop %v861
      %v863 = vmul.f32 %v779, 1.442695
      %v864 = vpow.pop %v863
      %v865 = vmul.f32 %v780, 1.442695
      %v866 = vpow.pop %v865
      %v867 = vmul.f32 %v781, 1.442695
      %v868 = vpow.pop %v867
      %v869 = vmul.f32 %v782, 1.442695
      %v870 = vpow.pop %v869
      %v871 = vmul.f32 %v783, 1.442695
      %v872 = vpow.pop %v871
      %v873 = vmul.f32 %v784, 1.442695
      %v874 = vpow.pop %v873
      %v875 = vmul.f32 %v785, 1.442695
      %v876 = vpow.pop %v875
      %v877 = vmul.f32 %v786, 1.442695
      %v878 = vpow.pop %v877
      %v879 = vmul.f32 %v787, 1.442695
      %v880 = vpow.pop %v879
      %v881 = vmul.f32 %v788, 1.442695
      %v882 = vpow.pop %v881
      %v883 = vmul.f32 %v789, 1.442695
      %v884 = vpow.pop %v883
      %v885 = vmul.f32 %v790, 1.442695
      %v886 = vpow.pop %v885
      %v887 = vmul.f32 %v791, 1.442695
      %v888 = vpow.pop %v887
      %v889 = vmul.f32 %v792, 1.442695
      %v890 = vpow.pop %v889
      %v891 = vmul.f32 %v793, 1.442695
      %v892 = vpow.pop %v891
      %v893 = vmul.f32 %v794, 1.442695
      %v894 = vpow.pop %v893
      %v895 = vmul.f32 %v795, 1.442695
      %v896 = vpow.pop %v895
      %v897 = vmul.f32 %v796, 1.442695
      %v898 = vpow.pop %v897
      %v899 = vmul.f32 %v797, 1.442695
      %v900 = vpow.pop %v899
      %v901 = vmul.f32 %v798, 1.442695
      %v902 = vpow.pop %v901
      %v903 = vmul.f32 %v799, 1.442695
      %v904 = vpow.pop %v903
      %v905 = vmul.f32 %v800, 1.442695
      %v906 = vpow.pop %v905
      %v907 = vmul.f32 %v801, 1.442695
      %v908 = vpow.pop %v907
      %v909 = vmul.f32 %v802, 1.442695
      %v910 = vpow.pop %v909
      %v911 = vmul.f32 %v803, 1.442695
      %v912 = vpow.pop %v911
      %v913 = vmul.f32 %v804, 1.442695
      %v914 = vpow.pop %v913
      %v915 = vmul.f32 %v805, 1.442695
      %v916 = vpow.pop %v915
      %v917 = vmul.f32 %v806, 1.442695
      %v918 = vpow.pop %v917
      %v919 = vmul.f32 %v807, 1.442695
      %v920 = vpow.pop %v919
      %v921 = vmul.f32 %v808, 1.442695
      %v922 = vpow.pop %v921
      %v923 = vmul.f32 %v809, 1.442695
      %v924 = vpow.pop %v923
      %v925 = vmul.f32 %v810, 1.442695
      %v926 = vpow.pop %v925
      %v927 = vmul.f32 %v811, 1.442695
      %v928 = vpow.pop %v927
      %v929 = vmul.f32 %v812, 1.442695
      %v930 = vpow.pop %v929
      %v931 = vmul.f32 %v813, 1.442695
      %v932 = vpow.pop %v931
      %v933 = vmul.f32 %v814, 1.442695
      %v934 = vpow.pop %v933
      %v935 = vmul.f32 %v815, 1.442695
      %v936 = vpow.pop %v935
      %v937 = vmul.f32 %v816, 1.442695
      %v938 = vpow.pop %v937
      %v939 = vmul.f32 %v817, 1.442695
      %v940 = vpow.pop %v939
      %v941 = vmul.f32 %v818, 1.442695
      %v942 = vpow.pop %v941
      %v943 = vmul.f32 %v819, 1.442695
      %v944 = vpow.pop %v943
      %v945 = vmul.f32 %v820, 1.442695
      %v946 = vpow.pop %v945
      %v947 = vmul.f32 %v821, 1.442695
      %v948 = vpow.pop %v947
      %v949 = vmul.f32 %v822, 1.442695
      %v950 = vpow.pop %v949
      %951 = vadd.xlane.f32.xlu0 %v824
      %v952 = vpop.xlane.xlu0 %951
      %953 = vadd.xlane.f32.xlu0 %v826
      %v954 = vpop.xlane.xlu0 %953
      %955 = vadd.xlane.f32.xlu0 %v828
      %v956 = vpop.xlane.xlu0 %955
      %957 = vadd.xlane.f32.xlu0 %v830
      %v958 = vpop.xlane.xlu0 %957
      %959 = vadd.xlane.f32.xlu0 %v832
      %v960 = vpop.xlane.xlu0 %959
      %961 = vadd.xlane.f32.xlu0 %v834
      %v962 = vpop.xlane.xlu0 %961
      %963 = vadd.xlane.f32.xlu0 %v836
      %v964 = vpop.xlane.xlu0 %963
      %965 = vadd.xlane.f32.xlu0 %v838
      %v966 = vpop.xlane.xlu0 %965
      %967 = vadd.xlane.f32.xlu0 %v840
      %v968 = vpop.xlane.xlu0 %967
      %969 = vadd.xlane.f32.xlu0 %v842
      %v970 = vpop.xlane.xlu0 %969
      %971 = vadd.xlane.f32.xlu0 %v844
      %v972 = vpop.xlane.xlu0 %971
      %973 = vadd.xlane.f32.xlu0 %v846
      %v974 = vpop.xlane.xlu0 %973
      %975 = vadd.xlane.f32.xlu0 %v848
      %v976 = vpop.xlane.xlu0 %975
      %977 = vadd.xlane.f32.xlu0 %v850
      %v978 = vpop.xlane.xlu0 %977
      %979 = vadd.xlane.f32.xlu0 %v852
      %v980 = vpop.xlane.xlu0 %979
      %981 = vadd.xlane.f32.xlu0 %v854
      %v982 = vpop.xlane.xlu0 %981
      %983 = vadd.xlane.f32.xlu0 %v856
      %v984 = vpop.xlane.xlu0 %983
      %985 = vadd.xlane.f32.xlu0 %v858
      %v986 = vpop.xlane.xlu0 %985
      %987 = vadd.xlane.f32.xlu0 %v860
      %v988 = vpop.xlane.xlu0 %987
      %989 = vadd.xlane.f32.xlu0 %v862
      %v990 = vpop.xlane.xlu0 %989
      %991 = vadd.xlane.f32.xlu0 %v864
      %v992 = vpop.xlane.xlu0 %991
      %993 = vadd.xlane.f32.xlu0 %v866
      %v994 = vpop.xlane.xlu0 %993
      %995 = vadd.xlane.f32.xlu0 %v868
      %v996 = vpop.xlane.xlu0 %995
      %997 = vadd.xlane.f32.xlu0 %v870
      %v998 = vpop.xlane.xlu0 %997
      %999 = vadd.xlane.f32.xlu0 %v872
      %v1000 = vpop.xlane.xlu0 %999
      %1001 = vadd.xlane.f32.xlu0 %v874
      %v1002 = vpop.xlane.xlu0 %1001
      %1003 = vadd.xlane.f32.xlu0 %v876
      %v1004 = vpop.xlane.xlu0 %1003
      %1005 = vadd.xlane.f32.xlu0 %v878
      %v1006 = vpop.xlane.xlu0 %1005
      %1007 = vadd.xlane.f32.xlu0 %v880
      %v1008 = vpop.xlane.xlu0 %1007
      %1009 = vadd.xlane.f32.xlu0 %v882
      %v1010 = vpop.xlane.xlu0 %1009
      %1011 = vadd.xlane.f32.xlu0 %v884
      %v1012 = vpop.xlane.xlu0 %1011
      %1013 = vadd.xlane.f32.xlu0 %v886
      %v1014 = vpop.xlane.xlu0 %1013
      %1015 = vadd.xlane.f32.xlu0 %v888
      %v1016 = vpop.xlane.xlu0 %1015
      %1017 = vadd.xlane.f32.xlu0 %v890
      %v1018 = vpop.xlane.xlu0 %1017
      %1019 = vadd.xlane.f32.xlu0 %v892
      %v1020 = vpop.xlane.xlu0 %1019
      %1021 = vadd.xlane.f32.xlu0 %v894
      %v1022 = vpop.xlane.xlu0 %1021
      %1023 = vadd.xlane.f32.xlu0 %v896
      %v1024 = vpop.xlane.xlu0 %1023
      %1025 = vadd.xlane.f32.xlu0 %v898
      %v1026 = vpop.xlane.xlu0 %1025
      %1027 = vadd.xlane.f32.xlu0 %v900
      %v1028 = vpop.xlane.xlu0 %1027
      %1029 = vadd.xlane.f32.xlu0 %v902
      %v1030 = vpop.xlane.xlu0 %1029
      %1031 = vadd.xlane.f32.xlu0 %v904
      %v1032 = vpop.xlane.xlu0 %1031
      %1033 = vadd.xlane.f32.xlu0 %v906
      %v1034 = vpop.xlane.xlu0 %1033
      %1035 = vadd.xlane.f32.xlu0 %v908
      %v1036 = vpop.xlane.xlu0 %1035
      %1037 = vadd.xlane.f32.xlu0 %v910
      %v1038 = vpop.xlane.xlu0 %1037
      %1039 = vadd.xlane.f32.xlu0 %v912
      %v1040 = vpop.xlane.xlu0 %1039
      %1041 = vadd.xlane.f32.xlu0 %v914
      %v1042 = vpop.xlane.xlu0 %1041
      %1043 = vadd.xlane.f32.xlu0 %v916
      %v1044 = vpop.xlane.xlu0 %1043
      %1045 = vadd.xlane.f32.xlu0 %v918
      %v1046 = vpop.xlane.xlu0 %1045
      %1047 = vadd.xlane.f32.xlu0 %v920
      %v1048 = vpop.xlane.xlu0 %1047
      %1049 = vadd.xlane.f32.xlu0 %v922
      %v1050 = vpop.xlane.xlu0 %1049
      %1051 = vadd.xlane.f32.xlu0 %v924
      %v1052 = vpop.xlane.xlu0 %1051
      %1053 = vadd.xlane.f32.xlu0 %v926
      %v1054 = vpop.xlane.xlu0 %1053
      %1055 = vadd.xlane.f32.xlu0 %v928
      %v1056 = vpop.xlane.xlu0 %1055
      %1057 = vadd.xlane.f32.xlu0 %v930
      %v1058 = vpop.xlane.xlu0 %1057
      %1059 = vadd.xlane.f32.xlu0 %v932
      %v1060 = vpop.xlane.xlu0 %1059
      %1061 = vadd.xlane.f32.xlu0 %v934
      %v1062 = vpop.xlane.xlu0 %1061
      %1063 = vadd.xlane.f32.xlu0 %v936
      %v1064 = vpop.xlane.xlu0 %1063
      %1065 = vadd.xlane.f32.xlu0 %v938
      %v1066 = vpop.xlane.xlu0 %1065
      %1067 = vadd.xlane.f32.xlu0 %v940
      %v1068 = vpop.xlane.xlu0 %1067
      %1069 = vadd.xlane.f32.xlu0 %v942
      %v1070 = vpop.xlane.xlu0 %1069
      %1071 = vadd.xlane.f32.xlu0 %v944
      %v1072 = vpop.xlane.xlu0 %1071
      %1073 = vadd.xlane.f32.xlu0 %v946
      %v1074 = vpop.xlane.xlu0 %1073
      %1075 = vadd.xlane.f32.xlu0 %v948
      %v1076 = vpop.xlane.xlu0 %1075
      %1077 = vadd.xlane.f32.xlu0 %v950
      %v1078 = vpop.xlane.xlu0 %1077
      %v1079 = vlog2.pop %v952
      %v1080 = vmul.f32 %v1079, 0.6931472
      %v1081 = vlog2.pop %v954
      %v1082 = vmul.f32 %v1081, 0.6931472
      %v1083 = vlog2.pop %v956
      %v1084 = vmul.f32 %v1083, 0.6931472
      %v1085 = vlog2.pop %v958
      %v1086 = vmul.f32 %v1085, 0.6931472
      %v1087 = vlog2.pop %v960
      %v1088 = vmul.f32 %v1087, 0.6931472
      %v1089 = vlog2.pop %v962
      %v1090 = vmul.f32 %v1089, 0.6931472
      %v1091 = vlog2.pop %v964
      %v1092 = vmul.f32 %v1091, 0.6931472
      %v1093 = vlog2.pop %v966
      %v1094 = vmul.f32 %v1093, 0.6931472
      %v1095 = vlog2.pop %v968
      %v1096 = vmul.f32 %v1095, 0.6931472
      %v1097 = vlog2.pop %v970
      %v1098 = vmul.f32 %v1097, 0.6931472
      %v1099 = vlog2.pop %v972
      %v1100 = vmul.f32 %v1099, 0.6931472
      %v1101 = vlog2.pop %v974
      %v1102 = vmul.f32 %v1101, 0.6931472
      %v1103 = vlog2.pop %v976
      %v1104 = vmul.f32 %v1103, 0.6931472
      %v1105 = vlog2.pop %v978
      %v1106 = vmul.f32 %v1105, 0.6931472
      %v1107 = vlog2.pop %v980
      %v1108 = vmul.f32 %v1107, 0.6931472
      %v1109 = vlog2.pop %v982
      %v1110 = vmul.f32 %v1109, 0.6931472
      %v1111 = vlog2.pop %v984
      %v1112 = vmul.f32 %v1111, 0.6931472
      %v1113 = vlog2.pop %v986
      %v1114 = vmul.f32 %v1113, 0.6931472
      %v1115 = vlog2.pop %v988
      %v1116 = vmul.f32 %v1115, 0.6931472
      %v1117 = vlog2.pop %v990
      %v1118 = vmul.f32 %v1117, 0.6931472
      %v1119 = vlog2.pop %v992
      %v1120 = vmul.f32 %v1119, 0.6931472
      %v1121 = vlog2.pop %v994
      %v1122 = vmul.f32 %v1121, 0.6931472
      %v1123 = vlog2.pop %v996
      %v1124 = vmul.f32 %v1123, 0.6931472
      %v1125 = vlog2.pop %v998
      %v1126 = vmul.f32 %v1125, 0.6931472
      %v1127 = vlog2.pop %v1000
      %v1128 = vmul.f32 %v1127, 0.6931472
      %v1129 = vlog2.pop %v1002
      %v1130 = vmul.f32 %v1129, 0.6931472
      %v1131 = vlog2.pop %v1004
      %v1132 = vmul.f32 %v1131, 0.6931472
      %v1133 = vlog2.pop %v1006
      %v1134 = vmul.f32 %v1133, 0.6931472
      %v1135 = vlog2.pop %v1008
      %v1136 = vmul.f32 %v1135, 0.6931472
      %v1137 = vlog2.pop %v1010
      %v1138 = vmul.f32 %v1137, 0.6931472
      %v1139 = vlog2.pop %v1012
      %v1140 = vmul.f32 %v1139, 0.6931472
      %v1141 = vlog2.pop %v1014
      %v1142 = vmul.f32 %v1141, 0.6931472
      %v1143 = vlog2.pop %v1016
      %v1144 = vmul.f32 %v1143, 0.6931472
      %v1145 = vlog2.pop %v1018
      %v1146 = vmul.f32 %v1145, 0.6931472
      %v1147 = vlog2.pop %v1020
      %v1148 = vmul.f32 %v1147, 0.6931472
      %v1149 = vlog2.pop %v1022
      %v1150 = vmul.f32 %v1149, 0.6931472
      %v1151 = vlog2.pop %v1024
      %v1152 = vmul.f32 %v1151, 0.6931472
      %v1153 = vlog2.pop %v1026
      %v1154 = vmul.f32 %v1153, 0.6931472
      %v1155 = vlog2.pop %v1028
      %v1156 = vmul.f32 %v1155, 0.6931472
      %v1157 = vlog2.pop %v1030
      %v1158 = vmul.f32 %v1157, 0.6931472
      %v1159 = vlog2.pop %v1032
      %v1160 = vmul.f32 %v1159, 0.6931472
      %v1161 = vlog2.pop %v1034
      %v1162 = vmul.f32 %v1161, 0.6931472
      %v1163 = vlog2.pop %v1036
      %v1164 = vmul.f32 %v1163, 0.6931472
      %v1165 = vlog2.pop %v1038
      %v1166 = vmul.f32 %v1165, 0.6931472
      %v1167 = vlog2.pop %v1040
      %v1168 = vmul.f32 %v1167, 0.6931472
      %v1169 = vlog2.pop %v1042
      %v1170 = vmul.f32 %v1169, 0.6931472
      %v1171 = vlog2.pop %v1044
      %v1172 = vmul.f32 %v1171, 0.6931472
      %v1173 = vlog2.pop %v1046
      %v1174 = vmul.f32 %v1173, 0.6931472
      %v1175 = vlog2.pop %v1048
      %v1176 = vmul.f32 %v1175, 0.6931472
      %v1177 = vlog2.pop %v1050
      %v1178 = vmul.f32 %v1177, 0.6931472
      %v1179 = vlog2.pop %v1052
      %v1180 = vmul.f32 %v1179, 0.6931472
      %v1181 = vlog2.pop %v1054
      %v1182 = vmul.f32 %v1181, 0.6931472
      %v1183 = vlog2.pop %v1056
      %v1184 = vmul.f32 %v1183, 0.6931472
      %v1185 = vlog2.pop %v1058
      %v1186 = vmul.f32 %v1185, 0.6931472
      %v1187 = vlog2.pop %v1060
      %v1188 = vmul.f32 %v1187, 0.6931472
      %v1189 = vlog2.pop %v1062
      %v1190 = vmul.f32 %v1189, 0.6931472
      %v1191 = vlog2.pop %v1064
      %v1192 = vmul.f32 %v1191, 0.6931472
      %v1193 = vlog2.pop %v1066
      %v1194 = vmul.f32 %v1193, 0.6931472
      %v1195 = vlog2.pop %v1068
      %v1196 = vmul.f32 %v1195, 0.6931472
      %v1197 = vlog2.pop %v1070
      %v1198 = vmul.f32 %v1197, 0.6931472
      %v1199 = vlog2.pop %v1072
      %v1200 = vmul.f32 %v1199, 0.6931472
      %v1201 = vlog2.pop %v1074
      %v1202 = vmul.f32 %v1201, 0.6931472
      %v1203 = vlog2.pop %v1076
      %v1204 = vmul.f32 %v1203, 0.6931472
      %v1205 = vlog2.pop %v1078
      %v1206 = vmul.f32 %v1205, 0.6931472
      %v1207 = vsub.f32 %v759, %v1080
      %v1208 = vsub.f32 %v760, %v1082
      %v1209 = vsub.f32 %v761, %v1084
      %v1210 = vsub.f32 %v762, %v1086
      %v1211 = vsub.f32 %v763, %v1088
      %v1212 = vsub.f32 %v764, %v1090
      %v1213 = vsub.f32 %v765, %v1092
      %v1214 = vsub.f32 %v766, %v1094
      %v1215 = vsub.f32 %v767, %v1096
      %v1216 = vsub.f32 %v768, %v1098
      %v1217 = vsub.f32 %v769, %v1100
      %v1218 = vsub.f32 %v770, %v1102
      %v1219 = vsub.f32 %v771, %v1104
      %v1220 = vsub.f32 %v772, %v1106
      %v1221 = vsub.f32 %v773, %v1108
      %v1222 = vsub.f32 %v774, %v1110
      %v1223 = vsub.f32 %v775, %v1112
      %v1224 = vsub.f32 %v776, %v1114
      %v1225 = vsub.f32 %v777, %v1116
      %v1226 = vsub.f32 %v778, %v1118
      %v1227 = vsub.f32 %v779, %v1120
      %v1228 = vsub.f32 %v780, %v1122
      %v1229 = vsub.f32 %v781, %v1124
      %v1230 = vsub.f32 %v782, %v1126
      %v1231 = vsub.f32 %v783, %v1128
      %v1232 = vsub.f32 %v784, %v1130
      %v1233 = vsub.f32 %v785, %v1132
      %v1234 = vsub.f32 %v786, %v1134
      %v1235 = vsub.f32 %v787, %v1136
      %v1236 = vsub.f32 %v788, %v1138
      %v1237 = vsub.f32 %v789, %v1140
      %v1238 = vsub.f32 %v790, %v1142
      %v1239 = vsub.f32 %v791, %v1144
      %v1240 = vsub.f32 %v792, %v1146
      %v1241 = vsub.f32 %v793, %v1148
      %v1242 = vsub.f32 %v794, %v1150
      %v1243 = vsub.f32 %v795, %v1152
      %v1244 = vsub.f32 %v796, %v1154
      %v1245 = vsub.f32 %v797, %v1156
      %v1246 = vsub.f32 %v798, %v1158
      %v1247 = vsub.f32 %v799, %v1160
      %v1248 = vsub.f32 %v800, %v1162
      %v1249 = vsub.f32 %v801, %v1164
      %v1250 = vsub.f32 %v802, %v1166
      %v1251 = vsub.f32 %v803, %v1168
      %v1252 = vsub.f32 %v804, %v1170
      %v1253 = vsub.f32 %v805, %v1172
      %v1254 = vsub.f32 %v806, %v1174
      %v1255 = vsub.f32 %v807, %v1176
      %v1256 = vsub.f32 %v808, %v1178
      %v1257 = vsub.f32 %v809, %v1180
      %v1258 = vsub.f32 %v810, %v1182
      %v1259 = vsub.f32 %v811, %v1184
      %v1260 = vsub.f32 %v812, %v1186
      %v1261 = vsub.f32 %v813, %v1188
      %v1262 = vsub.f32 %v814, %v1190
      %v1263 = vsub.f32 %v815, %v1192
      %v1264 = vsub.f32 %v816, %v1194
      %v1265 = vsub.f32 %v817, %v1196
      %v1266 = vsub.f32 %v818, %v1198
      %v1267 = vsub.f32 %v819, %v1200
      %v1268 = vsub.f32 %v820, %v1202
      %v1269 = vsub.f32 %v821, %v1204
      %v1270 = vsub.f32 %v822, %v1206
      %1271 = vst [vmem:[%s172] sm:$0xff] %v1207
      %1272 = vst [vmem:[%s172 + $0x8] sm:$0xff] %v1208
      %1273 = vst [vmem:[%s172 + $0x10] sm:$0xff] %v1209
      %1274 = vst [vmem:[%s172 + $0x18] sm:$0xff] %v1210
      %1275 = vst [vmem:[%s172 + $0x20] sm:$0xff] %v1211
      %1276 = vst [vmem:[%s172 + $0x28] sm:$0xff] %v1212
      %1277 = vst [vmem:[%s172 + $0x30] sm:$0xff] %v1213
      %1278 = vst [vmem:[%s172 + $0x38] sm:$0xff] %v1214
      %1279 = vst [vmem:[%s172 + $0x40] sm:$0xff] %v1215
      %1280 = vst [vmem:[%s172 + $0x48] sm:$0xff] %v1216
      %1281 = vst [vmem:[%s172 + $0x50] sm:$0xff] %v1217
      %1282 = vst [vmem:[%s172 + $0x58] sm:$0xff] %v1218
      %1283 = vst [vmem:[%s172 + $0x60] sm:$0xff] %v1219
      %1284 = vst [vmem:[%s172 + $0x68] sm:$0xff] %v1220
      %1285 = vst [vmem:[%s172 + $0x70] sm:$0xff] %v1221
      %1286 = vst [vmem:[%s172 + $0x78] sm:$0xff] %v1222
      %1287 = vst [vmem:[%s172 + $0x80] sm:$0xff] %v1223
      %1288 = vst [vmem:[%s172 + $0x88] sm:$0xff] %v1224
      %1289 = vst [vmem:[%s172 + $0x90] sm:$0xff] %v1225
      %1290 = vst [vmem:[%s172 + $0x98] sm:$0xff] %v1226
      %1291 = vst [vmem:[%s172 + $0xa0] sm:$0xff] %v1227
      %1292 = vst [vmem:[%s172 + $0xa8] sm:$0xff] %v1228
      %1293 = vst [vmem:[%s172 + $0xb0] sm:$0xff] %v1229
      %1294 = vst [vmem:[%s172 + $0xb8] sm:$0xff] %v1230
      %1295 = vst [vmem:[%s172 + $0xc0] sm:$0xff] %v1231
      %1296 = vst [vmem:[%s172 + $0xc8] sm:$0xff] %v1232
      %1297 = vst [vmem:[%s172 + $0xd0] sm:$0xff] %v1233
      %1298 = vst [vmem:[%s172 + $0xd8] sm:$0xff] %v1234
      %1299 = vst [vmem:[%s172 + $0xe0] sm:$0xff] %v1235
      %1300 = vst [vmem:[%s172 + $0xe8] sm:$0xff] %v1236
      %1301 = vst [vmem:[%s172 + $0xf0] sm:$0xff] %v1237
      %1302 = vst [vmem:[%s172 + $0xf8] sm:$0xff] %v1238
      %1303 = vst [vmem:[%s172 + $0x100] sm:$0xff] %v1239
      %1304 = vst [vmem:[%s172 + $0x108] sm:$0xff] %v1240
      %1305 = vst [vmem:[%s172 + $0x110] sm:$0xff] %v1241
      %1306 = vst [vmem:[%s172 + $0x118] sm:$0xff] %v1242
      %1307 = vst [vmem:[%s172 + $0x120] sm:$0xff] %v1243
      %1308 = vst [vmem:[%s172 + $0x128] sm:$0xff] %v1244
      %1309 = vst [vmem:[%s172 + $0x130] sm:$0xff] %v1245
      %1310 = vst [vmem:[%s172 + $0x138] sm:$0xff] %v1246
      %1311 = vst [vmem:[%s172 + $0x140] sm:$0xff] %v1247
      %1312 = vst [vmem:[%s172 + $0x148] sm:$0xff] %v1248
      %1313 = vst [vmem:[%s172 + $0x150] sm:$0xff] %v1249
      %1314 = vst [vmem:[%s172 + $0x158] sm:$0xff] %v1250
      %1315 = vst [vmem:[%s172 + $0x160] sm:$0xff] %v1251
      %1316 = vst [vmem:[%s172 + $0x168] sm:$0xff] %v1252
      %1317 = vst [vmem:[%s172 + $0x170] sm:$0xff] %v1253
      %1318 = vst [vmem:[%s172 + $0x178] sm:$0xff] %v1254
      %1319 = vst [vmem:[%s172 + $0x180] sm:$0xff] %v1255
      %1320 = vst [vmem:[%s172 + $0x188] sm:$0xff] %v1256
      %1321 = vst [vmem:[%s172 + $0x190] sm:$0xff] %v1257
      %1322 = vst [vmem:[%s172 + $0x198] sm:$0xff] %v1258
      %1323 = vst [vmem:[%s172 + $0x1a0] sm:$0xff] %v1259
      %1324 = vst [vmem:[%s172 + $0x1a8] sm:$0xff] %v1260
      %1325 = vst [vmem:[%s172 + $0x1b0] sm:$0xff] %v1261
      %1326 = vst [vmem:[%s172 + $0x1b8] sm:$0xff] %v1262
      %1327 = vst [vmem:[%s172 + $0x1c0] sm:$0xff] %v1263
      %1328 = vst [vmem:[%s172 + $0x1c8] sm:$0xff] %v1264
      %1329 = vst [vmem:[%s172 + $0x1d0] sm:$0xff] %v1265
      %1330 = vst [vmem:[%s172 + $0x1d8] sm:$0xff] %v1266
      %1331 = vst [vmem:[%s172 + $0x1e0] sm:$0xff] %v1267
      %1332 = vst [vmem:[%s172 + $0x1e8] sm:$0xff] %v1268
      %1333 = vst [vmem:[%s172 + $0x1f0] sm:$0xff] %v1269
      %1334 = vst [vmem:[%s172 + $0x1f8] sm:$0xff] %v1270
      %s1335 = smul.u32 64, %s14
      %p1336 = scmp.lt.s32.totalorder %s1335, 127
      %s1337 = scalar_select %p1336, %s1335, 127
      %s1338 = smul.addr %s1337, 8
      %s1339 = scalar_lea.vmem %s3, %s1338
      // Predicated region
      $region33: #{gcn_res_forward.15} parent=31 // pred_check
        %p1340 = pneg %p100
      $region34: #{gcn_res_forward.15} parent=31 // pred_check_branch
        %1342 = sbr.rel (%p1340) target = $region36
      $region35: #{gcn_res_forward.15} parent=31 // pred_region
        %s1343 = smul.u32 64, %s14
      $region36: #{gcn_res_forward.15} parent=31 // pred_fallthru
        _
    $region32: #{gcn_res_forward.15} parent=5 // pred_fallthru
      _
    %p1344 = scmp.le.s32.totalorder 2, %s9
    // Predicated region
    $region37: #{gcn_res_forward.15} parent=5 // pred_check
      %p1345 = pneg %p1344
    $region38: #{gcn_res_forward.15} parent=5 // pred_check_branch
      %1347 = sbr.rel (%p1345) target = $region40
    $region39: #{gcn_res_forward.15} parent=5 // pred_region
      %s1348 = ssub.s32 %s9, 2
      // Predicated region
      $region41: #{gcn_res_forward.15} parent=39 // pred_check
        %p1349 = pneg %p106
      $region42: #{gcn_res_forward.15} parent=39 // pred_check_branch
        %1351 = sbr.rel (%p1349) target = $region44
      $region43: #{gcn_res_forward.15} parent=39 // pred_region
        %s1352 = smul.u32 64, %s15
        %p1353 = scmp.lt.s32.totalorder %s1352, 127
        %s1354 = scalar_select %p1353, %s1352, 127
        %s1355 = smul.addr %s1354, 8
        %s1356 = scalar_lea.vmem %s3, %s1355
      $region44: #{gcn_res_forward.15} parent=39 // pred_fallthru
        _
    $region40: #{gcn_res_forward.15} parent=5 // pred_fallthru
      _
  $region6: #{gcn_res_forward.15} parent=0 // loop_footer
    %s13 = sadd.s32 1, %s9
  $region7: #{gcn_res_forward.15} parent=0 // loop_footer_branch
    %8 = sbr.rel target = $region3
  $region8: #{gcn_res_forward.15} parent=0 // loop_exit
    _

// kernel: gcn_res_forward.9
$region0: #{gcn_res_forward.9}
  #allocation0 [shape = 'u32[]', space=smem, size = 0x4, offset = 0x4, fixed_abs, tag = 'smem constant byte address 0x4 - core index']
  #allocation1 [shape = 'u32[144,128]{1,0:T(1,128)}', space=vmem, size = 0x12000, scoped, tag = 'internal scratch']
  #allocation2 [shape = 'f32[512,128]{1,0:T(8,128)}', space=vmem, size = 0x40000, scoped, tag = 'scratch operand']
  #allocation3 [shape = 's32[1]{0}', space=sflag, size = 0x4, scoped, tag = 'scoped memory for gcn_res_forward.9']
  #allocation4 [shape = 'u8[512]{0}', space=smem, size = 0x200, scoped, tag = 'prefetched SMEM operand 0']
  #allocation5 [shape = 'u8[512]{0}', space=smem, size = 0x200, scoped, tag = 'prefetched SMEM operand 1']
  %s0 = inlined_call_operand.vmem [shape: s32[6], index: 0, kind: input, shape index: {}]
  %s1 = inlined_call_operand.vmem [shape: s32[2], index: 1, kind: input, shape index: {}]
  %s2 = inlined_call_operand.vmem [shape: f32[3], index: 2, kind: input, shape index: {}]
  %s3 = inlined_call_operand.vmem [shape: bf16[1024,1024], index: 3, kind: input, shape index: {}]
  %s4 = inlined_call_operand.vmem [shape: bf16[1024,128], index: 4, kind: input, shape index: {}, may-alias: {4,5,6}]
  %s5 = inlined_call_operand.vmem [shape: bf16[1024,128], index: 5, kind: input, shape index: {}, may-alias: {4,5,6}]
  %s6 = inlined_call_operand.vmem [shape: bf16[1024,128], index: 6, kind: input, shape index: {}, may-alias: {4,5,6}]
  %s7 = inlined_call_operand.vmem [shape: f32[1024,128], index: 7, kind: input, shape index: {}]
  %s8 = inlined_call_operand.vmem [shape: bf16[128,128], index: 8, kind: input, shape index: {}]
  %s9 = inlined_call_operand.vmem [shape: f32[1,128], index: 9, kind: input, shape index: {}]
  %s10 = inlined_call_operand.vmem [shape: bf16[1024,128], index: 10, kind: output, shape index: {0}]
  %s11 = inlined_call_operand.vmem [shape: f32[1024,128], index: 11, kind: output, shape index: {1}]
  %12 = xla_tuple %s10, %s11
  %s13 = sld [smem:[#allocation0]]
  $region127: #{gcn_res_forward.9} parent=0
    _
  %s15 = ssub.s32 1, %s13
  %s16 = scalar_select 0, %s15, %s13
  %s17 = sshll.u32 %s0, 4
  %s18 = int_to_ptr.vmem [resolvable:$true] %s17
  %20 = dma.vmem_to_smem %s18, 16, [#allocation4], [#allocation3]
  %s21 = sshll.u32 %s1, 4
  %s22 = int_to_ptr.vmem [resolvable:$true] %s21
  %24 = dma.vmem_to_smem %s22, 16, [#allocation5], [#allocation3]
  %25 = dma.done [#allocation3], 32
  %26 = sfence
  $region1: #{gcn_res_forward.9} parent=0
    #allocation6 [shape = 'u8[512]{0}', space=smem, size = 0x200, scoped, tag = 'input window, operand 2, single buffered']
    #allocation7 [shape = 's32[2]{0}', space=sflag, size = 0x8, scoped, tag = 'scoped memory for gcn_res_forward.9']
    #allocation8 [shape = 'u8[524288]{0}', space=vmem, size = 0x80000, scoped, tag = 'input window, operand 3']
    %27 = vsyncpa [#allocation7], 0
    loop: start=0, step=1, limit=8
    $region2: #{gcn_res_forward.9} parent=1 // loop_pre_header
      _
    $region3: #{gcn_res_forward.9} parent=1 // loop_header
      %s29 = sphi 0, %s33
      %p30 = scmp.ge.s32.totalorder %s29, 8
      %s36 = sphi 0, %s48
      %s37 = sphi 0, %s44
      %s38 = sphi 0, %s36
      %s39 = sphi 0, %s37
      %s40 = sphi 0, %s38
      %s41 = sphi 0, %s39
      %s49 = sphi 0, %s49
      %s51 = sphi 0, %s49
      %s52 = sphi 0, %s51
      %s66 = sphi 0, %s52
      %s80 = sphi 0, %s82
      %s83 = sphi 0, %s80
      %s84 = sphi 0, %s83
      %s100 = sphi 0, %s84
      %s112 = sphi 0, %s114
      %s115 = sphi 0, %s112
      %s116 = sphi 0, %s115
      %s132 = sphi 0, %s116
      %s138 = sphi 0, %s140
      %s141 = sphi 0, %s138
      %s142 = sphi 0, %s141
      %s158 = sphi 0, %s142
      %s164 = sphi 0, %s166
      %s167 = sphi 0, %s164
      %s168 = sphi 0, %s167
      %s184 = sphi 0, %s168
      %s190 = sphi 0, %s192
      %s193 = sphi 0, %s190
      %s194 = sphi 0, %s193
      %s210 = sphi 0, %s194
      %s214 = sphi 0, %s214
      %s216 = sphi 0, %s214
      %s217 = sphi 0, %s216
      %s231 = sphi 0, %s217
      %s235 = sphi 0, %s235
      %s237 = sphi 0, %s235
      %s238 = sphi 0, %s237
      %s252 = sphi 0, %s238
      %s258 = sphi 0, %s260
      %s261 = sphi 0, %s258
      %s262 = sphi 0, %s261
      %s278 = sphi 0, %s262
      %s284 = sphi 0, %s286
      %s287 = sphi 0, %s284
      %s288 = sphi 0, %s287
      %s304 = sphi 0, %s288
    $region4: #{gcn_res_forward.9} parent=1 // loop_header_branch
      %32 = sbr.rel (%p30) target = $region8
    $region5: #{gcn_res_forward.9} parent=1 // loop_body
      %s34 = ssub.s32 %s29, 1
      %s35 = ssub.s32 %s29, 2
      %s42 = sadd.s32 1, %s37
      %p43 = scmp.ge.s32.totalorder %s42, 3
      %s44 = scalar_select %p43, 0, %s42
      %s45 = sadd.s32 1, %s36
      %s46 = scalar_select %p43, %s45, %s36
      %p47 = scmp.ge.s32.totalorder %s46, 2
      %s48 = scalar_select %p47, 0, %s46
      %s50 = sadd.s32 %s49, 1
      %p53 = scmp.eq.s32.totalorder %s29, 5
      %p54 = scmp.ne.s32.totalorder %s49, %s51
      %p55 = scmp.eq.s32.totalorder %s29, 0
      %p56 = por %p54, %p55
      %p57 = scmp.ne.s32.totalorder %s49, %s51
      %p58 = scmp.eq.s32.totalorder %s34, 5
      %p59 = por %p57, %p58
      %p60 = scmp.ne.s32.totalorder %s51, %s52
      %p61 = scmp.eq.s32.totalorder %s34, 0
      %p62 = por %p60, %p61
      %p63 = scmp.ne.s32.totalorder %s51, %s52
      %p64 = scmp.eq.s32.totalorder %s35, 5
      %p65 = por %p63, %p64
      %p67 = scmp.ne.s32.totalorder %s52, %s66
      %p68 = scmp.eq.s32.totalorder %s35, 0
      %p69 = por %p67, %p68
      %s70 = smul.u32 %s36, 3
      %s71 = sadd.s32 %s70, %s37
      %s72 = sld [smem:[#allocation4 + %s71]]
      %s73 = smul.u32 %s48, 3
      %s74 = sadd.s32 %s73, %s44
      %s75 = sld [smem:[#allocation4 + %s74]]
      %s76 = ssub.s32 %s36, %s48
      %s77 = ssub.s32 %s72, %s75
      %s78 = sor.u32 %s76, %s77
      %p79 = scmp.eq.s32.totalorder %s78, 0
      %s81 = sadd.s32 %s80, 1
      %s82 = scalar_select %p79, %s80, %s81
      %p85 = pneg %p79
      %p86 = scmp.eq.s32.totalorder %s29, 5
      %p87 = por %p85, %p86
      %p88 = scmp.ne.s32.totalorder %s80, %s83
      %p89 = scmp.eq.s32.totalorder %s29, 0
      %p90 = por %p88, %p89
      %p91 = scmp.ne.s32.totalorder %s80, %s83
      %p92 = scmp.eq.s32.totalorder %s34, 5
      %p93 = por %p91, %p92
      %p94 = scmp.ne.s32.totalorder %s83, %s84
      %p95 = scmp.eq.s32.totalorder %s34, 0
      %p96 = por %p94, %p95
      %p97 = scmp.ne.s32.totalorder %s83, %s84
      %p98 = scmp.eq.s32.totalorder %s35, 5
      %p99 = por %p97, %p98
      %p101 = scmp.ne.s32.totalorder %s84, %s100
      %p102 = scmp.eq.s32.totalorder %s35, 0
      %p103 = por %p101, %p102
      %s104 = smul.u32 %s36, 3
      %s105 = sadd.s32 %s104, %s37
      %s106 = sld [smem:[#allocation4 + %s105]]
      %s107 = smul.u32 %s48, 3
      %s108 = sadd.s32 %s107, %s44
      %s109 = sld [smem:[#allocation4 + %s108]]
      %s110 = ssub.s32 %s106, %s109
      %p111 = scmp.eq.s32.totalorder %s110, 0
      %s113 = sadd.s32 %s112, 1
      %s114 = scalar_select %p111, %s112, %s113
      %p117 = pneg %p111
      %p118 = scmp.eq.s32.totalorder %s29, 5
      %p119 = por %p117, %p118
      %p120 = scmp.ne.s32.totalorder %s112, %s115
      %p121 = scmp.eq.s32.totalorder %s29, 0
      %p122 = por %p120, %p121
      %p123 = scmp.ne.s32.totalorder %s112, %s115
      %p124 = scmp.eq.s32.totalorder %s34, 5
      %p125 = por %p123, %p124
      %p126 = scmp.ne.s32.totalorder %s115, %s116
      %p127 = scmp.eq.s32.totalorder %s34, 0
      %p128 = por %p126, %p127
      %p129 = scmp.ne.s32.totalorder %s115, %s116
      %p130 = scmp.eq.s32.totalorder %s35, 5
      %p131 = por %p129, %p130
      %p133 = scmp.ne.s32.totalorder %s116, %s132
      %p134 = scmp.eq.s32.totalorder %s35, 0
      %p135 = por %p133, %p134
      %s136 = ssub.s32 %s36, %s48
      %p137 = scmp.eq.s32.totalorder %s136, 0
      %s139 = sadd.s32 %s138, 1
      %s140 = scalar_select %p137, %s138, %s139
      %p143 = pneg %p137
      %p144 = scmp.eq.s32.totalorder %s29, 5
      %p145 = por %p143, %p144
      %p146 = scmp.ne.s32.totalorder %s138, %s141
      %p147 = scmp.eq.s32.totalorder %s29, 0
      %p148 = por %p146, %p147
      %p149 = scmp.ne.s32.totalorder %s138, %s141
      %p150 = scmp.eq.s32.totalorder %s34, 5
      %p151 = por %p149, %p150
      %p152 = scmp.ne.s32.totalorder %s141, %s142
      %p153 = scmp.eq.s32.totalorder %s34, 0
      %p154 = por %p152, %p153
      %p155 = scmp.ne.s32.totalorder %s141, %s142
      %p156 = scmp.eq.s32.totalorder %s35, 5
      %p157 = por %p155, %p156
      %p159 = scmp.ne.s32.totalorder %s142, %s158
      %p160 = scmp.eq.s32.totalorder %s35, 0
      %p161 = por %p159, %p160
      %s162 = ssub.s32 %s36, %s48
      %p163 = scmp.eq.s32.totalorder %s162, 0
      %s165 = sadd.s32 %s164, 1
      %s166 = scalar_select %p163, %s164, %s165
      %p169 = pneg %p163
      %p170 = scmp.eq.s32.totalorder %s29, 5
      %p171 = por %p169, %p170
      %p172 = scmp.ne.s32.totalorder %s164, %s167
      %p173 = scmp.eq.s32.totalorder %s29, 0
      %p174 = por %p172, %p173
      %p175 = scmp.ne.s32.totalorder %s164, %s167
      %p176 = scmp.eq.s32.totalorder %s34, 5
      %p177 = por %p175, %p176
      %p178 = scmp.ne.s32.totalorder %s167, %s168
      %p179 = scmp.eq.s32.totalorder %s34, 0
      %p180 = por %p178, %p179
      %p181 = scmp.ne.s32.totalorder %s167, %s168
      %p182 = scmp.eq.s32.totalorder %s35, 5
      %p183 = por %p181, %p182
      %p185 = scmp.ne.s32.totalorder %s168, %s184
      %p186 = scmp.eq.s32.totalorder %s35, 0
      %p187 = por %p185, %p186
      %s188 = ssub.s32 %s36, %s48
      %p189 = scmp.eq.s32.totalorder %s188, 0
      %s191 = sadd.s32 %s190, 1
      %s192 = scalar_select %p189, %s190, %s191
      %p195 = pneg %p189
      %p196 = scmp.eq.s32.totalorder %s29, 5
      %p197 = por %p195, %p196
      %p198 = scmp.ne.s32.totalorder %s190, %s193
      %p199 = scmp.eq.s32.totalorder %s29, 0
      %p200 = por %p198, %p199
      %p201 = scmp.ne.s32.totalorder %s190, %s193
      %p202 = scmp.eq.s32.totalorder %s34, 5
      %p203 = por %p201, %p202
      %p204 = scmp.ne.s32.totalorder %s193, %s194
      %p205 = scmp.eq.s32.totalorder %s34, 0
      %p206 = por %p204, %p205
      %p207 = scmp.ne.s32.totalorder %s193, %s194
      %p208 = scmp.eq.s32.totalorder %s35, 5
      %p209 = por %p207, %p208
      %p211 = scmp.ne.s32.totalorder %s194, %s210
      %p212 = scmp.eq.s32.totalorder %s35, 0
      %p213 = por %p211, %p212
      %s215 = sadd.s32 %s214, 1
      %p218 = scmp.eq.s32.totalorder %s29, 5
      %p219 = scmp.ne.s32.totalorder %s214, %s216
      %p220 = scmp.eq.s32.totalorder %s29, 0
      %p221 = por %p219, %p220
      %p222 = scmp.ne.s32.totalorder %s214, %s216
      %p223 = scmp.eq.s32.totalorder %s34, 5
      %p224 = por %p222, %p223
      %p225 = scmp.ne.s32.totalorder %s216, %s217
      %p226 = scmp.eq.s32.totalorder %s34, 0
      %p227 = por %p225, %p226
      %p228 = scmp.ne.s32.totalorder %s216, %s217
      %p229 = scmp.eq.s32.totalorder %s35, 5
      %p230 = por %p228, %p229
      %p232 = scmp.ne.s32.totalorder %s217, %s231
      %p233 = scmp.eq.s32.totalorder %s35, 0
      %p234 = por %p232, %p233
      %s236 = sadd.s32 %s235, 1
      %p239 = scmp.eq.s32.totalorder %s29, 5
      %p240 = scmp.ne.s32.totalorder %s235, %s237
      %p241 = scmp.eq.s32.totalorder %s29, 0
      %p242 = por %p240, %p241
      %p243 = scmp.ne.s32.totalorder %s235, %s237
      %p244 = scmp.eq.s32.totalorder %s34, 5
      %p245 = por %p243, %p244
      %p246 = scmp.ne.s32.totalorder %s237, %s238
      %p247 = scmp.eq.s32.totalorder %s34, 0
      %p248 = por %p246, %p247
      %p249 = scmp.ne.s32.totalorder %s237, %s238
      %p250 = scmp.eq.s32.totalorder %s35, 5
      %p251 = por %p249, %p250
      %p253 = scmp.ne.s32.totalorder %s238, %s252
      %p254 = scmp.eq.s32.totalorder %s35, 0
      %p255 = por %p253, %p254
      %s256 = ssub.s32 %s36, %s48
      %p257 = scmp.eq.s32.totalorder %s256, 0
      %s259 = sadd.s32 %s258, 1
      %s260 = scalar_select %p257, %s258, %s259
      %p263 = pneg %p257
      %p264 = scmp.eq.s32.totalorder %s29, 5
      %p265 = por %p263, %p264
      %p266 = scmp.ne.s32.totalorder %s258, %s261
      %p267 = scmp.eq.s32.totalorder %s29, 0
      %p268 = por %p266, %p267
      %p269 = scmp.ne.s32.totalorder %s258, %s261
      %p270 = scmp.eq.s32.totalorder %s34, 5
      %p271 = por %p269, %p270
      %p272 = scmp.ne.s32.totalorder %s261, %s262
      %p273 = scmp.eq.s32.totalorder %s34, 0
      %p274 = por %p272, %p273
      %p275 = scmp.ne.s32.totalorder %s261, %s262
      %p276 = scmp.eq.s32.totalorder %s35, 5
      %p277 = por %p275, %p276
      %p279 = scmp.ne.s32.totalorder %s262, %s278
      %p280 = scmp.eq.s32.totalorder %s35, 0
      %p281 = por %p279, %p280
      %s282 = ssub.s32 %s36, %s48
      %p283 = scmp.eq.s32.totalorder %s282, 0
      %s285 = sadd.s32 %s284, 1
      %s286 = scalar_select %p283, %s284, %s285
      %p289 = pneg %p283
      %p290 = scmp.eq.s32.totalorder %s29, 5
      %p291 = por %p289, %p290
      %p292 = scmp.ne.s32.totalorder %s284, %s287
      %p293 = scmp.eq.s32.totalorder %s29, 0
      %p294 = por %p292, %p293
      %p295 = scmp.ne.s32.totalorder %s284, %s287
      %p296 = scmp.eq.s32.totalorder %s34, 5
      %p297 = por %p295, %p296
      %p298 = scmp.ne.s32.totalorder %s287, %s288
      %p299 = scmp.eq.s32.totalorder %s34, 0
      %p300 = por %p298, %p299
      %p301 = scmp.ne.s32.totalorder %s287, %s288
      %p302 = scmp.eq.s32.totalorder %s35, 5
      %p303 = por %p301, %p302
      %p305 = scmp.ne.s32.totalorder %s288, %s304
      %p306 = scmp.eq.s32.totalorder %s35, 0
      %p307 = por %p305, %p306
      %p308 = scmp.le.s32.totalorder 1, %s29
      %p309 = scmp.lt.s32.totalorder %s29, 7
      %p310 = pnand %p308, %p309
      %p311 = pneg %p310
      // Predicated region
      $region9: #{gcn_res_forward.9} parent=5 // pred_check
        _
      $region10: #{gcn_res_forward.9} parent=5 // pred_check_branch
        %313 = sbr.rel (%p310) target = $region12
      $region11: #{gcn_res_forward.9} parent=5 // pred_region
        %s314 = ssub.s32 %s29, 1
        // Predicated region
        $region13: #{gcn_res_forward.9} parent=11 // pred_check
          %p315 = pneg %p62
        $region14: #{gcn_res_forward.9} parent=11 // pred_check_branch
          %317 = sbr.rel (%p315) target = $region16
        $region15: #{gcn_res_forward.9} parent=11 // pred_region
          %s319 = ssub.s32 16, 16
          %320 = vsyncadd [#allocation7], %s319
          %s322 = sshll.u32 %s2, 4
          %s323 = int_to_ptr.vmem [resolvable:$true] %s322
          %325 = dma.vmem_to_smem %s323, 16, [#allocation6], [#allocation7]
        $region16: #{gcn_res_forward.9} parent=11 // pred_fallthru
          _
        // Predicated region
        $region17: #{gcn_res_forward.9} parent=11 // pred_check
          %p326 = pneg %p227
        $region18: #{gcn_res_forward.9} parent=11 // pred_check_branch
          %328 = sbr.rel (%p326) target = $region20
        $region19: #{gcn_res_forward.9} parent=11 // pred_region
          _
        $region20: #{gcn_res_forward.9} parent=11 // pred_fallthru
          _
        // Predicated region
        $region21: #{gcn_res_forward.9} parent=11 // pred_check
          %p329 = pneg %p248
        $region22: #{gcn_res_forward.9} parent=11 // pred_check_branch
          %331 = sbr.rel (%p329) target = $region24
        $region23: #{gcn_res_forward.9} parent=11 // pred_region
          _
        $region24: #{gcn_res_forward.9} parent=11 // pred_fallthru
          _
      $region12: #{gcn_res_forward.9} parent=5 // pred_fallthru
        _
      %p332 = scmp.lt.s32.totalorder %s29, 6
      // Predicated region
      $region25: #{gcn_res_forward.9} parent=5 // pred_check
        %p333 = pneg %p332
      $region26: #{gcn_res_forward.9} parent=5 // pred_check_branch
        %335 = sbr.rel (%p333) target = $region28
      $region27: #{gcn_res_forward.9} parent=5 // pred_region
        // Predicated region
        $region29: #{gcn_res_forward.9} parent=27 // pred_check
          %p336 = pneg %p90
        $region30: #{gcn_res_forward.9} parent=27 // pred_check_branch
          %338 = sbr.rel (%p336) target = $region32
        $region31: #{gcn_res_forward.9} parent=27 // pred_region
          %s339 = sand.u32 %s80, 1
          %s340 = sand.u32 %s80, 1
          %s341 = smul.addr %s340, 512
          %s342 = scalar_lea.vmem [#allocation8], %s341
          %s343 = smul.u32 %s36, 3
          %s344 = sadd.s32 %s343, %s37
          %s345 = sld [smem:[#allocation4 + %s344]]
          %s346 = smul.u32 64, %s36
          %s347 = smul.u32 2, %s345
          %s348 = smul.addr %s346, 8
          %s349 = sadd.s32 %s347, %s348
          %s350 = smul.addr %s349, 4
          %s351 = scalar_lea.vmem %s3, %s350
          // Predicated region
          $region33: #{gcn_res_forward.9} parent=31 // pred_check
            _
          $region34: #{gcn_res_forward.9} parent=31 // pred_check_branch
            %353 = sbr.rel (0) target = $region36
          $region35: #{gcn_res_forward.9} parent=31 // pred_region
            // Predicated region
            $region37: #{gcn_res_forward.9} parent=35 // pred_check
              _
            $region38: #{gcn_res_forward.9} parent=35 // pred_check_branch
              %355 = sbr.rel (0) target = $region40
            $region39: #{gcn_res_forward.9} parent=35 // pred_region
              // Predicated region
              $region52: #{gcn_res_forward.9} parent=39 // pred_check
                _
              $region53: #{gcn_res_forward.9} parent=39 // pred_check_branch
                %496 = sbr.rel (0) target = $region55
              $region54: #{gcn_res_forward.9} parent=39 // pred_region
                loop: start=0, step=1, limit=1
                $region56: #{gcn_res_forward.9} parent=54 // loop_pre_header
                  _
                $region57: #{gcn_res_forward.9} parent=54 // loop_header
                  %s498 = sphi 0, %s502
                  %p499 = scmp.ge.s32.totalorder %s498, 1
                  %s503 = sphi %s351, %s351
                  %s504 = sphi %s342, %s342
                $region58: #{gcn_res_forward.9} parent=54 // loop_header_branch
                  %501 = sbr.rel (%p499) target = $region62
                $region59: #{gcn_res_forward.9} parent=54 // loop_body
                  %v505 = vld [vmem:[%s503] sm:$0xff]
                  %506 = vst [vmem:[%s504] sm:$0xff] %v505
                  %v507 = vld [vmem:[%s503 + $0x20] sm:$0xff]
                  %508 = vst [vmem:[%s504 + $0x8] sm:$0xff] %v507
                  %v509 = vld [vmem:[%s503 + $0x40] sm:$0xff]
                  %510 = vst [vmem:[%s504 + $0x10] sm:$0xff] %v509
                  %v511 = vld [vmem:[%s503 + $0x60] sm:$0xff]
                  %512 = vst [vmem:[%s504 + $0x18] sm:$0xff] %v511
                  %v513 = vld [vmem:[%s503 + $0x80] sm:$0xff]
                  %514 = vst [vmem:[%s504 + $0x20] sm:$0xff] %v513
                  %v515 = vld [vmem:[%s503 + $0xa0] sm:$0xff]
                  %516 = vst [vmem:[%s504 + $0x28] sm:$0xff] %v515
                  %v517 = vld [vmem:[%s503 + $0xc0] sm:$0xff]
                  %518 = vst [vmem:[%s504 + $0x30] sm:$0xff] %v517
                  %v519 = vld [vmem:[%s503 + $0xe0] sm:$0xff]
                  %520 = vst [vmem:[%s504 + $0x38] sm:$0xff] %v519
                  %v521 = vld [vmem:[%s503 + $0x100] sm:$0xff]
                  %522 = vst [vmem:[%s504 + $0x40] sm:$0xff] %v521
                  %v523 = vld [vmem:[%s503 + $0x120] sm:$0xff]
                  %524 = vst [vmem:[%s504 + $0x48] sm:$0xff] %v523
                  %v525 = vld [vmem:[%s503 + $0x140] sm:$0xff]
                  %526 = vst [vmem:[%s504 + $0x50] sm:$0xff] %v525
                  %v527 = vld [vmem:[%s503 + $0x160] sm:$0xff]
                  %528 = vst [vmem:[%s504 + $0x58] sm:$0xff] %v527
                  %v529 = vld [vmem:[%s503 + $0x180] sm:$0xff]
                  %530 = vst [vmem:[%s504 + $0x60] sm:$0xff] %v529
                  %v531 = vld [vmem:[%s503 + $0x1a0] sm:$0xff]
                  %532 = vst [vmem:[%s504 + $0x68] sm:$0xff] %v531
                  %v533 = vld [vmem:[%s503 + $0x1c0] sm:$0xff]
                  %534 = vst [vmem:[%s504 + $0x70] sm:$0xff] %v533
                  %v535 = vld [vmem:[%s503 + $0x1e0] sm:$0xff]
                  %536 = vst [vmem:[%s504 + $0x78] sm:$0xff] %v535
                  %v537 = vld [vmem:[%s503 + $0x200] sm:$0xff]
                  %538 = vst [vmem:[%s504 + $0x80] sm:$0xff] %v537
                  %v539 = vld [vmem:[%s503 + $0x220] sm:$0xff]
                  %540 = vst [vmem:[%s504 + $0x88] sm:$0xff] %v539
                  %v541 = vld [vmem:[%s503 + $0x240] sm:$0xff]
                  %542 = vst [vmem:[%s504 + $0x90] sm:$0xff] %v541
                  %v543 = vld [vmem:[%s503 + $0x260] sm:$0xff]
                  %544 = vst [vmem:[%s504 + $0x98] sm:$0xff] %v543
                  %v545 = vld [vmem:[%s503 + $0x280] sm:$0xff]
                  %546 = vst [vmem:[%s504 + $0xa0] sm:$0xff] %v545
                  %v547 = vld [vmem:[%s503 + $0x2a0] sm:$0xff]
                  %548 = vst [vmem:[%s504 + $0xa8] sm:$0xff] %v547
                  %v549 = vld [vmem:[%s503 + $0x2c0] sm:$0xff]
                  %550 = vst [vmem:[%s504 + $0xb0] sm:$0xff] %v549
                  %v551 = vld [vmem:[%s503 + $0x2e0] sm:$0xff]
                  %552 = vst [vmem:[%s504 + $0xb8] sm:$0xff] %v551
                  %v553 = vld [vmem:[%s503 + $0x300] sm:$0xff]
                  %554 = vst [vmem:[%s504 + $0xc0] sm:$0xff] %v553
                  %v555 = vld [vmem:[%s503 + $0x320] sm:$0xff]
                  %556 = vst [vmem:[%s504 + $0xc8] sm:$0xff] %v555
                  %v557 = vld [vmem:[%s503 + $0x340] sm:$0xff]
                  %558 = vst [vmem:[%s504 + $0xd0] sm:$0xff] %v557
                  %v559 = vld [vmem:[%s503 + $0x360] sm:$0xff]
                  %560 = vst [vmem:[%s504 + $0xd8] sm:$0xff] %v559
                  %v561 = vld [vmem:[%s503 + $0x380] sm:$0xff]
                  %562 = vst [vmem:[%s504 + $0xe0] sm:$0xff] %v561
                  %v563 = vld [vmem:[%s503 + $0x3a0] sm:$0xff]
                  %564 = vst [vmem:[%s504 + $0xe8] sm:$0xff] %v563
                  %v565 = vld [vmem:[%s503 + $0x3c0] sm:$0xff]
                  %566 = vst [vmem:[%s504 + $0xf0] sm:$0xff] %v565
                  %v567 = vld [vmem:[%s503 + $0x3e0] sm:$0xff]
                  %568 = vst [vmem:[%s504 + $0xf8] sm:$0xff] %v567
                  %v569 = vld [vmem:[%s503 + $0x400] sm:$0xff]
                  %570 = vst [vmem:[%s504 + $0x100] sm:$0xff] %v569
                  %v571 = vld [vmem:[%s503 + $0x420] sm:$0xff]
                  %572 = vst [vmem:[%s504 + $0x108] sm:$0xff] %v571
                  %v573 = vld [vmem:[%s503 + $0x440] sm:$0xff]
                  %574 = vst [vmem:[%s504 + $0x110] sm:$0xff] %v573
                  %v575 = vld [vmem:[%s503 + $0x460] sm:$0xff]
                  %576 = vst [vmem:[%s504 + $0x118] sm:$0xff] %v575
                  %v577 = vld [vmem:[%s503 + $0x480] sm:$0xff]
                  %578 = vst [vmem:[%s504 + $0x120] sm:$0xff] %v577
                  %v579 = vld [vmem:[%s503 + $0x4a0] sm:$0xff]
                  %580 = vst [vmem:[%s504 + $0x128] sm:$0xff] %v579
                  %v581 = vld [vmem:[%s503 + $0x4c0] sm:$0xff]
                  %582 = vst [vmem:[%s504 + $0x130] sm:$0xff] %v581
                  %v583 = vld [vmem:[%s503 + $0x4e0] sm:$0xff]
                  %584 = vst [vmem:[%s504 + $0x138] sm:$0xff] %v583
                  %v585 = vld [vmem:[%s503 + $0x500] sm:$0xff]
                  %586 = vst [vmem:[%s504 + $0x140] sm:$0xff] %v585
                  %v587 = vld [vmem:[%s503 + $0x520] sm:$0xff]
                  %588 = vst [vmem:[%s504 + $0x148] sm:$0xff] %v587
                  %v589 = vld [vmem:[%s503 + $0x540] sm:$0xff]
                  %590 = vst [vmem:[%s504 + $0x150] sm:$0xff] %v589
                  %v591 = vld [vmem:[%s503 + $0x560] sm:$0xff]
                  %592 = vst [vmem:[%s504 + $0x158] sm:$0xff] %v591
                  %v593 = vld [vmem:[%s503 + $0x580] sm:$0xff]
                  %594 = vst [vmem:[%s504 + $0x160] sm:$0xff] %v593
                  %v595 = vld [vmem:[%s503 + $0x5a0] sm:$0xff]
                  %596 = vst [vmem:[%s504 + $0x168] sm:$0xff] %v595
                  %v597 = vld [vmem:[%s503 + $0x5c0] sm:$0xff]
                  %598 = vst [vmem:[%s504 + $0x170] sm:$0xff] %v597
                  %v599 = vld [vmem:[%s503 + $0x5e0] sm:$0xff]
                  %600 = vst [vmem:[%s504 + $0x178] sm:$0xff] %v599
                  %v601 = vld [vmem:[%s503 + $0x600] sm:$0xff]
                  %602 = vst [vmem:[%s504 + $0x180] sm:$0xff] %v601
                  %v603 = vld [vmem:[%s503 + $0x620] sm:$0xff]
                  %604 = vst [vmem:[%s504 + $0x188] sm:$0xff] %v603
                  %v605 = vld [vmem:[%s503 + $0x640] sm:$0xff]
                  %606 = vst [vmem:[%s504 + $0x190] sm:$0xff] %v605
                  %v607 = vld [vmem:[%s503 + $0x660] sm:$0xff]
                  %608 = vst [vmem:[%s504 + $0x198] sm:$0xff] %v607
                  %v609 = vld [vmem:[%s503 + $0x680] sm:$0xff]
                  %610 = vst [vmem:[%s504 + $0x1a0] sm:$0xff] %v609
                  %v611 = vld [vmem:[%s503 + $0x6a0] sm:$0xff]
                  %612 = vst [vmem:[%s504 + $0x1a8] sm:$0xff] %v611
                  %v613 = vld [vmem:[%s503 + $0x6c0] sm:$0xff]
                  %614 = vst [vmem:[%s504 + $0x1b0] sm:$0xff] %v613
                  %v615 = vld [vmem:[%s503 + $0x6e0] sm:$0xff]
                  %616 = vst [vmem:[%s504 + $0x1b8] sm:$0xff] %v615
                  %v617 = vld [vmem:[%s503 + $0x700] sm:$0xff]
                  %618 = vst [vmem:[%s504 + $0x1c0] sm:$0xff] %v617
                  %v619 = vld [vmem:[%s503 + $0x720] sm:$0xff]
                  %620 = vst [vmem:[%s504 + $0x1c8] sm:$0xff] %v619
                  %v621 = vld [vmem:[%s503 + $0x740] sm:$0xff]
                  %622 = vst [vmem:[%s504 + $0x1d0] sm:$0xff] %v621
                  %v623 = vld [vmem:[%s503 + $0x760] sm:$0xff]
                  %624 = vst [vmem:[%s504 + $0x1d8] sm:$0xff] %v623
                  %v625 = vld [vmem:[%s503 + $0x780] sm:$0xff]
                  %626 = vst [vmem:[%s504 + $0x1e0] sm:$0xff] %v625
                  %v627 = vld [vmem:[%s503 + $0x7a0] sm:$0xff]
                  %628 = vst [vmem:[%s504 + $0x1e8] sm:$0xff] %v627
                  %v629 = vld [vmem:[%s503 + $0x7c0] sm:$0xff]
                  %630 = vst [vmem:[%s504 + $0x1f0] sm:$0xff] %v629
                  %v631 = vld [vmem:[%s503 + $0x7e0] sm:$0xff]
                  %632 = vst [vmem:[%s504 + $0x1f8] sm:$0xff] %v631
                $region60: #{gcn_res_forward.9} parent=54 // loop_footer
                  %s502 = sadd.s32 1, %s498
                $region61: #{gcn_res_forward.9} parent=54 // loop_footer_branch
                  %497 = sbr.rel target = $region57
                $region62: #{gcn_res_forward.9} parent=54 // loop_exit
                  _
              $region55: #{gcn_res_forward.9} parent=39 // pred_fallthru
                _
              // Predicated region
              $region63: #{gcn_res_forward.9} parent=39 // pred_check
                _
              $region64: #{gcn_res_forward.9} parent=39 // pred_check_branch
                %634 = sbr.rel target = $region66
              $region65: #{gcn_res_forward.9} parent=39 // pred_region
                _
              $region66: #{gcn_res_forward.9} parent=39 // pred_fallthru
                _
            $region40: #{gcn_res_forward.9} parent=35 // pred_fallthru
              _
            // Predicated region
            $region41: #{gcn_res_forward.9} parent=35 // pred_check
              _
            $region42: #{gcn_res_forward.9} parent=35 // pred_check_branch
              %357 = sbr.rel target = $region44
            $region43: #{gcn_res_forward.9} parent=35 // pred_region
              loop: start=0, step=1, limit=1
              $region45: #{gcn_res_forward.9} parent=43 // loop_pre_header
                _
              $region46: #{gcn_res_forward.9} parent=43 // loop_header
                %s360 = sphi 0, %s364
                %p361 = scmp.ge.s32.totalorder %s360, 1
                %s365 = sphi %s351, %s351
                %s366 = sphi %s342, %s342
              $region47: #{gcn_res_forward.9} parent=43 // loop_header_branch
                %363 = sbr.rel (%p361) target = $region51
              $region48: #{gcn_res_forward.9} parent=43 // loop_body
                %v367 = vld [vmem:[%s365] sm:$0xff]
                %368 = vst [vmem:[%s366] sm:$0xff] %v367
                %v369 = vld [vmem:[%s365 + $0x20] sm:$0xff]
                %370 = vst [vmem:[%s366 + $0x8] sm:$0xff] %v369
                %v371 = vld [vmem:[%s365 + $0x40] sm:$0xff]
                %372 = vst [vmem:[%s366 + $0x10] sm:$0xff] %v371
                %v373 = vld [vmem:[%s365 + $0x60] sm:$0xff]
                %374 = vst [vmem:[%s366 + $0x18] sm:$0xff] %v373
                %v375 = vld [vmem:[%s365 + $0x80] sm:$0xff]
                %376 = vst [vmem:[%s366 + $0x20] sm:$0xff] %v375
                %v377 = vld [vmem:[%s365 + $0xa0] sm:$0xff]
                %378 = vst [vmem:[%s366 + $0x28] sm:$0xff] %v377
                %v379 = vld [vmem:[%s365 + $0xc0] sm:$0xff]
                %380 = vst [vmem:[%s366 + $0x30] sm:$0xff] %v379
                %v381 = vld [vmem:[%s365 + $0xe0] sm:$0xff]
                %382 = vst [vmem:[%s366 + $0x38] sm:$0xff] %v381
                %v383 = vld [vmem:[%s365 + $0x100] sm:$0xff]
                %384 = vst [vmem:[%s366 + $0x40] sm:$0xff] %v383
                %v385 = vld [vmem:[%s365 + $0x120] sm:$0xff]
                %386 = vst [vmem:[%s366 + $0x48] sm:$0xff] %v385
                %v387 = vld [vmem:[%s365 + $0x140] sm:$0xff]
                %388 = vst [vmem:[%s366 + $0x50] sm:$0xff] %v387
                %v389 = vld [vmem:[%s365 + $0x160] sm:$0xff]
                %390 = vst [vmem:[%s366 + $0x58] sm:$0xff] %v389
                %v391 = vld [vmem:[%s365 + $0x180] sm:$0xff]
                %392 = vst [vmem:[%s366 + $0x60] sm:$0xff] %v391
                %v393 = vld [vmem:[%s365 + $0x1a0] sm:$0xff]
                %394 = vst [vmem:[%s366 + $0x68] sm:$0xff] %v393
                %v395 = vld [vmem:[%s365 + $0x1c0] sm:$0xff]
                %396 = vst [vmem:[%s366 + $0x70] sm:$0xff] %v395
                %v397 = vld [vmem:[%s365 + $0x1e0] sm:$0xff]
                %398 = vst [vmem:[%s366 + $0x78] sm:$0xff] %v397
                %v399 = vld [vmem:[%s365 + $0x200] sm:$0xff]
                %400 = vst [vmem:[%s366 + $0x80] sm:$0xff] %v399
                %v401 = vld [vmem:[%s365 + $0x220] sm:$0xff]
                %402 = vst [vmem:[%s366 + $0x88] sm:$0xff] %v401
                %v403 = vld [vmem:[%s365 + $0x240] sm:$0xff]
                %404 = vst [vmem:[%s366 + $0x90] sm:$0xff] %v403
                %v405 = vld [vmem:[%s365 + $0x260] sm:$0xff]
                %406 = vst [vmem:[%s366 + $0x98] sm:$0xff] %v405
                %v407 = vld [vmem:[%s365 + $0x280] sm:$0xff]
                %408 = vst [vmem:[%s366 + $0xa0] sm:$0xff] %v407
                %v409 = vld [vmem:[%s365 + $0x2a0] sm:$0xff]
                %410 = vst [vmem:[%s366 + $0xa8] sm:$0xff] %v409
                %v411 = vld [vmem:[%s365 + $0x2c0] sm:$0xff]
                %412 = vst [vmem:[%s366 + $0xb0] sm:$0xff] %v411
                %v413 = vld [vmem:[%s365 + $0x2e0] sm:$0xff]
                %414 = vst [vmem:[%s366 + $0xb8] sm:$0xff] %v413
                %v415 = vld [vmem:[%s365 + $0x300] sm:$0xff]
                %416 = vst [vmem:[%s366 + $0xc0] sm:$0xff] %v415
                %v417 = vld [vmem:[%s365 + $0x320] sm:$0xff]
                %418 = vst [vmem:[%s366 + $0xc8] sm:$0xff] %v417
                %v419 = vld [vmem:[%s365 + $0x340] sm:$0xff]
                %420 = vst [vmem:[%s366 + $0xd0] sm:$0xff] %v419
                %v421 = vld [vmem:[%s365 + $0x360] sm:$0xff]
                %422 = vst [vmem:[%s366 + $0xd8] sm:$0xff] %v421
                %v423 = vld [vmem:[%s365 + $0x380] sm:$0xff]
                %424 = vst [vmem:[%s366 + $0xe0] sm:$0xff] %v423
                %v425 = vld [vmem:[%s365 + $0x3a0] sm:$0xff]
                %426 = vst [vmem:[%s366 + $0xe8] sm:$0xff] %v425
                %v427 = vld [vmem:[%s365 + $0x3c0] sm:$0xff]
                %428 = vst [vmem:[%s366 + $0xf0] sm:$0xff] %v427
                %v429 = vld [vmem:[%s365 + $0x3e0] sm:$0xff]
                %430 = vst [vmem:[%s366 + $0xf8] sm:$0xff] %v429
                %v431 = vld [vmem:[%s365 + $0x400] sm:$0xff]
                %432 = vst [vmem:[%s366 + $0x100] sm:$0xff] %v431
                %v433 = vld [vmem:[%s365 + $0x420] sm:$0xff]
                %434 = vst [vmem:[%s366 + $0x108] sm:$0xff] %v433
                %v435 = vld [vmem:[%s365 + $0x440] sm:$0xff]
                %436 = vst [vmem:[%s366 + $0x110] sm:$0xff] %v435
                %v437 = vld [vmem:[%s365 + $0x460] sm:$0xff]
                %438 = vst [vmem:[%s366 + $0x118] sm:$0xff] %v437
                %v439 = vld [vmem:[%s365 + $0x480] sm:$0xff]
                %440 = vst [vmem:[%s366 + $0x120] sm:$0xff] %v439
                %v441 = vld [vmem:[%s365 + $0x4a0] sm:$0xff]
                %442 = vst [vmem:[%s366 + $0x128] sm:$0xff] %v441
                %v443 = vld [vmem:[%s365 + $0x4c0] sm:$0xff]
                %444 = vst [vmem:[%s366 + $0x130] sm:$0xff] %v443
                %v445 = vld [vmem:[%s365 + $0x4e0] sm:$0xff]
                %446 = vst [vmem:[%s366 + $0x138] sm:$0xff] %v445
                %v447 = vld [vmem:[%s365 + $0x500] sm:$0xff]
                %448 = vst [vmem:[%s366 + $0x140] sm:$0xff] %v447
                %v449 = vld [vmem:[%s365 + $0x520] sm:$0xff]
                %450 = vst [vmem:[%s366 + $0x148] sm:$0xff] %v449
                %v451 = vld [vmem:[%s365 + $0x540] sm:$0xff]
                %452 = vst [vmem:[%s366 + $0x150] sm:$0xff] %v451
                %v453 = vld [vmem:[%s365 + $0x560] sm:$0xff]
                %454 = vst [vmem:[%s366 + $0x158] sm:$0xff] %v453
                %v455 = vld [vmem:[%s365 + $0x580] sm:$0xff]
                %456 = vst [vmem:[%s366 + $0x160] sm:$0xff] %v455
                %v457 = vld [vmem:[%s365 + $0x5a0] sm:$0xff]
                %458 = vst [vmem:[%s366 + $0x168] sm:$0xff] %v457
                %v459 = vld [vmem:[%s365 + $0x5c0] sm:$0xff]
                %460 = vst [vmem:[%s366 + $0x170] sm:$0xff] %v459
                %v461 = vld [vmem:[%s365 + $0x5e0] sm:$0xff]
                %462 = vst [vmem:[%s366 + $0x178] sm:$0xff] %v461
                %v463 = vld [vmem:[%s365 + $0x600] sm:$0xff]
                %464 = vst [vmem:[%s366 + $0x180] sm:$0xff] %v463
                %v465 = vld [vmem:[%s365 + $0x620] sm:$0xff]
                %466 = vst [vmem:[%s366 + $0x188] sm:$0xff] %v465
                %v467 = vld [vmem:[%s365 + $0x640] sm:$0xff]
                %468 = vst [vmem:[%s366 + $0x190] sm:$0xff] %v467
                %v469 = vld [vmem:[%s365 + $0x660] sm:$0xff]
                %470 = vst [vmem:[%s366 + $0x198] sm:$0xff] %v469
                %v471 = vld [vmem:[%s365 + $0x680] sm:$0xff]
                %472 = vst [vmem:[%s366 + $0x1a0] sm:$0xff] %v471
                %v473 = vld [vmem:[%s365 + $0x6a0] sm:$0xff]
                %474 = vst [vmem:[%s366 + $0x1a8] sm:$0xff] %v473
                %v475 = vld [vmem:[%s365 + $0x6c0] sm:$0xff]
                %476 = vst [vmem:[%s366 + $0x1b0] sm:$0xff] %v475
                %v477 = vld [vmem:[%s365 + $0x6e0] sm:$0xff]
                %478 = vst [vmem:[%s366 + $0x1b8] sm:$0xff] %v477
                %v479 = vld [vmem:[%s365 + $0x700] sm:$0xff]
                %480 = vst [vmem:[%s366 + $0x1c0] sm:$0xff] %v479
                %v481 = vld [vmem:[%s365 + $0x720] sm:$0xff]
                %482 = vst [vmem:[%s366 + $0x1c8] sm:$0xff] %v481
                %v483 = vld [vmem:[%s365 + $0x740] sm:$0xff]
                %484 = vst [vmem:[%s366 + $0x1d0] sm:$0xff] %v483
                %v485 = vld [vmem:[%s365 + $0x760] sm:$0xff]
                %486 = vst [vmem:[%s366 + $0x1d8] sm:$0xff] %v485
                %v487 = vld [vmem:[%s365 + $0x780] sm:$0xff]
                %488 = vst [vmem:[%s366 + $0x1e0] sm:$0xff] %v487
                %v489 = vld [vmem:[%s365 + $0x7a0] sm:$0xff]
                %490 = vst [vmem:[%s366 + $0x1e8] sm:$0xff] %v489
                %v491 = vld [vmem:[%s365 + $0x7c0] sm:$0xff]
                %492 = vst [vmem:[%s366 + $0x1f0] sm:$0xff] %v491
                %v493 = vld [vmem:[%s365 + $0x7e0] sm:$0xff]
                %494 = vst [vmem:[%s366 + $0x1f8] sm:$0xff] %v493
              $region49: #{gcn_res_forward.9} parent=43 // loop_footer
                %s364 = sadd.s32 1, %s360
              $region50: #{gcn_res_forward.9} parent=43 // loop_footer_branch
                %359 = sbr.rel target = $region46
              $region51: #{gcn_res_forward.9} parent=43 // loop_exit
                _
            $region44: #{gcn_res_forward.9} parent=35 // pred_fallthru
              _
          $region36: #{gcn_res_forward.9} parent=31 // pred_fallthru
            _
          %635 = vnop
        $region32: #{gcn_res_forward.9} parent=27 // pred_fallthru
          _
        // Predicated region
        $region67: #{gcn_res_forward.9} parent=27 // pred_check
          %p636 = pneg %p122
        $region68: #{gcn_res_forward.9} parent=27 // pred_check_branch
          %638 = sbr.rel (%p636) target = $region70
        $region69: #{gcn_res_forward.9} parent=27 // pred_region
          %s639 = smul.u32 %s36, 3
          %s640 = sadd.s32 %s639, %s37
          %s641 = sld [smem:[#allocation4 + %s640]]
          %s642 = smul.u32 32, %s641
          %p643 = scmp.lt.s32.totalorder %s642, 127
          %s644 = scalar_select %p643, %s642, 127
          %s645 = smul.addr %s644, 4
          %s646 = scalar_lea.vmem %s4, %s645
          %s647 = smul.u32 %s36, 3
          %s648 = sadd.s32 %s647, %s37
          %s649 = sld [smem:[#allocation4 + %s648]]
          %s650 = smul.u32 32, %s649
        $region70: #{gcn_res_forward.9} parent=27 // pred_fallthru
          _
        // Predicated region
        $region71: #{gcn_res_forward.9} parent=27 // pred_check
          %p651 = pneg %p148
        $region72: #{gcn_res_forward.9} parent=27 // pred_check_branch
          %653 = sbr.rel (%p651) target = $region74
        $region73: #{gcn_res_forward.9} parent=27 // pred_region
          %s654 = smul.u32 64, %s36
          %p655 = scmp.lt.s32.totalorder %s654, 127
          %s656 = scalar_select %p655, %s654, 127
          %s657 = smul.addr %s656, 4
          %s658 = scalar_lea.vmem %s5, %s657
          %s659 = smul.u32 64, %s36
        $region74: #{gcn_res_forward.9} parent=27 // pred_fallthru
          _
        // Predicated region
        $region75: #{gcn_res_forward.9} parent=27 // pred_check
          %p660 = pneg %p174
        $region76: #{gcn_res_forward.9} parent=27 // pred_check_branch
          %662 = sbr.rel (%p660) target = $region78
        $region77: #{gcn_res_forward.9} parent=27 // pred_region
          %s663 = smul.u32 64, %s36
          %p664 = scmp.lt.s32.totalorder %s663, 127
          %s665 = scalar_select %p664, %s663, 127
          %s666 = smul.addr %s665, 4
          %s667 = scalar_lea.vmem %s6, %s666
          %s668 = smul.u32 64, %s36
        $region78: #{gcn_res_forward.9} parent=27 // pred_fallthru
          _
        // Predicated region
        $region79: #{gcn_res_forward.9} parent=27 // pred_check
          %p669 = pneg %p200
        $region80: #{gcn_res_forward.9} parent=27 // pred_check_branch
          %671 = sbr.rel (%p669) target = $region82
        $region81: #{gcn_res_forward.9} parent=27 // pred_region
          %s672 = smul.u32 64, %s36
          %p673 = scmp.lt.s32.totalorder %s672, 127
          %s674 = scalar_select %p673, %s672, 127
          %s675 = smul.addr %s674, 8
          %s676 = scalar_lea.vmem %s7, %s675
          %s677 = smul.u32 64, %s36
        $region82: #{gcn_res_forward.9} parent=27 // pred_fallthru
          _
      $region28: #{gcn_res_forward.9} parent=5 // pred_fallthru
        _
      %p678 = scmp.le.s32.totalorder 1, %s29
      %p679 = scmp.lt.s32.totalorder %s29, 7
      %p680 = pnand %p678, %p679
      %p681 = pneg %p680
      // Predicated region
      $region83: #{gcn_res_forward.9} parent=5 // pred_check
        _
      $region84: #{gcn_res_forward.9} parent=5 // pred_check_branch
        %683 = sbr.rel (%p680) target = $region86
      $region85: #{gcn_res_forward.9} parent=5 // pred_region
        %s684 = ssub.s32 %s29, 1
        // Predicated region
        $region87: #{gcn_res_forward.9} parent=85 // pred_check
          %p685 = pneg %p62
        $region88: #{gcn_res_forward.9} parent=85 // pred_check_branch
          %687 = sbr.rel (%p685) target = $region90
        $region89: #{gcn_res_forward.9} parent=85 // pred_region
          %688 = dma.done [#allocation7], 16
        $region90: #{gcn_res_forward.9} parent=85 // pred_fallthru
          _
        %s689 = sand.u32 %s83, 1
        %s690 = sand.u32 %s83, 1
        %s691 = smul.addr %s690, 512
        %s692 = scalar_lea.vmem [#allocation8], %s691
        // Predicated region
        $region91: #{gcn_res_forward.9} parent=85 // pred_check
          %p693 = pneg %p96
        $region92: #{gcn_res_forward.9} parent=85 // pred_check_branch
          %695 = sbr.rel (%p693) target = $region94
        $region93: #{gcn_res_forward.9} parent=85 // pred_region
          _
        $region94: #{gcn_res_forward.9} parent=85 // pred_fallthru
          _
        %696 = sfence
        %p697 = pneg %p62
        %p698 = pneg %p59
        %s699 = sand.u32 %s83, 1
        %s700 = sand.u32 %s83, 1
        %s701 = smul.addr %s700, 512
        %s702 = scalar_lea.vmem [#allocation8], %s701
        %p703 = pneg %p96
        %p704 = pneg %p93
        %s705 = smul.u32 %s38, 3
        %s706 = sadd.s32 %s705, %s39
        %s707 = sld [smem:[#allocation4 + %s706]]
        %s708 = smul.u32 32, %s707
        %p709 = scmp.lt.s32.totalorder %s708, 127
        %s710 = scalar_select %p709, %s708, 127
        %s711 = smul.addr %s710, 4
        %s712 = scalar_lea.vmem %s4, %s711
        %p713 = pneg %p128
        %p714 = pneg %p125
        %s715 = smul.u32 64, %s38
        %p716 = scmp.lt.s32.totalorder %s715, 127
        %s717 = scalar_select %p716, %s715, 127
        %s718 = smul.addr %s717, 4
        %s719 = scalar_lea.vmem %s5, %s718
        %p720 = pneg %p154
        %p721 = pneg %p151
        %s722 = smul.u32 64, %s38
        %p723 = scmp.lt.s32.totalorder %s722, 127
        %s724 = scalar_select %p723, %s722, 127
        %s725 = smul.addr %s724, 4
        %s726 = scalar_lea.vmem %s6, %s725
        %p727 = pneg %p180
        %p728 = pneg %p177
        %s729 = smul.u32 64, %s38
        %p730 = scmp.lt.s32.totalorder %s729, 127
        %s731 = scalar_select %p730, %s729, 127
        %s732 = smul.addr %s731, 8
        %s733 = scalar_lea.vmem %s7, %s732
        %p734 = pneg %p206
        %p735 = pneg %p203
        %p736 = pneg %p227
        %p737 = pneg %p224
        %p738 = pneg %p248
        %p739 = pneg %p245
        %p740 = pneg %p274
        %p741 = pneg %p271
        %s742 = smul.u32 64, %s38
        %p743 = scmp.lt.s32.totalorder %s742, 127
        %s744 = scalar_select %p743, %s742, 127
        %s745 = smul.addr %s744, 4
        %s746 = scalar_lea.vmem %s10, %s745
        %p747 = pneg %p300
        %p748 = pneg %p297
        %s749 = smul.u32 64, %s38
        %p750 = scmp.lt.s32.totalorder %s749, 127
        %s751 = scalar_select %p750, %s749, 127
        %s752 = smul.addr %s751, 8
        %s753 = scalar_lea.vmem %s11, %s752
        %s754 = smul.u32 %s38, 3
        %s755 = sadd.s32 %s754, %s39
        %s756 = sld [smem:[#allocation4 + %s755]]
        %s757 = smul.u32 64, %s38
        %s758 = smul.u32 2, %s756
        %s759 = smul.u32 %s38, 3
        %s760 = sadd.s32 %s759, %s39
        %s761 = sld [smem:[#allocation4 + %s760]]
        %s762 = smul.u32 32, %s761
        %p763 = scmp.lt.s32.totalorder %s762, 127
        %s764 = scalar_select %p763, %s762, 127
        %s765 = smul.addr %s764, 4
        %s766 = scalar_lea.vmem %s4, %s765
        %s767 = smul.u32 %s38, 3
        %s768 = sadd.s32 %s767, %s39
        %s769 = sld [smem:[#allocation4 + %s768]]
        %s770 = smul.u32 32, %s769
        %s771 = smul.u32 64, %s38
        %p772 = scmp.lt.s32.totalorder %s771, 127
        %s773 = scalar_select %p772, %s771, 127
        %s774 = smul.addr %s773, 4
        %s775 = scalar_lea.vmem %s5, %s774
        %s776 = smul.u32 64, %s38
        %s777 = smul.u32 64, %s38
        %p778 = scmp.lt.s32.totalorder %s777, 127
        %s779 = scalar_select %p778, %s777, 127
        %s780 = smul.addr %s779, 4
        %s781 = scalar_lea.vmem %s6, %s780
        %s782 = smul.u32 64, %s38
        %s783 = smul.u32 64, %s38
        %p784 = scmp.lt.s32.totalorder %s783, 127
        %s785 = scalar_select %p784, %s783, 127
        %s786 = smul.addr %s785, 8
        %s787 = scalar_lea.vmem %s7, %s786
        %s788 = smul.u32 64, %s38
        %s789 = smul.u32 64, %s38
        %p790 = scmp.lt.s32.totalorder %s789, 127
        %s791 = scalar_select %p790, %s789, 127
        %s792 = smul.addr %s791, 4
        %s793 = scalar_lea.vmem %s10, %s792
        %s794 = smul.u32 64, %s38
        %s795 = smul.u32 64, %s38
        %p796 = scmp.lt.s32.totalorder %s795, 127
        %s797 = scalar_select %p796, %s795, 127
        %s798 = smul.addr %s797, 8
        %s799 = scalar_lea.vmem %s11, %s798
        %s800 = smul.u32 64, %s38
        %p802 = scmp.eq.s32.totalorder %s39, 0
        // Predicated region
        $region95: #{gcn_res_forward.9} parent=85 // pred_check
          %p803 = pneg %p802
        $region96: #{gcn_res_forward.9} parent=85 // pred_check_branch
          %805 = sbr.rel (%p803) target = $region98
        $region97: #{gcn_res_forward.9} parent=85 // pred_region
          %806 = vst [vmem:[#allocation2] sm:$0xff] 0.0
          %807 = vst [vmem:[#allocation2 + $0x8] sm:$0xff] 0.0
          %808 = vst [vmem:[#allocation2 + $0x10] sm:$0xff] 0.0
          %809 = vst [vmem:[#allocation2 + $0x18] sm:$0xff] 0.0
          %810 = vst [vmem:[#allocation2 + $0x20] sm:$0xff] 0.0
          %811 = vst [vmem:[#allocation2 + $0x28] sm:$0xff] 0.0
          %812 = vst [vmem:[#allocation2 + $0x30] sm:$0xff] 0.0
          %813 = vst [vmem:[#allocation2 + $0x38] sm:$0xff] 0.0
          %814 = vst [vmem:[#allocation2 + $0x40] sm:$0xff] 0.0
          %815 = vst [vmem:[#allocation2 + $0x48] sm:$0xff] 0.0
          %816 = vst [vmem:[#allocation2 + $0x50] sm:$0xff] 0.0
          %817 = vst [vmem:[#allocation2 + $0x58] sm:$0xff] 0.0
          %818 = vst [vmem:[#allocation2 + $0x60] sm:$0xff] 0.0
          %819 = vst [vmem:[#allocation2 + $0x68] sm:$0xff] 0.0
          %820 = vst [vmem:[#allocation2 + $0x70] sm:$0xff] 0.0
          %821 = vst [vmem:[#allocation2 + $0x78] sm:$0xff] 0.0
          %822 = vst [vmem:[#allocation2 + $0x80] sm:$0xff] 0.0
          %823 = vst [vmem:[#allocation2 + $0x88] sm:$0xff] 0.0
          %824 = vst [vmem:[#allocation2 + $0x90] sm:$0xff] 0.0
          %825 = vst [vmem:[#allocation2 + $0x98] sm:$0xff] 0.0
          %826 = vst [vmem:[#allocation2 + $0xa0] sm:$0xff] 0.0
          %827 = vst [vmem:[#allocation2 + $0xa8] sm:$0xff] 0.0
          %828 = vst [vmem:[#allocation2 + $0xb0] sm:$0xff] 0.0
          %829 = vst [vmem:[#allocation2 + $0xb8] sm:$0xff] 0.0
          %830 = vst [vmem:[#allocation2 + $0xc0] sm:$0xff] 0.0
          %831 = vst [vmem:[#allocation2 + $0xc8] sm:$0xff] 0.0
          %832 = vst [vmem:[#allocation2 + $0xd0] sm:$0xff] 0.0
          %833 = vst [vmem:[#allocation2 + $0xd8] sm:$0xff] 0.0
          %834 = vst [vmem:[#allocation2 + $0xe0] sm:$0xff] 0.0
          %835 = vst [vmem:[#allocation2 + $0xe8] sm:$0xff] 0.0
          %836 = vst [vmem:[#allocation2 + $0xf0] sm:$0xff] 0.0
          %837 = vst [vmem:[#allocation2 + $0xf8] sm:$0xff] 0.0
          %838 = vst [vmem:[#allocation2 + $0x100] sm:$0xff] 0.0
          %839 = vst [vmem:[#allocation2 + $0x108] sm:$0xff] 0.0
          %840 = vst [vmem:[#allocation2 + $0x110] sm:$0xff] 0.0
          %841 = vst [vmem:[#allocation2 + $0x118] sm:$0xff] 0.0
          %842 = vst [vmem:[#allocation2 + $0x120] sm:$0xff] 0.0
          %843 = vst [vmem:[#allocation2 + $0x128] sm:$0xff] 0.0
          %844 = vst [vmem:[#allocation2 + $0x130] sm:$0xff] 0.0
          %845 = vst [vmem:[#allocation2 + $0x138] sm:$0xff] 0.0
          %846 = vst [vmem:[#allocation2 + $0x140] sm:$0xff] 0.0
          %847 = vst [vmem:[#allocation2 + $0x148] sm:$0xff] 0.0
          %848 = vst [vmem:[#allocation2 + $0x150] sm:$0xff] 0.0
          %849 = vst [vmem:[#allocation2 + $0x158] sm:$0xff] 0.0
          %850 = vst [vmem:[#allocation2 + $0x160] sm:$0xff] 0.0
          %851 = vst [vmem:[#allocation2 + $0x168] sm:$0xff] 0.0
          %852 = vst [vmem:[#allocation2 + $0x170] sm:$0xff] 0.0
          %853 = vst [vmem:[#allocation2 + $0x178] sm:$0xff] 0.0
          %854 = vst [vmem:[#allocation2 + $0x180] sm:$0xff] 0.0
          %855 = vst [vmem:[#allocation2 + $0x188] sm:$0xff] 0.0
          %856 = vst [vmem:[#allocation2 + $0x190] sm:$0xff] 0.0
          %857 = vst [vmem:[#allocation2 + $0x198] sm:$0xff] 0.0
          %858 = vst [vmem:[#allocation2 + $0x1a0] sm:$0xff] 0.0
          %859 = vst [vmem:[#allocation2 + $0x1a8] sm:$0xff] 0.0
          %860 = vst [vmem:[#allocation2 + $0x1b0] sm:$0xff] 0.0
          %861 = vst [vmem:[#allocation2 + $0x1b8] sm:$0xff] 0.0
          %862 = vst [vmem:[#allocation2 + $0x1c0] sm:$0xff] 0.0
          %863 = vst [vmem:[#allocation2 + $0x1c8] sm:$0xff] 0.0
          %864 = vst [vmem:[#allocation2 + $0x1d0] sm:$0xff] 0.0
          %865 = vst [vmem:[#allocation2 + $0x1d8] sm:$0xff] 0.0
          %866 = vst [vmem:[#allocation2 + $0x1e0] sm:$0xff] 0.0
          %867 = vst [vmem:[#allocation2 + $0x1e8] sm:$0xff] 0.0
          %868 = vst [vmem:[#allocation2 + $0x1f0] sm:$0xff] 0.0
          %869 = vst [vmem:[#allocation2 + $0x1f8] sm:$0xff] 0.0
        $region98: #{gcn_res_forward.9} parent=85 // pred_fallthru
          _
        %s870 = sld [smem:[#allocation5 + %s38]]
        %p871 = scmp.lt.s32.totalorder %s39, %s870
        // Predicated region
        $region99: #{gcn_res_forward.9} parent=85 // pred_check
          %p872 = pneg %p871
        $region100: #{gcn_res_forward.9} parent=85 // pred_check_branch
          %874 = sbr.rel (%p872) target = $region102
        $region101: #{gcn_res_forward.9} parent=85 // pred_region
          %v875 = vld [vmem:[#allocation2] sm:$0xff]
          %v876 = vld [vmem:[#allocation2 + $0x8] sm:$0xff]
          %v877 = vld [vmem:[#allocation2 + $0x10] sm:$0xff]
          %v878 = vld [vmem:[#allocation2 + $0x18] sm:$0xff]
          %v879 = vld [vmem:[#allocation2 + $0x20] sm:$0xff]
          %v880 = vld [vmem:[#allocation2 + $0x28] sm:$0xff]
          %v881 = vld [vmem:[#allocation2 + $0x30] sm:$0xff]
          %v882 = vld [vmem:[#allocation2 + $0x38] sm:$0xff]
          %v883 = vld [vmem:[#allocation2 + $0x40] sm:$0xff]
          %v884 = vld [vmem:[#allocation2 + $0x48] sm:$0xff]
          %v885 = vld [vmem:[#allocation2 + $0x50] sm:$0xff]
          %v886 = vld [vmem:[#allocation2 + $0x58] sm:$0xff]
          %v887 = vld [vmem:[#allocation2 + $0x60] sm:$0xff]
          %v888 = vld [vmem:[#allocation2 + $0x68] sm:$0xff]
          %v889 = vld [vmem:[#allocation2 + $0x70] sm:$0xff]
          %v890 = vld [vmem:[#allocation2 + $0x78] sm:$0xff]
          %v891 = vld [vmem:[#allocation2 + $0x80] sm:$0xff]
          %v892 = vld [vmem:[#allocation2 + $0x88] sm:$0xff]
          %v893 = vld [vmem:[#allocation2 + $0x90] sm:$0xff]
          %v894 = vld [vmem:[#allocation2 + $0x98] sm:$0xff]
          %v895 = vld [vmem:[#allocation2 + $0xa0] sm:$0xff]
          %v896 = vld [vmem:[#allocation2 + $0xa8] sm:$0xff]
          %v897 = vld [vmem:[#allocation2 + $0xb0] sm:$0xff]
          %v898 = vld [vmem:[#allocation2 + $0xb8] sm:$0xff]
          %v899 = vld [vmem:[#allocation2 + $0xc0] sm:$0xff]
          %v900 = vld [vmem:[#allocation2 + $0xc8] sm:$0xff]
          %v901 = vld [vmem:[#allocation2 + $0xd0] sm:$0xff]
          %v902 = vld [vmem:[#allocation2 + $0xd8] sm:$0xff]
          %v903 = vld [vmem:[#allocation2 + $0xe0] sm:$0xff]
          %v904 = vld [vmem:[#allocation2 + $0xe8] sm:$0xff]
          %v905 = vld [vmem:[#allocation2 + $0xf0] sm:$0xff]
          %v906 = vld [vmem:[#allocation2 + $0xf8] sm:$0xff]
          %v907 = vld [vmem:[#allocation2 + $0x100] sm:$0xff]
          %v908 = vld [vmem:[#allocation2 + $0x108] sm:$0xff]
          %v909 = vld [vmem:[#allocation2 + $0x110] sm:$0xff]
          %v910 = vld [vmem:[#allocation2 + $0x118] sm:$0xff]
          %v911 = vld [vmem:[#allocation2 + $0x120] sm:$0xff]
          %v912 = vld [vmem:[#allocation2 + $0x128] sm:$0xff]
          %v913 = vld [vmem:[#allocation2 + $0x130] sm:$0xff]
          %v914 = vld [vmem:[#allocation2 + $0x138] sm:$0xff]
          %v915 = vld [vmem:[#allocation2 + $0x140] sm:$0xff]
          %v916 = vld [vmem:[#allocation2 + $0x148] sm:$0xff]
          %v917 = vld [vmem:[#allocation2 + $0x150] sm:$0xff]
          %v918 = vld [vmem:[#allocation2 + $0x158] sm:$0xff]
          %v919 = vld [vmem:[#allocation2 + $0x160] sm:$0xff]
          %v920 = vld [vmem:[#allocation2 + $0x168] sm:$0xff]
          %v921 = vld [vmem:[#allocation2 + $0x170] sm:$0xff]
          %v922 = vld [vmem:[#allocation2 + $0x178] sm:$0xff]
          %v923 = vld [vmem:[#allocation2 + $0x180] sm:$0xff]
          %v924 = vld [vmem:[#allocation2 + $0x188] sm:$0xff]
          %v925 = vld [vmem:[#allocation2 + $0x190] sm:$0xff]
          %v926 = vld [vmem:[#allocation2 + $0x198] sm:$0xff]
          %v927 = vld [vmem:[#allocation2 + $0x1a0] sm:$0xff]
          %v928 = vld [vmem:[#allocation2 + $0x1a8] sm:$0xff]
          %v929 = vld [vmem:[#allocation2 + $0x1b0] sm:$0xff]
          %v930 = vld [vmem:[#allocation2 + $0x1b8] sm:$0xff]
          %v931 = vld [vmem:[#allocation2 + $0x1c0] sm:$0xff]
          %v932 = vld [vmem:[#allocation2 + $0x1c8] sm:$0xff]
          %v933 = vld [vmem:[#allocation2 + $0x1d0] sm:$0xff]
          %v934 = vld [vmem:[#allocation2 + $0x1d8] sm:$0xff]
          %v935 = vld [vmem:[#allocation2 + $0x1e0] sm:$0xff]
          %v936 = vld [vmem:[#allocation2 + $0x1e8] sm:$0xff]
          %v937 = vld [vmem:[#allocation2 + $0x1f0] sm:$0xff]
          %v938 = vld [vmem:[#allocation2 + $0x1f8] sm:$0xff]
          %v939 = vld [vmem:[%s692] sm:$0xff]
          %v940 = vld [vmem:[%s692 + $0x8] sm:$0xff]
          %v941 = vld [vmem:[%s692 + $0x10] sm:$0xff]
          %v942 = vld [vmem:[%s692 + $0x18] sm:$0xff]
          %v943 = vld [vmem:[%s692 + $0x20] sm:$0xff]
          %v944 = vld [vmem:[%s692 + $0x28] sm:$0xff]
          %v945 = vld [vmem:[%s692 + $0x30] sm:$0xff]
          %v946 = vld [vmem:[%s692 + $0x38] sm:$0xff]
          %v947 = vld [vmem:[%s692 + $0x40] sm:$0xff]
          %v948 = vld [vmem:[%s692 + $0x48] sm:$0xff]
          %v949 = vld [vmem:[%s692 + $0x50] sm:$0xff]
          %v950 = vld [vmem:[%s692 + $0x58] sm:$0xff]
          %v951 = vld [vmem:[%s692 + $0x60] sm:$0xff]
          %v952 = vld [vmem:[%s692 + $0x68] sm:$0xff]
          %v953 = vld [vmem:[%s692 + $0x70] sm:$0xff]
          %v954 = vld [vmem:[%s692 + $0x78] sm:$0xff]
          %v955 = vld [vmem:[%s692 + $0x80] sm:$0xff]
          %v956 = vld [vmem:[%s692 + $0x88] sm:$0xff]
          %v957 = vld [vmem:[%s692 + $0x90] sm:$0xff]
          %v958 = vld [vmem:[%s692 + $0x98] sm:$0xff]
          %v959 = vld [vmem:[%s692 + $0xa0] sm:$0xff]
          %v960 = vld [vmem:[%s692 + $0xa8] sm:$0xff]
          %v961 = vld [vmem:[%s692 + $0xb0] sm:$0xff]
          %v962 = vld [vmem:[%s692 + $0xb8] sm:$0xff]
          %v963 = vld [vmem:[%s692 + $0xc0] sm:$0xff]
          %v964 = vld [vmem:[%s692 + $0xc8] sm:$0xff]
          %v965 = vld [vmem:[%s692 + $0xd0] sm:$0xff]
          %v966 = vld [vmem:[%s692 + $0xd8] sm:$0xff]
          %v967 = vld [vmem:[%s692 + $0xe0] sm:$0xff]
          %v968 = vld [vmem:[%s692 + $0xe8] sm:$0xff]
          %v969 = vld [vmem:[%s692 + $0xf0] sm:$0xff]
          %v970 = vld [vmem:[%s692 + $0xf8] sm:$0xff]
          %v971 = vld [vmem:[%s692 + $0x100] sm:$0xff]
          %v972 = vld [vmem:[%s692 + $0x108] sm:$0xff]
          %v973 = vld [vmem:[%s692 + $0x110] sm:$0xff]
          %v974 = vld [vmem:[%s692 + $0x118] sm:$0xff]
          %v975 = vld [vmem:[%s692 + $0x120] sm:$0xff]
          %v976 = vld [vmem:[%s692 + $0x128] sm:$0xff]
          %v977 = vld [vmem:[%s692 + $0x130] sm:$0xff]
          %v978 = vld [vmem:[%s692 + $0x138] sm:$0xff]
          %v979 = vld [vmem:[%s692 + $0x140] sm:$0xff]
          %v980 = vld [vmem:[%s692 + $0x148] sm:$0xff]
          %v981 = vld [vmem:[%s692 + $0x150] sm:$0xff]
          %v982 = vld [vmem:[%s692 + $0x158] sm:$0xff]
          %v983 = vld [vmem:[%s692 + $0x160] sm:$0xff]
          %v984 = vld [vmem:[%s692 + $0x168] sm:$0xff]
          %v985 = vld [vmem:[%s692 + $0x170] sm:$0xff]
          %v986 = vld [vmem:[%s692 + $0x178] sm:$0xff]
          %v987 = vld [vmem:[%s692 + $0x180] sm:$0xff]
          %v988 = vld [vmem:[%s692 + $0x188] sm:$0xff]
          %v989 = vld [vmem:[%s692 + $0x190] sm:$0xff]
          %v990 = vld [vmem:[%s692 + $0x198] sm:$0xff]
          %v991 = vld [vmem:[%s692 + $0x1a0] sm:$0xff]
          %v992 = vld [vmem:[%s692 + $0x1a8] sm:$0xff]
          %v993 = vld [vmem:[%s692 + $0x1b0] sm:$0xff]
          %v994 = vld [vmem:[%s692 + $0x1b8] sm:$0xff]
          %v995 = vld [vmem:[%s692 + $0x1c0] sm:$0xff]
          %v996 = vld [vmem:[%s692 + $0x1c8] sm:$0xff]
          %v997 = vld [vmem:[%s692 + $0x1d0] sm:$0xff]
          %v998 = vld [vmem:[%s692 + $0x1d8] sm:$0xff]
          %v999 = vld [vmem:[%s692 + $0x1e0] sm:$0xff]
          %v1000 = vld [vmem:[%s692 + $0x1e8] sm:$0xff]
          %v1001 = vld [vmem:[%s692 + $0x1f0] sm:$0xff]
          %v1002 = vld [vmem:[%s692 + $0x1f8] sm:$0xff]
          %v1003 = vld [vmem:[%s766] sm:$0xf]
          %v1004 = vld [vmem:[%s766 + $0x4] sm:$0xf]
          %v1005 = vld [vmem:[%s766 + $0x8] sm:$0xf]
          %v1006 = vld [vmem:[%s766 + $0xc] sm:$0xf]
          %v1007 = vld [vmem:[%s766 + $0x10] sm:$0xf]
          %v1008 = vld [vmem:[%s766 + $0x14] sm:$0xf]
          %v1009 = vld [vmem:[%s766 + $0x18] sm:$0xf]
          %v1010 = vld [vmem:[%s766 + $0x1c] sm:$0xf]
          %v1011 = vld [vmem:[%s766 + $0x20] sm:$0xf]
          %v1012 = vld [vmem:[%s766 + $0x24] sm:$0xf]
          %v1013 = vld [vmem:[%s766 + $0x28] sm:$0xf]
          %v1014 = vld [vmem:[%s766 + $0x2c] sm:$0xf]
          %v1015 = vld [vmem:[%s766 + $0x30] sm:$0xf]
          %v1016 = vld [vmem:[%s766 + $0x34] sm:$0xf]
          %v1017 = vld [vmem:[%s766 + $0x38] sm:$0xf]
          %v1018 = vld [vmem:[%s766 + $0x3c] sm:$0xf]
          %v1019 = vld [vmem:[%s766 + $0x40] sm:$0xf]
          %v1020 = vld [vmem:[%s766 + $0x44] sm:$0xf]
          %v1021 = vld [vmem:[%s766 + $0x48] sm:$0xf]
          %v1022 = vld [vmem:[%s766 + $0x4c] sm:$0xf]
          %v1023 = vld [vmem:[%s766 + $0x50] sm:$0xf]
          %v1024 = vld [vmem:[%s766 + $0x54] sm:$0xf]
          %v1025 = vld [vmem:[%s766 + $0x58] sm:$0xf]
          %v1026 = vld [vmem:[%s766 + $0x5c] sm:$0xf]
          %v1027 = vld [vmem:[%s766 + $0x60] sm:$0xf]
          %v1028 = vld [vmem:[%s766 + $0x64] sm:$0xf]
          %v1029 = vld [vmem:[%s766 + $0x68] sm:$0xf]
          %v1030 = vld [vmem:[%s766 + $0x6c] sm:$0xf]
          %v1031 = vld [vmem:[%s766 + $0x70] sm:$0xf]
          %v1032 = vld [vmem:[%s766 + $0x74] sm:$0xf]
          %v1033 = vld [vmem:[%s766 + $0x78] sm:$0xf]
          %v1034 = vld [vmem:[%s766 + $0x7c] sm:$0xf]
          %v1099 = vunpack.c.l.b16 %v939
          %v1100 = vunpack.c.h.b16 %v939
          %v1101 = vunpack.c.l.b16 %v940
          %v1102 = vunpack.c.h.b16 %v940
          %v1103 = vunpack.c.l.b16 %v941
          %v1104 = vunpack.c.h.b16 %v941
          %v1105 = vunpack.c.l.b16 %v942
          %v1106 = vunpack.c.h.b16 %v942
          %v1107 = vunpack.c.l.b16 %v943
          %v1108 = vunpack.c.h.b16 %v943
          %v1109 = vunpack.c.l.b16 %v944
          %v1110 = vunpack.c.h.b16 %v944
          %v1111 = vunpack.c.l.b16 %v945
          %v1112 = vunpack.c.h.b16 %v945
          %v1113 = vunpack.c.l.b16 %v946
          %v1114 = vunpack.c.h.b16 %v946
          %v1115 = vunpack.c.l.b16 %v947
          %v1116 = vunpack.c.h.b16 %v947
          %v1117 = vunpack.c.l.b16 %v948
          %v1118 = vunpack.c.h.b16 %v948
          %v1119 = vunpack.c.l.b16 %v949
          %v1120 = vunpack.c.h.b16 %v949
          %v1121 = vunpack.c.l.b16 %v950
          %v1122 = vunpack.c.h.b16 %v950
          %v1123 = vunpack.c.l.b16 %v951
          %v1124 = vunpack.c.h.b16 %v951
          %v1125 = vunpack.c.l.b16 %v952
          %v1126 = vunpack.c.h.b16 %v952
          %v1127 = vunpack.c.l.b16 %v953
          %v1128 = vunpack.c.h.b16 %v953
          %v1129 = vunpack.c.l.b16 %v954
          %v1130 = vunpack.c.h.b16 %v954
          %v1131 = vunpack.c.l.b16 %v955
          %v1132 = vunpack.c.h.b16 %v955
          %v1133 = vunpack.c.l.b16 %v956
          %v1134 = vunpack.c.h.b16 %v956
          %v1135 = vunpack.c.l.b16 %v957
          %v1136 = vunpack.c.h.b16 %v957
          %v1137 = vunpack.c.l.b16 %v958
          %v1138 = vunpack.c.h.b16 %v958
          %v1139 = vunpack.c.l.b16 %v959
          %v1140 = vunpack.c.h.b16 %v959
          %v1141 = vunpack.c.l.b16 %v960
          %v1142 = vunpack.c.h.b16 %v960
          %v1143 = vunpack.c.l.b16 %v961
          %v1144 = vunpack.c.h.b16 %v961
          %v1145 = vunpack.c.l.b16 %v962
          %v1146 = vunpack.c.h.b16 %v962
          %v1147 = vunpack.c.l.b16 %v963
          %v1148 = vunpack.c.h.b16 %v963
          %v1149 = vunpack.c.l.b16 %v964
          %v1150 = vunpack.c.h.b16 %v964
          %v1151 = vunpack.c.l.b16 %v965
          %v1152 = vunpack.c.h.b16 %v965
          %v1153 = vunpack.c.l.b16 %v966
          %v1154 = vunpack.c.h.b16 %v966
          %v1155 = vunpack.c.l.b16 %v967
          %v1156 = vunpack.c.h.b16 %v967
          %v1157 = vunpack.c.l.b16 %v968
          %v1158 = vunpack.c.h.b16 %v968
          %v1159 = vunpack.c.l.b16 %v969
          %v1160 = vunpack.c.h.b16 %v969
          %v1161 = vunpack.c.l.b16 %v970
          %v1162 = vunpack.c.h.b16 %v970
          %v1163 = vunpack.c.l.b16 %v971
          %v1164 = vunpack.c.h.b16 %v971
          %v1165 = vunpack.c.l.b16 %v972
          %v1166 = vunpack.c.h.b16 %v972
          %v1167 = vunpack.c.l.b16 %v973
          %v1168 = vunpack.c.h.b16 %v973
          %v1169 = vunpack.c.l.b16 %v974
          %v1170 = vunpack.c.h.b16 %v974
          %v1171 = vunpack.c.l.b16 %v975
          %v1172 = vunpack.c.h.b16 %v975
          %v1173 = vunpack.c.l.b16 %v976
          %v1174 = vunpack.c.h.b16 %v976
          %v1175 = vunpack.c.l.b16 %v977
          %v1176 = vunpack.c.h.b16 %v977
          %v1177 = vunpack.c.l.b16 %v978
          %v1178 = vunpack.c.h.b16 %v978
          %v1179 = vunpack.c.l.b16 %v979
          %v1180 = vunpack.c.h.b16 %v979
          %v1181 = vunpack.c.l.b16 %v980
          %v1182 = vunpack.c.h.b16 %v980
          %v1183 = vunpack.c.l.b16 %v981
          %v1184 = vunpack.c.h.b16 %v981
          %v1185 = vunpack.c.l.b16 %v982
          %v1186 = vunpack.c.h.b16 %v982
          %v1187 = vunpack.c.l.b16 %v983
          %v1188 = vunpack.c.h.b16 %v983
          %v1189 = vunpack.c.l.b16 %v984
          %v1190 = vunpack.c.h.b16 %v984
          %v1191 = vunpack.c.l.b16 %v985
          %v1192 = vunpack.c.h.b16 %v985
          %v1193 = vunpack.c.l.b16 %v986
          %v1194 = vunpack.c.h.b16 %v986
          %v1195 = vunpack.c.l.b16 %v987
          %v1196 = vunpack.c.h.b16 %v987
          %v1197 = vunpack.c.l.b16 %v988
          %v1198 = vunpack.c.h.b16 %v988
          %v1199 = vunpack.c.l.b16 %v989
          %v1200 = vunpack.c.h.b16 %v989
          %v1201 = vunpack.c.l.b16 %v990
          %v1202 = vunpack.c.h.b16 %v990
          %v1203 = vunpack.c.l.b16 %v991
          %v1204 = vunpack.c.h.b16 %v991
          %v1205 = vunpack.c.l.b16 %v992
          %v1206 = vunpack.c.h.b16 %v992
          %v1207 = vunpack.c.l.b16 %v993
          %v1208 = vunpack.c.h.b16 %v993
          %v1209 = vunpack.c.l.b16 %v994
          %v1210 = vunpack.c.h.b16 %v994
          %v1211 = vunpack.c.l.b16 %v995
          %v1212 = vunpack.c.h.b16 %v995
          %v1213 = vunpack.c.l.b16 %v996
          %v1214 = vunpack.c.h.b16 %v996
          %v1215 = vunpack.c.l.b16 %v997
          %v1216 = vunpack.c.h.b16 %v997
          %v1217 = vunpack.c.l.b16 %v998
          %v1218 = vunpack.c.h.b16 %v998
          %v1219 = vunpack.c.l.b16 %v999
          %v1220 = vunpack.c.h.b16 %v999
          %v1221 = vunpack.c.l.b16 %v1000
          %v1222 = vunpack.c.h.b16 %v1000
          %v1223 = vunpack.c.l.b16 %v1001
          %v1224 = vunpack.c.h.b16 %v1001
          %v1225 = vunpack.c.l.b16 %v1002
          %v1226 = vunpack.c.h.b16 %v1002
          %v1227 = vpack.c.b16 %v1101, %v1099
          %v1228 = vpack.c.b16 %v1102, %v1100
          %v1229 = vpack.c.b16 %v1105, %v1103
          %v1230 = vpack.c.b16 %v1106, %v1104
          %v1231 = vpack.c.b16 %v1109, %v1107
          %v1232 = vpack.c.b16 %v1110, %v1108
          %v1233 = vpack.c.b16 %v1113, %v1111
          %v1234 = vpack.c.b16 %v1114, %v1112
          %v1235 = vpack.c.b16 %v1117, %v1115
          %v1236 = vpack.c.b16 %v1118, %v1116
          %v1237 = vpack.c.b16 %v1121, %v1119
          %v1238 = vpack.c.b16 %v1122, %v1120
          %v1239 = vpack.c.b16 %v1125, %v1123
          %v1240 = vpack.c.b16 %v1126, %v1124
          %v1241 = vpack.c.b16 %v1129, %v1127
          %v1242 = vpack.c.b16 %v1130, %v1128
          %v1243 = vpack.c.b16 %v1133, %v1131
          %v1244 = vpack.c.b16 %v1134, %v1132
          %v1245 = vpack.c.b16 %v1137, %v1135
          %v1246 = vpack.c.b16 %v1138, %v1136
          %v1247 = vpack.c.b16 %v1141, %v1139
          %v1248 = vpack.c.b16 %v1142, %v1140
          %v1249 = vpack.c.b16 %v1145, %v1143
          %v1250 = vpack.c.b16 %v1146, %v1144
          %v1251 = vpack.c.b16 %v1149, %v1147
          %v1252 = vpack.c.b16 %v1150, %v1148
          %v1253 = vpack.c.b16 %v1153, %v1151
          %v1254 = vpack.c.b16 %v1154, %v1152
          %v1255 = vpack.c.b16 %v1157, %v1155
          %v1256 = vpack.c.b16 %v1158, %v1156
          %v1257 = vpack.c.b16 %v1161, %v1159
          %v1258 = vpack.c.b16 %v1162, %v1160
          %v1259 = vpack.c.b16 %v1165, %v1163
          %v1260 = vpack.c.b16 %v1166, %v1164
          %v1261 = vpack.c.b16 %v1169, %v1167
          %v1262 = vpack.c.b16 %v1170, %v1168
          %v1263 = vpack.c.b16 %v1173, %v1171
          %v1264 = vpack.c.b16 %v1174, %v1172
          %v1265 = vpack.c.b16 %v1177, %v1175
          %v1266 = vpack.c.b16 %v1178, %v1176
          %v1267 = vpack.c.b16 %v1181, %v1179
          %v1268 = vpack.c.b16 %v1182, %v1180
          %v1269 = vpack.c.b16 %v1185, %v1183
          %v1270 = vpack.c.b16 %v1186, %v1184
          %v1271 = vpack.c.b16 %v1189, %v1187
          %v1272 = vpack.c.b16 %v1190, %v1188
          %v1273 = vpack.c.b16 %v1193, %v1191
          %v1274 = vpack.c.b16 %v1194, %v1192
          %v1275 = vpack.c.b16 %v1197, %v1195
          %v1276 = vpack.c.b16 %v1198, %v1196
          %v1277 = vpack.c.b16 %v1201, %v1199
          %v1278 = vpack.c.b16 %v1202, %v1200
          %v1279 = vpack.c.b16 %v1205, %v1203
          %v1280 = vpack.c.b16 %v1206, %v1204
          %v1281 = vpack.c.b16 %v1209, %v1207
          %v1282 = vpack.c.b16 %v1210, %v1208
          %v1283 = vpack.c.b16 %v1213, %v1211
          %v1284 = vpack.c.b16 %v1214, %v1212
          %v1285 = vpack.c.b16 %v1217, %v1215
          %v1286 = vpack.c.b16 %v1218, %v1216
          %v1287 = vpack.c.b16 %v1221, %v1219
          %v1288 = vpack.c.b16 %v1222, %v1220
          %v1289 = vpack.c.b16 %v1225, %v1223
          %v1290 = vpack.c.b16 %v1226, %v1224
          %v1387 = vunpack.c.l.b16 %v1003
          %v1388 = vunpack.c.l.b16 %v1004
          %v1389 = vunpack.c.l.b16 %v1005
          %v1390 = vunpack.c.l.b16 %v1006
          %v1391 = vunpack.c.l.b16 %v1007
          %v1392 = vunpack.c.l.b16 %v1008
          %v1393 = vunpack.c.l.b16 %v1009
          %v1394 = vunpack.c.l.b16 %v1010
          %v1395 = vunpack.c.l.b16 %v1011
          %v1396 = vunpack.c.l.b16 %v1012
          %v1397 = vunpack.c.l.b16 %v1013
          %v1398 = vunpack.c.l.b16 %v1014
          %v1399 = vunpack.c.l.b16 %v1015
          %v1400 = vunpack.c.l.b16 %v1016
          %v1401 = vunpack.c.l.b16 %v1017
          %v1402 = vunpack.c.l.b16 %v1018
          %v1403 = vunpack.c.l.b16 %v1019
          %v1404 = vunpack.c.l.b16 %v1020
          %v1405 = vunpack.c.l.b16 %v1021
          %v1406 = vunpack.c.l.b16 %v1022
          %v1407 = vunpack.c.l.b16 %v1023
          %v1408 = vunpack.c.l.b16 %v1024
          %v1409 = vunpack.c.l.b16 %v1025
          %v1410 = vunpack.c.l.b16 %v1026
          %v1411 = vunpack.c.l.b16 %v1027
          %v1412 = vunpack.c.l.b16 %v1028
          %v1413 = vunpack.c.l.b16 %v1029
          %v1414 = vunpack.c.l.b16 %v1030
          %v1415 = vunpack.c.l.b16 %v1031
          %v1416 = vunpack.c.l.b16 %v1032
          %v1417 = vunpack.c.l.b16 %v1033
          %v1418 = vunpack.c.l.b16 %v1034
          %v1419 = vpack.c.b16 %v1388, %v1387
          %v1420 = vpack.c.b16 %v1390, %v1389
          %v1421 = vpack.c.b16 %v1392, %v1391
          %v1422 = vpack.c.b16 %v1394, %v1393
          %v1423 = vpack.c.b16 %v1396, %v1395
          %v1424 = vpack.c.b16 %v1398, %v1397
          %v1425 = vpack.c.b16 %v1400, %v1399
          %v1426 = vpack.c.b16 %v1402, %v1401
          %v1427 = vpack.c.b16 %v1404, %v1403
          %v1428 = vpack.c.b16 %v1406, %v1405
          %v1429 = vpack.c.b16 %v1408, %v1407
          %v1430 = vpack.c.b16 %v1410, %v1409
          %v1431 = vpack.c.b16 %v1412, %v1411
          %v1432 = vpack.c.b16 %v1414, %v1413
          %v1433 = vpack.c.b16 %v1416, %v1415
          %v1434 = vpack.c.b16 %v1418, %v1417
          %1451 = vmatprep.subr.bf16.mxu0 0
          %1452 = vmatpush1.bf16.msra.mxu0 %v1419
          %1453 = vmatprep.subr.bf16.mxu0 0
          %1454 = vmatpush1.bf16.msra.mxu0 %v1420
          %1455 = vmatprep.subr.bf16.mxu0 0
          %1456 = vmatpush1.bf16.msra.mxu0 %v1421
          %1457 = vmatprep.subr.bf16.mxu0 0
          %1458 = vmatpush1.bf16.msra.mxu0 %v1422
          %1459 = vmatprep.subr.bf16.mxu0 0
          %1460 = vmatpush1.bf16.msra.mxu0 %v1423
          %1461 = vmatprep.subr.bf16.mxu0 0
          %1462 = vmatpush1.bf16.msra.mxu0 %v1424
          %1463 = vmatprep.subr.bf16.mxu0 0
          %1464 = vmatpush1.bf16.msra.mxu0 %v1425
          %1465 = vmatprep.subr.bf16.mxu0 0
          %1466 = vmatpush1.bf16.msra.mxu0 %v1426
          %1467 = vmatprep.subr.bf16.mxu0 0
          %1468 = vmatpush1.bf16.msra.mxu0 %v1427
          %1469 = vmatprep.subr.bf16.mxu0 0
          %1470 = vmatpush1.bf16.msra.mxu0 %v1428
          %1471 = vmatprep.subr.bf16.mxu0 0
          %1472 = vmatpush1.bf16.msra.mxu0 %v1429
          %1473 = vmatprep.subr.bf16.mxu0 0
          %1474 = vmatpush1.bf16.msra.mxu0 %v1430
          %1475 = vmatprep.subr.bf16.mxu0 0
          %1476 = vmatpush1.bf16.msra.mxu0 %v1431
          %1477 = vmatprep.subr.bf16.mxu0 0
          %1478 = vmatpush1.bf16.msra.mxu0 %v1432
          %1479 = vmatprep.subr.bf16.mxu0 0
          %1480 = vmatpush1.bf16.msra.mxu0 %v1433
          %1481 = vmatprep.subr.bf16.mxu0 0
          %1482 = vmatpush1.bf16.msra.mxu0 %v1434
          %1483 = vmatprep.mubr.bf16.mxu0 %v1228
          %1484 = vmatmul.mubr.bf16.gmra.mrb[0].mxu0 %v1227
          %v1485 = vpop.f32.mrb[0].mxu0
          %v1486 = vadd.f32 0.0, %v1485
          %v1487 = vpop.f32.mrb[0].mxu0
          %v1488 = vpop.f32.mrb[0].mxu0
          %v1489 = vadd.f32 0.0, %v1488
          %v1490 = vpop.f32.mrb[0].mxu0
          %1491 = vmatprep.mubr.bf16.mxu0 %v1230
          %1492 = vmatmul.mubr.bf16.gmra.mrb[0].mxu0 %v1229
          %v1493 = vpop.f32.mrb[0].mxu0
          %v1494 = vadd.f32 0.0, %v1493
          %v1495 = vpop.f32.mrb[0].mxu0
          %v1496 = vpop.f32.mrb[0].mxu0
          %v1497 = vadd.f32 0.0, %v1496
          %v1498 = vpop.f32.mrb[0].mxu0
          %1499 = vmatprep.mubr.bf16.mxu0 %v1232
          %1500 = vmatmul.mubr.bf16.gmra.mrb[0].mxu0 %v1231
          %v1501 = vpop.f32.mrb[0].mxu0
          %v1502 = vadd.f32 0.0, %v1501
          %v1503 = vpop.f32.mrb[0].mxu0
          %v1504 = vpop.f32.mrb[0].mxu0
          %v1505 = vadd.f32 0.0, %v1504
          %v1506 = vpop.f32.mrb[0].mxu0
          %1507 = vmatprep.mubr.bf16.mxu0 %v1234
          %1508 = vmatmul.mubr.bf16.gmra.mrb[0].mxu0 %v1233
          %v1509 = vpop.f32.mrb[0].mxu0
          %v1510 = vadd.f32 0.0, %v1509
          %v1511 = vpop.f32.mrb[0].mxu0
          %v1512 = vpop.f32.mrb[0].mxu0
          %v1513 = vadd.f32 0.0, %v1512
          %v1514 = vpop.f32.mrb[0].mxu0
          %1515 = vmatprep.mubr.bf16.mxu0 %v1236
          %1516 = vmatmul.mubr.bf16.gmra.mrb[0].mxu0 %v1235
          %v1517 = vpop.f32.mrb[0].mxu0
          %v1518 = vadd.f32 0.0, %v1517
          %v1519 = vpop.f32.mrb[0].mxu0
          %v1520 = vpop.f32.mrb[0].mxu0
          %v1521 = vadd.f32 0.0, %v1520
          %v1522 = vpop.f32.mrb[0].mxu0
          %1523 = vmatprep.mubr.bf16.mxu0 %v1238
          %1524 = vmatmul.mubr.bf16.gmra.mrb[0].mxu0 %v1237
          %v1525 = vpop.f32.mrb[0].mxu0
          %v1526 = vadd.f32 0.0, %v1525
          %v1527 = vpop.f32.mrb[0].mxu0
          %v1528 = vpop.f32.mrb[0].mxu0
          %v1529 = vadd.f32 0.0, %v1528
          %v1530 = vpop.f32.mrb[0].mxu0
          %1531 = vmatprep.mubr.bf16.mxu0 %v1240
          %1532 = vmatmul.mubr.bf16.gmra.mrb[0].mxu0 %v1239
          %v1533 = vpop.f32.mrb[0].mxu0
          %v1534 = vadd.f32 0.0, %v1533
          %v1535 = vpop.f32.mrb[0].mxu0
          %v1536 = vpop.f32.mrb[0].mxu0
          %v1537 = vadd.f32 0.0, %v1536
          %v1538 = vpop.f32.mrb[0].mxu0
          %1539 = vmatprep.mubr.bf16.mxu0 %v1242
          %1540 = vmatmul.mubr.bf16.gmra.mrb[0].mxu0 %v1241
          %v1541 = vpop.f32.mrb[0].mxu0
          %v1542 = vadd.f32 0.0, %v1541
          %v1543 = vpop.f32.mrb[0].mxu0
          %v1544 = vpop.f32.mrb[0].mxu0
          %v1545 = vadd.f32 0.0, %v1544
          %v1546 = vpop.f32.mrb[0].mxu0
          %1547 = vmatprep.mubr.bf16.mxu0 %v1244
          %1548 = vmatmul.mubr.bf16.gmra.mrb[0].mxu0 %v1243
          %v1549 = vpop.f32.mrb[0].mxu0
          %v1550 = vadd.f32 0.0, %v1549
          %v1551 = vpop.f32.mrb[0].mxu0
          %v1552 = vpop.f32.mrb[0].mxu0
          %v1553 = vadd.f32 0.0, %v1552
          %v1554 = vpop.f32.mrb[0].mxu0
          %1555 = vmatprep.mubr.bf16.mxu0 %v1246
          %1556 = vmatmul.mubr.bf16.gmra.mrb[0].mxu0 %v1245
          %v1557 = vpop.f32.mrb[0].mxu0
          %v1558 = vadd.f32 0.0, %v1557
          %v1559 = vpop.f32.mrb[0].mxu0
          %v1560 = vpop.f32.mrb[0].mxu0
          %v1561 = vadd.f32 0.0, %v1560
          %v1562 = vpop.f32.mrb[0].mxu0
          %1563 = vmatprep.mubr.bf16.mxu0 %v1248
          %1564 = vmatmul.mubr.bf16.gmra.mrb[0].mxu0 %v1247
          %v1565 = vpop.f32.mrb[0].mxu0
          %v1566 = vadd.f32 0.0, %v1565
          %v1567 = vpop.f32.mrb[0].mxu0
          %v1568 = vpop.f32.mrb[0].mxu0
          %v1569 = vadd.f32 0.0, %v1568
          %v1570 = vpop.f32.mrb[0].mxu0
          %1571 = vmatprep.mubr.bf16.mxu0 %v1250
          %1572 = vmatmul.mubr.bf16.gmra.mrb[0].mxu0 %v1249
          %v1573 = vpop.f32.mrb[0].mxu0
          %v1574 = vadd.f32 0.0, %v1573
          %v1575 = vpop.f32.mrb[0].mxu0
          %v1576 = vpop.f32.mrb[0].mxu0
          %v1577 = vadd.f32 0.0, %v1576
          %v1578 = vpop.f32.mrb[0].mxu0
          %1579 = vmatprep.mubr.bf16.mxu0 %v1252
          %1580 = vmatmul.mubr.bf16.gmra.mrb[0].mxu0 %v1251
          %v1581 = vpop.f32.mrb[0].mxu0
          %v1582 = vadd.f32 0.0, %v1581
          %v1583 = vpop.f32.mrb[0].mxu0
          %v1584 = vpop.f32.mrb[0].mxu0
          %v1585 = vadd.f32 0.0, %v1584
          %v1586 = vpop.f32.mrb[0].mxu0
          %1587 = vmatprep.mubr.bf16.mxu0 %v1254
          %1588 = vmatmul.mubr.bf16.gmra.mrb[0].mxu0 %v1253
          %v1589 = vpop.f32.mrb[0].mxu0
          %v1590 = vadd.f32 0.0, %v1589
          %v1591 = vpop.f32.mrb[0].mxu0
          %v1592 = vpop.f32.mrb[0].mxu0
          %v1593 = vadd.f32 0.0, %v1592
          %v1594 = vpop.f32.mrb[0].mxu0
          %1595 = vmatprep.mubr.bf16.mxu0 %v1256
          %1596 = vmatmul.mubr.bf16.gmra.mrb[0].mxu0 %v1255
          %v1597 = vpop.f32.mrb[0].mxu0
          %v1598 = vadd.f32 0.0, %v1597
          %v1599 = vpop.f32.mrb[0].mxu0
          %v1600 = vpop.f32.mrb[0].mxu0
          %v1601 = vadd.f32 0.0, %v1600
          %v1602 = vpop.f32.mrb[0].mxu0
          %1603 = vmatprep.mubr.bf16.mxu0 %v1258
          %1604 = vmatmul.mubr.bf16.gmra.mrb[0].mxu0 %v1257
          %v1605 = vpop.f32.mrb[0].mxu0
          %v1606 = vadd.f32 0.0, %v1605
          %v1607 = vpop.f32.mrb[0].mxu0
          %v1608 = vpop.f32.mrb[0].mxu0
          %v1609 = vadd.f32 0.0, %v1608
          %v1610 = vpop.f32.mrb[0].mxu0
          %1611 = vmatprep.mubr.bf16.mxu0 %v1260
          %1612 = vmatmul.mubr.bf16.gmra.mrb[0].mxu0 %v1259
          %v1613 = vpop.f32.mrb[0].mxu0
          %v1614 = vadd.f32 0.0, %v1613
          %v1615 = vpop.f32.mrb[0].mxu0
          %v1616 = vpop.f32.mrb[0].mxu0
          %v1617 = vadd.f32 0.0, %v1616
          %v1618 = vpop.f32.mrb[0].mxu0
          %1619 = vmatprep.mubr.bf16.mxu0 %v1262
          %1620 = vmatmul.mubr.bf16.gmra.mrb[0].mxu0 %v1261
          %v1621 = vpop.f32.mrb[0].mxu0
          %v1622 = vadd.f32 0.0, %v1621
          %v1623 = vpop.f32.mrb[0].mxu0
          %v1624 = vpop.f32.mrb[0].mxu0
          %v1625 = vadd.f32 0.0, %v1624
          %v1626 = vpop.f32.mrb[0].mxu0
          %1627 = vmatprep.mubr.bf16.mxu0 %v1264
          %1628 = vmatmul.mubr.bf16.gmra.mrb[0].mxu0 %v1263
          %v1629 = vpop.f32.mrb[0].mxu0
          %v1630 = vadd.f32 0.0, %v1629
          %v1631 = vpop.f32.mrb[0].mxu0
          %v1632 = vpop.f32.mrb[0].mxu0
          %v1633 = vadd.f32 0.0, %v1632
          %v1634 = vpop.f32.mrb[0].mxu0
          %1635 = vmatprep.mubr.bf16.mxu0 %v1266
          %1636 = vmatmul.mubr.bf16.gmra.mrb[0].mxu0 %v1265
          %v1637 = vpop.f32.mrb[0].mxu0
          %v1638 = vadd.f32 0.0, %v1637
          %v1639 = vpop.f32.mrb[0].mxu0
          %v1640 = vpop.f32.mrb[0].mxu0
          %v1641 = vadd.f32 0.0, %v1640
          %v1642 = vpop.f32.mrb[0].mxu0
          %1643 = vmatprep.mubr.bf16.mxu0 %v1268
          %1644 = vmatmul.mubr.bf16.gmra.mrb[0].mxu0 %v1267
          %v1645 = vpop.f32.mrb[0].mxu0
          %v1646 = vadd.f32 0.0, %v1645
          %v1647 = vpop.f32.mrb[0].mxu0
          %v1648 = vpop.f32.mrb[0].mxu0
          %v1649 = vadd.f32 0.0, %v1648
          %v1650 = vpop.f32.mrb[0].mxu0
          %1651 = vmatprep.mubr.bf16.mxu0 %v1270
          %1652 = vmatmul.mubr.bf16.gmra.mrb[0].mxu0 %v1269
          %v1653 = vpop.f32.mrb[0].mxu0
          %v1654 = vadd.f32 0.0, %v1653
          %v1655 = vpop.f32.mrb[0].mxu0
          %v1656 = vpop.f32.mrb[0].mxu0
          %v1657 = vadd.f32 0.0, %v1656
          %v1658 = vpop.f32.mrb[0].mxu0
          %1659 = vmatprep.mubr.bf16.mxu0 %v1272
          %1660 = vmatmul.mubr.bf16.gmra.mrb[0].mxu0 %v1271
          %v1661 = vpop.f32.mrb[0].mxu0
          %v1662 = vadd.f32 0.0, %v1661
          %v1663 = vpop.f32.mrb[0].mxu0
          %v1664 = vpop.f32.mrb[0].mxu0
          %v1665 = vadd.f32 0.0, %v1664
          %v1666 = vpop.f32.mrb[0].mxu0
          %1667 = vmatprep.mubr.bf16.mxu0 %v1274
          %1668 = vmatmul.mubr.bf16.gmra.mrb[0].mxu0 %v1273
          %v1669 = vpop.f32.mrb[0].mxu0
          %v1670 = vadd.f32 0.0, %v1669
          %v1671 = vpop.f32.mrb[0].mxu0
          %v1672 = vpop.f32.mrb[0].mxu0
          %v1673 = vadd.f32 0.0, %v1672
          %v1674 = vpop.f32.mrb[0].mxu0
          %1675 = vmatprep.mubr.bf16.mxu0 %v1276
          %1676 = vmatmul.mubr.bf16.gmra.mrb[0].mxu0 %v1275
          %v1677 = vpop.f32.mrb[0].mxu0
          %v1678 = vadd.f32 0.0, %v1677
          %v1679 = vpop.f32.mrb[0].mxu0
          %v1680 = vpop.f32.mrb[0].mxu0
          %v1681 = vadd.f32 0.0, %v1680
          %v1682 = vpop.f32.mrb[0].mxu0
          %1683 = vmatprep.mubr.bf16.mxu0 %v1278
          %1684 = vmatmul.mubr.bf16.gmra.mrb[0].mxu0 %v1277
          %v1685 = vpop.f32.mrb[0].mxu0
          %v1686 = vadd.f32 0.0, %v1685
          %v1687 = vpop.f32.mrb[0].mxu0
          %v1688 = vpop.f32.mrb[0].mxu0
          %v1689 = vadd.f32 0.0, %v1688
          %v1690 = vpop.f32.mrb[0].mxu0
          %1691 = vmatprep.mubr.bf16.mxu0 %v1280
          %1692 = vmatmul.mubr.bf16.gmra.mrb[0].mxu0 %v1279
          %v1693 = vpop.f32.mrb[0].mxu0
          %v1694 = vadd.f32 0.0, %v1693
          %v1695 = vpop.f32.mrb[0].mxu0
          %v1696 = vpop.f32.mrb[0].mxu0
          %v1697 = vadd.f32 0.0, %v1696
          %v1698 = vpop.f32.mrb[0].mxu0
          %1699 = vmatprep.mubr.bf16.mxu0 %v1282
          %1700 = vmatmul.mubr.bf16.gmra.mrb[0].mxu0 %v1281
          %v1701 = vpop.f32.mrb[0].mxu0
          %v1702 = vadd.f32 0.0, %v1701
          %v1703 = vpop.f32.mrb[0].mxu0
          %v1704 = vpop.f32.mrb[0].mxu0
          %v1705 = vadd.f32 0.0, %v1704
          %v1706 = vpop.f32.mrb[0].mxu0
          %1707 = vmatprep.mubr.bf16.mxu0 %v1284
          %1708 = vmatmul.mubr.bf16.gmra.mrb[0].mxu0 %v1283
          %v1709 = vpop.f32.mrb[0].mxu0
          %v1710 = vadd.f32 0.0, %v1709
          %v1711 = vpop.f32.mrb[0].mxu0
          %v1712 = vpop.f32.mrb[0].mxu0
          %v1713 = vadd.f32 0.0, %v1712
          %v1714 = vpop.f32.mrb[0].mxu0
          %1715 = vmatprep.mubr.bf16.mxu0 %v1286
          %1716 = vmatmul.mubr.bf16.gmra.mrb[0].mxu0 %v1285
          %v1717 = vpop.f32.mrb[0].mxu0
          %v1718 = vadd.f32 0.0, %v1717
          %v1719 = vpop.f32.mrb[0].mxu0
          %v1720 = vpop.f32.mrb[0].mxu0
          %v1721 = vadd.f32 0.0, %v1720
          %v1722 = vpop.f32.mrb[0].mxu0
          %1723 = vmatprep.mubr.bf16.mxu0 %v1288
          %1724 = vmatmul.mubr.bf16.gmra.mrb[0].mxu0 %v1287
          %v1725 = vpop.f32.mrb[0].mxu0
          %v1726 = vadd.f32 0.0, %v1725
          %v1727 = vpop.f32.mrb[0].mxu0
          %v1728 = vpop.f32.mrb[0].mxu0
          %v1729 = vadd.f32 0.0, %v1728
          %v1730 = vpop.f32.mrb[0].mxu0
          %1731 = vmatprep.mubr.bf16.mxu0 %v1290
          %1732 = vmatmul.mubr.bf16.gmra.mrb[0].mxu0 %v1289
          %v1733 = vpop.f32.mrb[0].mxu0
          %v1734 = vadd.f32 0.0, %v1733
          %v1735 = vpop.f32.mrb[0].mxu0
          %v1736 = vpop.f32.mrb[0].mxu0
          %v1737 = vadd.f32 0.0, %v1736
          %v1738 = vpop.f32.mrb[0].mxu0
          %1739 = vdwg.mxu0
          %v1740 = vadd.f32 %v875, %v1486
          %v1741 = vadd.f32 %v876, %v1489
          %v1742 = vadd.f32 %v877, %v1494
          %v1743 = vadd.f32 %v878, %v1497
          %v1744 = vadd.f32 %v879, %v1502
          %v1745 = vadd.f32 %v880, %v1505
          %v1746 = vadd.f32 %v881, %v1510
          %v1747 = vadd.f32 %v882, %v1513
          %v1748 = vadd.f32 %v883, %v1518
          %v1749 = vadd.f32 %v884, %v1521
          %v1750 = vadd.f32 %v885, %v1526
          %v1751 = vadd.f32 %v886, %v1529
          %v1752 = vadd.f32 %v887, %v1534
          %v1753 = vadd.f32 %v888, %v1537
          %v1754 = vadd.f32 %v889, %v1542
          %v1755 = vadd.f32 %v890, %v1545
          %v1756 = vadd.f32 %v891, %v1550
          %v1757 = vadd.f32 %v892, %v1553
          %v1758 = vadd.f32 %v893, %v1558
          %v1759 = vadd.f32 %v894, %v1561
          %v1760 = vadd.f32 %v895, %v1566
          %v1761 = vadd.f32 %v896, %v1569
          %v1762 = vadd.f32 %v897, %v1574
          %v1763 = vadd.f32 %v898, %v1577
          %v1764 = vadd.f32 %v899, %v1582
          %v1765 = vadd.f32 %v900, %v1585
          %v1766 = vadd.f32 %v901, %v1590
          %v1767 = vadd.f32 %v902, %v1593
          %v1768 = vadd.f32 %v903, %v1598
          %v1769 = vadd.f32 %v904, %v1601
          %v1770 = vadd.f32 %v905, %v1606
          %v1771 = vadd.f32 %v906, %v1609
          %v1772 = vadd.f32 %v907, %v1614
          %v1773 = vadd.f32 %v908, %v1617
          %v1774 = vadd.f32 %v909, %v1622
          %v1775 = vadd.f32 %v910, %v1625
          %v1776 = vadd.f32 %v911, %v1630
          %v1777 = vadd.f32 %v912, %v1633
          %v1778 = vadd.f32 %v913, %v1638
          %v1779 = vadd.f32 %v914, %v1641
          %v1780 = vadd.f32 %v915, %v1646
          %v1781 = vadd.f32 %v916, %v1649
          %v1782 = vadd.f32 %v917, %v1654
          %v1783 = vadd.f32 %v918, %v1657
          %v1784 = vadd.f32 %v919, %v1662
          %v1785 = vadd.f32 %v920, %v1665
          %v1786 = vadd.f32 %v921, %v1670
          %v1787 = vadd.f32 %v922, %v1673
          %v1788 = vadd.f32 %v923, %v1678
          %v1789 = vadd.f32 %v924, %v1681
          %v1790 = vadd.f32 %v925, %v1686
          %v1791 = vadd.f32 %v926, %v1689
          %v1792 = vadd.f32 %v927, %v1694
          %v1793 = vadd.f32 %v928, %v1697
          %v1794 = vadd.f32 %v929, %v1702
          %v1795 = vadd.f32 %v930, %v1705
          %v1796 = vadd.f32 %v931, %v1710
          %v1797 = vadd.f32 %v932, %v1713
          %v1798 = vadd.f32 %v933, %v1718
          %v1799 = vadd.f32 %v934, %v1721
          %v1800 = vadd.f32 %v935, %v1726
          %v1801 = vadd.f32 %v936, %v1729
          %v1802 = vadd.f32 %v937, %v1734
          %v1803 = vadd.f32 %v938, %v1737
          %1804 = vst [vmem:[#allocation2] sm:$0xff] %v1740
          %1805 = vst [vmem:[#allocation2 + $0x8] sm:$0xff] %v1741
          %1806 = vst [vmem:[#allocation2 + $0x10] sm:$0xff] %v1742
          %1807 = vst [vmem:[#allocation2 + $0x18] sm:$0xff] %v1743
          %1808 = vst [vmem:[#allocation2 + $0x20] sm:$0xff] %v1744
          %1809 = vst [vmem:[#allocation2 + $0x28] sm:$0xff] %v1745
          %1810 = vst [vmem:[#allocation2 + $0x30] sm:$0xff] %v1746
          %1811 = vst [vmem:[#allocation2 + $0x38] sm:$0xff] %v1747
          %1812 = vst [vmem:[#allocation2 + $0x40] sm:$0xff] %v1748
          %1813 = vst [vmem:[#allocation2 + $0x48] sm:$0xff] %v1749
          %1814 = vst [vmem:[#allocation2 + $0x50] sm:$0xff] %v1750
          %1815 = vst [vmem:[#allocation2 + $0x58] sm:$0xff] %v1751
          %1816 = vst [vmem:[#allocation2 + $0x60] sm:$0xff] %v1752
          %1817 = vst [vmem:[#allocation2 + $0x68] sm:$0xff] %v1753
          %1818 = vst [vmem:[#allocation2 + $0x70] sm:$0xff] %v1754
          %1819 = vst [vmem:[#allocation2 + $0x78] sm:$0xff] %v1755
          %1820 = vst [vmem:[#allocation2 + $0x80] sm:$0xff] %v1756
          %1821 = vst [vmem:[#allocation2 + $0x88] sm:$0xff] %v1757
          %1822 = vst [vmem:[#allocation2 + $0x90] sm:$0xff] %v1758
          %1823 = vst [vmem:[#allocation2 + $0x98] sm:$0xff] %v1759
          %1824 = vst [vmem:[#allocation2 + $0xa0] sm:$0xff] %v1760
          %1825 = vst [vmem:[#allocation2 + $0xa8] sm:$0xff] %v1761
          %1826 = vst [vmem:[#allocation2 + $0xb0] sm:$0xff] %v1762
          %1827 = vst [vmem:[#allocation2 + $0xb8] sm:$0xff] %v1763
          %1828 = vst [vmem:[#allocation2 + $0xc0] sm:$0xff] %v1764
          %1829 = vst [vmem:[#allocation2 + $0xc8] sm:$0xff] %v1765
          %1830 = vst [vmem:[#allocation2 + $0xd0] sm:$0xff] %v1766
          %1831 = vst [vmem:[#allocation2 + $0xd8] sm:$0xff] %v1767
          %1832 = vst [vmem:[#allocation2 + $0xe0] sm:$0xff] %v1768
          %1833 = vst [vmem:[#allocation2 + $0xe8] sm:$0xff] %v1769
          %1834 = vst [vmem:[#allocation2 + $0xf0] sm:$0xff] %v1770
          %1835 = vst [vmem:[#allocation2 + $0xf8] sm:$0xff] %v1771
          %1836 = vst [vmem:[#allocation2 + $0x100] sm:$0xff] %v1772
          %1837 = vst [vmem:[#allocation2 + $0x108] sm:$0xff] %v1773
          %1838 = vst [vmem:[#allocation2 + $0x110] sm:$0xff] %v1774
          %1839 = vst [vmem:[#allocation2 + $0x118] sm:$0xff] %v1775
          %1840 = vst [vmem:[#allocation2 + $0x120] sm:$0xff] %v1776
          %1841 = vst [vmem:[#allocation2 + $0x128] sm:$0xff] %v1777
          %1842 = vst [vmem:[#allocation2 + $0x130] sm:$0xff] %v1778
          %1843 = vst [vmem:[#allocation2 + $0x138] sm:$0xff] %v1779
          %1844 = vst [vmem:[#allocation2 + $0x140] sm:$0xff] %v1780
          %1845 = vst [vmem:[#allocation2 + $0x148] sm:$0xff] %v1781
          %1846 = vst [vmem:[#allocation2 + $0x150] sm:$0xff] %v1782
          %1847 = vst [vmem:[#allocation2 + $0x158] sm:$0xff] %v1783
          %1848 = vst [vmem:[#allocation2 + $0x160] sm:$0xff] %v1784
          %1849 = vst [vmem:[#allocation2 + $0x168] sm:$0xff] %v1785
          %1850 = vst [vmem:[#allocation2 + $0x170] sm:$0xff] %v1786
          %1851 = vst [vmem:[#allocation2 + $0x178] sm:$0xff] %v1787
          %1852 = vst [vmem:[#allocation2 + $0x180] sm:$0xff] %v1788
          %1853 = vst [vmem:[#allocation2 + $0x188] sm:$0xff] %v1789
          %1854 = vst [vmem:[#allocation2 + $0x190] sm:$0xff] %v1790
          %1855 = vst [vmem:[#allocation2 + $0x198] sm:$0xff] %v1791
          %1856 = vst [vmem:[#allocation2 + $0x1a0] sm:$0xff] %v1792
          %1857 = vst [vmem:[#allocation2 + $0x1a8] sm:$0xff] %v1793
          %1858 = vst [vmem:[#allocation2 + $0x1b0] sm:$0xff] %v1794
          %1859 = vst [vmem:[#allocation2 + $0x1b8] sm:$0xff] %v1795
          %1860 = vst [vmem:[#allocation2 + $0x1c0] sm:$0xff] %v1796
          %1861 = vst [vmem:[#allocation2 + $0x1c8] sm:$0xff] %v1797
          %1862 = vst [vmem:[#allocation2 + $0x1d0] sm:$0xff] %v1798
          %1863 = vst [vmem:[#allocation2 + $0x1d8] sm:$0xff] %v1799
          %1864 = vst [vmem:[#allocation2 + $0x1e0] sm:$0xff] %v1800
          %1865 = vst [vmem:[#allocation2 + $0x1e8] sm:$0xff] %v1801
          %1866 = vst [vmem:[#allocation2 + $0x1f0] sm:$0xff] %v1802
          %1867 = vst [vmem:[#allocation2 + $0x1f8] sm:$0xff] %v1803
        $region102: #{gcn_res_forward.9} parent=85 // pred_fallthru
          _
        %p1868 = scmp.eq.s32.totalorder %s39, 2
        // Predicated region
        $region103: #{gcn_res_forward.9} parent=85 // pred_check
          %p1869 = pneg %p1868
        $region104: #{gcn_res_forward.9} parent=85 // pred_check_branch
          %1871 = sbr.rel (%p1869) target = $region106
        $region105: #{gcn_res_forward.9} parent=85 // pred_region
          %v1872 = vld [vmem:[#allocation2] sm:$0xff]
          %v1873 = vld [vmem:[#allocation2 + $0x8] sm:$0xff]
          %v1874 = vld [vmem:[#allocation2 + $0x10] sm:$0xff]
          %v1875 = vld [vmem:[#allocation2 + $0x18] sm:$0xff]
          %v1876 = vld [vmem:[#allocation2 + $0x20] sm:$0xff]
          %v1877 = vld [vmem:[#allocation2 + $0x28] sm:$0xff]
          %v1878 = vld [vmem:[#allocation2 + $0x30] sm:$0xff]
          %v1879 = vld [vmem:[#allocation2 + $0x38] sm:$0xff]
          %v1880 = vld [vmem:[#allocation2 + $0x40] sm:$0xff]
          %v1881 = vld [vmem:[#allocation2 + $0x48] sm:$0xff]
          %v1882 = vld [vmem:[#allocation2 + $0x50] sm:$0xff]
          %v1883 = vld [vmem:[#allocation2 + $0x58] sm:$0xff]
          %v1884 = vld [vmem:[#allocation2 + $0x60] sm:$0xff]
          %v1885 = vld [vmem:[#allocation2 + $0x68] sm:$0xff]
          %v1886 = vld [vmem:[#allocation2 + $0x70] sm:$0xff]
          %v1887 = vld [vmem:[#allocation2 + $0x78] sm:$0xff]
          %v1888 = vld [vmem:[#allocation2 + $0x80] sm:$0xff]
          %v1889 = vld [vmem:[#allocation2 + $0x88] sm:$0xff]
          %v1890 = vld [vmem:[#allocation2 + $0x90] sm:$0xff]
          %v1891 = vld [vmem:[#allocation2 + $0x98] sm:$0xff]
          %v1892 = vld [vmem:[#allocation2 + $0xa0] sm:$0xff]
          %v1893 = vld [vmem:[#allocation2 + $0xa8] sm:$0xff]
          %v1894 = vld [vmem:[#allocation2 + $0xb0] sm:$0xff]
          %v1895 = vld [vmem:[#allocation2 + $0xb8] sm:$0xff]
          %v1896 = vld [vmem:[#allocation2 + $0xc0] sm:$0xff]
          %v1897 = vld [vmem:[#allocation2 + $0xc8] sm:$0xff]
          %v1898 = vld [vmem:[#allocation2 + $0xd0] sm:$0xff]
          %v1899 = vld [vmem:[#allocation2 + $0xd8] sm:$0xff]
          %v1900 = vld [vmem:[#allocation2 + $0xe0] sm:$0xff]
          %v1901 = vld [vmem:[#allocation2 + $0xe8] sm:$0xff]
          %v1902 = vld [vmem:[#allocation2 + $0xf0] sm:$0xff]
          %v1903 = vld [vmem:[#allocation2 + $0xf8] sm:$0xff]
          %v1904 = vld [vmem:[#allocation2 + $0x100] sm:$0xff]
          %v1905 = vld [vmem:[#allocation2 + $0x108] sm:$0xff]
          %v1906 = vld [vmem:[#allocation2 + $0x110] sm:$0xff]
          %v1907 = vld [vmem:[#allocation2 + $0x118] sm:$0xff]
          %v1908 = vld [vmem:[#allocation2 + $0x120] sm:$0xff]
          %v1909 = vld [vmem:[#allocation2 + $0x128] sm:$0xff]
          %v1910 = vld [vmem:[#allocation2 + $0x130] sm:$0xff]
          %v1911 = vld [vmem:[#allocation2 + $0x138] sm:$0xff]
          %v1912 = vld [vmem:[#allocation2 + $0x140] sm:$0xff]
          %v1913 = vld [vmem:[#allocation2 + $0x148] sm:$0xff]
          %v1914 = vld [vmem:[#allocation2 + $0x150] sm:$0xff]
          %v1915 = vld [vmem:[#allocation2 + $0x158] sm:$0xff]
          %v1916 = vld [vmem:[#allocation2 + $0x160] sm:$0xff]
          %v1917 = vld [vmem:[#allocation2 + $0x168] sm:$0xff]
          %v1918 = vld [vmem:[#allocation2 + $0x170] sm:$0xff]
          %v1919 = vld [vmem:[#allocation2 + $0x178] sm:$0xff]
          %v1920 = vld [vmem:[#allocation2 + $0x180] sm:$0xff]
          %v1921 = vld [vmem:[#allocation2 + $0x188] sm:$0xff]
          %v1922 = vld [vmem:[#allocation2 + $0x190] sm:$0xff]
          %v1923 = vld [vmem:[#allocation2 + $0x198] sm:$0xff]
          %v1924 = vld [vmem:[#allocation2 + $0x1a0] sm:$0xff]
          %v1925 = vld [vmem:[#allocation2 + $0x1a8] sm:$0xff]
          %v1926 = vld [vmem:[#allocation2 + $0x1b0] sm:$0xff]
          %v1927 = vld [vmem:[#allocation2 + $0x1b8] sm:$0xff]
          %v1928 = vld [vmem:[#allocation2 + $0x1c0] sm:$0xff]
          %v1929 = vld [vmem:[#allocation2 + $0x1c8] sm:$0xff]
          %v1930 = vld [vmem:[#allocation2 + $0x1d0] sm:$0xff]
          %v1931 = vld [vmem:[#allocation2 + $0x1d8] sm:$0xff]
          %v1932 = vld [vmem:[#allocation2 + $0x1e0] sm:$0xff]
          %v1933 = vld [vmem:[#allocation2 + $0x1e8] sm:$0xff]
          %v1934 = vld [vmem:[#allocation2 + $0x1f0] sm:$0xff]
          %v1935 = vld [vmem:[#allocation2 + $0x1f8] sm:$0xff]
          %v1936 = vpack.c.bf16 %v1873, %v1872
          %v1937 = vpack.c.bf16 %v1875, %v1874
          %v1938 = vpack.c.bf16 %v1877, %v1876
          %v1939 = vpack.c.bf16 %v1879, %v1878
          %v1940 = vpack.c.bf16 %v1881, %v1880
          %v1941 = vpack.c.bf16 %v1883, %v1882
          %v1942 = vpack.c.bf16 %v1885, %v1884
          %v1943 = vpack.c.bf16 %v1887, %v1886
          %v1944 = vpack.c.bf16 %v1889, %v1888
          %v1945 = vpack.c.bf16 %v1891, %v1890
          %v1946 = vpack.c.bf16 %v1893, %v1892
          %v1947 = vpack.c.bf16 %v1895, %v1894
          %v1948 = vpack.c.bf16 %v1897, %v1896
          %v1949 = vpack.c.bf16 %v1899, %v1898
          %v1950 = vpack.c.bf16 %v1901, %v1900
          %v1951 = vpack.c.bf16 %v1903, %v1902
          %v1952 = vpack.c.bf16 %v1905, %v1904
          %v1953 = vpack.c.bf16 %v1907, %v1906
          %v1954 = vpack.c.bf16 %v1909, %v1908
          %v1955 = vpack.c.bf16 %v1911, %v1910
          %v1956 = vpack.c.bf16 %v1913, %v1912
          %v1957 = vpack.c.bf16 %v1915, %v1914
          %v1958 = vpack.c.bf16 %v1917, %v1916
          %v1959 = vpack.c.bf16 %v1919, %v1918
          %v1960 = vpack.c.bf16 %v1921, %v1920
          %v1961 = vpack.c.bf16 %v1923, %v1922
          %v1962 = vpack.c.bf16 %v1925, %v1924
          %v1963 = vpack.c.bf16 %v1927, %v1926
          %v1964 = vpack.c.bf16 %v1929, %v1928
          %v1965 = vpack.c.bf16 %v1931, %v1930
          %v1966 = vpack.c.bf16 %v1933, %v1932
          %v1967 = vpack.c.bf16 %v1935, %v1934
          %v1968 = vld [vmem:[%s8] sm:$0xf]
          %v1969 = vld [vmem:[%s8 + $0x4] sm:$0xf]
          %v1970 = vld [vmem:[%s8 + $0x8] sm:$0xf]
          %v1971 = vld [vmem:[%s8 + $0xc] sm:$0xf]
          %v1972 = vld [vmem:[%s8 + $0x10] sm:$0xf]
          %v1973 = vld [vmem:[%s8 + $0x14] sm:$0xf]
          %v1974 = vld [vmem:[%s8 + $0x18] sm:$0xf]
          %v1975 = vld [vmem:[%s8 + $0x1c] sm:$0xf]
          %v1976 = vld [vmem:[%s8 + $0x20] sm:$0xf]
          %v1977 = vld [vmem:[%s8 + $0x24] sm:$0xf]
          %v1978 = vld [vmem:[%s8 + $0x28] sm:$0xf]
          %v1979 = vld [vmem:[%s8 + $0x2c] sm:$0xf]
          %v1980 = vld [vmem:[%s8 + $0x30] sm:$0xf]
          %v1981 = vld [vmem:[%s8 + $0x34] sm:$0xf]
          %v1982 = vld [vmem:[%s8 + $0x38] sm:$0xf]
          %v1983 = vld [vmem:[%s8 + $0x3c] sm:$0xf]
          %v1984 = vld [vmem:[%s9] sm:$0x1]
          %v1986 = vlaneseq
          %v1987 = vshrl.u32 %v1986, 7
          %v1988 = vsub.s32 0, %v1987
          %v1989 = vrot.slane %v1984, %v1988
          %v2007 = vunpack.c.l.b16 %v1968
          %v2008 = vunpack.c.l.b16 %v1969
          %v2009 = vunpack.c.l.b16 %v1970
          %v2010 = vunpack.c.l.b16 %v1971
          %v2011 = vunpack.c.l.b16 %v1972
          %v2012 = vunpack.c.l.b16 %v1973
          %v2013 = vunpack.c.l.b16 %v1974
          %v2014 = vunpack.c.l.b16 %v1975
          %v2015 = vunpack.c.l.b16 %v1976
          %v2016 = vunpack.c.l.b16 %v1977
          %v2017 = vunpack.c.l.b16 %v1978
          %v2018 = vunpack.c.l.b16 %v1979
          %v2019 = vunpack.c.l.b16 %v1980
          %v2020 = vunpack.c.l.b16 %v1981
          %v2021 = vunpack.c.l.b16 %v1982
          %v2022 = vunpack.c.l.b16 %v1983
          %v2023 = vpack.c.b16 %v2008, %v2007
          %v2024 = vpack.c.b16 %v2010, %v2009
          %v2025 = vpack.c.b16 %v2012, %v2011
          %v2026 = vpack.c.b16 %v2014, %v2013
          %v2027 = vpack.c.b16 %v2016, %v2015
          %v2028 = vpack.c.b16 %v2018, %v2017
          %v2029 = vpack.c.b16 %v2020, %v2019
          %v2030 = vpack.c.b16 %v2022, %v2021
          %2039 = vmatprep.subr.bf16.mxu0 0
          %2040 = vmatpush1.bf16.msra.mxu0 %v2023
          %2041 = vmatprep.subr.bf16.mxu0 0
          %2042 = vmatpush1.bf16.msra.mxu0 %v2024
          %2043 = vmatprep.subr.bf16.mxu0 0
          %2044 = vmatpush1.bf16.msra.mxu0 %v2025
          %2045 = vmatprep.subr.bf16.mxu0 0
          %2046 = vmatpush1.bf16.msra.mxu0 %v2026
          %2047 = vmatprep.subr.bf16.mxu0 0
          %2048 = vmatpush1.bf16.msra.mxu0 %v2027
          %2049 = vmatprep.subr.bf16.mxu0 0
          %2050 = vmatpush1.bf16.msra.mxu0 %v2028
          %2051 = vmatprep.subr.bf16.mxu0 0
          %2052 = vmatpush1.bf16.msra.mxu0 %v2029
          %2053 = vmatprep.subr.bf16.mxu0 0
          %2054 = vmatpush1.bf16.msra.mxu0 %v2030
          %2055 = vmatprep.subr.bf16.mxu0 0
          %2056 = vmatpush1.bf16.msra.mxu0 0
          %2057 = vmatprep.subr.bf16.mxu0 0
          %2058 = vmatpush1.bf16.msra.mxu0 0
          %2059 = vmatprep.subr.bf16.mxu0 0
          %2060 = vmatpush1.bf16.msra.mxu0 0
          %2061 = vmatprep.subr.bf16.mxu0 0
          %2062 = vmatpush1.bf16.msra.mxu0 0
          %2063 = vmatprep.subr.bf16.mxu0 0
          %2064 = vmatpush1.bf16.msra.mxu0 0
          %2065 = vmatprep.subr.bf16.mxu0 0
          %2066 = vmatpush1.bf16.msra.mxu0 0
          %2067 = vmatprep.subr.bf16.mxu0 0
          %2068 = vmatpush1.bf16.msra.mxu0 0
          %2069 = vmatprep.subr.bf16.mxu0 0
          %2070 = vmatpush1.bf16.msra.mxu0 0
          %2071 = vmatprep.mubr.bf16.mxu0 0
          %2072 = vmatmul.mubr.bf16.gmra.mrb[0].mxu0 %v1936
          %v2073 = vpop.f32.mrb[0].mxu0
          %v2074 = vadd.f32 %v1989, %v2073
          %v2075 = vpop.f32.mrb[0].mxu0
          %v2076 = vpop.f32.mrb[0].mxu0
          %v2077 = vadd.f32 %v1989, %v2076
          %v2078 = vpop.f32.mrb[0].mxu0
          %2079 = vmatprep.mubr.bf16.mxu0 0
          %2080 = vmatmul.mubr.bf16.gmra.mrb[0].mxu0 %v1937
          %v2081 = vpop.f32.mrb[0].mxu0
          %v2082 = vadd.f32 %v1989, %v2081
          %v2083 = vpop.f32.mrb[0].mxu0
          %v2084 = vpop.f32.mrb[0].mxu0
          %v2085 = vadd.f32 %v1989, %v2084
          %v2086 = vpop.f32.mrb[0].mxu0
          %2087 = vmatprep.mubr.bf16.mxu0 0
          %2088 = vmatmul.mubr.bf16.gmra.mrb[0].mxu0 %v1938
          %v2089 = vpop.f32.mrb[0].mxu0
          %v2090 = vadd.f32 %v1989, %v2089
          %v2091 = vpop.f32.mrb[0].mxu0
          %v2092 = vpop.f32.mrb[0].mxu0
          %v2093 = vadd.f32 %v1989, %v2092
          %v2094 = vpop.f32.mrb[0].mxu0
          %2095 = vmatprep.mubr.bf16.mxu0 0
          %2096 = vmatmul.mubr.bf16.gmra.mrb[0].mxu0 %v1939
          %v2097 = vpop.f32.mrb[0].mxu0
          %v2098 = vadd.f32 %v1989, %v2097
          %v2099 = vpop.f32.mrb[0].mxu0
          %v2100 = vpop.f32.mrb[0].mxu0
          %v2101 = vadd.f32 %v1989, %v2100
          %v2102 = vpop.f32.mrb[0].mxu0
          %2103 = vmatprep.mubr.bf16.mxu0 0
          %2104 = vmatmul.mubr.bf16.gmra.mrb[0].mxu0 %v1940
          %v2105 = vpop.f32.mrb[0].mxu0
          %v2106 = vadd.f32 %v1989, %v2105
          %v2107 = vpop.f32.mrb[0].mxu0
          %v2108 = vpop.f32.mrb[0].mxu0
          %v2109 = vadd.f32 %v1989, %v2108
          %v2110 = vpop.f32.mrb[0].mxu0
          %2111 = vmatprep.mubr.bf16.mxu0 0
          %2112 = vmatmul.mubr.bf16.gmra.mrb[0].mxu0 %v1941
          %v2113 = vpop.f32.mrb[0].mxu0
          %v2114 = vadd.f32 %v1989, %v2113
          %v2115 = vpop.f32.mrb[0].mxu0
          %v2116 = vpop.f32.mrb[0].mxu0
          %v2117 = vadd.f32 %v1989, %v2116
          %v2118 = vpop.f32.mrb[0].mxu0
          %2119 = vmatprep.mubr.bf16.mxu0 0
          %2120 = vmatmul.mubr.bf16.gmra.mrb[0].mxu0 %v1942
          %v2121 = vpop.f32.mrb[0].mxu0
          %v2122 = vadd.f32 %v1989, %v2121
          %v2123 = vpop.f32.mrb[0].mxu0
          %v2124 = vpop.f32.mrb[0].mxu0
          %v2125 = vadd.f32 %v1989, %v2124
          %v2126 = vpop.f32.mrb[0].mxu0
          %2127 = vmatprep.mubr.bf16.mxu0 0
          %2128 = vmatmul.mubr.bf16.gmra.mrb[0].mxu0 %v1943
          %v2129 = vpop.f32.mrb[0].mxu0
          %v2130 = vadd.f32 %v1989, %v2129
          %v2131 = vpop.f32.mrb[0].mxu0
          %v2132 = vpop.f32.mrb[0].mxu0
          %v2133 = vadd.f32 %v1989, %v2132
          %v2134 = vpop.f32.mrb[0].mxu0
          %2135 = vmatprep.mubr.bf16.mxu0 0
          %2136 = vmatmul.mubr.bf16.gmra.mrb[0].mxu0 %v1944
          %v2137 = vpop.f32.mrb[0].mxu0
          %v2138 = vadd.f32 %v1989, %v2137
          %v2139 = vpop.f32.mrb[0].mxu0
          %v2140 = vpop.f32.mrb[0].mxu0
          %v2141 = vadd.f32 %v1989, %v2140
          %v2142 = vpop.f32.mrb[0].mxu0
          %2143 = vmatprep.mubr.bf16.mxu0 0
          %2144 = vmatmul.mubr.bf16.gmra.mrb[0].mxu0 %v1945
          %v2145 = vpop.f32.mrb[0].mxu0
          %v2146 = vadd.f32 %v1989, %v2145
          %v2147 = vpop.f32.mrb[0].mxu0
          %v2148 = vpop.f32.mrb[0].mxu0
          %v2149 = vadd.f32 %v1989, %v2148
          %v2150 = vpop.f32.mrb[0].mxu0
          %2151 = vmatprep.mubr.bf16.mxu0 0
          %2152 = vmatmul.mubr.bf16.gmra.mrb[0].mxu0 %v1946
          %v2153 = vpop.f32.mrb[0].mxu0
          %v2154 = vadd.f32 %v1989, %v2153
          %v2155 = vpop.f32.mrb[0].mxu0
          %v2156 = vpop.f32.mrb[0].mxu0
          %v2157 = vadd.f32 %v1989, %v2156
          %v2158 = vpop.f32.mrb[0].mxu0
          %2159 = vmatprep.mubr.bf16.mxu0 0
          %2160 = vmatmul.mubr.bf16.gmra.mrb[0].mxu0 %v1947
          %v2161 = vpop.f32.mrb[0].mxu0
          %v2162 = vadd.f32 %v1989, %v2161
          %v2163 = vpop.f32.mrb[0].mxu0
          %v2164 = vpop.f32.mrb[0].mxu0
          %v2165 = vadd.f32 %v1989, %v2164
          %v2166 = vpop.f32.mrb[0].mxu0
          %2167 = vmatprep.mubr.bf16.mxu0 0
          %2168 = vmatmul.mubr.bf16.gmra.mrb[0].mxu0 %v1948
          %v2169 = vpop.f32.mrb[0].mxu0
          %v2170 = vadd.f32 %v1989, %v2169
          %v2171 = vpop.f32.mrb[0].mxu0
          %v2172 = vpop.f32.mrb[0].mxu0
          %v2173 = vadd.f32 %v1989, %v2172
          %v2174 = vpop.f32.mrb[0].mxu0
          %2175 = vmatprep.mubr.bf16.mxu0 0
          %2176 = vmatmul.mubr.bf16.gmra.mrb[0].mxu0 %v1949
          %v2177 = vpop.f32.mrb[0].mxu0
          %v2178 = vadd.f32 %v1989, %v2177
          %v2179 = vpop.f32.mrb[0].mxu0
          %v2180 = vpop.f32.mrb[0].mxu0
          %v2181 = vadd.f32 %v1989, %v2180
          %v2182 = vpop.f32.mrb[0].mxu0
          %2183 = vmatprep.mubr.bf16.mxu0 0
          %2184 = vmatmul.mubr.bf16.gmra.mrb[0].mxu0 %v1950
          %v2185 = vpop.f32.mrb[0].mxu0
          %v2186 = vadd.f32 %v1989, %v2185
          %v2187 = vpop.f32.mrb[0].mxu0
          %v2188 = vpop.f32.mrb[0].mxu0
          %v2189 = vadd.f32 %v1989, %v2188
          %v2190 = vpop.f32.mrb[0].mxu0
          %2191 = vmatprep.mubr.bf16.mxu0 0
          %2192 = vmatmul.mubr.bf16.gmra.mrb[0].mxu0 %v1951
          %v2193 = vpop.f32.mrb[0].mxu0
          %v2194 = vadd.f32 %v1989, %v2193
          %v2195 = vpop.f32.mrb[0].mxu0
          %v2196 = vpop.f32.mrb[0].mxu0
          %v2197 = vadd.f32 %v1989, %v2196
          %v2198 = vpop.f32.mrb[0].mxu0
          %2199 = vmatprep.mubr.bf16.mxu0 0
          %2200 = vmatmul.mubr.bf16.gmra.mrb[0].mxu0 %v1952
          %v2201 = vpop.f32.mrb[0].mxu0
          %v2202 = vadd.f32 %v1989, %v2201
          %v2203 = vpop.f32.mrb[0].mxu0
          %v2204 = vpop.f32.mrb[0].mxu0
          %v2205 = vadd.f32 %v1989, %v2204
          %v2206 = vpop.f32.mrb[0].mxu0
          %2207 = vmatprep.mubr.bf16.mxu0 0
          %2208 = vmatmul.mubr.bf16.gmra.mrb[0].mxu0 %v1953
          %v2209 = vpop.f32.mrb[0].mxu0
          %v2210 = vadd.f32 %v1989, %v2209
          %v2211 = vpop.f32.mrb[0].mxu0
          %v2212 = vpop.f32.mrb[0].mxu0
          %v2213 = vadd.f32 %v1989, %v2212
          %v2214 = vpop.f32.mrb[0].mxu0
          %2215 = vmatprep.mubr.bf16.mxu0 0
          %2216 = vmatmul.mubr.bf16.gmra.mrb[0].mxu0 %v1954
          %v2217 = vpop.f32.mrb[0].mxu0
          %v2218 = vadd.f32 %v1989, %v2217
          %v2219 = vpop.f32.mrb[0].mxu0
          %v2220 = vpop.f32.mrb[0].mxu0
          %v2221 = vadd.f32 %v1989, %v2220
          %v2222 = vpop.f32.mrb[0].mxu0
          %2223 = vmatprep.mubr.bf16.mxu0 0
          %2224 = vmatmul.mubr.bf16.gmra.mrb[0].mxu0 %v1955
          %v2225 = vpop.f32.mrb[0].mxu0
          %v2226 = vadd.f32 %v1989, %v2225
          %v2227 = vpop.f32.mrb[0].mxu0
          %v2228 = vpop.f32.mrb[0].mxu0
          %v2229 = vadd.f32 %v1989, %v2228
          %v2230 = vpop.f32.mrb[0].mxu0
          %2231 = vmatprep.mubr.bf16.mxu0 0
          %2232 = vmatmul.mubr.bf16.gmra.mrb[0].mxu0 %v1956
          %v2233 = vpop.f32.mrb[0].mxu0
          %v2234 = vadd.f32 %v1989, %v2233
          %v2235 = vpop.f32.mrb[0].mxu0
          %v2236 = vpop.f32.mrb[0].mxu0
          %v2237 = vadd.f32 %v1989, %v2236
          %v2238 = vpop.f32.mrb[0].mxu0
          %2239 = vmatprep.mubr.bf16.mxu0 0
          %2240 = vmatmul.mubr.bf16.gmra.mrb[0].mxu0 %v1957
          %v2241 = vpop.f32.mrb[0].mxu0
          %v2242 = vadd.f32 %v1989, %v2241
          %v2243 = vpop.f32.mrb[0].mxu0
          %v2244 = vpop.f32.mrb[0].mxu0
          %v2245 = vadd.f32 %v1989, %v2244
          %v2246 = vpop.f32.mrb[0].mxu0
          %2247 = vmatprep.mubr.bf16.mxu0 0
          %2248 = vmatmul.mubr.bf16.gmra.mrb[0].mxu0 %v1958
          %v2249 = vpop.f32.mrb[0].mxu0
          %v2250 = vadd.f32 %v1989, %v2249
          %v2251 = vpop.f32.mrb[0].mxu0
          %v2252 = vpop.f32.mrb[0].mxu0
          %v2253 = vadd.f32 %v1989, %v2252
          %v2254 = vpop.f32.mrb[0].mxu0
          %2255 = vmatprep.mubr.bf16.mxu0 0
          %2256 = vmatmul.mubr.bf16.gmra.mrb[0].mxu0 %v1959
          %v2257 = vpop.f32.mrb[0].mxu0
          %v2258 = vadd.f32 %v1989, %v2257
          %v2259 = vpop.f32.mrb[0].mxu0
          %v2260 = vpop.f32.mrb[0].mxu0
          %v2261 = vadd.f32 %v1989, %v2260
          %v2262 = vpop.f32.mrb[0].mxu0
          %2263 = vmatprep.mubr.bf16.mxu0 0
          %2264 = vmatmul.mubr.bf16.gmra.mrb[0].mxu0 %v1960
          %v2265 = vpop.f32.mrb[0].mxu0
          %v2266 = vadd.f32 %v1989, %v2265
          %v2267 = vpop.f32.mrb[0].mxu0
          %v2268 = vpop.f32.mrb[0].mxu0
          %v2269 = vadd.f32 %v1989, %v2268
          %v2270 = vpop.f32.mrb[0].mxu0
          %2271 = vmatprep.mubr.bf16.mxu0 0
          %2272 = vmatmul.mubr.bf16.gmra.mrb[0].mxu0 %v1961
          %v2273 = vpop.f32.mrb[0].mxu0
          %v2274 = vadd.f32 %v1989, %v2273
          %v2275 = vpop.f32.mrb[0].mxu0
          %v2276 = vpop.f32.mrb[0].mxu0
          %v2277 = vadd.f32 %v1989, %v2276
          %v2278 = vpop.f32.mrb[0].mxu0
          %2279 = vmatprep.mubr.bf16.mxu0 0
          %2280 = vmatmul.mubr.bf16.gmra.mrb[0].mxu0 %v1962
          %v2281 = vpop.f32.mrb[0].mxu0
          %v2282 = vadd.f32 %v1989, %v2281
          %v2283 = vpop.f32.mrb[0].mxu0
          %v2284 = vpop.f32.mrb[0].mxu0
          %v2285 = vadd.f32 %v1989, %v2284
          %v2286 = vpop.f32.mrb[0].mxu0
          %2287 = vmatprep.mubr.bf16.mxu0 0
          %2288 = vmatmul.mubr.bf16.gmra.mrb[0].mxu0 %v1963
          %v2289 = vpop.f32.mrb[0].mxu0
          %v2290 = vadd.f32 %v1989, %v2289
          %v2291 = vpop.f32.mrb[0].mxu0
          %v2292 = vpop.f32.mrb[0].mxu0
          %v2293 = vadd.f32 %v1989, %v2292
          %v2294 = vpop.f32.mrb[0].mxu0
          %2295 = vmatprep.mubr.bf16.mxu0 0
          %2296 = vmatmul.mubr.bf16.gmra.mrb[0].mxu0 %v1964
          %v2297 = vpop.f32.mrb[0].mxu0
          %v2298 = vadd.f32 %v1989, %v2297
          %v2299 = vpop.f32.mrb[0].mxu0
          %v2300 = vpop.f32.mrb[0].mxu0
          %v2301 = vadd.f32 %v1989, %v2300
          %v2302 = vpop.f32.mrb[0].mxu0
          %2303 = vmatprep.mubr.bf16.mxu0 0
          %2304 = vmatmul.mubr.bf16.gmra.mrb[0].mxu0 %v1965
          %v2305 = vpop.f32.mrb[0].mxu0
          %v2306 = vadd.f32 %v1989, %v2305
          %v2307 = vpop.f32.mrb[0].mxu0
          %v2308 = vpop.f32.mrb[0].mxu0
          %v2309 = vadd.f32 %v1989, %v2308
          %v2310 = vpop.f32.mrb[0].mxu0
          %2311 = vmatprep.mubr.bf16.mxu0 0
          %2312 = vmatmul.mubr.bf16.gmra.mrb[0].mxu0 %v1966
          %v2313 = vpop.f32.mrb[0].mxu0
          %v2314 = vadd.f32 %v1989, %v2313
          %v2315 = vpop.f32.mrb[0].mxu0
          %v2316 = vpop.f32.mrb[0].mxu0
          %v2317 = vadd.f32 %v1989, %v2316
          %v2318 = vpop.f32.mrb[0].mxu0
          %2319 = vmatprep.mubr.bf16.mxu0 0
          %2320 = vmatmul.mubr.bf16.gmra.mrb[0].mxu0 %v1967
          %v2321 = vpop.f32.mrb[0].mxu0
          %v2322 = vadd.f32 %v1989, %v2321
          %v2323 = vpop.f32.mrb[0].mxu0
          %v2324 = vpop.f32.mrb[0].mxu0
          %v2325 = vadd.f32 %v1989, %v2324
          %v2326 = vpop.f32.mrb[0].mxu0
          %2327 = vdwg.mxu0
          %v2328 = vmax.f32 %v2074, 0.0
          %v2329 = vmax.f32 %v2077, 0.0
          %v2330 = vmax.f32 %v2082, 0.0
          %v2331 = vmax.f32 %v2085, 0.0
          %v2332 = vmax.f32 %v2090, 0.0
          %v2333 = vmax.f32 %v2093, 0.0
          %v2334 = vmax.f32 %v2098, 0.0
          %v2335 = vmax.f32 %v2101, 0.0
          %v2336 = vmax.f32 %v2106, 0.0
          %v2337 = vmax.f32 %v2109, 0.0
          %v2338 = vmax.f32 %v2114, 0.0
          %v2339 = vmax.f32 %v2117, 0.0
          %v2340 = vmax.f32 %v2122, 0.0
          %v2341 = vmax.f32 %v2125, 0.0
          %v2342 = vmax.f32 %v2130, 0.0
          %v2343 = vmax.f32 %v2133, 0.0
          %v2344 = vmax.f32 %v2138, 0.0
          %v2345 = vmax.f32 %v2141, 0.0
          %v2346 = vmax.f32 %v2146, 0.0
          %v2347 = vmax.f32 %v2149, 0.0
          %v2348 = vmax.f32 %v2154, 0.0
          %v2349 = vmax.f32 %v2157, 0.0
          %v2350 = vmax.f32 %v2162, 0.0
          %v2351 = vmax.f32 %v2165, 0.0
          %v2352 = vmax.f32 %v2170, 0.0
          %v2353 = vmax.f32 %v2173, 0.0
          %v2354 = vmax.f32 %v2178, 0.0
          %v2355 = vmax.f32 %v2181, 0.0
          %v2356 = vmax.f32 %v2186, 0.0
          %v2357 = vmax.f32 %v2189, 0.0
          %v2358 = vmax.f32 %v2194, 0.0
          %v2359 = vmax.f32 %v2197, 0.0
          %v2360 = vmax.f32 %v2202, 0.0
          %v2361 = vmax.f32 %v2205, 0.0
          %v2362 = vmax.f32 %v2210, 0.0
          %v2363 = vmax.f32 %v2213, 0.0
          %v2364 = vmax.f32 %v2218, 0.0
          %v2365 = vmax.f32 %v2221, 0.0
          %v2366 = vmax.f32 %v2226, 0.0
          %v2367 = vmax.f32 %v2229, 0.0
          %v2368 = vmax.f32 %v2234, 0.0
          %v2369 = vmax.f32 %v2237, 0.0
          %v2370 = vmax.f32 %v2242, 0.0
          %v2371 = vmax.f32 %v2245, 0.0
          %v2372 = vmax.f32 %v2250, 0.0
          %v2373 = vmax.f32 %v2253, 0.0
          %v2374 = vmax.f32 %v2258, 0.0
          %v2375 = vmax.f32 %v2261, 0.0
          %v2376 = vmax.f32 %v2266, 0.0
          %v2377 = vmax.f32 %v2269, 0.0
          %v2378 = vmax.f32 %v2274, 0.0
          %v2379 = vmax.f32 %v2277, 0.0
          %v2380 = vmax.f32 %v2282, 0.0
          %v2381 = vmax.f32 %v2285, 0.0
          %v2382 = vmax.f32 %v2290, 0.0
          %v2383 = vmax.f32 %v2293, 0.0
          %v2384 = vmax.f32 %v2298, 0.0
          %v2385 = vmax.f32 %v2301, 0.0
          %v2386 = vmax.f32 %v2306, 0.0
          %v2387 = vmax.f32 %v2309, 0.0
          %v2388 = vmax.f32 %v2314, 0.0
          %v2389 = vmax.f32 %v2317, 0.0
          %v2390 = vmax.f32 %v2322, 0.0
          %v2391 = vmax.f32 %v2325, 0.0
          %s2392 = sld [smem:[#allocation6]]
          %v2393 = vld [vmem:[%s781] sm:$0xf]
          %v2394 = vld [vmem:[%s781 + $0x4] sm:$0xf]
          %v2395 = vld [vmem:[%s781 + $0x8] sm:$0xf]
          %v2396 = vld [vmem:[%s781 + $0xc] sm:$0xf]
          %v2397 = vld [vmem:[%s781 + $0x10] sm:$0xf]
          %v2398 = vld [vmem:[%s781 + $0x14] sm:$0xf]
          %v2399 = vld [vmem:[%s781 + $0x18] sm:$0xf]
          %v2400 = vld [vmem:[%s781 + $0x1c] sm:$0xf]
          %v2401 = vld [vmem:[%s781 + $0x20] sm:$0xf]
          %v2402 = vld [vmem:[%s781 + $0x24] sm:$0xf]
          %v2403 = vld [vmem:[%s781 + $0x28] sm:$0xf]
          %v2404 = vld [vmem:[%s781 + $0x2c] sm:$0xf]
          %v2405 = vld [vmem:[%s781 + $0x30] sm:$0xf]
          %v2406 = vld [vmem:[%s781 + $0x34] sm:$0xf]
          %v2407 = vld [vmem:[%s781 + $0x38] sm:$0xf]
          %v2408 = vld [vmem:[%s781 + $0x3c] sm:$0xf]
          %v2409 = vld [vmem:[%s781 + $0x40] sm:$0xf]
          %v2410 = vld [vmem:[%s781 + $0x44] sm:$0xf]
          %v2411 = vld [vmem:[%s781 + $0x48] sm:$0xf]
          %v2412 = vld [vmem:[%s781 + $0x4c] sm:$0xf]
          %v2413 = vld [vmem:[%s781 + $0x50] sm:$0xf]
          %v2414 = vld [vmem:[%s781 + $0x54] sm:$0xf]
          %v2415 = vld [vmem:[%s781 + $0x58] sm:$0xf]
          %v2416 = vld [vmem:[%s781 + $0x5c] sm:$0xf]
          %v2417 = vld [vmem:[%s781 + $0x60] sm:$0xf]
          %v2418 = vld [vmem:[%s781 + $0x64] sm:$0xf]
          %v2419 = vld [vmem:[%s781 + $0x68] sm:$0xf]
          %v2420 = vld [vmem:[%s781 + $0x6c] sm:$0xf]
          %v2421 = vld [vmem:[%s781 + $0x70] sm:$0xf]
          %v2422 = vld [vmem:[%s781 + $0x74] sm:$0xf]
          %v2423 = vld [vmem:[%s781 + $0x78] sm:$0xf]
          %v2424 = vld [vmem:[%s781 + $0x7c] sm:$0xf]
          %v2425 = vld [vmem:[%s781 + $0x80] sm:$0xf]
          %v2426 = vld [vmem:[%s781 + $0x84] sm:$0xf]
          %v2427 = vld [vmem:[%s781 + $0x88] sm:$0xf]
          %v2428 = vld [vmem:[%s781 + $0x8c] sm:$0xf]
          %v2429 = vld [vmem:[%s781 + $0x90] sm:$0xf]
          %v2430 = vld [vmem:[%s781 + $0x94] sm:$0xf]
          %v2431 = vld [vmem:[%s781 + $0x98] sm:$0xf]
          %v2432 = vld [vmem:[%s781 + $0x9c] sm:$0xf]
          %v2433 = vld [vmem:[%s781 + $0xa0] sm:$0xf]
          %v2434 = vld [vmem:[%s781 + $0xa4] sm:$0xf]
          %v2435 = vld [vmem:[%s781 + $0xa8] sm:$0xf]
          %v2436 = vld [vmem:[%s781 + $0xac] sm:$0xf]
          %v2437 = vld [vmem:[%s781 + $0xb0] sm:$0xf]
          %v2438 = vld [vmem:[%s781 + $0xb4] sm:$0xf]
          %v2439 = vld [vmem:[%s781 + $0xb8] sm:$0xf]
          %v2440 = vld [vmem:[%s781 + $0xbc] sm:$0xf]
          %v2441 = vld [vmem:[%s781 + $0xc0] sm:$0xf]
          %v2442 = vld [vmem:[%s781 + $0xc4] sm:$0xf]
          %v2443 = vld [vmem:[%s781 + $0xc8] sm:$0xf]
          %v2444 = vld [vmem:[%s781 + $0xcc] sm:$0xf]
          %v2445 = vld [vmem:[%s781 + $0xd0] sm:$0xf]
          %v2446 = vld [vmem:[%s781 + $0xd4] sm:$0xf]
          %v2447 = vld [vmem:[%s781 + $0xd8] sm:$0xf]
          %v2448 = vld [vmem:[%s781 + $0xdc] sm:$0xf]
          %v2449 = vld [vmem:[%s781 + $0xe0] sm:$0xf]
          %v2450 = vld [vmem:[%s781 + $0xe4] sm:$0xf]
          %v2451 = vld [vmem:[%s781 + $0xe8] sm:$0xf]
          %v2452 = vld [vmem:[%s781 + $0xec] sm:$0xf]
          %v2453 = vld [vmem:[%s781 + $0xf0] sm:$0xf]
          %v2454 = vld [vmem:[%s781 + $0xf4] sm:$0xf]
          %v2455 = vld [vmem:[%s781 + $0xf8] sm:$0xf]
          %v2456 = vld [vmem:[%s781 + $0xfc] sm:$0xf]
          %v2457 = vunpack.c.l.bf16 %v2393
          %v2458 = vunpack.c.l.bf16 %v2394
          %v2459 = vunpack.c.l.bf16 %v2395
          %v2460 = vunpack.c.l.bf16 %v2396
          %v2461 = vunpack.c.l.bf16 %v2397
          %v2462 = vunpack.c.l.bf16 %v2398
          %v2463 = vunpack.c.l.bf16 %v2399
          %v2464 = vunpack.c.l.bf16 %v2400
          %v2465 = vunpack.c.l.bf16 %v2401
          %v2466 = vunpack.c.l.bf16 %v2402
          %v2467 = vunpack.c.l.bf16 %v2403
          %v2468 = vunpack.c.l.bf16 %v2404
          %v2469 = vunpack.c.l.bf16 %v2405
          %v2470 = vunpack.c.l.bf16 %v2406
          %v2471 = vunpack.c.l.bf16 %v2407
          %v2472 = vunpack.c.l.bf16 %v2408
          %v2473 = vunpack.c.l.bf16 %v2409
          %v2474 = vunpack.c.l.bf16 %v2410
          %v2475 = vunpack.c.l.bf16 %v2411
          %v2476 = vunpack.c.l.bf16 %v2412
          %v2477 = vunpack.c.l.bf16 %v2413
          %v2478 = vunpack.c.l.bf16 %v2414
          %v2479 = vunpack.c.l.bf16 %v2415
          %v2480 = vunpack.c.l.bf16 %v2416
          %v2481 = vunpack.c.l.bf16 %v2417
          %v2482 = vunpack.c.l.bf16 %v2418
          %v2483 = vunpack.c.l.bf16 %v2419
          %v2484 = vunpack.c.l.bf16 %v2420
          %v2485 = vunpack.c.l.bf16 %v2421
          %v2486 = vunpack.c.l.bf16 %v2422
          %v2487 = vunpack.c.l.bf16 %v2423
          %v2488 = vunpack.c.l.bf16 %v2424
          %v2489 = vunpack.c.l.bf16 %v2425
          %v2490 = vunpack.c.l.bf16 %v2426
          %v2491 = vunpack.c.l.bf16 %v2427
          %v2492 = vunpack.c.l.bf16 %v2428
          %v2493 = vunpack.c.l.bf16 %v2429
          %v2494 = vunpack.c.l.bf16 %v2430
          %v2495 = vunpack.c.l.bf16 %v2431
          %v2496 = vunpack.c.l.bf16 %v2432
          %v2497 = vunpack.c.l.bf16 %v2433
          %v2498 = vunpack.c.l.bf16 %v2434
          %v2499 = vunpack.c.l.bf16 %v2435
          %v2500 = vunpack.c.l.bf16 %v2436
          %v2501 = vunpack.c.l.bf16 %v2437
          %v2502 = vunpack.c.l.bf16 %v2438
          %v2503 = vunpack.c.l.bf16 %v2439
          %v2504 = vunpack.c.l.bf16 %v2440
          %v2505 = vunpack.c.l.bf16 %v2441
          %v2506 = vunpack.c.l.bf16 %v2442
          %v2507 = vunpack.c.l.bf16 %v2443
          %v2508 = vunpack.c.l.bf16 %v2444
          %v2509 = vunpack.c.l.bf16 %v2445
          %v2510 = vunpack.c.l.bf16 %v2446
          %v2511 = vunpack.c.l.bf16 %v2447
          %v2512 = vunpack.c.l.bf16 %v2448
          %v2513 = vunpack.c.l.bf16 %v2449
          %v2514 = vunpack.c.l.bf16 %v2450
          %v2515 = vunpack.c.l.bf16 %v2451
          %v2516 = vunpack.c.l.bf16 %v2452
          %v2517 = vunpack.c.l.bf16 %v2453
          %v2518 = vunpack.c.l.bf16 %v2454
          %v2519 = vunpack.c.l.bf16 %v2455
          %v2520 = vunpack.c.l.bf16 %v2456
          %v2521 = vstv %s2392
          %v2522 = vmul.f32 %v2521, %v2457
          %v2523 = vmul.f32 %v2521, %v2458
          %v2524 = vmul.f32 %v2521, %v2459
          %v2525 = vmul.f32 %v2521, %v2460
          %v2526 = vmul.f32 %v2521, %v2461
          %v2527 = vmul.f32 %v2521, %v2462
          %v2528 = vmul.f32 %v2521, %v2463
          %v2529 = vmul.f32 %v2521, %v2464
          %v2530 = vmul.f32 %v2521, %v2465
          %v2531 = vmul.f32 %v2521, %v2466
          %v2532 = vmul.f32 %v2521, %v2467
          %v2533 = vmul.f32 %v2521, %v2468
          %v2534 = vmul.f32 %v2521, %v2469
          %v2535 = vmul.f32 %v2521, %v2470
          %v2536 = vmul.f32 %v2521, %v2471
          %v2537 = vmul.f32 %v2521, %v2472
          %v2538 = vmul.f32 %v2521, %v2473
          %v2539 = vmul.f32 %v2521, %v2474
          %v2540 = vmul.f32 %v2521, %v2475
          %v2541 = vmul.f32 %v2521, %v2476
          %v2542 = vmul.f32 %v2521, %v2477
          %v2543 = vmul.f32 %v2521, %v2478
          %v2544 = vmul.f32 %v2521, %v2479
          %v2545 = vmul.f32 %v2521, %v2480
          %v2546 = vmul.f32 %v2521, %v2481
          %v2547 = vmul.f32 %v2521, %v2482
          %v2548 = vmul.f32 %v2521, %v2483
          %v2549 = vmul.f32 %v2521, %v2484
          %v2550 = vmul.f32 %v2521, %v2485
          %v2551 = vmul.f32 %v2521, %v2486
          %v2552 = vmul.f32 %v2521, %v2487
          %v2553 = vmul.f32 %v2521, %v2488
          %v2554 = vmul.f32 %v2521, %v2489
          %v2555 = vmul.f32 %v2521, %v2490
          %v2556 = vmul.f32 %v2521, %v2491
          %v2557 = vmul.f32 %v2521, %v2492
          %v2558 = vmul.f32 %v2521, %v2493
          %v2559 = vmul.f32 %v2521, %v2494
          %v2560 = vmul.f32 %v2521, %v2495
          %v2561 = vmul.f32 %v2521, %v2496
          %v2562 = vmul.f32 %v2521, %v2497
          %v2563 = vmul.f32 %v2521, %v2498
          %v2564 = vmul.f32 %v2521, %v2499
          %v2565 = vmul.f32 %v2521, %v2500
          %v2566 = vmul.f32 %v2521, %v2501
          %v2567 = vmul.f32 %v2521, %v2502
          %v2568 = vmul.f32 %v2521, %v2503
          %v2569 = vmul.f32 %v2521, %v2504
          %v2570 = vmul.f32 %v2521, %v2505
          %v2571 = vmul.f32 %v2521, %v2506
          %v2572 = vmul.f32 %v2521, %v2507
          %v2573 = vmul.f32 %v2521, %v2508
          %v2574 = vmul.f32 %v2521, %v2509
          %v2575 = vmul.f32 %v2521, %v2510
          %v2576 = vmul.f32 %v2521, %v2511
          %v2577 = vmul.f32 %v2521, %v2512
          %v2578 = vmul.f32 %v2521, %v2513
          %v2579 = vmul.f32 %v2521, %v2514
          %v2580 = vmul.f32 %v2521, %v2515
          %v2581 = vmul.f32 %v2521, %v2516
          %v2582 = vmul.f32 %v2521, %v2517
          %v2583 = vmul.f32 %v2521, %v2518
          %v2584 = vmul.f32 %v2521, %v2519
          %v2585 = vmul.f32 %v2521, %v2520
          %v2586 = vadd.f32 %v2328, %v2522
          %v2587 = vadd.f32 %v2329, %v2523
          %v2588 = vadd.f32 %v2330, %v2524
          %v2589 = vadd.f32 %v2331, %v2525
          %v2590 = vadd.f32 %v2332, %v2526
          %v2591 = vadd.f32 %v2333, %v2527
          %v2592 = vadd.f32 %v2334, %v2528
          %v2593 = vadd.f32 %v2335, %v2529
          %v2594 = vadd.f32 %v2336, %v2530
          %v2595 = vadd.f32 %v2337, %v2531
          %v2596 = vadd.f32 %v2338, %v2532
          %v2597 = vadd.f32 %v2339, %v2533
          %v2598 = vadd.f32 %v2340, %v2534
          %v2599 = vadd.f32 %v2341, %v2535
          %v2600 = vadd.f32 %v2342, %v2536
          %v2601 = vadd.f32 %v2343, %v2537
          %v2602 = vadd.f32 %v2344, %v2538
          %v2603 = vadd.f32 %v2345, %v2539
          %v2604 = vadd.f32 %v2346, %v2540
          %v2605 = vadd.f32 %v2347, %v2541
          %v2606 = vadd.f32 %v2348, %v2542
          %v2607 = vadd.f32 %v2349, %v2543
          %v2608 = vadd.f32 %v2350, %v2544
          %v2609 = vadd.f32 %v2351, %v2545
          %v2610 = vadd.f32 %v2352, %v2546
          %v2611 = vadd.f32 %v2353, %v2547
          %v2612 = vadd.f32 %v2354, %v2548
          %v2613 = vadd.f32 %v2355, %v2549
          %v2614 = vadd.f32 %v2356, %v2550
          %v2615 = vadd.f32 %v2357, %v2551
          %v2616 = vadd.f32 %v2358, %v2552
          %v2617 = vadd.f32 %v2359, %v2553
          %v2618 = vadd.f32 %v2360, %v2554
          %v2619 = vadd.f32 %v2361, %v2555
          %v2620 = vadd.f32 %v2362, %v2556
          %v2621 = vadd.f32 %v2363, %v2557
          %v2622 = vadd.f32 %v2364, %v2558
          %v2623 = vadd.f32 %v2365, %v2559
          %v2624 = vadd.f32 %v2366, %v2560
          %v2625 = vadd.f32 %v2367, %v2561
          %v2626 = vadd.f32 %v2368, %v2562
          %v2627 = vadd.f32 %v2369, %v2563
          %v2628 = vadd.f32 %v2370, %v2564
          %v2629 = vadd.f32 %v2371, %v2565
          %v2630 = vadd.f32 %v2372, %v2566
          %v2631 = vadd.f32 %v2373, %v2567
          %v2632 = vadd.f32 %v2374, %v2568
          %v2633 = vadd.f32 %v2375, %v2569
          %v2634 = vadd.f32 %v2376, %v2570
          %v2635 = vadd.f32 %v2377, %v2571
          %v2636 = vadd.f32 %v2378, %v2572
          %v2637 = vadd.f32 %v2379, %v2573
          %v2638 = vadd.f32 %v2380, %v2574
          %v2639 = vadd.f32 %v2381, %v2575
          %v2640 = vadd.f32 %v2382, %v2576
          %v2641 = vadd.f32 %v2383, %v2577
          %v2642 = vadd.f32 %v2384, %v2578
          %v2643 = vadd.f32 %v2385, %v2579
          %v2644 = vadd.f32 %v2386, %v2580
          %v2645 = vadd.f32 %v2387, %v2581
          %v2646 = vadd.f32 %v2388, %v2582
          %v2647 = vadd.f32 %v2389, %v2583
          %v2648 = vadd.f32 %v2390, %v2584
          %v2649 = vadd.f32 %v2391, %v2585
          %s2650 = sld [smem:[#allocation6 + $0x1]]
          %v2651 = vld [vmem:[%s775] sm:$0xf]
          %v2652 = vld [vmem:[%s775 + $0x4] sm:$0xf]
          %v2653 = vld [vmem:[%s775 + $0x8] sm:$0xf]
          %v2654 = vld [vmem:[%s775 + $0xc] sm:$0xf]
          %v2655 = vld [vmem:[%s775 + $0x10] sm:$0xf]
          %v2656 = vld [vmem:[%s775 + $0x14] sm:$0xf]
          %v2657 = vld [vmem:[%s775 + $0x18] sm:$0xf]
          %v2658 = vld [vmem:[%s775 + $0x1c] sm:$0xf]
          %v2659 = vld [vmem:[%s775 + $0x20] sm:$0xf]
          %v2660 = vld [vmem:[%s775 + $0x24] sm:$0xf]
          %v2661 = vld [vmem:[%s775 + $0x28] sm:$0xf]
          %v2662 = vld [vmem:[%s775 + $0x2c] sm:$0xf]
          %v2663 = vld [vmem:[%s775 + $0x30] sm:$0xf]
          %v2664 = vld [vmem:[%s775 + $0x34] sm:$0xf]
          %v2665 = vld [vmem:[%s775 + $0x38] sm:$0xf]
          %v2666 = vld [vmem:[%s775 + $0x3c] sm:$0xf]
          %v2667 = vld [vmem:[%s775 + $0x40] sm:$0xf]
          %v2668 = vld [vmem:[%s775 + $0x44] sm:$0xf]
          %v2669 = vld [vmem:[%s775 + $0x48] sm:$0xf]
          %v2670 = vld [vmem:[%s775 + $0x4c] sm:$0xf]
          %v2671 = vld [vmem:[%s775 + $0x50] sm:$0xf]
          %v2672 = vld [vmem:[%s775 + $0x54] sm:$0xf]
          %v2673 = vld [vmem:[%s775 + $0x58] sm:$0xf]
          %v2674 = vld [vmem:[%s775 + $0x5c] sm:$0xf]
          %v2675 = vld [vmem:[%s775 + $0x60] sm:$0xf]
          %v2676 = vld [vmem:[%s775 + $0x64] sm:$0xf]
          %v2677 = vld [vmem:[%s775 + $0x68] sm:$0xf]
          %v2678 = vld [vmem:[%s775 + $0x6c] sm:$0xf]
          %v2679 = vld [vmem:[%s775 + $0x70] sm:$0xf]
          %v2680 = vld [vmem:[%s775 + $0x74] sm:$0xf]
          %v2681 = vld [vmem:[%s775 + $0x78] sm:$0xf]
          %v2682 = vld [vmem:[%s775 + $0x7c] sm:$0xf]
          %v2683 = vld [vmem:[%s775 + $0x80] sm:$0xf]
          %v2684 = vld [vmem:[%s775 + $0x84] sm:$0xf]
          %v2685 = vld [vmem:[%s775 + $0x88] sm:$0xf]
          %v2686 = vld [vmem:[%s775 + $0x8c] sm:$0xf]
          %v2687 = vld [vmem:[%s775 + $0x90] sm:$0xf]
          %v2688 = vld [vmem:[%s775 + $0x94] sm:$0xf]
          %v2689 = vld [vmem:[%s775 + $0x98] sm:$0xf]
          %v2690 = vld [vmem:[%s775 + $0x9c] sm:$0xf]
          %v2691 = vld [vmem:[%s775 + $0xa0] sm:$0xf]
          %v2692 = vld [vmem:[%s775 + $0xa4] sm:$0xf]
          %v2693 = vld [vmem:[%s775 + $0xa8] sm:$0xf]
          %v2694 = vld [vmem:[%s775 + $0xac] sm:$0xf]
          %v2695 = vld [vmem:[%s775 + $0xb0] sm:$0xf]
          %v2696 = vld [vmem:[%s775 + $0xb4] sm:$0xf]
          %v2697 = vld [vmem:[%s775 + $0xb8] sm:$0xf]
          %v2698 = vld [vmem:[%s775 + $0xbc] sm:$0xf]
          %v2699 = vld [vmem:[%s775 + $0xc0] sm:$0xf]
          %v2700 = vld [vmem:[%s775 + $0xc4] sm:$0xf]
          %v2701 = vld [vmem:[%s775 + $0xc8] sm:$0xf]
          %v2702 = vld [vmem:[%s775 + $0xcc] sm:$0xf]
          %v2703 = vld [vmem:[%s775 + $0xd0] sm:$0xf]
          %v2704 = vld [vmem:[%s775 + $0xd4] sm:$0xf]
          %v2705 = vld [vmem:[%s775 + $0xd8] sm:$0xf]
          %v2706 = vld [vmem:[%s775 + $0xdc] sm:$0xf]
          %v2707 = vld [vmem:[%s775 + $0xe0] sm:$0xf]
          %v2708 = vld [vmem:[%s775 + $0xe4] sm:$0xf]
          %v2709 = vld [vmem:[%s775 + $0xe8] sm:$0xf]
          %v2710 = vld [vmem:[%s775 + $0xec] sm:$0xf]
          %v2711 = vld [vmem:[%s775 + $0xf0] sm:$0xf]
          %v2712 = vld [vmem:[%s775 + $0xf4] sm:$0xf]
          %v2713 = vld [vmem:[%s775 + $0xf8] sm:$0xf]
          %v2714 = vld [vmem:[%s775 + $0xfc] sm:$0xf]
          %v2715 = vunpack.c.l.bf16 %v2651
          %v2716 = vunpack.c.l.bf16 %v2652
          %v2717 = vunpack.c.l.bf16 %v2653
          %v2718 = vunpack.c.l.bf16 %v2654
          %v2719 = vunpack.c.l.bf16 %v2655
          %v2720 = vunpack.c.l.bf16 %v2656
          %v2721 = vunpack.c.l.bf16 %v2657
          %v2722 = vunpack.c.l.bf16 %v2658
          %v2723 = vunpack.c.l.bf16 %v2659
          %v2724 = vunpack.c.l.bf16 %v2660
          %v2725 = vunpack.c.l.bf16 %v2661
          %v2726 = vunpack.c.l.bf16 %v2662
          %v2727 = vunpack.c.l.bf16 %v2663
          %v2728 = vunpack.c.l.bf16 %v2664
          %v2729 = vunpack.c.l.bf16 %v2665
          %v2730 = vunpack.c.l.bf16 %v2666
          %v2731 = vunpack.c.l.bf16 %v2667
          %v2732 = vunpack.c.l.bf16 %v2668
          %v2733 = vunpack.c.l.bf16 %v2669
          %v2734 = vunpack.c.l.bf16 %v2670
          %v2735 = vunpack.c.l.bf16 %v2671
          %v2736 = vunpack.c.l.bf16 %v2672
          %v2737 = vunpack.c.l.bf16 %v2673
          %v2738 = vunpack.c.l.bf16 %v2674
          %v2739 = vunpack.c.l.bf16 %v2675
          %v2740 = vunpack.c.l.bf16 %v2676
          %v2741 = vunpack.c.l.bf16 %v2677
          %v2742 = vunpack.c.l.bf16 %v2678
          %v2743 = vunpack.c.l.bf16 %v2679
          %v2744 = vunpack.c.l.bf16 %v2680
          %v2745 = vunpack.c.l.bf16 %v2681
          %v2746 = vunpack.c.l.bf16 %v2682
          %v2747 = vunpack.c.l.bf16 %v2683
          %v2748 = vunpack.c.l.bf16 %v2684
          %v2749 = vunpack.c.l.bf16 %v2685
          %v2750 = vunpack.c.l.bf16 %v2686
          %v2751 = vunpack.c.l.bf16 %v2687
          %v2752 = vunpack.c.l.bf16 %v2688
          %v2753 = vunpack.c.l.bf16 %v2689
          %v2754 = vunpack.c.l.bf16 %v2690
          %v2755 = vunpack.c.l.bf16 %v2691
          %v2756 = vunpack.c.l.bf16 %v2692
          %v2757 = vunpack.c.l.bf16 %v2693
          %v2758 = vunpack.c.l.bf16 %v2694
          %v2759 = vunpack.c.l.bf16 %v2695
          %v2760 = vunpack.c.l.bf16 %v2696
          %v2761 = vunpack.c.l.bf16 %v2697
          %v2762 = vunpack.c.l.bf16 %v2698
          %v2763 = vunpack.c.l.bf16 %v2699
          %v2764 = vunpack.c.l.bf16 %v2700
          %v2765 = vunpack.c.l.bf16 %v2701
          %v2766 = vunpack.c.l.bf16 %v2702
          %v2767 = vunpack.c.l.bf16 %v2703
          %v2768 = vunpack.c.l.bf16 %v2704
          %v2769 = vunpack.c.l.bf16 %v2705
          %v2770 = vunpack.c.l.bf16 %v2706
          %v2771 = vunpack.c.l.bf16 %v2707
          %v2772 = vunpack.c.l.bf16 %v2708
          %v2773 = vunpack.c.l.bf16 %v2709
          %v2774 = vunpack.c.l.bf16 %v2710
          %v2775 = vunpack.c.l.bf16 %v2711
          %v2776 = vunpack.c.l.bf16 %v2712
          %v2777 = vunpack.c.l.bf16 %v2713
          %v2778 = vunpack.c.l.bf16 %v2714
          %v2779 = vstv %s2650
          %v2780 = vmul.f32 %v2779, %v2715
          %v2781 = vmul.f32 %v2779, %v2716
          %v2782 = vmul.f32 %v2779, %v2717
          %v2783 = vmul.f32 %v2779, %v2718
          %v2784 = vmul.f32 %v2779, %v2719
          %v2785 = vmul.f32 %v2779, %v2720
          %v2786 = vmul.f32 %v2779, %v2721
          %v2787 = vmul.f32 %v2779, %v2722
          %v2788 = vmul.f32 %v2779, %v2723
          %v2789 = vmul.f32 %v2779, %v2724
          %v2790 = vmul.f32 %v2779, %v2725
          %v2791 = vmul.f32 %v2779, %v2726
          %v2792 = vmul.f32 %v2779, %v2727
          %v2793 = vmul.f32 %v2779, %v2728
          %v2794 = vmul.f32 %v2779, %v2729
          %v2795 = vmul.f32 %v2779, %v2730
          %v2796 = vmul.f32 %v2779, %v2731
          %v2797 = vmul.f32 %v2779, %v2732
          %v2798 = vmul.f32 %v2779, %v2733
          %v2799 = vmul.f32 %v2779, %v2734
          %v2800 = vmul.f32 %v2779, %v2735
          %v2801 = vmul.f32 %v2779, %v2736
          %v2802 = vmul.f32 %v2779, %v2737
          %v2803 = vmul.f32 %v2779, %v2738
          %v2804 = vmul.f32 %v2779, %v2739
          %v2805 = vmul.f32 %v2779, %v2740
          %v2806 = vmul.f32 %v2779, %v2741
          %v2807 = vmul.f32 %v2779, %v2742
          %v2808 = vmul.f32 %v2779, %v2743
          %v2809 = vmul.f32 %v2779, %v2744
          %v2810 = vmul.f32 %v2779, %v2745
          %v2811 = vmul.f32 %v2779, %v2746
          %v2812 = vmul.f32 %v2779, %v2747
          %v2813 = vmul.f32 %v2779, %v2748
          %v2814 = vmul.f32 %v2779, %v2749
          %v2815 = vmul.f32 %v2779, %v2750
          %v2816 = vmul.f32 %v2779, %v2751
          %v2817 = vmul.f32 %v2779, %v2752
          %v2818 = vmul.f32 %v2779, %v2753
          %v2819 = vmul.f32 %v2779, %v2754
          %v2820 = vmul.f32 %v2779, %v2755
          %v2821 = vmul.f32 %v2779, %v2756
          %v2822 = vmul.f32 %v2779, %v2757
          %v2823 = vmul.f32 %v2779, %v2758
          %v2824 = vmul.f32 %v2779, %v2759
          %v2825 = vmul.f32 %v2779, %v2760
          %v2826 = vmul.f32 %v2779, %v2761
          %v2827 = vmul.f32 %v2779, %v2762
          %v2828 = vmul.f32 %v2779, %v2763
          %v2829 = vmul.f32 %v2779, %v2764
          %v2830 = vmul.f32 %v2779, %v2765
          %v2831 = vmul.f32 %v2779, %v2766
          %v2832 = vmul.f32 %v2779, %v2767
          %v2833 = vmul.f32 %v2779, %v2768
          %v2834 = vmul.f32 %v2779, %v2769
          %v2835 = vmul.f32 %v2779, %v2770
          %v2836 = vmul.f32 %v2779, %v2771
          %v2837 = vmul.f32 %v2779, %v2772
          %v2838 = vmul.f32 %v2779, %v2773
          %v2839 = vmul.f32 %v2779, %v2774
          %v2840 = vmul.f32 %v2779, %v2775
          %v2841 = vmul.f32 %v2779, %v2776
          %v2842 = vmul.f32 %v2779, %v2777
          %v2843 = vmul.f32 %v2779, %v2778
          %v2844 = vadd.f32 %v2586, %v2780
          %v2845 = vadd.f32 %v2587, %v2781
          %v2846 = vadd.f32 %v2588, %v2782
          %v2847 = vadd.f32 %v2589, %v2783
          %v2848 = vadd.f32 %v2590, %v2784
          %v2849 = vadd.f32 %v2591, %v2785
          %v2850 = vadd.f32 %v2592, %v2786
          %v2851 = vadd.f32 %v2593, %v2787
          %v2852 = vadd.f32 %v2594, %v2788
          %v2853 = vadd.f32 %v2595, %v2789
          %v2854 = vadd.f32 %v2596, %v2790
          %v2855 = vadd.f32 %v2597, %v2791
          %v2856 = vadd.f32 %v2598, %v2792
          %v2857 = vadd.f32 %v2599, %v2793
          %v2858 = vadd.f32 %v2600, %v2794
          %v2859 = vadd.f32 %v2601, %v2795
          %v2860 = vadd.f32 %v2602, %v2796
          %v2861 = vadd.f32 %v2603, %v2797
          %v2862 = vadd.f32 %v2604, %v2798
          %v2863 = vadd.f32 %v2605, %v2799
          %v2864 = vadd.f32 %v2606, %v2800
          %v2865 = vadd.f32 %v2607, %v2801
          %v2866 = vadd.f32 %v2608, %v2802
          %v2867 = vadd.f32 %v2609, %v2803
          %v2868 = vadd.f32 %v2610, %v2804
          %v2869 = vadd.f32 %v2611, %v2805
          %v2870 = vadd.f32 %v2612, %v2806
          %v2871 = vadd.f32 %v2613, %v2807
          %v2872 = vadd.f32 %v2614, %v2808
          %v2873 = vadd.f32 %v2615, %v2809
          %v2874 = vadd.f32 %v2616, %v2810
          %v2875 = vadd.f32 %v2617, %v2811
          %v2876 = vadd.f32 %v2618, %v2812
          %v2877 = vadd.f32 %v2619, %v2813
          %v2878 = vadd.f32 %v2620, %v2814
          %v2879 = vadd.f32 %v2621, %v2815
          %v2880 = vadd.f32 %v2622, %v2816
          %v2881 = vadd.f32 %v2623, %v2817
          %v2882 = vadd.f32 %v2624, %v2818
          %v2883 = vadd.f32 %v2625, %v2819
          %v2884 = vadd.f32 %v2626, %v2820
          %v2885 = vadd.f32 %v2627, %v2821
          %v2886 = vadd.f32 %v2628, %v2822
          %v2887 = vadd.f32 %v2629, %v2823
          %v2888 = vadd.f32 %v2630, %v2824
          %v2889 = vadd.f32 %v2631, %v2825
          %v2890 = vadd.f32 %v2632, %v2826
          %v2891 = vadd.f32 %v2633, %v2827
          %v2892 = vadd.f32 %v2634, %v2828
          %v2893 = vadd.f32 %v2635, %v2829
          %v2894 = vadd.f32 %v2636, %v2830
          %v2895 = vadd.f32 %v2637, %v2831
          %v2896 = vadd.f32 %v2638, %v2832
          %v2897 = vadd.f32 %v2639, %v2833
          %v2898 = vadd.f32 %v2640, %v2834
          %v2899 = vadd.f32 %v2641, %v2835
          %v2900 = vadd.f32 %v2642, %v2836
          %v2901 = vadd.f32 %v2643, %v2837
          %v2902 = vadd.f32 %v2644, %v2838
          %v2903 = vadd.f32 %v2645, %v2839
          %v2904 = vadd.f32 %v2646, %v2840
          %v2905 = vadd.f32 %v2647, %v2841
          %v2906 = vadd.f32 %v2648, %v2842
          %v2907 = vadd.f32 %v2649, %v2843
          %v2908 = vpack.c.bf16 %v2845, %v2844
          %v2909 = vpack.c.bf16 %v2847, %v2846
          %v2910 = vpack.c.bf16 %v2849, %v2848
          %v2911 = vpack.c.bf16 %v2851, %v2850
          %v2912 = vpack.c.bf16 %v2853, %v2852
          %v2913 = vpack.c.bf16 %v2855, %v2854
          %v2914 = vpack.c.bf16 %v2857, %v2856
          %v2915 = vpack.c.bf16 %v2859, %v2858
          %v2916 = vpack.c.bf16 %v2861, %v2860
          %v2917 = vpack.c.bf16 %v2863, %v2862
          %v2918 = vpack.c.bf16 %v2865, %v2864
          %v2919 = vpack.c.bf16 %v2867, %v2866
          %v2920 = vpack.c.bf16 %v2869, %v2868
          %v2921 = vpack.c.bf16 %v2871, %v2870
          %v2922 = vpack.c.bf16 %v2873, %v2872
          %v2923 = vpack.c.bf16 %v2875, %v2874
          %v2924 = vpack.c.bf16 %v2877, %v2876
          %v2925 = vpack.c.bf16 %v2879, %v2878
          %v2926 = vpack.c.bf16 %v2881, %v2880
          %v2927 = vpack.c.bf16 %v2883, %v2882
          %v2928 = vpack.c.bf16 %v2885, %v2884
          %v2929 = vpack.c.bf16 %v2887, %v2886
          %v2930 = vpack.c.bf16 %v2889, %v2888
          %v2931 = vpack.c.bf16 %v2891, %v2890
          %v2932 = vpack.c.bf16 %v2893, %v2892
          %v2933 = vpack.c.bf16 %v2895, %v2894
          %v2934 = vpack.c.bf16 %v2897, %v2896
          %v2935 = vpack.c.bf16 %v2899, %v2898
          %v2936 = vpack.c.bf16 %v2901, %v2900
          %v2937 = vpack.c.bf16 %v2903, %v2902
          %v2938 = vpack.c.bf16 %v2905, %v2904
          %v2939 = vpack.c.bf16 %v2907, %v2906
          %v2972 = vunpack.c.l.b16 %v2908
          %v2973 = vunpack.c.h.b16 %v2908
          %v2974 = vunpack.c.l.b16 %v2909
          %v2975 = vunpack.c.h.b16 %v2909
          %v2976 = vunpack.c.l.b16 %v2910
          %v2977 = vunpack.c.h.b16 %v2910
          %v2978 = vunpack.c.l.b16 %v2911
          %v2979 = vunpack.c.h.b16 %v2911
          %v2980 = vunpack.c.l.b16 %v2912
          %v2981 = vunpack.c.h.b16 %v2912
          %v2982 = vunpack.c.l.b16 %v2913
          %v2983 = vunpack.c.h.b16 %v2913
          %v2984 = vunpack.c.l.b16 %v2914
          %v2985 = vunpack.c.h.b16 %v2914
          %v2986 = vunpack.c.l.b16 %v2915
          %v2987 = vunpack.c.h.b16 %v2915
          %v2988 = vunpack.c.l.b16 %v2916
          %v2989 = vunpack.c.h.b16 %v2916
          %v2990 = vunpack.c.l.b16 %v2917
          %v2991 = vunpack.c.h.b16 %v2917
          %v2992 = vunpack.c.l.b16 %v2918
          %v2993 = vunpack.c.h.b16 %v2918
          %v2994 = vunpack.c.l.b16 %v2919
          %v2995 = vunpack.c.h.b16 %v2919
          %v2996 = vunpack.c.l.b16 %v2920
          %v2997 = vunpack.c.h.b16 %v2920
          %v2998 = vunpack.c.l.b16 %v2921
          %v2999 = vunpack.c.h.b16 %v2921
          %v3000 = vunpack.c.l.b16 %v2922
          %v3001 = vunpack.c.h.b16 %v2922
          %v3002 = vunpack.c.l.b16 %v2923
          %v3003 = vunpack.c.h.b16 %v2923
          %v3004 = vunpack.c.l.b16 %v2924
          %v3005 = vunpack.c.h.b16 %v2924
          %v3006 = vunpack.c.l.b16 %v2925
          %v3007 = vunpack.c.h.b16 %v2925
          %v3008 = vunpack.c.l.b16 %v2926
          %v3009 = vunpack.c.h.b16 %v2926
          %v3010 = vunpack.c.l.b16 %v2927
          %v3011 = vunpack.c.h.b16 %v2927
          %v3012 = vunpack.c.l.b16 %v2928
          %v3013 = vunpack.c.h.b16 %v2928
          %v3014 = vunpack.c.l.b16 %v2929
          %v3015 = vunpack.c.h.b16 %v2929
          %v3016 = vunpack.c.l.b16 %v2930
          %v3017 = vunpack.c.h.b16 %v2930
          %v3018 = vunpack.c.l.b16 %v2931
          %v3019 = vunpack.c.h.b16 %v2931
          %v3020 = vunpack.c.l.b16 %v2932
          %v3021 = vunpack.c.h.b16 %v2932
          %v3022 = vunpack.c.l.b16 %v2933
          %v3023 = vunpack.c.h.b16 %v2933
          %v3024 = vunpack.c.l.b16 %v2934
          %v3025 = vunpack.c.h.b16 %v2934
          %v3026 = vunpack.c.l.b16 %v2935
          %v3027 = vunpack.c.h.b16 %v2935
          %v3028 = vunpack.c.l.b16 %v2936
          %v3029 = vunpack.c.h.b16 %v2936
          %v3030 = vunpack.c.l.b16 %v2937
          %v3031 = vunpack.c.h.b16 %v2937
          %v3032 = vunpack.c.l.b16 %v2938
          %v3033 = vunpack.c.h.b16 %v2938
          %v3034 = vunpack.c.l.b16 %v2939
          %v3035 = vunpack.c.h.b16 %v2939
          %v3036 = vpack.c.b16 %v2972, %v2972
          %v3037 = vpack.c.b16 %v2973, %v2973
          %v3038 = vpack.c.b16 %v2974, %v2974
          %v3039 = vpack.c.b16 %v2975, %v2975
          %v3040 = vpack.c.b16 %v2976, %v2976
          %v3041 = vpack.c.b16 %v2977, %v2977
          %v3042 = vpack.c.b16 %v2978, %v2978
          %v3043 = vpack.c.b16 %v2979, %v2979
          %v3044 = vpack.c.b16 %v2980, %v2980
          %v3045 = vpack.c.b16 %v2981, %v2981
          %v3046 = vpack.c.b16 %v2982, %v2982
          %v3047 = vpack.c.b16 %v2983, %v2983
          %v3048 = vpack.c.b16 %v2984, %v2984
          %v3049 = vpack.c.b16 %v2985, %v2985
          %v3050 = vpack.c.b16 %v2986, %v2986
          %v3051 = vpack.c.b16 %v2987, %v2987
          %v3052 = vpack.c.b16 %v2988, %v2988
          %v3053 = vpack.c.b16 %v2989, %v2989
          %v3054 = vpack.c.b16 %v2990, %v2990
          %v3055 = vpack.c.b16 %v2991, %v2991
          %v3056 = vpack.c.b16 %v2992, %v2992
          %v3057 = vpack.c.b16 %v2993, %v2993
          %v3058 = vpack.c.b16 %v2994, %v2994
          %v3059 = vpack.c.b16 %v2995, %v2995
          %v3060 = vpack.c.b16 %v2996, %v2996
          %v3061 = vpack.c.b16 %v2997, %v2997
          %v3062 = vpack.c.b16 %v2998, %v2998
          %v3063 = vpack.c.b16 %v2999, %v2999
          %v3064 = vpack.c.b16 %v3000, %v3000
          %v3065 = vpack.c.b16 %v3001, %v3001
          %v3066 = vpack.c.b16 %v3002, %v3002
          %v3067 = vpack.c.b16 %v3003, %v3003
          %v3068 = vpack.c.b16 %v3004, %v3004
          %v3069 = vpack.c.b16 %v3005, %v3005
          %v3070 = vpack.c.b16 %v3006, %v3006
          %v3071 = vpack.c.b16 %v3007, %v3007
          %v3072 = vpack.c.b16 %v3008, %v3008
          %v3073 = vpack.c.b16 %v3009, %v3009
          %v3074 = vpack.c.b16 %v3010, %v3010
          %v3075 = vpack.c.b16 %v3011, %v3011
          %v3076 = vpack.c.b16 %v3012, %v3012
          %v3077 = vpack.c.b16 %v3013, %v3013
          %v3078 = vpack.c.b16 %v3014, %v3014
          %v3079 = vpack.c.b16 %v3015, %v3015
          %v3080 = vpack.c.b16 %v3016, %v3016
          %v3081 = vpack.c.b16 %v3017, %v3017
          %v3082 = vpack.c.b16 %v3018, %v3018
          %v3083 = vpack.c.b16 %v3019, %v3019
          %v3084 = vpack.c.b16 %v3020, %v3020
          %v3085 = vpack.c.b16 %v3021, %v3021
          %v3086 = vpack.c.b16 %v3022, %v3022
          %v3087 = vpack.c.b16 %v3023, %v3023
          %v3088 = vpack.c.b16 %v3024, %v3024
          %v3089 = vpack.c.b16 %v3025, %v3025
          %v3090 = vpack.c.b16 %v3026, %v3026
          %v3091 = vpack.c.b16 %v3027, %v3027
          %v3092 = vpack.c.b16 %v3028, %v3028
          %v3093 = vpack.c.b16 %v3029, %v3029
          %v3094 = vpack.c.b16 %v3030, %v3030
          %v3095 = vpack.c.b16 %v3031, %v3031
          %v3096 = vpack.c.b16 %v3032, %v3032
          %v3097 = vpack.c.b16 %v3033, %v3033
          %v3098 = vpack.c.b16 %v3034, %v3034
          %v3099 = vpack.c.b16 %v3035, %v3035
          %3164 = vst [vmem:[%s793] sm:$0xf] %v3036
          %3165 = vst [vmem:[%s793 + $0x4] sm:$0xf] %v3037
          %3166 = vst [vmem:[%s793 + $0x8] sm:$0xf] %v3038
          %3167 = vst [vmem:[%s793 + $0xc] sm:$0xf] %v3039
          %3168 = vst [vmem:[%s793 + $0x10] sm:$0xf] %v3040
          %3169 = vst [vmem:[%s793 + $0x14] sm:$0xf] %v3041
          %3170 = vst [vmem:[%s793 + $0x18] sm:$0xf] %v3042
          %3171 = vst [vmem:[%s793 + $0x1c] sm:$0xf] %v3043
          %3172 = vst [vmem:[%s793 + $0x20] sm:$0xf] %v3044
          %3173 = vst [vmem:[%s793 + $0x24] sm:$0xf] %v3045
          %3174 = vst [vmem:[%s793 + $0x28] sm:$0xf] %v3046
          %3175 = vst [vmem:[%s793 + $0x2c] sm:$0xf] %v3047
          %3176 = vst [vmem:[%s793 + $0x30] sm:$0xf] %v3048
          %3177 = vst [vmem:[%s793 + $0x34] sm:$0xf] %v3049
          %3178 = vst [vmem:[%s793 + $0x38] sm:$0xf] %v3050
          %3179 = vst [vmem:[%s793 + $0x3c] sm:$0xf] %v3051
          %3180 = vst [vmem:[%s793 + $0x40] sm:$0xf] %v3052
          %3181 = vst [vmem:[%s793 + $0x44] sm:$0xf] %v3053
          %3182 = vst [vmem:[%s793 + $0x48] sm:$0xf] %v3054
          %3183 = vst [vmem:[%s793 + $0x4c] sm:$0xf] %v3055
          %3184 = vst [vmem:[%s793 + $0x50] sm:$0xf] %v3056
          %3185 = vst [vmem:[%s793 + $0x54] sm:$0xf] %v3057
          %3186 = vst [vmem:[%s793 + $0x58] sm:$0xf] %v3058
          %3187 = vst [vmem:[%s793 + $0x5c] sm:$0xf] %v3059
          %3188 = vst [vmem:[%s793 + $0x60] sm:$0xf] %v3060
          %3189 = vst [vmem:[%s793 + $0x64] sm:$0xf] %v3061
          %3190 = vst [vmem:[%s793 + $0x68] sm:$0xf] %v3062
          %3191 = vst [vmem:[%s793 + $0x6c] sm:$0xf] %v3063
          %3192 = vst [vmem:[%s793 + $0x70] sm:$0xf] %v3064
          %3193 = vst [vmem:[%s793 + $0x74] sm:$0xf] %v3065
          %3194 = vst [vmem:[%s793 + $0x78] sm:$0xf] %v3066
          %3195 = vst [vmem:[%s793 + $0x7c] sm:$0xf] %v3067
          %3196 = vst [vmem:[%s793 + $0x80] sm:$0xf] %v3068
          %3197 = vst [vmem:[%s793 + $0x84] sm:$0xf] %v3069
          %3198 = vst [vmem:[%s793 + $0x88] sm:$0xf] %v3070
          %3199 = vst [vmem:[%s793 + $0x8c] sm:$0xf] %v3071
          %3200 = vst [vmem:[%s793 + $0x90] sm:$0xf] %v3072
          %3201 = vst [vmem:[%s793 + $0x94] sm:$0xf] %v3073
          %3202 = vst [vmem:[%s793 + $0x98] sm:$0xf] %v3074
          %3203 = vst [vmem:[%s793 + $0x9c] sm:$0xf] %v3075
          %3204 = vst [vmem:[%s793 + $0xa0] sm:$0xf] %v3076
          %3205 = vst [vmem:[%s793 + $0xa4] sm:$0xf] %v3077
          %3206 = vst [vmem:[%s793 + $0xa8] sm:$0xf] %v3078
          %3207 = vst [vmem:[%s793 + $0xac] sm:$0xf] %v3079
          %3208 = vst [vmem:[%s793 + $0xb0] sm:$0xf] %v3080
          %3209 = vst [vmem:[%s793 + $0xb4] sm:$0xf] %v3081
          %3210 = vst [vmem:[%s793 + $0xb8] sm:$0xf] %v3082
          %3211 = vst [vmem:[%s793 + $0xbc] sm:$0xf] %v3083
          %3212 = vst [vmem:[%s793 + $0xc0] sm:$0xf] %v3084
          %3213 = vst [vmem:[%s793 + $0xc4] sm:$0xf] %v3085
          %3214 = vst [vmem:[%s793 + $0xc8] sm:$0xf] %v3086
          %3215 = vst [vmem:[%s793 + $0xcc] sm:$0xf] %v3087
          %3216 = vst [vmem:[%s793 + $0xd0] sm:$0xf] %v3088
          %3217 = vst [vmem:[%s793 + $0xd4] sm:$0xf] %v3089
          %3218 = vst [vmem:[%s793 + $0xd8] sm:$0xf] %v3090
          %3219 = vst [vmem:[%s793 + $0xdc] sm:$0xf] %v3091
          %3220 = vst [vmem:[%s793 + $0xe0] sm:$0xf] %v3092
          %3221 = vst [vmem:[%s793 + $0xe4] sm:$0xf] %v3093
          %3222 = vst [vmem:[%s793 + $0xe8] sm:$0xf] %v3094
          %3223 = vst [vmem:[%s793 + $0xec] sm:$0xf] %v3095
          %3224 = vst [vmem:[%s793 + $0xf0] sm:$0xf] %v3096
          %3225 = vst [vmem:[%s793 + $0xf4] sm:$0xf] %v3097
          %3226 = vst [vmem:[%s793 + $0xf8] sm:$0xf] %v3098
          %3227 = vst [vmem:[%s793 + $0xfc] sm:$0xf] %v3099
          %v3228 = vld [vmem:[%s787] sm:$0xff]
          %v3229 = vld [vmem:[%s787 + $0x8] sm:$0xff]
          %v3230 = vld [vmem:[%s787 + $0x10] sm:$0xff]
          %v3231 = vld [vmem:[%s787 + $0x18] sm:$0xff]
          %v3232 = vld [vmem:[%s787 + $0x20] sm:$0xff]
          %v3233 = vld [vmem:[%s787 + $0x28] sm:$0xff]
          %v3234 = vld [vmem:[%s787 + $0x30] sm:$0xff]
          %v3235 = vld [vmem:[%s787 + $0x38] sm:$0xff]
          %v3236 = vld [vmem:[%s787 + $0x40] sm:$0xff]
          %v3237 = vld [vmem:[%s787 + $0x48] sm:$0xff]
          %v3238 = vld [vmem:[%s787 + $0x50] sm:$0xff]
          %v3239 = vld [vmem:[%s787 + $0x58] sm:$0xff]
          %v3240 = vld [vmem:[%s787 + $0x60] sm:$0xff]
          %v3241 = vld [vmem:[%s787 + $0x68] sm:$0xff]
          %v3242 = vld [vmem:[%s787 + $0x70] sm:$0xff]
          %v3243 = vld [vmem:[%s787 + $0x78] sm:$0xff]
          %v3244 = vld [vmem:[%s787 + $0x80] sm:$0xff]
          %v3245 = vld [vmem:[%s787 + $0x88] sm:$0xff]
          %v3246 = vld [vmem:[%s787 + $0x90] sm:$0xff]
          %v3247 = vld [vmem:[%s787 + $0x98] sm:$0xff]
          %v3248 = vld [vmem:[%s787 + $0xa0] sm:$0xff]
          %v3249 = vld [vmem:[%s787 + $0xa8] sm:$0xff]
          %v3250 = vld [vmem:[%s787 + $0xb0] sm:$0xff]
          %v3251 = vld [vmem:[%s787 + $0xb8] sm:$0xff]
          %v3252 = vld [vmem:[%s787 + $0xc0] sm:$0xff]
          %v3253 = vld [vmem:[%s787 + $0xc8] sm:$0xff]
          %v3254 = vld [vmem:[%s787 + $0xd0] sm:$0xff]
          %v3255 = vld [vmem:[%s787 + $0xd8] sm:$0xff]
          %v3256 = vld [vmem:[%s787 + $0xe0] sm:$0xff]
          %v3257 = vld [vmem:[%s787 + $0xe8] sm:$0xff]
          %v3258 = vld [vmem:[%s787 + $0xf0] sm:$0xff]
          %v3259 = vld [vmem:[%s787 + $0xf8] sm:$0xff]
          %v3260 = vld [vmem:[%s787 + $0x100] sm:$0xff]
          %v3261 = vld [vmem:[%s787 + $0x108] sm:$0xff]
          %v3262 = vld [vmem:[%s787 + $0x110] sm:$0xff]
          %v3263 = vld [vmem:[%s787 + $0x118] sm:$0xff]
          %v3264 = vld [vmem:[%s787 + $0x120] sm:$0xff]
          %v3265 = vld [vmem:[%s787 + $0x128] sm:$0xff]
          %v3266 = vld [vmem:[%s787 + $0x130] sm:$0xff]
          %v3267 = vld [vmem:[%s787 + $0x138] sm:$0xff]
          %v3268 = vld [vmem:[%s787 + $0x140] sm:$0xff]
          %v3269 = vld [vmem:[%s787 + $0x148] sm:$0xff]
          %v3270 = vld [vmem:[%s787 + $0x150] sm:$0xff]
          %v3271 = vld [vmem:[%s787 + $0x158] sm:$0xff]
          %v3272 = vld [vmem:[%s787 + $0x160] sm:$0xff]
          %v3273 = vld [vmem:[%s787 + $0x168] sm:$0xff]
          %v3274 = vld [vmem:[%s787 + $0x170] sm:$0xff]
          %v3275 = vld [vmem:[%s787 + $0x178] sm:$0xff]
          %v3276 = vld [vmem:[%s787 + $0x180] sm:$0xff]
          %v3277 = vld [vmem:[%s787 + $0x188] sm:$0xff]
          %v3278 = vld [vmem:[%s787 + $0x190] sm:$0xff]
          %v3279 = vld [vmem:[%s787 + $0x198] sm:$0xff]
          %v3280 = vld [vmem:[%s787 + $0x1a0] sm:$0xff]
          %v3281 = vld [vmem:[%s787 + $0x1a8] sm:$0xff]
          %v3282 = vld [vmem:[%s787 + $0x1b0] sm:$0xff]
          %v3283 = vld [vmem:[%s787 + $0x1b8] sm:$0xff]
          %v3284 = vld [vmem:[%s787 + $0x1c0] sm:$0xff]
          %v3285 = vld [vmem:[%s787 + $0x1c8] sm:$0xff]
          %v3286 = vld [vmem:[%s787 + $0x1d0] sm:$0xff]
          %v3287 = vld [vmem:[%s787 + $0x1d8] sm:$0xff]
          %v3288 = vld [vmem:[%s787 + $0x1e0] sm:$0xff]
          %v3289 = vld [vmem:[%s787 + $0x1e8] sm:$0xff]
          %v3290 = vld [vmem:[%s787 + $0x1f0] sm:$0xff]
          %v3291 = vld [vmem:[%s787 + $0x1f8] sm:$0xff]
          %s3292 = sld [smem:[#allocation6 + $0x2]]
          %v3293 = vstv %s3292
          %v3294 = vmul.f32 %v3293, %v2844
          %v3295 = vmul.f32 %v3293, %v2845
          %v3296 = vmul.f32 %v3293, %v2846
          %v3297 = vmul.f32 %v3293, %v2847
          %v3298 = vmul.f32 %v3293, %v2848
          %v3299 = vmul.f32 %v3293, %v2849
          %v3300 = vmul.f32 %v3293, %v2850
          %v3301 = vmul.f32 %v3293, %v2851
          %v3302 = vmul.f32 %v3293, %v2852
          %v3303 = vmul.f32 %v3293, %v2853
          %v3304 = vmul.f32 %v3293, %v2854
          %v3305 = vmul.f32 %v3293, %v2855
          %v3306 = vmul.f32 %v3293, %v2856
          %v3307 = vmul.f32 %v3293, %v2857
          %v3308 = vmul.f32 %v3293, %v2858
          %v3309 = vmul.f32 %v3293, %v2859
          %v3310 = vmul.f32 %v3293, %v2860
          %v3311 = vmul.f32 %v3293, %v2861
          %v3312 = vmul.f32 %v3293, %v2862
          %v3313 = vmul.f32 %v3293, %v2863
          %v3314 = vmul.f32 %v3293, %v2864
          %v3315 = vmul.f32 %v3293, %v2865
          %v3316 = vmul.f32 %v3293, %v2866
          %v3317 = vmul.f32 %v3293, %v2867
          %v3318 = vmul.f32 %v3293, %v2868
          %v3319 = vmul.f32 %v3293, %v2869
          %v3320 = vmul.f32 %v3293, %v2870
          %v3321 = vmul.f32 %v3293, %v2871
          %v3322 = vmul.f32 %v3293, %v2872
          %v3323 = vmul.f32 %v3293, %v2873
          %v3324 = vmul.f32 %v3293, %v2874
          %v3325 = vmul.f32 %v3293, %v2875
          %v3326 = vmul.f32 %v3293, %v2876
          %v3327 = vmul.f32 %v3293, %v2877
          %v3328 = vmul.f32 %v3293, %v2878
          %v3329 = vmul.f32 %v3293, %v2879
          %v3330 = vmul.f32 %v3293, %v2880
          %v3331 = vmul.f32 %v3293, %v2881
          %v3332 = vmul.f32 %v3293, %v2882
          %v3333 = vmul.f32 %v3293, %v2883
          %v3334 = vmul.f32 %v3293, %v2884
          %v3335 = vmul.f32 %v3293, %v2885
          %v3336 = vmul.f32 %v3293, %v2886
          %v3337 = vmul.f32 %v3293, %v2887
          %v3338 = vmul.f32 %v3293, %v2888
          %v3339 = vmul.f32 %v3293, %v2889
          %v3340 = vmul.f32 %v3293, %v2890
          %v3341 = vmul.f32 %v3293, %v2891
          %v3342 = vmul.f32 %v3293, %v2892
          %v3343 = vmul.f32 %v3293, %v2893
          %v3344 = vmul.f32 %v3293, %v2894
          %v3345 = vmul.f32 %v3293, %v2895
          %v3346 = vmul.f32 %v3293, %v2896
          %v3347 = vmul.f32 %v3293, %v2897
          %v3348 = vmul.f32 %v3293, %v2898
          %v3349 = vmul.f32 %v3293, %v2899
          %v3350 = vmul.f32 %v3293, %v2900
          %v3351 = vmul.f32 %v3293, %v2901
          %v3352 = vmul.f32 %v3293, %v2902
          %v3353 = vmul.f32 %v3293, %v2903
          %v3354 = vmul.f32 %v3293, %v2904
          %v3355 = vmul.f32 %v3293, %v2905
          %v3356 = vmul.f32 %v3293, %v2906
          %v3357 = vmul.f32 %v3293, %v2907
          %v3358 = vadd.f32 %v3228, %v3294
          %v3359 = vadd.f32 %v3229, %v3295
          %v3360 = vadd.f32 %v3230, %v3296
          %v3361 = vadd.f32 %v3231, %v3297
          %v3362 = vadd.f32 %v3232, %v3298
          %v3363 = vadd.f32 %v3233, %v3299
          %v3364 = vadd.f32 %v3234, %v3300
          %v3365 = vadd.f32 %v3235, %v3301
          %v3366 = vadd.f32 %v3236, %v3302
          %v3367 = vadd.f32 %v3237, %v3303
          %v3368 = vadd.f32 %v3238, %v3304
          %v3369 = vadd.f32 %v3239, %v3305
          %v3370 = vadd.f32 %v3240, %v3306
          %v3371 = vadd.f32 %v3241, %v3307
          %v3372 = vadd.f32 %v3242, %v3308
          %v3373 = vadd.f32 %v3243, %v3309
          %v3374 = vadd.f32 %v3244, %v3310
          %v3375 = vadd.f32 %v3245, %v3311
          %v3376 = vadd.f32 %v3246, %v3312
          %v3377 = vadd.f32 %v3247, %v3313
          %v3378 = vadd.f32 %v3248, %v3314
          %v3379 = vadd.f32 %v3249, %v3315
          %v3380 = vadd.f32 %v3250, %v3316
          %v3381 = vadd.f32 %v3251, %v3317
          %v3382 = vadd.f32 %v3252, %v3318
          %v3383 = vadd.f32 %v3253, %v3319
          %v3384 = vadd.f32 %v3254, %v3320
          %v3385 = vadd.f32 %v3255, %v3321
          %v3386 = vadd.f32 %v3256, %v3322
          %v3387 = vadd.f32 %v3257, %v3323
          %v3388 = vadd.f32 %v3258, %v3324
          %v3389 = vadd.f32 %v3259, %v3325
          %v3390 = vadd.f32 %v3260, %v3326
          %v3391 = vadd.f32 %v3261, %v3327
          %v3392 = vadd.f32 %v3262, %v3328
          %v3393 = vadd.f32 %v3263, %v3329
          %v3394 = vadd.f32 %v3264, %v3330
          %v3395 = vadd.f32 %v3265, %v3331
          %v3396 = vadd.f32 %v3266, %v3332
          %v3397 = vadd.f32 %v3267, %v3333
          %v3398 = vadd.f32 %v3268, %v3334
          %v3399 = vadd.f32 %v3269, %v3335
          %v3400 = vadd.f32 %v3270, %v3336
          %v3401 = vadd.f32 %v3271, %v3337
          %v3402 = vadd.f32 %v3272, %v3338
          %v3403 = vadd.f32 %v3273, %v3339
          %v3404 = vadd.f32 %v3274, %v3340
          %v3405 = vadd.f32 %v3275, %v3341
          %v3406 = vadd.f32 %v3276, %v3342
          %v3407 = vadd.f32 %v3277, %v3343
          %v3408 = vadd.f32 %v3278, %v3344
          %v3409 = vadd.f32 %v3279, %v3345
          %v3410 = vadd.f32 %v3280, %v3346
          %v3411 = vadd.f32 %v3281, %v3347
          %v3412 = vadd.f32 %v3282, %v3348
          %v3413 = vadd.f32 %v3283, %v3349
          %v3414 = vadd.f32 %v3284, %v3350
          %v3415 = vadd.f32 %v3285, %v3351
          %v3416 = vadd.f32 %v3286, %v3352
          %v3417 = vadd.f32 %v3287, %v3353
          %v3418 = vadd.f32 %v3288, %v3354
          %v3419 = vadd.f32 %v3289, %v3355
          %v3420 = vadd.f32 %v3290, %v3356
          %v3421 = vadd.f32 %v3291, %v3357
          %3422 = vst [vmem:[%s799] sm:$0xff] %v3358
          %3423 = vst [vmem:[%s799 + $0x8] sm:$0xff] %v3359
          %3424 = vst [vmem:[%s799 + $0x10] sm:$0xff] %v3360
          %3425 = vst [vmem:[%s799 + $0x18] sm:$0xff] %v3361
          %3426 = vst [vmem:[%s799 + $0x20] sm:$0xff] %v3362
          %3427 = vst [vmem:[%s799 + $0x28] sm:$0xff] %v3363
          %3428 = vst [vmem:[%s799 + $0x30] sm:$0xff] %v3364
          %3429 = vst [vmem:[%s799 + $0x38] sm:$0xff] %v3365
          %3430 = vst [vmem:[%s799 + $0x40] sm:$0xff] %v3366
          %3431 = vst [vmem:[%s799 + $0x48] sm:$0xff] %v3367
          %3432 = vst [vmem:[%s799 + $0x50] sm:$0xff] %v3368
          %3433 = vst [vmem:[%s799 + $0x58] sm:$0xff] %v3369
          %3434 = vst [vmem:[%s799 + $0x60] sm:$0xff] %v3370
          %3435 = vst [vmem:[%s799 + $0x68] sm:$0xff] %v3371
          %3436 = vst [vmem:[%s799 + $0x70] sm:$0xff] %v3372
          %3437 = vst [vmem:[%s799 + $0x78] sm:$0xff] %v3373
          %3438 = vst [vmem:[%s799 + $0x80] sm:$0xff] %v3374
          %3439 = vst [vmem:[%s799 + $0x88] sm:$0xff] %v3375
          %3440 = vst [vmem:[%s799 + $0x90] sm:$0xff] %v3376
          %3441 = vst [vmem:[%s799 + $0x98] sm:$0xff] %v3377
          %3442 = vst [vmem:[%s799 + $0xa0] sm:$0xff] %v3378
          %3443 = vst [vmem:[%s799 + $0xa8] sm:$0xff] %v3379
          %3444 = vst [vmem:[%s799 + $0xb0] sm:$0xff] %v3380
          %3445 = vst [vmem:[%s799 + $0xb8] sm:$0xff] %v3381
          %3446 = vst [vmem:[%s799 + $0xc0] sm:$0xff] %v3382
          %3447 = vst [vmem:[%s799 + $0xc8] sm:$0xff] %v3383
          %3448 = vst [vmem:[%s799 + $0xd0] sm:$0xff] %v3384
          %3449 = vst [vmem:[%s799 + $0xd8] sm:$0xff] %v3385
          %3450 = vst [vmem:[%s799 + $0xe0] sm:$0xff] %v3386
          %3451 = vst [vmem:[%s799 + $0xe8] sm:$0xff] %v3387
          %3452 = vst [vmem:[%s799 + $0xf0] sm:$0xff] %v3388
          %3453 = vst [vmem:[%s799 + $0xf8] sm:$0xff] %v3389
          %3454 = vst [vmem:[%s799 + $0x100] sm:$0xff] %v3390
          %3455 = vst [vmem:[%s799 + $0x108] sm:$0xff] %v3391
          %3456 = vst [vmem:[%s799 + $0x110] sm:$0xff] %v3392
          %3457 = vst [vmem:[%s799 + $0x118] sm:$0xff] %v3393
          %3458 = vst [vmem:[%s799 + $0x120] sm:$0xff] %v3394
          %3459 = vst [vmem:[%s799 + $0x128] sm:$0xff] %v3395
          %3460 = vst [vmem:[%s799 + $0x130] sm:$0xff] %v3396
          %3461 = vst [vmem:[%s799 + $0x138] sm:$0xff] %v3397
          %3462 = vst [vmem:[%s799 + $0x140] sm:$0xff] %v3398
          %3463 = vst [vmem:[%s799 + $0x148] sm:$0xff] %v3399
          %3464 = vst [vmem:[%s799 + $0x150] sm:$0xff] %v3400
          %3465 = vst [vmem:[%s799 + $0x158] sm:$0xff] %v3401
          %3466 = vst [vmem:[%s799 + $0x160] sm:$0xff] %v3402
          %3467 = vst [vmem:[%s799 + $0x168] sm:$0xff] %v3403
          %3468 = vst [vmem:[%s799 + $0x170] sm:$0xff] %v3404
          %3469 = vst [vmem:[%s799 + $0x178] sm:$0xff] %v3405
          %3470 = vst [vmem:[%s799 + $0x180] sm:$0xff] %v3406
          %3471 = vst [vmem:[%s799 + $0x188] sm:$0xff] %v3407
          %3472 = vst [vmem:[%s799 + $0x190] sm:$0xff] %v3408
          %3473 = vst [vmem:[%s799 + $0x198] sm:$0xff] %v3409
          %3474 = vst [vmem:[%s799 + $0x1a0] sm:$0xff] %v3410
          %3475 = vst [vmem:[%s799 + $0x1a8] sm:$0xff] %v3411
          %3476 = vst [vmem:[%s799 + $0x1b0] sm:$0xff] %v3412
          %3477 = vst [vmem:[%s799 + $0x1b8] sm:$0xff] %v3413
          %3478 = vst [vmem:[%s799 + $0x1c0] sm:$0xff] %v3414
          %3479 = vst [vmem:[%s799 + $0x1c8] sm:$0xff] %v3415
          %3480 = vst [vmem:[%s799 + $0x1d0] sm:$0xff] %v3416
          %3481 = vst [vmem:[%s799 + $0x1d8] sm:$0xff] %v3417
          %3482 = vst [vmem:[%s799 + $0x1e0] sm:$0xff] %v3418
          %3483 = vst [vmem:[%s799 + $0x1e8] sm:$0xff] %v3419
          %3484 = vst [vmem:[%s799 + $0x1f0] sm:$0xff] %v3420
          %3485 = vst [vmem:[%s799 + $0x1f8] sm:$0xff] %v3421
        $region106: #{gcn_res_forward.9} parent=85 // pred_fallthru
          _
        %s3486 = smul.u32 64, %s38
        %p3487 = scmp.lt.s32.totalorder %s3486, 127
        %s3488 = scalar_select %p3487, %s3486, 127
        %s3489 = smul.addr %s3488, 4
        %s3490 = scalar_lea.vmem %s10, %s3489
        %s3491 = smul.u32 64, %s38
        %p3492 = scmp.lt.s32.totalorder %s3491, 127
        %s3493 = scalar_select %p3492, %s3491, 127
        %s3494 = smul.addr %s3493, 8
        %s3495 = scalar_lea.vmem %s11, %s3494
        // Predicated region
        $region107: #{gcn_res_forward.9} parent=85 // pred_check
          %p3496 = pneg %p271
        $region108: #{gcn_res_forward.9} parent=85 // pred_check_branch
          %3498 = sbr.rel (%p3496) target = $region110
        $region109: #{gcn_res_forward.9} parent=85 // pred_region
          %s3499 = smul.u32 64, %s38
        $region110: #{gcn_res_forward.9} parent=85 // pred_fallthru
          _
        // Predicated region
        $region111: #{gcn_res_forward.9} parent=85 // pred_check
          %p3500 = pneg %p297
        $region112: #{gcn_res_forward.9} parent=85 // pred_check_branch
          %3502 = sbr.rel (%p3500) target = $region114
        $region113: #{gcn_res_forward.9} parent=85 // pred_region
          %s3503 = smul.u32 64, %s38
        $region114: #{gcn_res_forward.9} parent=85 // pred_fallthru
          _
      $region86: #{gcn_res_forward.9} parent=5 // pred_fallthru
        _
      %p3504 = scmp.le.s32.totalorder 2, %s29
      // Predicated region
      $region115: #{gcn_res_forward.9} parent=5 // pred_check
        %p3505 = pneg %p3504
      $region116: #{gcn_res_forward.9} parent=5 // pred_check_branch
        %3507 = sbr.rel (%p3505) target = $region118
      $region117: #{gcn_res_forward.9} parent=5 // pred_region
        %s3508 = ssub.s32 %s29, 2
        // Predicated region
        $region119: #{gcn_res_forward.9} parent=117 // pred_check
          %p3509 = pneg %p277
        $region120: #{gcn_res_forward.9} parent=117 // pred_check_branch
          %3511 = sbr.rel (%p3509) target = $region122
        $region121: #{gcn_res_forward.9} parent=117 // pred_region
          %s3512 = smul.u32 64, %s40
          %p3513 = scmp.lt.s32.totalorder %s3512, 127
          %s3514 = scalar_select %p3513, %s3512, 127
          %s3515 = smul.addr %s3514, 4
          %s3516 = scalar_lea.vmem %s10, %s3515
        $region122: #{gcn_res_forward.9} parent=117 // pred_fallthru
          _
        // Predicated region
        $region123: #{gcn_res_forward.9} parent=117 // pred_check
          %p3517 = pneg %p303
        $region124: #{gcn_res_forward.9} parent=117 // pred_check_branch
          %3519 = sbr.rel (%p3517) target = $region126
        $region125: #{gcn_res_forward.9} parent=117 // pred_region
          %s3520 = smul.u32 64, %s40
          %p3521 = scmp.lt.s32.totalorder %s3520, 127
          %s3522 = scalar_select %p3521, %s3520, 127
          %s3523 = smul.addr %s3522, 8
          %s3524 = scalar_lea.vmem %s11, %s3523
        $region126: #{gcn_res_forward.9} parent=117 // pred_fallthru
          _
      $region118: #{gcn_res_forward.9} parent=5 // pred_fallthru
        _
    $region6: #{gcn_res_forward.9} parent=1 // loop_footer
      %s33 = sadd.s32 1, %s29
    $region7: #{gcn_res_forward.9} parent=1 // loop_footer_branch
      %28 = sbr.rel target = $region3
    $region8: #{gcn_res_forward.9} parent=1 // loop_exit
      _
    %3525 = vsyncpa [#allocation7], 1
    %s3526 = scalar_lea.sflag [#allocation7], 1
    %3527 = vsyncpa %s3526, 1

// kernel: gcn_res_forward.14
$region0: #{gcn_res_forward.14}
  #allocation0 [shape = 'u32[]', space=smem, size = 0x4, offset = 0x4, fixed_abs, tag = 'smem constant byte address 0x4 - core index']
  #allocation1 [shape = 'u32[144,128]{1,0:T(1,128)}', space=vmem, size = 0x12000, scoped, tag = 'internal scratch']
  #allocation2 [shape = 'f32[512,128]{1,0:T(8,128)}', space=vmem, size = 0x40000, scoped, tag = 'scratch operand']
  #allocation3 [shape = 's32[1]{0}', space=sflag, size = 0x4, scoped, tag = 'scoped memory for gcn_res_forward.14']
  #allocation4 [shape = 'u8[512]{0}', space=smem, size = 0x200, scoped, tag = 'prefetched SMEM operand 0']
  #allocation5 [shape = 'u8[512]{0}', space=smem, size = 0x200, scoped, tag = 'prefetched SMEM operand 1']
  %s0 = inlined_call_operand.vmem [shape: s32[6], index: 0, kind: input, shape index: {}]
  %s1 = inlined_call_operand.vmem [shape: s32[2], index: 1, kind: input, shape index: {}]
  %s2 = inlined_call_operand.vmem [shape: f32[3], index: 2, kind: input, shape index: {}]
  %s3 = inlined_call_operand.vmem [shape: bf16[1024,1024], index: 3, kind: input, shape index: {}]
  %s4 = inlined_call_operand.vmem [shape: bf16[1024,128], index: 4, kind: input, shape index: {}, may-alias: {4,5}]
  %s5 = inlined_call_operand.vmem [shape: bf16[1024,128], index: 5, kind: input, shape index: {}, may-alias: {4,5}]
  %s6 = inlined_call_operand.vmem [shape: bf16[1024,128], index: 6, kind: input, shape index: {}]
  %s7 = inlined_call_operand.vmem [shape: f32[1024,128], index: 7, kind: input, shape index: {}]
  %s8 = inlined_call_operand.vmem [shape: bf16[128,128], index: 8, kind: input, shape index: {}]
  %s9 = inlined_call_operand.vmem [shape: f32[1,128], index: 9, kind: input, shape index: {}]
  %s10 = inlined_call_operand.hbm [shape: bf16[1024,128], index: 10, kind: output, shape index: {0}]
  %s11 = inlined_call_operand.vmem [shape: f32[1024,128], index: 11, kind: output, shape index: {1}]
  %12 = xla_tuple %s10, %s11
  %s13 = sld [smem:[#allocation0]]
  $region127: #{gcn_res_forward.14} parent=0
    _
  %s15 = ssub.s32 1, %s13
  %s16 = scalar_select 0, %s15, %s13
  %s17 = sshll.u32 %s0, 4
  %s18 = int_to_ptr.vmem [resolvable:$true] %s17
  %20 = dma.vmem_to_smem %s18, 16, [#allocation4], [#allocation3]
  %s21 = sshll.u32 %s1, 4
  %s22 = int_to_ptr.vmem [resolvable:$true] %s21
  %24 = dma.vmem_to_smem %s22, 16, [#allocation5], [#allocation3]
  %25 = dma.done [#allocation3], 32
  %26 = sfence
  $region1: #{gcn_res_forward.14} parent=0
    #allocation6 [shape = 'u8[512]{0}', space=smem, size = 0x200, scoped, tag = 'input window, operand 2, single buffered']
    #allocation7 [shape = 's32[2]{0}', space=sflag, size = 0x8, scoped, tag = 'scoped memory for gcn_res_forward.14']
    #allocation8 [shape = 's32[2]{0}', space=sflag, size = 0x8, scoped, tag = 'scoped memory for gcn_res_forward.14']
    #allocation9 [shape = 'u8[524288]{0}', space=vmem, size = 0x80000, scoped, tag = 'input window, operand 3']
    #allocation10 [shape = 'u8[262144]{0}', space=vmem, size = 0x40000, scoped, tag = 'output window, operand 0']
    %27 = vsyncpa [#allocation8], 0
    %28 = vsyncpa [#allocation7], 0
    %s29 = scalar_lea.sflag [#allocation7], 1
    %30 = vsyncpa %s29, 0
    loop: start=0, step=1, limit=8
    $region2: #{gcn_res_forward.14} parent=1 // loop_pre_header
      _
    $region3: #{gcn_res_forward.14} parent=1 // loop_header
      %s32 = sphi 0, %s36
      %p33 = scmp.ge.s32.totalorder %s32, 8
      %s39 = sphi 0, %s51
      %s40 = sphi 0, %s47
      %s41 = sphi 0, %s39
      %s42 = sphi 0, %s40
      %s43 = sphi 0, %s41
      %s44 = sphi 0, %s42
      %s52 = sphi 0, %s52
      %s54 = sphi 0, %s52
      %s55 = sphi 0, %s54
      %s69 = sphi 0, %s55
      %s83 = sphi 0, %s85
      %s86 = sphi 0, %s83
      %s87 = sphi 0, %s86
      %s103 = sphi 0, %s87
      %s115 = sphi 0, %s117
      %s118 = sphi 0, %s115
      %s119 = sphi 0, %s118
      %s135 = sphi 0, %s119
      %s141 = sphi 0, %s143
      %s144 = sphi 0, %s141
      %s145 = sphi 0, %s144
      %s161 = sphi 0, %s145
      %s167 = sphi 0, %s169
      %s170 = sphi 0, %s167
      %s171 = sphi 0, %s170
      %s187 = sphi 0, %s171
      %s193 = sphi 0, %s195
      %s196 = sphi 0, %s193
      %s197 = sphi 0, %s196
      %s213 = sphi 0, %s197
      %s217 = sphi 0, %s217
      %s219 = sphi 0, %s217
      %s220 = sphi 0, %s219
      %s234 = sphi 0, %s220
      %s238 = sphi 0, %s238
      %s240 = sphi 0, %s238
      %s241 = sphi 0, %s240
      %s255 = sphi 0, %s241
      %s261 = sphi 0, %s263
      %s264 = sphi 0, %s261
      %s265 = sphi 0, %s264
      %s281 = sphi 0, %s265
      %s287 = sphi 0, %s289
      %s290 = sphi 0, %s287
      %s291 = sphi 0, %s290
      %s307 = sphi 0, %s291
    $region4: #{gcn_res_forward.14} parent=1 // loop_header_branch
      %35 = sbr.rel (%p33) target = $region8
    $region5: #{gcn_res_forward.14} parent=1 // loop_body
      %s37 = ssub.s32 %s32, 1
      %s38 = ssub.s32 %s32, 2
      %s45 = sadd.s32 1, %s40
      %p46 = scmp.ge.s32.totalorder %s45, 3
      %s47 = scalar_select %p46, 0, %s45
      %s48 = sadd.s32 1, %s39
      %s49 = scalar_select %p46, %s48, %s39
      %p50 = scmp.ge.s32.totalorder %s49, 2
      %s51 = scalar_select %p50, 0, %s49
      %s53 = sadd.s32 %s52, 1
      %p56 = scmp.eq.s32.totalorder %s32, 5
      %p57 = scmp.ne.s32.totalorder %s52, %s54
      %p58 = scmp.eq.s32.totalorder %s32, 0
      %p59 = por %p57, %p58
      %p60 = scmp.ne.s32.totalorder %s52, %s54
      %p61 = scmp.eq.s32.totalorder %s37, 5
      %p62 = por %p60, %p61
      %p63 = scmp.ne.s32.totalorder %s54, %s55
      %p64 = scmp.eq.s32.totalorder %s37, 0
      %p65 = por %p63, %p64
      %p66 = scmp.ne.s32.totalorder %s54, %s55
      %p67 = scmp.eq.s32.totalorder %s38, 5
      %p68 = por %p66, %p67
      %p70 = scmp.ne.s32.totalorder %s55, %s69
      %p71 = scmp.eq.s32.totalorder %s38, 0
      %p72 = por %p70, %p71
      %s73 = smul.u32 %s39, 3
      %s74 = sadd.s32 %s73, %s40
      %s75 = sld [smem:[#allocation4 + %s74]]
      %s76 = smul.u32 %s51, 3
      %s77 = sadd.s32 %s76, %s47
      %s78 = sld [smem:[#allocation4 + %s77]]
      %s79 = ssub.s32 %s39, %s51
      %s80 = ssub.s32 %s75, %s78
      %s81 = sor.u32 %s79, %s80
      %p82 = scmp.eq.s32.totalorder %s81, 0
      %s84 = sadd.s32 %s83, 1
      %s85 = scalar_select %p82, %s83, %s84
      %p88 = pneg %p82
      %p89 = scmp.eq.s32.totalorder %s32, 5
      %p90 = por %p88, %p89
      %p91 = scmp.ne.s32.totalorder %s83, %s86
      %p92 = scmp.eq.s32.totalorder %s32, 0
      %p93 = por %p91, %p92
      %p94 = scmp.ne.s32.totalorder %s83, %s86
      %p95 = scmp.eq.s32.totalorder %s37, 5
      %p96 = por %p94, %p95
      %p97 = scmp.ne.s32.totalorder %s86, %s87
      %p98 = scmp.eq.s32.totalorder %s37, 0
      %p99 = por %p97, %p98
      %p100 = scmp.ne.s32.totalorder %s86, %s87
      %p101 = scmp.eq.s32.totalorder %s38, 5
      %p102 = por %p100, %p101
      %p104 = scmp.ne.s32.totalorder %s87, %s103
      %p105 = scmp.eq.s32.totalorder %s38, 0
      %p106 = por %p104, %p105
      %s107 = smul.u32 %s39, 3
      %s108 = sadd.s32 %s107, %s40
      %s109 = sld [smem:[#allocation4 + %s108]]
      %s110 = smul.u32 %s51, 3
      %s111 = sadd.s32 %s110, %s47
      %s112 = sld [smem:[#allocation4 + %s111]]
      %s113 = ssub.s32 %s109, %s112
      %p114 = scmp.eq.s32.totalorder %s113, 0
      %s116 = sadd.s32 %s115, 1
      %s117 = scalar_select %p114, %s115, %s116
      %p120 = pneg %p114
      %p121 = scmp.eq.s32.totalorder %s32, 5
      %p122 = por %p120, %p121
      %p123 = scmp.ne.s32.totalorder %s115, %s118
      %p124 = scmp.eq.s32.totalorder %s32, 0
      %p125 = por %p123, %p124
      %p126 = scmp.ne.s32.totalorder %s115, %s118
      %p127 = scmp.eq.s32.totalorder %s37, 5
      %p128 = por %p126, %p127
      %p129 = scmp.ne.s32.totalorder %s118, %s119
      %p130 = scmp.eq.s32.totalorder %s37, 0
      %p131 = por %p129, %p130
      %p132 = scmp.ne.s32.totalorder %s118, %s119
      %p133 = scmp.eq.s32.totalorder %s38, 5
      %p134 = por %p132, %p133
      %p136 = scmp.ne.s32.totalorder %s119, %s135
      %p137 = scmp.eq.s32.totalorder %s38, 0
      %p138 = por %p136, %p137
      %s139 = ssub.s32 %s39, %s51
      %p140 = scmp.eq.s32.totalorder %s139, 0
      %s142 = sadd.s32 %s141, 1
      %s143 = scalar_select %p140, %s141, %s142
      %p146 = pneg %p140
      %p147 = scmp.eq.s32.totalorder %s32, 5
      %p148 = por %p146, %p147
      %p149 = scmp.ne.s32.totalorder %s141, %s144
      %p150 = scmp.eq.s32.totalorder %s32, 0
      %p151 = por %p149, %p150
      %p152 = scmp.ne.s32.totalorder %s141, %s144
      %p153 = scmp.eq.s32.totalorder %s37, 5
      %p154 = por %p152, %p153
      %p155 = scmp.ne.s32.totalorder %s144, %s145
      %p156 = scmp.eq.s32.totalorder %s37, 0
      %p157 = por %p155, %p156
      %p158 = scmp.ne.s32.totalorder %s144, %s145
      %p159 = scmp.eq.s32.totalorder %s38, 5
      %p160 = por %p158, %p159
      %p162 = scmp.ne.s32.totalorder %s145, %s161
      %p163 = scmp.eq.s32.totalorder %s38, 0
      %p164 = por %p162, %p163
      %s165 = ssub.s32 %s39, %s51
      %p166 = scmp.eq.s32.totalorder %s165, 0
      %s168 = sadd.s32 %s167, 1
      %s169 = scalar_select %p166, %s167, %s168
      %p172 = pneg %p166
      %p173 = scmp.eq.s32.totalorder %s32, 5
      %p174 = por %p172, %p173
      %p175 = scmp.ne.s32.totalorder %s167, %s170
      %p176 = scmp.eq.s32.totalorder %s32, 0
      %p177 = por %p175, %p176
      %p178 = scmp.ne.s32.totalorder %s167, %s170
      %p179 = scmp.eq.s32.totalorder %s37, 5
      %p180 = por %p178, %p179
      %p181 = scmp.ne.s32.totalorder %s170, %s171
      %p182 = scmp.eq.s32.totalorder %s37, 0
      %p183 = por %p181, %p182
      %p184 = scmp.ne.s32.totalorder %s170, %s171
      %p185 = scmp.eq.s32.totalorder %s38, 5
      %p186 = por %p184, %p185
      %p188 = scmp.ne.s32.totalorder %s171, %s187
      %p189 = scmp.eq.s32.totalorder %s38, 0
      %p190 = por %p188, %p189
      %s191 = ssub.s32 %s39, %s51
      %p192 = scmp.eq.s32.totalorder %s191, 0
      %s194 = sadd.s32 %s193, 1
      %s195 = scalar_select %p192, %s193, %s194
      %p198 = pneg %p192
      %p199 = scmp.eq.s32.totalorder %s32, 5
      %p200 = por %p198, %p199
      %p201 = scmp.ne.s32.totalorder %s193, %s196
      %p202 = scmp.eq.s32.totalorder %s32, 0
      %p203 = por %p201, %p202
      %p204 = scmp.ne.s32.totalorder %s193, %s196
      %p205 = scmp.eq.s32.totalorder %s37, 5
      %p206 = por %p204, %p205
      %p207 = scmp.ne.s32.totalorder %s196, %s197
      %p208 = scmp.eq.s32.totalorder %s37, 0
      %p209 = por %p207, %p208
      %p210 = scmp.ne.s32.totalorder %s196, %s197
      %p211 = scmp.eq.s32.totalorder %s38, 5
      %p212 = por %p210, %p211
      %p214 = scmp.ne.s32.totalorder %s197, %s213
      %p215 = scmp.eq.s32.totalorder %s38, 0
      %p216 = por %p214, %p215
      %s218 = sadd.s32 %s217, 1
      %p221 = scmp.eq.s32.totalorder %s32, 5
      %p222 = scmp.ne.s32.totalorder %s217, %s219
      %p223 = scmp.eq.s32.totalorder %s32, 0
      %p224 = por %p222, %p223
      %p225 = scmp.ne.s32.totalorder %s217, %s219
      %p226 = scmp.eq.s32.totalorder %s37, 5
      %p227 = por %p225, %p226
      %p228 = scmp.ne.s32.totalorder %s219, %s220
      %p229 = scmp.eq.s32.totalorder %s37, 0
      %p230 = por %p228, %p229
      %p231 = scmp.ne.s32.totalorder %s219, %s220
      %p232 = scmp.eq.s32.totalorder %s38, 5
      %p233 = por %p231, %p232
      %p235 = scmp.ne.s32.totalorder %s220, %s234
      %p236 = scmp.eq.s32.totalorder %s38, 0
      %p237 = por %p235, %p236
      %s239 = sadd.s32 %s238, 1
      %p242 = scmp.eq.s32.totalorder %s32, 5
      %p243 = scmp.ne.s32.totalorder %s238, %s240
      %p244 = scmp.eq.s32.totalorder %s32, 0
      %p245 = por %p243, %p244
      %p246 = scmp.ne.s32.totalorder %s238, %s240
      %p247 = scmp.eq.s32.totalorder %s37, 5
      %p248 = por %p246, %p247
      %p249 = scmp.ne.s32.totalorder %s240, %s241
      %p250 = scmp.eq.s32.totalorder %s37, 0
      %p251 = por %p249, %p250
      %p252 = scmp.ne.s32.totalorder %s240, %s241
      %p253 = scmp.eq.s32.totalorder %s38, 5
      %p254 = por %p252, %p253
      %p256 = scmp.ne.s32.totalorder %s241, %s255
      %p257 = scmp.eq.s32.totalorder %s38, 0
      %p258 = por %p256, %p257
      %s259 = ssub.s32 %s39, %s51
      %p260 = scmp.eq.s32.totalorder %s259, 0
      %s262 = sadd.s32 %s261, 1
      %s263 = scalar_select %p260, %s261, %s262
      %p266 = pneg %p260
      %p267 = scmp.eq.s32.totalorder %s32, 5
      %p268 = por %p266, %p267
      %p269 = scmp.ne.s32.totalorder %s261, %s264
      %p270 = scmp.eq.s32.totalorder %s32, 0
      %p271 = por %p269, %p270
      %p272 = scmp.ne.s32.totalorder %s261, %s264
      %p273 = scmp.eq.s32.totalorder %s37, 5
      %p274 = por %p272, %p273
      %p275 = scmp.ne.s32.totalorder %s264, %s265
      %p276 = scmp.eq.s32.totalorder %s37, 0
      %p277 = por %p275, %p276
      %p278 = scmp.ne.s32.totalorder %s264, %s265
      %p279 = scmp.eq.s32.totalorder %s38, 5
      %p280 = por %p278, %p279
      %p282 = scmp.ne.s32.totalorder %s265, %s281
      %p283 = scmp.eq.s32.totalorder %s38, 0
      %p284 = por %p282, %p283
      %s285 = ssub.s32 %s39, %s51
      %p286 = scmp.eq.s32.totalorder %s285, 0
      %s288 = sadd.s32 %s287, 1
      %s289 = scalar_select %p286, %s287, %s288
      %p292 = pneg %p286
      %p293 = scmp.eq.s32.totalorder %s32, 5
      %p294 = por %p292, %p293
      %p295 = scmp.ne.s32.totalorder %s287, %s290
      %p296 = scmp.eq.s32.totalorder %s32, 0
      %p297 = por %p295, %p296
      %p298 = scmp.ne.s32.totalorder %s287, %s290
      %p299 = scmp.eq.s32.totalorder %s37, 5
      %p300 = por %p298, %p299
      %p301 = scmp.ne.s32.totalorder %s290, %s291
      %p302 = scmp.eq.s32.totalorder %s37, 0
      %p303 = por %p301, %p302
      %p304 = scmp.ne.s32.totalorder %s290, %s291
      %p305 = scmp.eq.s32.totalorder %s38, 5
      %p306 = por %p304, %p305
      %p308 = scmp.ne.s32.totalorder %s291, %s307
      %p309 = scmp.eq.s32.totalorder %s38, 0
      %p310 = por %p308, %p309
      %p311 = scmp.le.s32.totalorder 1, %s32
      %p312 = scmp.lt.s32.totalorder %s32, 7
      %p313 = pnand %p311, %p312
      %p314 = pneg %p313
      // Predicated region
      $region9: #{gcn_res_forward.14} parent=5 // pred_check
        _
      $region10: #{gcn_res_forward.14} parent=5 // pred_check_branch
        %316 = sbr.rel (%p313) target = $region12
      $region11: #{gcn_res_forward.14} parent=5 // pred_region
        %s317 = ssub.s32 %s32, 1
        // Predicated region
        $region13: #{gcn_res_forward.14} parent=11 // pred_check
          %p318 = pneg %p65
        $region14: #{gcn_res_forward.14} parent=11 // pred_check_branch
          %320 = sbr.rel (%p318) target = $region16
        $region15: #{gcn_res_forward.14} parent=11 // pred_region
          %s322 = ssub.s32 16, 16
          %323 = vsyncadd [#allocation8], %s322
          %s325 = sshll.u32 %s2, 4
          %s326 = int_to_ptr.vmem [resolvable:$true] %s325
          %328 = dma.vmem_to_smem %s326, 16, [#allocation6], [#allocation8]
        $region16: #{gcn_res_forward.14} parent=11 // pred_fallthru
          _
        // Predicated region
        $region17: #{gcn_res_forward.14} parent=11 // pred_check
          %p329 = pneg %p230
        $region18: #{gcn_res_forward.14} parent=11 // pred_check_branch
          %331 = sbr.rel (%p329) target = $region20
        $region19: #{gcn_res_forward.14} parent=11 // pred_region
          _
        $region20: #{gcn_res_forward.14} parent=11 // pred_fallthru
          _
        // Predicated region
        $region21: #{gcn_res_forward.14} parent=11 // pred_check
          %p332 = pneg %p251
        $region22: #{gcn_res_forward.14} parent=11 // pred_check_branch
          %334 = sbr.rel (%p332) target = $region24
        $region23: #{gcn_res_forward.14} parent=11 // pred_region
          _
        $region24: #{gcn_res_forward.14} parent=11 // pred_fallthru
          _
      $region12: #{gcn_res_forward.14} parent=5 // pred_fallthru
        _
      %p335 = scmp.lt.s32.totalorder %s32, 6
      // Predicated region
      $region25: #{gcn_res_forward.14} parent=5 // pred_check
        %p336 = pneg %p335
      $region26: #{gcn_res_forward.14} parent=5 // pred_check_branch
        %338 = sbr.rel (%p336) target = $region28
      $region27: #{gcn_res_forward.14} parent=5 // pred_region
        // Predicated region
        $region29: #{gcn_res_forward.14} parent=27 // pred_check
          %p339 = pneg %p93
        $region30: #{gcn_res_forward.14} parent=27 // pred_check_branch
          %341 = sbr.rel (%p339) target = $region32
        $region31: #{gcn_res_forward.14} parent=27 // pred_region
          %s342 = sand.u32 %s83, 1
          %s343 = sand.u32 %s83, 1
          %s344 = smul.addr %s343, 512
          %s345 = scalar_lea.vmem [#allocation9], %s344
          %s346 = smul.u32 %s39, 3
          %s347 = sadd.s32 %s346, %s40
          %s348 = sld [smem:[#allocation4 + %s347]]
          %s349 = smul.u32 64, %s39
          %s350 = smul.u32 2, %s348
          %s351 = smul.addr %s349, 8
          %s352 = sadd.s32 %s350, %s351
          %s353 = smul.addr %s352, 4
          %s354 = scalar_lea.vmem %s3, %s353
          // Predicated region
          $region33: #{gcn_res_forward.14} parent=31 // pred_check
            _
          $region34: #{gcn_res_forward.14} parent=31 // pred_check_branch
            %356 = sbr.rel (0) target = $region36
          $region35: #{gcn_res_forward.14} parent=31 // pred_region
            // Predicated region
            $region37: #{gcn_res_forward.14} parent=35 // pred_check
              _
            $region38: #{gcn_res_forward.14} parent=35 // pred_check_branch
              %358 = sbr.rel (0) target = $region40
            $region39: #{gcn_res_forward.14} parent=35 // pred_region
              // Predicated region
              $region52: #{gcn_res_forward.14} parent=39 // pred_check
                _
              $region53: #{gcn_res_forward.14} parent=39 // pred_check_branch
                %499 = sbr.rel (0) target = $region55
              $region54: #{gcn_res_forward.14} parent=39 // pred_region
                loop: start=0, step=1, limit=1
                $region56: #{gcn_res_forward.14} parent=54 // loop_pre_header
                  _
                $region57: #{gcn_res_forward.14} parent=54 // loop_header
                  %s501 = sphi 0, %s505
                  %p502 = scmp.ge.s32.totalorder %s501, 1
                  %s506 = sphi %s354, %s354
                  %s507 = sphi %s345, %s345
                $region58: #{gcn_res_forward.14} parent=54 // loop_header_branch
                  %504 = sbr.rel (%p502) target = $region62
                $region59: #{gcn_res_forward.14} parent=54 // loop_body
                  %v508 = vld [vmem:[%s506] sm:$0xff]
                  %509 = vst [vmem:[%s507] sm:$0xff] %v508
                  %v510 = vld [vmem:[%s506 + $0x20] sm:$0xff]
                  %511 = vst [vmem:[%s507 + $0x8] sm:$0xff] %v510
                  %v512 = vld [vmem:[%s506 + $0x40] sm:$0xff]
                  %513 = vst [vmem:[%s507 + $0x10] sm:$0xff] %v512
                  %v514 = vld [vmem:[%s506 + $0x60] sm:$0xff]
                  %515 = vst [vmem:[%s507 + $0x18] sm:$0xff] %v514
                  %v516 = vld [vmem:[%s506 + $0x80] sm:$0xff]
                  %517 = vst [vmem:[%s507 + $0x20] sm:$0xff] %v516
                  %v518 = vld [vmem:[%s506 + $0xa0] sm:$0xff]
                  %519 = vst [vmem:[%s507 + $0x28] sm:$0xff] %v518
                  %v520 = vld [vmem:[%s506 + $0xc0] sm:$0xff]
                  %521 = vst [vmem:[%s507 + $0x30] sm:$0xff] %v520
                  %v522 = vld [vmem:[%s506 + $0xe0] sm:$0xff]
                  %523 = vst [vmem:[%s507 + $0x38] sm:$0xff] %v522
                  %v524 = vld [vmem:[%s506 + $0x100] sm:$0xff]
                  %525 = vst [vmem:[%s507 + $0x40] sm:$0xff] %v524
                  %v526 = vld [vmem:[%s506 + $0x120] sm:$0xff]
                  %527 = vst [vmem:[%s507 + $0x48] sm:$0xff] %v526
                  %v528 = vld [vmem:[%s506 + $0x140] sm:$0xff]
                  %529 = vst [vmem:[%s507 + $0x50] sm:$0xff] %v528
                  %v530 = vld [vmem:[%s506 + $0x160] sm:$0xff]
                  %531 = vst [vmem:[%s507 + $0x58] sm:$0xff] %v530
                  %v532 = vld [vmem:[%s506 + $0x180] sm:$0xff]
                  %533 = vst [vmem:[%s507 + $0x60] sm:$0xff] %v532
                  %v534 = vld [vmem:[%s506 + $0x1a0] sm:$0xff]
                  %535 = vst [vmem:[%s507 + $0x68] sm:$0xff] %v534
                  %v536 = vld [vmem:[%s506 + $0x1c0] sm:$0xff]
                  %537 = vst [vmem:[%s507 + $0x70] sm:$0xff] %v536
                  %v538 = vld [vmem:[%s506 + $0x1e0] sm:$0xff]
                  %539 = vst [vmem:[%s507 + $0x78] sm:$0xff] %v538
                  %v540 = vld [vmem:[%s506 + $0x200] sm:$0xff]
                  %541 = vst [vmem:[%s507 + $0x80] sm:$0xff] %v540
                  %v542 = vld [vmem:[%s506 + $0x220] sm:$0xff]
                  %543 = vst [vmem:[%s507 + $0x88] sm:$0xff] %v542
                  %v544 = vld [vmem:[%s506 + $0x240] sm:$0xff]
                  %545 = vst [vmem:[%s507 + $0x90] sm:$0xff] %v544
                  %v546 = vld [vmem:[%s506 + $0x260] sm:$0xff]
                  %547 = vst [vmem:[%s507 + $0x98] sm:$0xff] %v546
                  %v548 = vld [vmem:[%s506 + $0x280] sm:$0xff]
                  %549 = vst [vmem:[%s507 + $0xa0] sm:$0xff] %v548
                  %v550 = vld [vmem:[%s506 + $0x2a0] sm:$0xff]
                  %551 = vst [vmem:[%s507 + $0xa8] sm:$0xff] %v550
                  %v552 = vld [vmem:[%s506 + $0x2c0] sm:$0xff]
                  %553 = vst [vmem:[%s507 + $0xb0] sm:$0xff] %v552
                  %v554 = vld [vmem:[%s506 + $0x2e0] sm:$0xff]
                  %555 = vst [vmem:[%s507 + $0xb8] sm:$0xff] %v554
                  %v556 = vld [vmem:[%s506 + $0x300] sm:$0xff]
                  %557 = vst [vmem:[%s507 + $0xc0] sm:$0xff] %v556
                  %v558 = vld [vmem:[%s506 + $0x320] sm:$0xff]
                  %559 = vst [vmem:[%s507 + $0xc8] sm:$0xff] %v558
                  %v560 = vld [vmem:[%s506 + $0x340] sm:$0xff]
                  %561 = vst [vmem:[%s507 + $0xd0] sm:$0xff] %v560
                  %v562 = vld [vmem:[%s506 + $0x360] sm:$0xff]
                  %563 = vst [vmem:[%s507 + $0xd8] sm:$0xff] %v562
                  %v564 = vld [vmem:[%s506 + $0x380] sm:$0xff]
                  %565 = vst [vmem:[%s507 + $0xe0] sm:$0xff] %v564
                  %v566 = vld [vmem:[%s506 + $0x3a0] sm:$0xff]
                  %567 = vst [vmem:[%s507 + $0xe8] sm:$0xff] %v566
                  %v568 = vld [vmem:[%s506 + $0x3c0] sm:$0xff]
                  %569 = vst [vmem:[%s507 + $0xf0] sm:$0xff] %v568
                  %v570 = vld [vmem:[%s506 + $0x3e0] sm:$0xff]
                  %571 = vst [vmem:[%s507 + $0xf8] sm:$0xff] %v570
                  %v572 = vld [vmem:[%s506 + $0x400] sm:$0xff]
                  %573 = vst [vmem:[%s507 + $0x100] sm:$0xff] %v572
                  %v574 = vld [vmem:[%s506 + $0x420] sm:$0xff]
                  %575 = vst [vmem:[%s507 + $0x108] sm:$0xff] %v574
                  %v576 = vld [vmem:[%s506 + $0x440] sm:$0xff]
                  %577 = vst [vmem:[%s507 + $0x110] sm:$0xff] %v576
                  %v578 = vld [vmem:[%s506 + $0x460] sm:$0xff]
                  %579 = vst [vmem:[%s507 + $0x118] sm:$0xff] %v578
                  %v580 = vld [vmem:[%s506 + $0x480] sm:$0xff]
                  %581 = vst [vmem:[%s507 + $0x120] sm:$0xff] %v580
                  %v582 = vld [vmem:[%s506 + $0x4a0] sm:$0xff]
                  %583 = vst [vmem:[%s507 + $0x128] sm:$0xff] %v582
                  %v584 = vld [vmem:[%s506 + $0x4c0] sm:$0xff]
                  %585 = vst [vmem:[%s507 + $0x130] sm:$0xff] %v584
                  %v586 = vld [vmem:[%s506 + $0x4e0] sm:$0xff]
                  %587 = vst [vmem:[%s507 + $0x138] sm:$0xff] %v586
                  %v588 = vld [vmem:[%s506 + $0x500] sm:$0xff]
                  %589 = vst [vmem:[%s507 + $0x140] sm:$0xff] %v588
                  %v590 = vld [vmem:[%s506 + $0x520] sm:$0xff]
                  %591 = vst [vmem:[%s507 + $0x148] sm:$0xff] %v590
                  %v592 = vld [vmem:[%s506 + $0x540] sm:$0xff]
                  %593 = vst [vmem:[%s507 + $0x150] sm:$0xff] %v592
                  %v594 = vld [vmem:[%s506 + $0x560] sm:$0xff]
                  %595 = vst [vmem:[%s507 + $0x158] sm:$0xff] %v594
                  %v596 = vld [vmem:[%s506 + $0x580] sm:$0xff]
                  %597 = vst [vmem:[%s507 + $0x160] sm:$0xff] %v596
                  %v598 = vld [vmem:[%s506 + $0x5a0] sm:$0xff]
                  %599 = vst [vmem:[%s507 + $0x168] sm:$0xff] %v598
                  %v600 = vld [vmem:[%s506 + $0x5c0] sm:$0xff]
                  %601 = vst [vmem:[%s507 + $0x170] sm:$0xff] %v600
                  %v602 = vld [vmem:[%s506 + $0x5e0] sm:$0xff]
                  %603 = vst [vmem:[%s507 + $0x178] sm:$0xff] %v602
                  %v604 = vld [vmem:[%s506 + $0x600] sm:$0xff]
                  %605 = vst [vmem:[%s507 + $0x180] sm:$0xff] %v604
                  %v606 = vld [vmem:[%s506 + $0x620] sm:$0xff]
                  %607 = vst [vmem:[%s507 + $0x188] sm:$0xff] %v606
                  %v608 = vld [vmem:[%s506 + $0x640] sm:$0xff]
                  %609 = vst [vmem:[%s507 + $0x190] sm:$0xff] %v608
                  %v610 = vld [vmem:[%s506 + $0x660] sm:$0xff]
                  %611 = vst [vmem:[%s507 + $0x198] sm:$0xff] %v610
                  %v612 = vld [vmem:[%s506 + $0x680] sm:$0xff]
                  %613 = vst [vmem:[%s507 + $0x1a0] sm:$0xff] %v612
                  %v614 = vld [vmem:[%s506 + $0x6a0] sm:$0xff]
                  %615 = vst [vmem:[%s507 + $0x1a8] sm:$0xff] %v614
                  %v616 = vld [vmem:[%s506 + $0x6c0] sm:$0xff]
                  %617 = vst [vmem:[%s507 + $0x1b0] sm:$0xff] %v616
                  %v618 = vld [vmem:[%s506 + $0x6e0] sm:$0xff]
                  %619 = vst [vmem:[%s507 + $0x1b8] sm:$0xff] %v618
                  %v620 = vld [vmem:[%s506 + $0x700] sm:$0xff]
                  %621 = vst [vmem:[%s507 + $0x1c0] sm:$0xff] %v620
                  %v622 = vld [vmem:[%s506 + $0x720] sm:$0xff]
                  %623 = vst [vmem:[%s507 + $0x1c8] sm:$0xff] %v622
                  %v624 = vld [vmem:[%s506 + $0x740] sm:$0xff]
                  %625 = vst [vmem:[%s507 + $0x1d0] sm:$0xff] %v624
                  %v626 = vld [vmem:[%s506 + $0x760] sm:$0xff]
                  %627 = vst [vmem:[%s507 + $0x1d8] sm:$0xff] %v626
                  %v628 = vld [vmem:[%s506 + $0x780] sm:$0xff]
                  %629 = vst [vmem:[%s507 + $0x1e0] sm:$0xff] %v628
                  %v630 = vld [vmem:[%s506 + $0x7a0] sm:$0xff]
                  %631 = vst [vmem:[%s507 + $0x1e8] sm:$0xff] %v630
                  %v632 = vld [vmem:[%s506 + $0x7c0] sm:$0xff]
                  %633 = vst [vmem:[%s507 + $0x1f0] sm:$0xff] %v632
                  %v634 = vld [vmem:[%s506 + $0x7e0] sm:$0xff]
                  %635 = vst [vmem:[%s507 + $0x1f8] sm:$0xff] %v634
                $region60: #{gcn_res_forward.14} parent=54 // loop_footer
                  %s505 = sadd.s32 1, %s501
                $region61: #{gcn_res_forward.14} parent=54 // loop_footer_branch
                  %500 = sbr.rel target = $region57
                $region62: #{gcn_res_forward.14} parent=54 // loop_exit
                  _
              $region55: #{gcn_res_forward.14} parent=39 // pred_fallthru
                _
              // Predicated region
              $region63: #{gcn_res_forward.14} parent=39 // pred_check
                _
              $region64: #{gcn_res_forward.14} parent=39 // pred_check_branch
                %637 = sbr.rel target = $region66
              $region65: #{gcn_res_forward.14} parent=39 // pred_region
                _
              $region66: #{gcn_res_forward.14} parent=39 // pred_fallthru
                _
            $region40: #{gcn_res_forward.14} parent=35 // pred_fallthru
              _
            // Predicated region
            $region41: #{gcn_res_forward.14} parent=35 // pred_check
              _
            $region42: #{gcn_res_forward.14} parent=35 // pred_check_branch
              %360 = sbr.rel target = $region44
            $region43: #{gcn_res_forward.14} parent=35 // pred_region
              loop: start=0, step=1, limit=1
              $region45: #{gcn_res_forward.14} parent=43 // loop_pre_header
                _
              $region46: #{gcn_res_forward.14} parent=43 // loop_header
                %s363 = sphi 0, %s367
                %p364 = scmp.ge.s32.totalorder %s363, 1
                %s368 = sphi %s354, %s354
                %s369 = sphi %s345, %s345
              $region47: #{gcn_res_forward.14} parent=43 // loop_header_branch
                %366 = sbr.rel (%p364) target = $region51
              $region48: #{gcn_res_forward.14} parent=43 // loop_body
                %v370 = vld [vmem:[%s368] sm:$0xff]
                %371 = vst [vmem:[%s369] sm:$0xff] %v370
                %v372 = vld [vmem:[%s368 + $0x20] sm:$0xff]
                %373 = vst [vmem:[%s369 + $0x8] sm:$0xff] %v372
                %v374 = vld [vmem:[%s368 + $0x40] sm:$0xff]
                %375 = vst [vmem:[%s369 + $0x10] sm:$0xff] %v374
                %v376 = vld [vmem:[%s368 + $0x60] sm:$0xff]
                %377 = vst [vmem:[%s369 + $0x18] sm:$0xff] %v376
                %v378 = vld [vmem:[%s368 + $0x80] sm:$0xff]
                %379 = vst [vmem:[%s369 + $0x20] sm:$0xff] %v378
                %v380 = vld [vmem:[%s368 + $0xa0] sm:$0xff]
                %381 = vst [vmem:[%s369 + $0x28] sm:$0xff] %v380
                %v382 = vld [vmem:[%s368 + $0xc0] sm:$0xff]
                %383 = vst [vmem:[%s369 + $0x30] sm:$0xff] %v382
                %v384 = vld [vmem:[%s368 + $0xe0] sm:$0xff]
                %385 = vst [vmem:[%s369 + $0x38] sm:$0xff] %v384
                %v386 = vld [vmem:[%s368 + $0x100] sm:$0xff]
                %387 = vst [vmem:[%s369 + $0x40] sm:$0xff] %v386
                %v388 = vld [vmem:[%s368 + $0x120] sm:$0xff]
                %389 = vst [vmem:[%s369 + $0x48] sm:$0xff] %v388
                %v390 = vld [vmem:[%s368 + $0x140] sm:$0xff]
                %391 = vst [vmem:[%s369 + $0x50] sm:$0xff] %v390
                %v392 = vld [vmem:[%s368 + $0x160] sm:$0xff]
                %393 = vst [vmem:[%s369 + $0x58] sm:$0xff] %v392
                %v394 = vld [vmem:[%s368 + $0x180] sm:$0xff]
                %395 = vst [vmem:[%s369 + $0x60] sm:$0xff] %v394
                %v396 = vld [vmem:[%s368 + $0x1a0] sm:$0xff]
                %397 = vst [vmem:[%s369 + $0x68] sm:$0xff] %v396
                %v398 = vld [vmem:[%s368 + $0x1c0] sm:$0xff]
                %399 = vst [vmem:[%s369 + $0x70] sm:$0xff] %v398
                %v400 = vld [vmem:[%s368 + $0x1e0] sm:$0xff]
                %401 = vst [vmem:[%s369 + $0x78] sm:$0xff] %v400
                %v402 = vld [vmem:[%s368 + $0x200] sm:$0xff]
                %403 = vst [vmem:[%s369 + $0x80] sm:$0xff] %v402
                %v404 = vld [vmem:[%s368 + $0x220] sm:$0xff]
                %405 = vst [vmem:[%s369 + $0x88] sm:$0xff] %v404
                %v406 = vld [vmem:[%s368 + $0x240] sm:$0xff]
                %407 = vst [vmem:[%s369 + $0x90] sm:$0xff] %v406
                %v408 = vld [vmem:[%s368 + $0x260] sm:$0xff]
                %409 = vst [vmem:[%s369 + $0x98] sm:$0xff] %v408
                %v410 = vld [vmem:[%s368 + $0x280] sm:$0xff]
                %411 = vst [vmem:[%s369 + $0xa0] sm:$0xff] %v410
                %v412 = vld [vmem:[%s368 + $0x2a0] sm:$0xff]
                %413 = vst [vmem:[%s369 + $0xa8] sm:$0xff] %v412
                %v414 = vld [vmem:[%s368 + $0x2c0] sm:$0xff]
                %415 = vst [vmem:[%s369 + $0xb0] sm:$0xff] %v414
                %v416 = vld [vmem:[%s368 + $0x2e0] sm:$0xff]
                %417 = vst [vmem:[%s369 + $0xb8] sm:$0xff] %v416
                %v418 = vld [vmem:[%s368 + $0x300] sm:$0xff]
                %419 = vst [vmem:[%s369 + $0xc0] sm:$0xff] %v418
                %v420 = vld [vmem:[%s368 + $0x320] sm:$0xff]
                %421 = vst [vmem:[%s369 + $0xc8] sm:$0xff] %v420
                %v422 = vld [vmem:[%s368 + $0x340] sm:$0xff]
                %423 = vst [vmem:[%s369 + $0xd0] sm:$0xff] %v422
                %v424 = vld [vmem:[%s368 + $0x360] sm:$0xff]
                %425 = vst [vmem:[%s369 + $0xd8] sm:$0xff] %v424
                %v426 = vld [vmem:[%s368 + $0x380] sm:$0xff]
                %427 = vst [vmem:[%s369 + $0xe0] sm:$0xff] %v426
                %v428 = vld [vmem:[%s368 + $0x3a0] sm:$0xff]
                %429 = vst [vmem:[%s369 + $0xe8] sm:$0xff] %v428
                %v430 = vld [vmem:[%s368 + $0x3c0] sm:$0xff]
                %431 = vst [vmem:[%s369 + $0xf0] sm:$0xff] %v430
                %v432 = vld [vmem:[%s368 + $0x3e0] sm:$0xff]
                %433 = vst [vmem:[%s369 + $0xf8] sm:$0xff] %v432
                %v434 = vld [vmem:[%s368 + $0x400] sm:$0xff]
                %435 = vst [vmem:[%s369 + $0x100] sm:$0xff] %v434
                %v436 = vld [vmem:[%s368 + $0x420] sm:$0xff]
                %437 = vst [vmem:[%s369 + $0x108] sm:$0xff] %v436
                %v438 = vld [vmem:[%s368 + $0x440] sm:$0xff]
                %439 = vst [vmem:[%s369 + $0x110] sm:$0xff] %v438
                %v440 = vld [vmem:[%s368 + $0x460] sm:$0xff]
                %441 = vst [vmem:[%s369 + $0x118] sm:$0xff] %v440
                %v442 = vld [vmem:[%s368 + $0x480] sm:$0xff]
                %443 = vst [vmem:[%s369 + $0x120] sm:$0xff] %v442
                %v444 = vld [vmem:[%s368 + $0x4a0] sm:$0xff]
                %445 = vst [vmem:[%s369 + $0x128] sm:$0xff] %v444
                %v446 = vld [vmem:[%s368 + $0x4c0] sm:$0xff]
                %447 = vst [vmem:[%s369 + $0x130] sm:$0xff] %v446
                %v448 = vld [vmem:[%s368 + $0x4e0] sm:$0xff]
                %449 = vst [vmem:[%s369 + $0x138] sm:$0xff] %v448
                %v450 = vld [vmem:[%s368 + $0x500] sm:$0xff]
                %451 = vst [vmem:[%s369 + $0x140] sm:$0xff] %v450
                %v452 = vld [vmem:[%s368 + $0x520] sm:$0xff]
                %453 = vst [vmem:[%s369 + $0x148] sm:$0xff] %v452
                %v454 = vld [vmem:[%s368 + $0x540] sm:$0xff]
                %455 = vst [vmem:[%s369 + $0x150] sm:$0xff] %v454
                %v456 = vld [vmem:[%s368 + $0x560] sm:$0xff]
                %457 = vst [vmem:[%s369 + $0x158] sm:$0xff] %v456
                %v458 = vld [vmem:[%s368 + $0x580] sm:$0xff]
                %459 = vst [vmem:[%s369 + $0x160] sm:$0xff] %v458
                %v460 = vld [vmem:[%s368 + $0x5a0] sm:$0xff]
                %461 = vst [vmem:[%s369 + $0x168] sm:$0xff] %v460
                %v462 = vld [vmem:[%s368 + $0x5c0] sm:$0xff]
                %463 = vst [vmem:[%s369 + $0x170] sm:$0xff] %v462
                %v464 = vld [vmem:[%s368 + $0x5e0] sm:$0xff]
                %465 = vst [vmem:[%s369 + $0x178] sm:$0xff] %v464
                %v466 = vld [vmem:[%s368 + $0x600] sm:$0xff]
                %467 = vst [vmem:[%s369 + $0x180] sm:$0xff] %v466
                %v468 = vld [vmem:[%s368 + $0x620] sm:$0xff]
                %469 = vst [vmem:[%s369 + $0x188] sm:$0xff] %v468
                %v470 = vld [vmem:[%s368 + $0x640] sm:$0xff]
                %471 = vst [vmem:[%s369 + $0x190] sm:$0xff] %v470
                %v472 = vld [vmem:[%s368 + $0x660] sm:$0xff]
                %473 = vst [vmem:[%s369 + $0x198] sm:$0xff] %v472
                %v474 = vld [vmem:[%s368 + $0x680] sm:$0xff]
                %475 = vst [vmem:[%s369 + $0x1a0] sm:$0xff] %v474
                %v476 = vld [vmem:[%s368 + $0x6a0] sm:$0xff]
                %477 = vst [vmem:[%s369 + $0x1a8] sm:$0xff] %v476
                %v478 = vld [vmem:[%s368 + $0x6c0] sm:$0xff]
                %479 = vst [vmem:[%s369 + $0x1b0] sm:$0xff] %v478
                %v480 = vld [vmem:[%s368 + $0x6e0] sm:$0xff]
                %481 = vst [vmem:[%s369 + $0x1b8] sm:$0xff] %v480
                %v482 = vld [vmem:[%s368 + $0x700] sm:$0xff]
                %483 = vst [vmem:[%s369 + $0x1c0] sm:$0xff] %v482
                %v484 = vld [vmem:[%s368 + $0x720] sm:$0xff]
                %485 = vst [vmem:[%s369 + $0x1c8] sm:$0xff] %v484
                %v486 = vld [vmem:[%s368 + $0x740] sm:$0xff]
                %487 = vst [vmem:[%s369 + $0x1d0] sm:$0xff] %v486
                %v488 = vld [vmem:[%s368 + $0x760] sm:$0xff]
                %489 = vst [vmem:[%s369 + $0x1d8] sm:$0xff] %v488
                %v490 = vld [vmem:[%s368 + $0x780] sm:$0xff]
                %491 = vst [vmem:[%s369 + $0x1e0] sm:$0xff] %v490
                %v492 = vld [vmem:[%s368 + $0x7a0] sm:$0xff]
                %493 = vst [vmem:[%s369 + $0x1e8] sm:$0xff] %v492
                %v494 = vld [vmem:[%s368 + $0x7c0] sm:$0xff]
                %495 = vst [vmem:[%s369 + $0x1f0] sm:$0xff] %v494
                %v496 = vld [vmem:[%s368 + $0x7e0] sm:$0xff]
                %497 = vst [vmem:[%s369 + $0x1f8] sm:$0xff] %v496
              $region49: #{gcn_res_forward.14} parent=43 // loop_footer
                %s367 = sadd.s32 1, %s363
              $region50: #{gcn_res_forward.14} parent=43 // loop_footer_branch
                %362 = sbr.rel target = $region46
              $region51: #{gcn_res_forward.14} parent=43 // loop_exit
                _
            $region44: #{gcn_res_forward.14} parent=35 // pred_fallthru
              _
          $region36: #{gcn_res_forward.14} parent=31 // pred_fallthru
            _
          %638 = vnop
        $region32: #{gcn_res_forward.14} parent=27 // pred_fallthru
          _
        // Predicated region
        $region67: #{gcn_res_forward.14} parent=27 // pred_check
          %p639 = pneg %p125
        $region68: #{gcn_res_forward.14} parent=27 // pred_check_branch
          %641 = sbr.rel (%p639) target = $region70
        $region69: #{gcn_res_forward.14} parent=27 // pred_region
          %s642 = smul.u32 %s39, 3
          %s643 = sadd.s32 %s642, %s40
          %s644 = sld [smem:[#allocation4 + %s643]]
          %s645 = smul.u32 32, %s644
          %p646 = scmp.lt.s32.totalorder %s645, 127
          %s647 = scalar_select %p646, %s645, 127
          %s648 = smul.addr %s647, 4
          %s649 = scalar_lea.vmem %s4, %s648
          %s650 = smul.u32 %s39, 3
          %s651 = sadd.s32 %s650, %s40
          %s652 = sld [smem:[#allocation4 + %s651]]
          %s653 = smul.u32 32, %s652
        $region70: #{gcn_res_forward.14} parent=27 // pred_fallthru
          _
        // Predicated region
        $region71: #{gcn_res_forward.14} parent=27 // pred_check
          %p654 = pneg %p151
        $region72: #{gcn_res_forward.14} parent=27 // pred_check_branch
          %656 = sbr.rel (%p654) target = $region74
        $region73: #{gcn_res_forward.14} parent=27 // pred_region
          %s657 = smul.u32 64, %s39
          %p658 = scmp.lt.s32.totalorder %s657, 127
          %s659 = scalar_select %p658, %s657, 127
          %s660 = smul.addr %s659, 4
          %s661 = scalar_lea.vmem %s5, %s660
          %s662 = smul.u32 64, %s39
        $region74: #{gcn_res_forward.14} parent=27 // pred_fallthru
          _
        // Predicated region
        $region75: #{gcn_res_forward.14} parent=27 // pred_check
          %p663 = pneg %p177
        $region76: #{gcn_res_forward.14} parent=27 // pred_check_branch
          %665 = sbr.rel (%p663) target = $region78
        $region77: #{gcn_res_forward.14} parent=27 // pred_region
          %s666 = smul.u32 64, %s39
          %p667 = scmp.lt.s32.totalorder %s666, 127
          %s668 = scalar_select %p667, %s666, 127
          %s669 = smul.addr %s668, 4
          %s670 = scalar_lea.vmem %s6, %s669
          %s671 = smul.u32 64, %s39
        $region78: #{gcn_res_forward.14} parent=27 // pred_fallthru
          _
        // Predicated region
        $region79: #{gcn_res_forward.14} parent=27 // pred_check
          %p672 = pneg %p203
        $region80: #{gcn_res_forward.14} parent=27 // pred_check_branch
          %674 = sbr.rel (%p672) target = $region82
        $region81: #{gcn_res_forward.14} parent=27 // pred_region
          %s675 = smul.u32 64, %s39
          %p676 = scmp.lt.s32.totalorder %s675, 127
          %s677 = scalar_select %p676, %s675, 127
          %s678 = smul.addr %s677, 8
          %s679 = scalar_lea.vmem %s7, %s678
          %s680 = smul.u32 64, %s39
        $region82: #{gcn_res_forward.14} parent=27 // pred_fallthru
          _
      $region28: #{gcn_res_forward.14} parent=5 // pred_fallthru
        _
      %p681 = scmp.le.s32.totalorder 1, %s32
      %p682 = scmp.lt.s32.totalorder %s32, 7
      %p683 = pnand %p681, %p682
      %p684 = pneg %p683
      // Predicated region
      $region83: #{gcn_res_forward.14} parent=5 // pred_check
        _
      $region84: #{gcn_res_forward.14} parent=5 // pred_check_branch
        %686 = sbr.rel (%p683) target = $region86
      $region85: #{gcn_res_forward.14} parent=5 // pred_region
        %s687 = ssub.s32 %s32, 1
        // Predicated region
        $region87: #{gcn_res_forward.14} parent=85 // pred_check
          %p688 = pneg %p65
        $region88: #{gcn_res_forward.14} parent=85 // pred_check_branch
          %690 = sbr.rel (%p688) target = $region90
        $region89: #{gcn_res_forward.14} parent=85 // pred_region
          %691 = dma.done [#allocation8], 16
        $region90: #{gcn_res_forward.14} parent=85 // pred_fallthru
          _
        %s692 = sand.u32 %s86, 1
        %s693 = sand.u32 %s86, 1
        %s694 = smul.addr %s693, 512
        %s695 = scalar_lea.vmem [#allocation9], %s694
        // Predicated region
        $region91: #{gcn_res_forward.14} parent=85 // pred_check
          %p696 = pneg %p99
        $region92: #{gcn_res_forward.14} parent=85 // pred_check_branch
          %698 = sbr.rel (%p696) target = $region94
        $region93: #{gcn_res_forward.14} parent=85 // pred_region
          _
        $region94: #{gcn_res_forward.14} parent=85 // pred_fallthru
          _
        %699 = sfence
        %p700 = pneg %p65
        %p701 = pneg %p62
        %s702 = sand.u32 %s86, 1
        %s703 = sand.u32 %s86, 1
        %s704 = smul.addr %s703, 512
        %s705 = scalar_lea.vmem [#allocation9], %s704
        %p706 = pneg %p99
        %p707 = pneg %p96
        %s708 = smul.u32 %s41, 3
        %s709 = sadd.s32 %s708, %s42
        %s710 = sld [smem:[#allocation4 + %s709]]
        %s711 = smul.u32 32, %s710
        %p712 = scmp.lt.s32.totalorder %s711, 127
        %s713 = scalar_select %p712, %s711, 127
        %s714 = smul.addr %s713, 4
        %s715 = scalar_lea.vmem %s4, %s714
        %p716 = pneg %p131
        %p717 = pneg %p128
        %s718 = smul.u32 64, %s41
        %p719 = scmp.lt.s32.totalorder %s718, 127
        %s720 = scalar_select %p719, %s718, 127
        %s721 = smul.addr %s720, 4
        %s722 = scalar_lea.vmem %s5, %s721
        %p723 = pneg %p157
        %p724 = pneg %p154
        %s725 = smul.u32 64, %s41
        %p726 = scmp.lt.s32.totalorder %s725, 127
        %s727 = scalar_select %p726, %s725, 127
        %s728 = smul.addr %s727, 4
        %s729 = scalar_lea.vmem %s6, %s728
        %p730 = pneg %p183
        %p731 = pneg %p180
        %s732 = smul.u32 64, %s41
        %p733 = scmp.lt.s32.totalorder %s732, 127
        %s734 = scalar_select %p733, %s732, 127
        %s735 = smul.addr %s734, 8
        %s736 = scalar_lea.vmem %s7, %s735
        %p737 = pneg %p209
        %p738 = pneg %p206
        %p739 = pneg %p230
        %p740 = pneg %p227
        %p741 = pneg %p251
        %p742 = pneg %p248
        %p743 = pneg %p277
        %p744 = pneg %p274
        %s745 = sand.u32 %s264, 1
        %s746 = scalar_lea.sflag [#allocation7], %s745
        %s747 = sand.u32 %s264, 1
        %s748 = smul.addr %s747, 256
        %s749 = scalar_lea.vmem [#allocation10], %s748
        %p750 = pneg %p303
        %p751 = pneg %p300
        %s752 = smul.u32 64, %s41
        %p753 = scmp.lt.s32.totalorder %s752, 127
        %s754 = scalar_select %p753, %s752, 127
        %s755 = smul.addr %s754, 8
        %s756 = scalar_lea.vmem %s11, %s755
        %s757 = smul.u32 %s41, 3
        %s758 = sadd.s32 %s757, %s42
        %s759 = sld [smem:[#allocation4 + %s758]]
        %s760 = smul.u32 64, %s41
        %s761 = smul.u32 2, %s759
        %s762 = smul.u32 %s41, 3
        %s763 = sadd.s32 %s762, %s42
        %s764 = sld [smem:[#allocation4 + %s763]]
        %s765 = smul.u32 32, %s764
        %p766 = scmp.lt.s32.totalorder %s765, 127
        %s767 = scalar_select %p766, %s765, 127
        %s768 = smul.addr %s767, 4
        %s769 = scalar_lea.vmem %s4, %s768
        %s770 = smul.u32 %s41, 3
        %s771 = sadd.s32 %s770, %s42
        %s772 = sld [smem:[#allocation4 + %s771]]
        %s773 = smul.u32 32, %s772
        %s774 = smul.u32 64, %s41
        %p775 = scmp.lt.s32.totalorder %s774, 127
        %s776 = scalar_select %p775, %s774, 127
        %s777 = smul.addr %s776, 4
        %s778 = scalar_lea.vmem %s5, %s777
        %s779 = smul.u32 64, %s41
        %s780 = smul.u32 64, %s41
        %p781 = scmp.lt.s32.totalorder %s780, 127
        %s782 = scalar_select %p781, %s780, 127
        %s783 = smul.addr %s782, 4
        %s784 = scalar_lea.vmem %s6, %s783
        %s785 = smul.u32 64, %s41
        %s786 = smul.u32 64, %s41
        %p787 = scmp.lt.s32.totalorder %s786, 127
        %s788 = scalar_select %p787, %s786, 127
        %s789 = smul.addr %s788, 8
        %s790 = scalar_lea.vmem %s7, %s789
        %s791 = smul.u32 64, %s41
        %s792 = smul.u32 64, %s41
        %s793 = smul.u32 64, %s41
        %p794 = scmp.lt.s32.totalorder %s793, 127
        %s795 = scalar_select %p794, %s793, 127
        %s796 = smul.addr %s795, 8
        %s797 = scalar_lea.vmem %s11, %s796
        %s798 = smul.u32 64, %s41
        %p800 = scmp.eq.s32.totalorder %s42, 0
        // Predicated region
        $region95: #{gcn_res_forward.14} parent=85 // pred_check
          %p801 = pneg %p800
        $region96: #{gcn_res_forward.14} parent=85 // pred_check_branch
          %803 = sbr.rel (%p801) target = $region98
        $region97: #{gcn_res_forward.14} parent=85 // pred_region
          %804 = vst [vmem:[#allocation2] sm:$0xff] 0.0
          %805 = vst [vmem:[#allocation2 + $0x8] sm:$0xff] 0.0
          %806 = vst [vmem:[#allocation2 + $0x10] sm:$0xff] 0.0
          %807 = vst [vmem:[#allocation2 + $0x18] sm:$0xff] 0.0
          %808 = vst [vmem:[#allocation2 + $0x20] sm:$0xff] 0.0
          %809 = vst [vmem:[#allocation2 + $0x28] sm:$0xff] 0.0
          %810 = vst [vmem:[#allocation2 + $0x30] sm:$0xff] 0.0
          %811 = vst [vmem:[#allocation2 + $0x38] sm:$0xff] 0.0
          %812 = vst [vmem:[#allocation2 + $0x40] sm:$0xff] 0.0
          %813 = vst [vmem:[#allocation2 + $0x48] sm:$0xff] 0.0
          %814 = vst [vmem:[#allocation2 + $0x50] sm:$0xff] 0.0
          %815 = vst [vmem:[#allocation2 + $0x58] sm:$0xff] 0.0
          %816 = vst [vmem:[#allocation2 + $0x60] sm:$0xff] 0.0
          %817 = vst [vmem:[#allocation2 + $0x68] sm:$0xff] 0.0
          %818 = vst [vmem:[#allocation2 + $0x70] sm:$0xff] 0.0
          %819 = vst [vmem:[#allocation2 + $0x78] sm:$0xff] 0.0
          %820 = vst [vmem:[#allocation2 + $0x80] sm:$0xff] 0.0
          %821 = vst [vmem:[#allocation2 + $0x88] sm:$0xff] 0.0
          %822 = vst [vmem:[#allocation2 + $0x90] sm:$0xff] 0.0
          %823 = vst [vmem:[#allocation2 + $0x98] sm:$0xff] 0.0
          %824 = vst [vmem:[#allocation2 + $0xa0] sm:$0xff] 0.0
          %825 = vst [vmem:[#allocation2 + $0xa8] sm:$0xff] 0.0
          %826 = vst [vmem:[#allocation2 + $0xb0] sm:$0xff] 0.0
          %827 = vst [vmem:[#allocation2 + $0xb8] sm:$0xff] 0.0
          %828 = vst [vmem:[#allocation2 + $0xc0] sm:$0xff] 0.0
          %829 = vst [vmem:[#allocation2 + $0xc8] sm:$0xff] 0.0
          %830 = vst [vmem:[#allocation2 + $0xd0] sm:$0xff] 0.0
          %831 = vst [vmem:[#allocation2 + $0xd8] sm:$0xff] 0.0
          %832 = vst [vmem:[#allocation2 + $0xe0] sm:$0xff] 0.0
          %833 = vst [vmem:[#allocation2 + $0xe8] sm:$0xff] 0.0
          %834 = vst [vmem:[#allocation2 + $0xf0] sm:$0xff] 0.0
          %835 = vst [vmem:[#allocation2 + $0xf8] sm:$0xff] 0.0
          %836 = vst [vmem:[#allocation2 + $0x100] sm:$0xff] 0.0
          %837 = vst [vmem:[#allocation2 + $0x108] sm:$0xff] 0.0
          %838 = vst [vmem:[#allocation2 + $0x110] sm:$0xff] 0.0
          %839 = vst [vmem:[#allocation2 + $0x118] sm:$0xff] 0.0
          %840 = vst [vmem:[#allocation2 + $0x120] sm:$0xff] 0.0
          %841 = vst [vmem:[#allocation2 + $0x128] sm:$0xff] 0.0
          %842 = vst [vmem:[#allocation2 + $0x130] sm:$0xff] 0.0
          %843 = vst [vmem:[#allocation2 + $0x138] sm:$0xff] 0.0
          %844 = vst [vmem:[#allocation2 + $0x140] sm:$0xff] 0.0
          %845 = vst [vmem:[#allocation2 + $0x148] sm:$0xff] 0.0
          %846 = vst [vmem:[#allocation2 + $0x150] sm:$0xff] 0.0
          %847 = vst [vmem:[#allocation2 + $0x158] sm:$0xff] 0.0
          %848 = vst [vmem:[#allocation2 + $0x160] sm:$0xff] 0.0
          %849 = vst [vmem:[#allocation2 + $0x168] sm:$0xff] 0.0
          %850 = vst [vmem:[#allocation2 + $0x170] sm:$0xff] 0.0
          %851 = vst [vmem:[#allocation2 + $0x178] sm:$0xff] 0.0
          %852 = vst [vmem:[#allocation2 + $0x180] sm:$0xff] 0.0
          %853 = vst [vmem:[#allocation2 + $0x188] sm:$0xff] 0.0
          %854 = vst [vmem:[#allocation2 + $0x190] sm:$0xff] 0.0
          %855 = vst [vmem:[#allocation2 + $0x198] sm:$0xff] 0.0
          %856 = vst [vmem:[#allocation2 + $0x1a0] sm:$0xff] 0.0
          %857 = vst [vmem:[#allocation2 + $0x1a8] sm:$0xff] 0.0
          %858 = vst [vmem:[#allocation2 + $0x1b0] sm:$0xff] 0.0
          %859 = vst [vmem:[#allocation2 + $0x1b8] sm:$0xff] 0.0
          %860 = vst [vmem:[#allocation2 + $0x1c0] sm:$0xff] 0.0
          %861 = vst [vmem:[#allocation2 + $0x1c8] sm:$0xff] 0.0
          %862 = vst [vmem:[#allocation2 + $0x1d0] sm:$0xff] 0.0
          %863 = vst [vmem:[#allocation2 + $0x1d8] sm:$0xff] 0.0
          %864 = vst [vmem:[#allocation2 + $0x1e0] sm:$0xff] 0.0
          %865 = vst [vmem:[#allocation2 + $0x1e8] sm:$0xff] 0.0
          %866 = vst [vmem:[#allocation2 + $0x1f0] sm:$0xff] 0.0
          %867 = vst [vmem:[#allocation2 + $0x1f8] sm:$0xff] 0.0
        $region98: #{gcn_res_forward.14} parent=85 // pred_fallthru
          _
        %s868 = sld [smem:[#allocation5 + %s41]]
        %p869 = scmp.lt.s32.totalorder %s42, %s868
        // Predicated region
        $region99: #{gcn_res_forward.14} parent=85 // pred_check
          %p870 = pneg %p869
        $region100: #{gcn_res_forward.14} parent=85 // pred_check_branch
          %872 = sbr.rel (%p870) target = $region102
        $region101: #{gcn_res_forward.14} parent=85 // pred_region
          %v873 = vld [vmem:[#allocation2] sm:$0xff]
          %v874 = vld [vmem:[#allocation2 + $0x8] sm:$0xff]
          %v875 = vld [vmem:[#allocation2 + $0x10] sm:$0xff]
          %v876 = vld [vmem:[#allocation2 + $0x18] sm:$0xff]
          %v877 = vld [vmem:[#allocation2 + $0x20] sm:$0xff]
          %v878 = vld [vmem:[#allocation2 + $0x28] sm:$0xff]
          %v879 = vld [vmem:[#allocation2 + $0x30] sm:$0xff]
          %v880 = vld [vmem:[#allocation2 + $0x38] sm:$0xff]
          %v881 = vld [vmem:[#allocation2 + $0x40] sm:$0xff]
          %v882 = vld [vmem:[#allocation2 + $0x48] sm:$0xff]
          %v883 = vld [vmem:[#allocation2 + $0x50] sm:$0xff]
          %v884 = vld [vmem:[#allocation2 + $0x58] sm:$0xff]
          %v885 = vld [vmem:[#allocation2 + $0x60] sm:$0xff]
          %v886 = vld [vmem:[#allocation2 + $0x68] sm:$0xff]
          %v887 = vld [vmem:[#allocation2 + $0x70] sm:$0xff]
          %v888 = vld [vmem:[#allocation2 + $0x78] sm:$0xff]
          %v889 = vld [vmem:[#allocation2 + $0x80] sm:$0xff]
          %v890 = vld [vmem:[#allocation2 + $0x88] sm:$0xff]
          %v891 = vld [vmem:[#allocation2 + $0x90] sm:$0xff]
          %v892 = vld [vmem:[#allocation2 + $0x98] sm:$0xff]
          %v893 = vld [vmem:[#allocation2 + $0xa0] sm:$0xff]
          %v894 = vld [vmem:[#allocation2 + $0xa8] sm:$0xff]
          %v895 = vld [vmem:[#allocation2 + $0xb0] sm:$0xff]
          %v896 = vld [vmem:[#allocation2 + $0xb8] sm:$0xff]
          %v897 = vld [vmem:[#allocation2 + $0xc0] sm:$0xff]
          %v898 = vld [vmem:[#allocation2 + $0xc8] sm:$0xff]
          %v899 = vld [vmem:[#allocation2 + $0xd0] sm:$0xff]
          %v900 = vld [vmem:[#allocation2 + $0xd8] sm:$0xff]
          %v901 = vld [vmem:[#allocation2 + $0xe0] sm:$0xff]
          %v902 = vld [vmem:[#allocation2 + $0xe8] sm:$0xff]
          %v903 = vld [vmem:[#allocation2 + $0xf0] sm:$0xff]
          %v904 = vld [vmem:[#allocation2 + $0xf8] sm:$0xff]
          %v905 = vld [vmem:[#allocation2 + $0x100] sm:$0xff]
          %v906 = vld [vmem:[#allocation2 + $0x108] sm:$0xff]
          %v907 = vld [vmem:[#allocation2 + $0x110] sm:$0xff]
          %v908 = vld [vmem:[#allocation2 + $0x118] sm:$0xff]
          %v909 = vld [vmem:[#allocation2 + $0x120] sm:$0xff]
          %v910 = vld [vmem:[#allocation2 + $0x128] sm:$0xff]
          %v911 = vld [vmem:[#allocation2 + $0x130] sm:$0xff]
          %v912 = vld [vmem:[#allocation2 + $0x138] sm:$0xff]
          %v913 = vld [vmem:[#allocation2 + $0x140] sm:$0xff]
          %v914 = vld [vmem:[#allocation2 + $0x148] sm:$0xff]
          %v915 = vld [vmem:[#allocation2 + $0x150] sm:$0xff]
          %v916 = vld [vmem:[#allocation2 + $0x158] sm:$0xff]
          %v917 = vld [vmem:[#allocation2 + $0x160] sm:$0xff]
          %v918 = vld [vmem:[#allocation2 + $0x168] sm:$0xff]
          %v919 = vld [vmem:[#allocation2 + $0x170] sm:$0xff]
          %v920 = vld [vmem:[#allocation2 + $0x178] sm:$0xff]
          %v921 = vld [vmem:[#allocation2 + $0x180] sm:$0xff]
          %v922 = vld [vmem:[#allocation2 + $0x188] sm:$0xff]
          %v923 = vld [vmem:[#allocation2 + $0x190] sm:$0xff]
          %v924 = vld [vmem:[#allocation2 + $0x198] sm:$0xff]
          %v925 = vld [vmem:[#allocation2 + $0x1a0] sm:$0xff]
          %v926 = vld [vmem:[#allocation2 + $0x1a8] sm:$0xff]
          %v927 = vld [vmem:[#allocation2 + $0x1b0] sm:$0xff]
          %v928 = vld [vmem:[#allocation2 + $0x1b8] sm:$0xff]
          %v929 = vld [vmem:[#allocation2 + $0x1c0] sm:$0xff]
          %v930 = vld [vmem:[#allocation2 + $0x1c8] sm:$0xff]
          %v931 = vld [vmem:[#allocation2 + $0x1d0] sm:$0xff]
          %v932 = vld [vmem:[#allocation2 + $0x1d8] sm:$0xff]
          %v933 = vld [vmem:[#allocation2 + $0x1e0] sm:$0xff]
          %v934 = vld [vmem:[#allocation2 + $0x1e8] sm:$0xff]
          %v935 = vld [vmem:[#allocation2 + $0x1f0] sm:$0xff]
          %v936 = vld [vmem:[#allocation2 + $0x1f8] sm:$0xff]
          %v937 = vld [vmem:[%s695] sm:$0xff]
          %v938 = vld [vmem:[%s695 + $0x8] sm:$0xff]
          %v939 = vld [vmem:[%s695 + $0x10] sm:$0xff]
          %v940 = vld [vmem:[%s695 + $0x18] sm:$0xff]
          %v941 = vld [vmem:[%s695 + $0x20] sm:$0xff]
          %v942 = vld [vmem:[%s695 + $0x28] sm:$0xff]
          %v943 = vld [vmem:[%s695 + $0x30] sm:$0xff]
          %v944 = vld [vmem:[%s695 + $0x38] sm:$0xff]
          %v945 = vld [vmem:[%s695 + $0x40] sm:$0xff]
          %v946 = vld [vmem:[%s695 + $0x48] sm:$0xff]
          %v947 = vld [vmem:[%s695 + $0x50] sm:$0xff]
          %v948 = vld [vmem:[%s695 + $0x58] sm:$0xff]
          %v949 = vld [vmem:[%s695 + $0x60] sm:$0xff]
          %v950 = vld [vmem:[%s695 + $0x68] sm:$0xff]
          %v951 = vld [vmem:[%s695 + $0x70] sm:$0xff]
          %v952 = vld [vmem:[%s695 + $0x78] sm:$0xff]
          %v953 = vld [vmem:[%s695 + $0x80] sm:$0xff]
          %v954 = vld [vmem:[%s695 + $0x88] sm:$0xff]
          %v955 = vld [vmem:[%s695 + $0x90] sm:$0xff]
          %v956 = vld [vmem:[%s695 + $0x98] sm:$0xff]
          %v957 = vld [vmem:[%s695 + $0xa0] sm:$0xff]
          %v958 = vld [vmem:[%s695 + $0xa8] sm:$0xff]
          %v959 = vld [vmem:[%s695 + $0xb0] sm:$0xff]
          %v960 = vld [vmem:[%s695 + $0xb8] sm:$0xff]
          %v961 = vld [vmem:[%s695 + $0xc0] sm:$0xff]
          %v962 = vld [vmem:[%s695 + $0xc8] sm:$0xff]
          %v963 = vld [vmem:[%s695 + $0xd0] sm:$0xff]
          %v964 = vld [vmem:[%s695 + $0xd8] sm:$0xff]
          %v965 = vld [vmem:[%s695 + $0xe0] sm:$0xff]
          %v966 = vld [vmem:[%s695 + $0xe8] sm:$0xff]
          %v967 = vld [vmem:[%s695 + $0xf0] sm:$0xff]
          %v968 = vld [vmem:[%s695 + $0xf8] sm:$0xff]
          %v969 = vld [vmem:[%s695 + $0x100] sm:$0xff]
          %v970 = vld [vmem:[%s695 + $0x108] sm:$0xff]
          %v971 = vld [vmem:[%s695 + $0x110] sm:$0xff]
          %v972 = vld [vmem:[%s695 + $0x118] sm:$0xff]
          %v973 = vld [vmem:[%s695 + $0x120] sm:$0xff]
          %v974 = vld [vmem:[%s695 + $0x128] sm:$0xff]
          %v975 = vld [vmem:[%s695 + $0x130] sm:$0xff]
          %v976 = vld [vmem:[%s695 + $0x138] sm:$0xff]
          %v977 = vld [vmem:[%s695 + $0x140] sm:$0xff]
          %v978 = vld [vmem:[%s695 + $0x148] sm:$0xff]
          %v979 = vld [vmem:[%s695 + $0x150] sm:$0xff]
          %v980 = vld [vmem:[%s695 + $0x158] sm:$0xff]
          %v981 = vld [vmem:[%s695 + $0x160] sm:$0xff]
          %v982 = vld [vmem:[%s695 + $0x168] sm:$0xff]
          %v983 = vld [vmem:[%s695 + $0x170] sm:$0xff]
          %v984 = vld [vmem:[%s695 + $0x178] sm:$0xff]
          %v985 = vld [vmem:[%s695 + $0x180] sm:$0xff]
          %v986 = vld [vmem:[%s695 + $0x188] sm:$0xff]
          %v987 = vld [vmem:[%s695 + $0x190] sm:$0xff]
          %v988 = vld [vmem:[%s695 + $0x198] sm:$0xff]
          %v989 = vld [vmem:[%s695 + $0x1a0] sm:$0xff]
          %v990 = vld [vmem:[%s695 + $0x1a8] sm:$0xff]
          %v991 = vld [vmem:[%s695 + $0x1b0] sm:$0xff]
          %v992 = vld [vmem:[%s695 + $0x1b8] sm:$0xff]
          %v993 = vld [vmem:[%s695 + $0x1c0] sm:$0xff]
          %v994 = vld [vmem:[%s695 + $0x1c8] sm:$0xff]
          %v995 = vld [vmem:[%s695 + $0x1d0] sm:$0xff]
          %v996 = vld [vmem:[%s695 + $0x1d8] sm:$0xff]
          %v997 = vld [vmem:[%s695 + $0x1e0] sm:$0xff]
          %v998 = vld [vmem:[%s695 + $0x1e8] sm:$0xff]
          %v999 = vld [vmem:[%s695 + $0x1f0] sm:$0xff]
          %v1000 = vld [vmem:[%s695 + $0x1f8] sm:$0xff]
          %v1001 = vld [vmem:[%s769] sm:$0xf]
          %v1002 = vld [vmem:[%s769 + $0x4] sm:$0xf]
          %v1003 = vld [vmem:[%s769 + $0x8] sm:$0xf]
          %v1004 = vld [vmem:[%s769 + $0xc] sm:$0xf]
          %v1005 = vld [vmem:[%s769 + $0x10] sm:$0xf]
          %v1006 = vld [vmem:[%s769 + $0x14] sm:$0xf]
          %v1007 = vld [vmem:[%s769 + $0x18] sm:$0xf]
          %v1008 = vld [vmem:[%s769 + $0x1c] sm:$0xf]
          %v1009 = vld [vmem:[%s769 + $0x20] sm:$0xf]
          %v1010 = vld [vmem:[%s769 + $0x24] sm:$0xf]
          %v1011 = vld [vmem:[%s769 + $0x28] sm:$0xf]
          %v1012 = vld [vmem:[%s769 + $0x2c] sm:$0xf]
          %v1013 = vld [vmem:[%s769 + $0x30] sm:$0xf]
          %v1014 = vld [vmem:[%s769 + $0x34] sm:$0xf]
          %v1015 = vld [vmem:[%s769 + $0x38] sm:$0xf]
          %v1016 = vld [vmem:[%s769 + $0x3c] sm:$0xf]
          %v1017 = vld [vmem:[%s769 + $0x40] sm:$0xf]
          %v1018 = vld [vmem:[%s769 + $0x44] sm:$0xf]
          %v1019 = vld [vmem:[%s769 + $0x48] sm:$0xf]
          %v1020 = vld [vmem:[%s769 + $0x4c] sm:$0xf]
          %v1021 = vld [vmem:[%s769 + $0x50] sm:$0xf]
          %v1022 = vld [vmem:[%s769 + $0x54] sm:$0xf]
          %v1023 = vld [vmem:[%s769 + $0x58] sm:$0xf]
          %v1024 = vld [vmem:[%s769 + $0x5c] sm:$0xf]
          %v1025 = vld [vmem:[%s769 + $0x60] sm:$0xf]
          %v1026 = vld [vmem:[%s769 + $0x64] sm:$0xf]
          %v1027 = vld [vmem:[%s769 + $0x68] sm:$0xf]
          %v1028 = vld [vmem:[%s769 + $0x6c] sm:$0xf]
          %v1029 = vld [vmem:[%s769 + $0x70] sm:$0xf]
          %v1030 = vld [vmem:[%s769 + $0x74] sm:$0xf]
          %v1031 = vld [vmem:[%s769 + $0x78] sm:$0xf]
          %v1032 = vld [vmem:[%s769 + $0x7c] sm:$0xf]
          %v1097 = vunpack.c.l.b16 %v937
          %v1098 = vunpack.c.h.b16 %v937
          %v1099 = vunpack.c.l.b16 %v938
          %v1100 = vunpack.c.h.b16 %v938
          %v1101 = vunpack.c.l.b16 %v939
          %v1102 = vunpack.c.h.b16 %v939
          %v1103 = vunpack.c.l.b16 %v940
          %v1104 = vunpack.c.h.b16 %v940
          %v1105 = vunpack.c.l.b16 %v941
          %v1106 = vunpack.c.h.b16 %v941
          %v1107 = vunpack.c.l.b16 %v942
          %v1108 = vunpack.c.h.b16 %v942
          %v1109 = vunpack.c.l.b16 %v943
          %v1110 = vunpack.c.h.b16 %v943
          %v1111 = vunpack.c.l.b16 %v944
          %v1112 = vunpack.c.h.b16 %v944
          %v1113 = vunpack.c.l.b16 %v945
          %v1114 = vunpack.c.h.b16 %v945
          %v1115 = vunpack.c.l.b16 %v946
          %v1116 = vunpack.c.h.b16 %v946
          %v1117 = vunpack.c.l.b16 %v947
          %v1118 = vunpack.c.h.b16 %v947
          %v1119 = vunpack.c.l.b16 %v948
          %v1120 = vunpack.c.h.b16 %v948
          %v1121 = vunpack.c.l.b16 %v949
          %v1122 = vunpack.c.h.b16 %v949
          %v1123 = vunpack.c.l.b16 %v950
          %v1124 = vunpack.c.h.b16 %v950
          %v1125 = vunpack.c.l.b16 %v951
          %v1126 = vunpack.c.h.b16 %v951
          %v1127 = vunpack.c.l.b16 %v952
          %v1128 = vunpack.c.h.b16 %v952
          %v1129 = vunpack.c.l.b16 %v953
          %v1130 = vunpack.c.h.b16 %v953
          %v1131 = vunpack.c.l.b16 %v954
          %v1132 = vunpack.c.h.b16 %v954
          %v1133 = vunpack.c.l.b16 %v955
          %v1134 = vunpack.c.h.b16 %v955
          %v1135 = vunpack.c.l.b16 %v956
          %v1136 = vunpack.c.h.b16 %v956
          %v1137 = vunpack.c.l.b16 %v957
          %v1138 = vunpack.c.h.b16 %v957
          %v1139 = vunpack.c.l.b16 %v958
          %v1140 = vunpack.c.h.b16 %v958
          %v1141 = vunpack.c.l.b16 %v959
          %v1142 = vunpack.c.h.b16 %v959
          %v1143 = vunpack.c.l.b16 %v960
          %v1144 = vunpack.c.h.b16 %v960
          %v1145 = vunpack.c.l.b16 %v961
          %v1146 = vunpack.c.h.b16 %v961
          %v1147 = vunpack.c.l.b16 %v962
          %v1148 = vunpack.c.h.b16 %v962
          %v1149 = vunpack.c.l.b16 %v963
          %v1150 = vunpack.c.h.b16 %v963
          %v1151 = vunpack.c.l.b16 %v964
          %v1152 = vunpack.c.h.b16 %v964
          %v1153 = vunpack.c.l.b16 %v965
          %v1154 = vunpack.c.h.b16 %v965
          %v1155 = vunpack.c.l.b16 %v966
          %v1156 = vunpack.c.h.b16 %v966
          %v1157 = vunpack.c.l.b16 %v967
          %v1158 = vunpack.c.h.b16 %v967
          %v1159 = vunpack.c.l.b16 %v968
          %v1160 = vunpack.c.h.b16 %v968
          %v1161 = vunpack.c.l.b16 %v969
          %v1162 = vunpack.c.h.b16 %v969
          %v1163 = vunpack.c.l.b16 %v970
          %v1164 = vunpack.c.h.b16 %v970
          %v1165 = vunpack.c.l.b16 %v971
          %v1166 = vunpack.c.h.b16 %v971
          %v1167 = vunpack.c.l.b16 %v972
          %v1168 = vunpack.c.h.b16 %v972
          %v1169 = vunpack.c.l.b16 %v973
          %v1170 = vunpack.c.h.b16 %v973
          %v1171 = vunpack.c.l.b16 %v974
          %v1172 = vunpack.c.h.b16 %v974
          %v1173 = vunpack.c.l.b16 %v975
          %v1174 = vunpack.c.h.b16 %v975
          %v1175 = vunpack.c.l.b16 %v976
          %v1176 = vunpack.c.h.b16 %v976
          %v1177 = vunpack.c.l.b16 %v977
          %v1178 = vunpack.c.h.b16 %v977
          %v1179 = vunpack.c.l.b16 %v978
          %v1180 = vunpack.c.h.b16 %v978
          %v1181 = vunpack.c.l.b16 %v979
          %v1182 = vunpack.c.h.b16 %v979
          %v1183 = vunpack.c.l.b16 %v980
          %v1184 = vunpack.c.h.b16 %v980
          %v1185 = vunpack.c.l.b16 %v981
          %v1186 = vunpack.c.h.b16 %v981
          %v1187 = vunpack.c.l.b16 %v982
          %v1188 = vunpack.c.h.b16 %v982
          %v1189 = vunpack.c.l.b16 %v983
          %v1190 = vunpack.c.h.b16 %v983
          %v1191 = vunpack.c.l.b16 %v984
          %v1192 = vunpack.c.h.b16 %v984
          %v1193 = vunpack.c.l.b16 %v985
          %v1194 = vunpack.c.h.b16 %v985
          %v1195 = vunpack.c.l.b16 %v986
          %v1196 = vunpack.c.h.b16 %v986
          %v1197 = vunpack.c.l.b16 %v987
          %v1198 = vunpack.c.h.b16 %v987
          %v1199 = vunpack.c.l.b16 %v988
          %v1200 = vunpack.c.h.b16 %v988
          %v1201 = vunpack.c.l.b16 %v989
          %v1202 = vunpack.c.h.b16 %v989
          %v1203 = vunpack.c.l.b16 %v990
          %v1204 = vunpack.c.h.b16 %v990
          %v1205 = vunpack.c.l.b16 %v991
          %v1206 = vunpack.c.h.b16 %v991
          %v1207 = vunpack.c.l.b16 %v992
          %v1208 = vunpack.c.h.b16 %v992
          %v1209 = vunpack.c.l.b16 %v993
          %v1210 = vunpack.c.h.b16 %v993
          %v1211 = vunpack.c.l.b16 %v994
          %v1212 = vunpack.c.h.b16 %v994
          %v1213 = vunpack.c.l.b16 %v995
          %v1214 = vunpack.c.h.b16 %v995
          %v1215 = vunpack.c.l.b16 %v996
          %v1216 = vunpack.c.h.b16 %v996
          %v1217 = vunpack.c.l.b16 %v997
          %v1218 = vunpack.c.h.b16 %v997
          %v1219 = vunpack.c.l.b16 %v998
          %v1220 = vunpack.c.h.b16 %v998
          %v1221 = vunpack.c.l.b16 %v999
          %v1222 = vunpack.c.h.b16 %v999
          %v1223 = vunpack.c.l.b16 %v1000
          %v1224 = vunpack.c.h.b16 %v1000
          %v1225 = vpack.c.b16 %v1099, %v1097
          %v1226 = vpack.c.b16 %v1100, %v1098
          %v1227 = vpack.c.b16 %v1103, %v1101
          %v1228 = vpack.c.b16 %v1104, %v1102
          %v1229 = vpack.c.b16 %v1107, %v1105
          %v1230 = vpack.c.b16 %v1108, %v1106
          %v1231 = vpack.c.b16 %v1111, %v1109
          %v1232 = vpack.c.b16 %v1112, %v1110
          %v1233 = vpack.c.b16 %v1115, %v1113
          %v1234 = vpack.c.b16 %v1116, %v1114
          %v1235 = vpack.c.b16 %v1119, %v1117
          %v1236 = vpack.c.b16 %v1120, %v1118
          %v1237 = vpack.c.b16 %v1123, %v1121
          %v1238 = vpack.c.b16 %v1124, %v1122
          %v1239 = vpack.c.b16 %v1127, %v1125
          %v1240 = vpack.c.b16 %v1128, %v1126
          %v1241 = vpack.c.b16 %v1131, %v1129
          %v1242 = vpack.c.b16 %v1132, %v1130
          %v1243 = vpack.c.b16 %v1135, %v1133
          %v1244 = vpack.c.b16 %v1136, %v1134
          %v1245 = vpack.c.b16 %v1139, %v1137
          %v1246 = vpack.c.b16 %v1140, %v1138
          %v1247 = vpack.c.b16 %v1143, %v1141
          %v1248 = vpack.c.b16 %v1144, %v1142
          %v1249 = vpack.c.b16 %v1147, %v1145
          %v1250 = vpack.c.b16 %v1148, %v1146
          %v1251 = vpack.c.b16 %v1151, %v1149
          %v1252 = vpack.c.b16 %v1152, %v1150
          %v1253 = vpack.c.b16 %v1155, %v1153
          %v1254 = vpack.c.b16 %v1156, %v1154
          %v1255 = vpack.c.b16 %v1159, %v1157
          %v1256 = vpack.c.b16 %v1160, %v1158
          %v1257 = vpack.c.b16 %v1163, %v1161
          %v1258 = vpack.c.b16 %v1164, %v1162
          %v1259 = vpack.c.b16 %v1167, %v1165
          %v1260 = vpack.c.b16 %v1168, %v1166
          %v1261 = vpack.c.b16 %v1171, %v1169
          %v1262 = vpack.c.b16 %v1172, %v1170
          %v1263 = vpack.c.b16 %v1175, %v1173
          %v1264 = vpack.c.b16 %v1176, %v1174
          %v1265 = vpack.c.b16 %v1179, %v1177
          %v1266 = vpack.c.b16 %v1180, %v1178
          %v1267 = vpack.c.b16 %v1183, %v1181
          %v1268 = vpack.c.b16 %v1184, %v1182
          %v1269 = vpack.c.b16 %v1187, %v1185
          %v1270 = vpack.c.b16 %v1188, %v1186
          %v1271 = vpack.c.b16 %v1191, %v1189
          %v1272 = vpack.c.b16 %v1192, %v1190
          %v1273 = vpack.c.b16 %v1195, %v1193
          %v1274 = vpack.c.b16 %v1196, %v1194
          %v1275 = vpack.c.b16 %v1199, %v1197
          %v1276 = vpack.c.b16 %v1200, %v1198
          %v1277 = vpack.c.b16 %v1203, %v1201
          %v1278 = vpack.c.b16 %v1204, %v1202
          %v1279 = vpack.c.b16 %v1207, %v1205
          %v1280 = vpack.c.b16 %v1208, %v1206
          %v1281 = vpack.c.b16 %v1211, %v1209
          %v1282 = vpack.c.b16 %v1212, %v1210
          %v1283 = vpack.c.b16 %v1215, %v1213
          %v1284 = vpack.c.b16 %v1216, %v1214
          %v1285 = vpack.c.b16 %v1219, %v1217
          %v1286 = vpack.c.b16 %v1220, %v1218
          %v1287 = vpack.c.b16 %v1223, %v1221
          %v1288 = vpack.c.b16 %v1224, %v1222
          %v1385 = vunpack.c.l.b16 %v1001
          %v1386 = vunpack.c.l.b16 %v1002
          %v1387 = vunpack.c.l.b16 %v1003
          %v1388 = vunpack.c.l.b16 %v1004
          %v1389 = vunpack.c.l.b16 %v1005
          %v1390 = vunpack.c.l.b16 %v1006
          %v1391 = vunpack.c.l.b16 %v1007
          %v1392 = vunpack.c.l.b16 %v1008
          %v1393 = vunpack.c.l.b16 %v1009
          %v1394 = vunpack.c.l.b16 %v1010
          %v1395 = vunpack.c.l.b16 %v1011
          %v1396 = vunpack.c.l.b16 %v1012
          %v1397 = vunpack.c.l.b16 %v1013
          %v1398 = vunpack.c.l.b16 %v1014
          %v1399 = vunpack.c.l.b16 %v1015
          %v1400 = vunpack.c.l.b16 %v1016
          %v1401 = vunpack.c.l.b16 %v1017
          %v1402 = vunpack.c.l.b16 %v1018
          %v1403 = vunpack.c.l.b16 %v1019
          %v1404 = vunpack.c.l.b16 %v1020
          %v1405 = vunpack.c.l.b16 %v1021
          %v1406 = vunpack.c.l.b16 %v1022
          %v1407 = vunpack.c.l.b16 %v1023
          %v1408 = vunpack.c.l.b16 %v1024
          %v1409 = vunpack.c.l.b16 %v1025
          %v1410 = vunpack.c.l.b16 %v1026
          %v1411 = vunpack.c.l.b16 %v1027
          %v1412 = vunpack.c.l.b16 %v1028
          %v1413 = vunpack.c.l.b16 %v1029
          %v1414 = vunpack.c.l.b16 %v1030
          %v1415 = vunpack.c.l.b16 %v1031
          %v1416 = vunpack.c.l.b16 %v1032
          %v1417 = vpack.c.b16 %v1386, %v1385
          %v1418 = vpack.c.b16 %v1388, %v1387
          %v1419 = vpack.c.b16 %v1390, %v1389
          %v1420 = vpack.c.b16 %v1392, %v1391
          %v1421 = vpack.c.b16 %v1394, %v1393
          %v1422 = vpack.c.b16 %v1396, %v1395
          %v1423 = vpack.c.b16 %v1398, %v1397
          %v1424 = vpack.c.b16 %v1400, %v1399
          %v1425 = vpack.c.b16 %v1402, %v1401
          %v1426 = vpack.c.b16 %v1404, %v1403
          %v1427 = vpack.c.b16 %v1406, %v1405
          %v1428 = vpack.c.b16 %v1408, %v1407
          %v1429 = vpack.c.b16 %v1410, %v1409
          %v1430 = vpack.c.b16 %v1412, %v1411
          %v1431 = vpack.c.b16 %v1414, %v1413
          %v1432 = vpack.c.b16 %v1416, %v1415
          %1449 = vmatprep.subr.bf16.mxu0 0
          %1450 = vmatpush1.bf16.msra.mxu0 %v1417
          %1451 = vmatprep.subr.bf16.mxu0 0
          %1452 = vmatpush1.bf16.msra.mxu0 %v1418
          %1453 = vmatprep.subr.bf16.mxu0 0
          %1454 = vmatpush1.bf16.msra.mxu0 %v1419
          %1455 = vmatprep.subr.bf16.mxu0 0
          %1456 = vmatpush1.bf16.msra.mxu0 %v1420
          %1457 = vmatprep.subr.bf16.mxu0 0
          %1458 = vmatpush1.bf16.msra.mxu0 %v1421
          %1459 = vmatprep.subr.bf16.mxu0 0
          %1460 = vmatpush1.bf16.msra.mxu0 %v1422
          %1461 = vmatprep.subr.bf16.mxu0 0
          %1462 = vmatpush1.bf16.msra.mxu0 %v1423
          %1463 = vmatprep.subr.bf16.mxu0 0
          %1464 = vmatpush1.bf16.msra.mxu0 %v1424
          %1465 = vmatprep.subr.bf16.mxu0 0
          %1466 = vmatpush1.bf16.msra.mxu0 %v1425
          %1467 = vmatprep.subr.bf16.mxu0 0
          %1468 = vmatpush1.bf16.msra.mxu0 %v1426
          %1469 = vmatprep.subr.bf16.mxu0 0
          %1470 = vmatpush1.bf16.msra.mxu0 %v1427
          %1471 = vmatprep.subr.bf16.mxu0 0
          %1472 = vmatpush1.bf16.msra.mxu0 %v1428
          %1473 = vmatprep.subr.bf16.mxu0 0
          %1474 = vmatpush1.bf16.msra.mxu0 %v1429
          %1475 = vmatprep.subr.bf16.mxu0 0
          %1476 = vmatpush1.bf16.msra.mxu0 %v1430
          %1477 = vmatprep.subr.bf16.mxu0 0
          %1478 = vmatpush1.bf16.msra.mxu0 %v1431
          %1479 = vmatprep.subr.bf16.mxu0 0
          %1480 = vmatpush1.bf16.msra.mxu0 %v1432
          %1481 = vmatprep.mubr.bf16.mxu0 %v1226
          %1482 = vmatmul.mubr.bf16.gmra.mrb[0].mxu0 %v1225
          %v1483 = vpop.f32.mrb[0].mxu0
          %v1484 = vadd.f32 0.0, %v1483
          %v1485 = vpop.f32.mrb[0].mxu0
          %v1486 = vpop.f32.mrb[0].mxu0
          %v1487 = vadd.f32 0.0, %v1486
          %v1488 = vpop.f32.mrb[0].mxu0
          %1489 = vmatprep.mubr.bf16.mxu0 %v1228
          %1490 = vmatmul.mubr.bf16.gmra.mrb[0].mxu0 %v1227
          %v1491 = vpop.f32.mrb[0].mxu0
          %v1492 = vadd.f32 0.0, %v1491
          %v1493 = vpop.f32.mrb[0].mxu0
          %v1494 = vpop.f32.mrb[0].mxu0
          %v1495 = vadd.f32 0.0, %v1494
          %v1496 = vpop.f32.mrb[0].mxu0
          %1497 = vmatprep.mubr.bf16.mxu0 %v1230
          %1498 = vmatmul.mubr.bf16.gmra.mrb[0].mxu0 %v1229
          %v1499 = vpop.f32.mrb[0].mxu0
          %v1500 = vadd.f32 0.0, %v1499
          %v1501 = vpop.f32.mrb[0].mxu0
          %v1502 = vpop.f32.mrb[0].mxu0
          %v1503 = vadd.f32 0.0, %v1502
          %v1504 = vpop.f32.mrb[0].mxu0
          %1505 = vmatprep.mubr.bf16.mxu0 %v1232
          %1506 = vmatmul.mubr.bf16.gmra.mrb[0].mxu0 %v1231
          %v1507 = vpop.f32.mrb[0].mxu0
          %v1508 = vadd.f32 0.0, %v1507
          %v1509 = vpop.f32.mrb[0].mxu0
          %v1510 = vpop.f32.mrb[0].mxu0
          %v1511 = vadd.f32 0.0, %v1510
          %v1512 = vpop.f32.mrb[0].mxu0
          %1513 = vmatprep.mubr.bf16.mxu0 %v1234
          %1514 = vmatmul.mubr.bf16.gmra.mrb[0].mxu0 %v1233
          %v1515 = vpop.f32.mrb[0].mxu0
          %v1516 = vadd.f32 0.0, %v1515
          %v1517 = vpop.f32.mrb[0].mxu0
          %v1518 = vpop.f32.mrb[0].mxu0
          %v1519 = vadd.f32 0.0, %v1518
          %v1520 = vpop.f32.mrb[0].mxu0
          %1521 = vmatprep.mubr.bf16.mxu0 %v1236
          %1522 = vmatmul.mubr.bf16.gmra.mrb[0].mxu0 %v1235
          %v1523 = vpop.f32.mrb[0].mxu0
          %v1524 = vadd.f32 0.0, %v1523
          %v1525 = vpop.f32.mrb[0].mxu0
          %v1526 = vpop.f32.mrb[0].mxu0
          %v1527 = vadd.f32 0.0, %v1526
          %v1528 = vpop.f32.mrb[0].mxu0
          %1529 = vmatprep.mubr.bf16.mxu0 %v1238
          %1530 = vmatmul.mubr.bf16.gmra.mrb[0].mxu0 %v1237
          %v1531 = vpop.f32.mrb[0].mxu0
          %v1532 = vadd.f32 0.0, %v1531
          %v1533 = vpop.f32.mrb[0].mxu0
          %v1534 = vpop.f32.mrb[0].mxu0
          %v1535 = vadd.f32 0.0, %v1534
          %v1536 = vpop.f32.mrb[0].mxu0
          %1537 = vmatprep.mubr.bf16.mxu0 %v1240
          %1538 = vmatmul.mubr.bf16.gmra.mrb[0].mxu0 %v1239
          %v1539 = vpop.f32.mrb[0].mxu0
          %v1540 = vadd.f32 0.0, %v1539
          %v1541 = vpop.f32.mrb[0].mxu0
          %v1542 = vpop.f32.mrb[0].mxu0
          %v1543 = vadd.f32 0.0, %v1542
          %v1544 = vpop.f32.mrb[0].mxu0
          %1545 = vmatprep.mubr.bf16.mxu0 %v1242
          %1546 = vmatmul.mubr.bf16.gmra.mrb[0].mxu0 %v1241
          %v1547 = vpop.f32.mrb[0].mxu0
          %v1548 = vadd.f32 0.0, %v1547
          %v1549 = vpop.f32.mrb[0].mxu0
          %v1550 = vpop.f32.mrb[0].mxu0
          %v1551 = vadd.f32 0.0, %v1550
          %v1552 = vpop.f32.mrb[0].mxu0
          %1553 = vmatprep.mubr.bf16.mxu0 %v1244
          %1554 = vmatmul.mubr.bf16.gmra.mrb[0].mxu0 %v1243
          %v1555 = vpop.f32.mrb[0].mxu0
          %v1556 = vadd.f32 0.0, %v1555
          %v1557 = vpop.f32.mrb[0].mxu0
          %v1558 = vpop.f32.mrb[0].mxu0
          %v1559 = vadd.f32 0.0, %v1558
          %v1560 = vpop.f32.mrb[0].mxu0
          %1561 = vmatprep.mubr.bf16.mxu0 %v1246
          %1562 = vmatmul.mubr.bf16.gmra.mrb[0].mxu0 %v1245
          %v1563 = vpop.f32.mrb[0].mxu0
          %v1564 = vadd.f32 0.0, %v1563
          %v1565 = vpop.f32.mrb[0].mxu0
          %v1566 = vpop.f32.mrb[0].mxu0
          %v1567 = vadd.f32 0.0, %v1566
          %v1568 = vpop.f32.mrb[0].mxu0
          %1569 = vmatprep.mubr.bf16.mxu0 %v1248
          %1570 = vmatmul.mubr.bf16.gmra.mrb[0].mxu0 %v1247
          %v1571 = vpop.f32.mrb[0].mxu0
          %v1572 = vadd.f32 0.0, %v1571
          %v1573 = vpop.f32.mrb[0].mxu0
          %v1574 = vpop.f32.mrb[0].mxu0
          %v1575 = vadd.f32 0.0, %v1574
          %v1576 = vpop.f32.mrb[0].mxu0
          %1577 = vmatprep.mubr.bf16.mxu0 %v1250
          %1578 = vmatmul.mubr.bf16.gmra.mrb[0].mxu0 %v1249
          %v1579 = vpop.f32.mrb[0].mxu0
          %v1580 = vadd.f32 0.0, %v1579
          %v1581 = vpop.f32.mrb[0].mxu0
          %v1582 = vpop.f32.mrb[0].mxu0
          %v1583 = vadd.f32 0.0, %v1582
          %v1584 = vpop.f32.mrb[0].mxu0
          %1585 = vmatprep.mubr.bf16.mxu0 %v1252
          %1586 = vmatmul.mubr.bf16.gmra.mrb[0].mxu0 %v1251
          %v1587 = vpop.f32.mrb[0].mxu0
          %v1588 = vadd.f32 0.0, %v1587
          %v1589 = vpop.f32.mrb[0].mxu0
          %v1590 = vpop.f32.mrb[0].mxu0
          %v1591 = vadd.f32 0.0, %v1590
          %v1592 = vpop.f32.mrb[0].mxu0
          %1593 = vmatprep.mubr.bf16.mxu0 %v1254
          %1594 = vmatmul.mubr.bf16.gmra.mrb[0].mxu0 %v1253
          %v1595 = vpop.f32.mrb[0].mxu0
          %v1596 = vadd.f32 0.0, %v1595
          %v1597 = vpop.f32.mrb[0].mxu0
          %v1598 = vpop.f32.mrb[0].mxu0
          %v1599 = vadd.f32 0.0, %v1598
          %v1600 = vpop.f32.mrb[0].mxu0
          %1601 = vmatprep.mubr.bf16.mxu0 %v1256
          %1602 = vmatmul.mubr.bf16.gmra.mrb[0].mxu0 %v1255
          %v1603 = vpop.f32.mrb[0].mxu0
          %v1604 = vadd.f32 0.0, %v1603
          %v1605 = vpop.f32.mrb[0].mxu0
          %v1606 = vpop.f32.mrb[0].mxu0
          %v1607 = vadd.f32 0.0, %v1606
          %v1608 = vpop.f32.mrb[0].mxu0
          %1609 = vmatprep.mubr.bf16.mxu0 %v1258
          %1610 = vmatmul.mubr.bf16.gmra.mrb[0].mxu0 %v1257
          %v1611 = vpop.f32.mrb[0].mxu0
          %v1612 = vadd.f32 0.0, %v1611
          %v1613 = vpop.f32.mrb[0].mxu0
          %v1614 = vpop.f32.mrb[0].mxu0
          %v1615 = vadd.f32 0.0, %v1614
          %v1616 = vpop.f32.mrb[0].mxu0
          %1617 = vmatprep.mubr.bf16.mxu0 %v1260
          %1618 = vmatmul.mubr.bf16.gmra.mrb[0].mxu0 %v1259
          %v1619 = vpop.f32.mrb[0].mxu0
          %v1620 = vadd.f32 0.0, %v1619
          %v1621 = vpop.f32.mrb[0].mxu0
          %v1622 = vpop.f32.mrb[0].mxu0
          %v1623 = vadd.f32 0.0, %v1622
          %v1624 = vpop.f32.mrb[0].mxu0
          %1625 = vmatprep.mubr.bf16.mxu0 %v1262
          %1626 = vmatmul.mubr.bf16.gmra.mrb[0].mxu0 %v1261
          %v1627 = vpop.f32.mrb[0].mxu0
          %v1628 = vadd.f32 0.0, %v1627
          %v1629 = vpop.f32.mrb[0].mxu0
          %v1630 = vpop.f32.mrb[0].mxu0
          %v1631 = vadd.f32 0.0, %v1630
          %v1632 = vpop.f32.mrb[0].mxu0
          %1633 = vmatprep.mubr.bf16.mxu0 %v1264
          %1634 = vmatmul.mubr.bf16.gmra.mrb[0].mxu0 %v1263
          %v1635 = vpop.f32.mrb[0].mxu0
          %v1636 = vadd.f32 0.0, %v1635
          %v1637 = vpop.f32.mrb[0].mxu0
          %v1638 = vpop.f32.mrb[0].mxu0
          %v1639 = vadd.f32 0.0, %v1638
          %v1640 = vpop.f32.mrb[0].mxu0
          %1641 = vmatprep.mubr.bf16.mxu0 %v1266
          %1642 = vmatmul.mubr.bf16.gmra.mrb[0].mxu0 %v1265
          %v1643 = vpop.f32.mrb[0].mxu0
          %v1644 = vadd.f32 0.0, %v1643
          %v1645 = vpop.f32.mrb[0].mxu0
          %v1646 = vpop.f32.mrb[0].mxu0
          %v1647 = vadd.f32 0.0, %v1646
          %v1648 = vpop.f32.mrb[0].mxu0
          %1649 = vmatprep.mubr.bf16.mxu0 %v1268
          %1650 = vmatmul.mubr.bf16.gmra.mrb[0].mxu0 %v1267
          %v1651 = vpop.f32.mrb[0].mxu0
          %v1652 = vadd.f32 0.0, %v1651
          %v1653 = vpop.f32.mrb[0].mxu0
          %v1654 = vpop.f32.mrb[0].mxu0
          %v1655 = vadd.f32 0.0, %v1654
          %v1656 = vpop.f32.mrb[0].mxu0
          %1657 = vmatprep.mubr.bf16.mxu0 %v1270
          %1658 = vmatmul.mubr.bf16.gmra.mrb[0].mxu0 %v1269
          %v1659 = vpop.f32.mrb[0].mxu0
          %v1660 = vadd.f32 0.0, %v1659
          %v1661 = vpop.f32.mrb[0].mxu0
          %v1662 = vpop.f32.mrb[0].mxu0
          %v1663 = vadd.f32 0.0, %v1662
          %v1664 = vpop.f32.mrb[0].mxu0
          %1665 = vmatprep.mubr.bf16.mxu0 %v1272
          %1666 = vmatmul.mubr.bf16.gmra.mrb[0].mxu0 %v1271
          %v1667 = vpop.f32.mrb[0].mxu0
          %v1668 = vadd.f32 0.0, %v1667
          %v1669 = vpop.f32.mrb[0].mxu0
          %v1670 = vpop.f32.mrb[0].mxu0
          %v1671 = vadd.f32 0.0, %v1670
          %v1672 = vpop.f32.mrb[0].mxu0
          %1673 = vmatprep.mubr.bf16.mxu0 %v1274
          %1674 = vmatmul.mubr.bf16.gmra.mrb[0].mxu0 %v1273
          %v1675 = vpop.f32.mrb[0].mxu0
          %v1676 = vadd.f32 0.0, %v1675
          %v1677 = vpop.f32.mrb[0].mxu0
          %v1678 = vpop.f32.mrb[0].mxu0
          %v1679 = vadd.f32 0.0, %v1678
          %v1680 = vpop.f32.mrb[0].mxu0
          %1681 = vmatprep.mubr.bf16.mxu0 %v1276
          %1682 = vmatmul.mubr.bf16.gmra.mrb[0].mxu0 %v1275
          %v1683 = vpop.f32.mrb[0].mxu0
          %v1684 = vadd.f32 0.0, %v1683
          %v1685 = vpop.f32.mrb[0].mxu0
          %v1686 = vpop.f32.mrb[0].mxu0
          %v1687 = vadd.f32 0.0, %v1686
          %v1688 = vpop.f32.mrb[0].mxu0
          %1689 = vmatprep.mubr.bf16.mxu0 %v1278
          %1690 = vmatmul.mubr.bf16.gmra.mrb[0].mxu0 %v1277
          %v1691 = vpop.f32.mrb[0].mxu0
          %v1692 = vadd.f32 0.0, %v1691
          %v1693 = vpop.f32.mrb[0].mxu0
          %v1694 = vpop.f32.mrb[0].mxu0
          %v1695 = vadd.f32 0.0, %v1694
          %v1696 = vpop.f32.mrb[0].mxu0
          %1697 = vmatprep.mubr.bf16.mxu0 %v1280
          %1698 = vmatmul.mubr.bf16.gmra.mrb[0].mxu0 %v1279
          %v1699 = vpop.f32.mrb[0].mxu0
          %v1700 = vadd.f32 0.0, %v1699
          %v1701 = vpop.f32.mrb[0].mxu0
          %v1702 = vpop.f32.mrb[0].mxu0
          %v1703 = vadd.f32 0.0, %v1702
          %v1704 = vpop.f32.mrb[0].mxu0
          %1705 = vmatprep.mubr.bf16.mxu0 %v1282
          %1706 = vmatmul.mubr.bf16.gmra.mrb[0].mxu0 %v1281
          %v1707 = vpop.f32.mrb[0].mxu0
          %v1708 = vadd.f32 0.0, %v1707
          %v1709 = vpop.f32.mrb[0].mxu0
          %v1710 = vpop.f32.mrb[0].mxu0
          %v1711 = vadd.f32 0.0, %v1710
          %v1712 = vpop.f32.mrb[0].mxu0
          %1713 = vmatprep.mubr.bf16.mxu0 %v1284
          %1714 = vmatmul.mubr.bf16.gmra.mrb[0].mxu0 %v1283
          %v1715 = vpop.f32.mrb[0].mxu0
          %v1716 = vadd.f32 0.0, %v1715
          %v1717 = vpop.f32.mrb[0].mxu0
          %v1718 = vpop.f32.mrb[0].mxu0
          %v1719 = vadd.f32 0.0, %v1718
          %v1720 = vpop.f32.mrb[0].mxu0
          %1721 = vmatprep.mubr.bf16.mxu0 %v1286
          %1722 = vmatmul.mubr.bf16.gmra.mrb[0].mxu0 %v1285
          %v1723 = vpop.f32.mrb[0].mxu0
          %v1724 = vadd.f32 0.0, %v1723
          %v1725 = vpop.f32.mrb[0].mxu0
          %v1726 = vpop.f32.mrb[0].mxu0
          %v1727 = vadd.f32 0.0, %v1726
          %v1728 = vpop.f32.mrb[0].mxu0
          %1729 = vmatprep.mubr.bf16.mxu0 %v1288
          %1730 = vmatmul.mubr.bf16.gmra.mrb[0].mxu0 %v1287
          %v1731 = vpop.f32.mrb[0].mxu0
          %v1732 = vadd.f32 0.0, %v1731
          %v1733 = vpop.f32.mrb[0].mxu0
          %v1734 = vpop.f32.mrb[0].mxu0
          %v1735 = vadd.f32 0.0, %v1734
          %v1736 = vpop.f32.mrb[0].mxu0
          %1737 = vdwg.mxu0
          %v1738 = vadd.f32 %v873, %v1484
          %v1739 = vadd.f32 %v874, %v1487
          %v1740 = vadd.f32 %v875, %v1492
          %v1741 = vadd.f32 %v876, %v1495
          %v1742 = vadd.f32 %v877, %v1500
          %v1743 = vadd.f32 %v878, %v1503
          %v1744 = vadd.f32 %v879, %v1508
          %v1745 = vadd.f32 %v880, %v1511
          %v1746 = vadd.f32 %v881, %v1516
          %v1747 = vadd.f32 %v882, %v1519
          %v1748 = vadd.f32 %v883, %v1524
          %v1749 = vadd.f32 %v884, %v1527
          %v1750 = vadd.f32 %v885, %v1532
          %v1751 = vadd.f32 %v886, %v1535
          %v1752 = vadd.f32 %v887, %v1540
          %v1753 = vadd.f32 %v888, %v1543
          %v1754 = vadd.f32 %v889, %v1548
          %v1755 = vadd.f32 %v890, %v1551
          %v1756 = vadd.f32 %v891, %v1556
          %v1757 = vadd.f32 %v892, %v1559
          %v1758 = vadd.f32 %v893, %v1564
          %v1759 = vadd.f32 %v894, %v1567
          %v1760 = vadd.f32 %v895, %v1572
          %v1761 = vadd.f32 %v896, %v1575
          %v1762 = vadd.f32 %v897, %v1580
          %v1763 = vadd.f32 %v898, %v1583
          %v1764 = vadd.f32 %v899, %v1588
          %v1765 = vadd.f32 %v900, %v1591
          %v1766 = vadd.f32 %v901, %v1596
          %v1767 = vadd.f32 %v902, %v1599
          %v1768 = vadd.f32 %v903, %v1604
          %v1769 = vadd.f32 %v904, %v1607
          %v1770 = vadd.f32 %v905, %v1612
          %v1771 = vadd.f32 %v906, %v1615
          %v1772 = vadd.f32 %v907, %v1620
          %v1773 = vadd.f32 %v908, %v1623
          %v1774 = vadd.f32 %v909, %v1628
          %v1775 = vadd.f32 %v910, %v1631
          %v1776 = vadd.f32 %v911, %v1636
          %v1777 = vadd.f32 %v912, %v1639
          %v1778 = vadd.f32 %v913, %v1644
          %v1779 = vadd.f32 %v914, %v1647
          %v1780 = vadd.f32 %v915, %v1652
          %v1781 = vadd.f32 %v916, %v1655
          %v1782 = vadd.f32 %v917, %v1660
          %v1783 = vadd.f32 %v918, %v1663
          %v1784 = vadd.f32 %v919, %v1668
          %v1785 = vadd.f32 %v920, %v1671
          %v1786 = vadd.f32 %v921, %v1676
          %v1787 = vadd.f32 %v922, %v1679
          %v1788 = vadd.f32 %v923, %v1684
          %v1789 = vadd.f32 %v924, %v1687
          %v1790 = vadd.f32 %v925, %v1692
          %v1791 = vadd.f32 %v926, %v1695
          %v1792 = vadd.f32 %v927, %v1700
          %v1793 = vadd.f32 %v928, %v1703
          %v1794 = vadd.f32 %v929, %v1708
          %v1795 = vadd.f32 %v930, %v1711
          %v1796 = vadd.f32 %v931, %v1716
          %v1797 = vadd.f32 %v932, %v1719
          %v1798 = vadd.f32 %v933, %v1724
          %v1799 = vadd.f32 %v934, %v1727
          %v1800 = vadd.f32 %v935, %v1732
          %v1801 = vadd.f32 %v936, %v1735
          %1802 = vst [vmem:[#allocation2] sm:$0xff] %v1738
          %1803 = vst [vmem:[#allocation2 + $0x8] sm:$0xff] %v1739
          %1804 = vst [vmem:[#allocation2 + $0x10] sm:$0xff] %v1740
          %1805 = vst [vmem:[#allocation2 + $0x18] sm:$0xff] %v1741
          %1806 = vst [vmem:[#allocation2 + $0x20] sm:$0xff] %v1742
          %1807 = vst [vmem:[#allocation2 + $0x28] sm:$0xff] %v1743
          %1808 = vst [vmem:[#allocation2 + $0x30] sm:$0xff] %v1744
          %1809 = vst [vmem:[#allocation2 + $0x38] sm:$0xff] %v1745
          %1810 = vst [vmem:[#allocation2 + $0x40] sm:$0xff] %v1746
          %1811 = vst [vmem:[#allocation2 + $0x48] sm:$0xff] %v1747
          %1812 = vst [vmem:[#allocation2 + $0x50] sm:$0xff] %v1748
          %1813 = vst [vmem:[#allocation2 + $0x58] sm:$0xff] %v1749
          %1814 = vst [vmem:[#allocation2 + $0x60] sm:$0xff] %v1750
          %1815 = vst [vmem:[#allocation2 + $0x68] sm:$0xff] %v1751
          %1816 = vst [vmem:[#allocation2 + $0x70] sm:$0xff] %v1752
          %1817 = vst [vmem:[#allocation2 + $0x78] sm:$0xff] %v1753
          %1818 = vst [vmem:[#allocation2 + $0x80] sm:$0xff] %v1754
          %1819 = vst [vmem:[#allocation2 + $0x88] sm:$0xff] %v1755
          %1820 = vst [vmem:[#allocation2 + $0x90] sm:$0xff] %v1756
          %1821 = vst [vmem:[#allocation2 + $0x98] sm:$0xff] %v1757
          %1822 = vst [vmem:[#allocation2 + $0xa0] sm:$0xff] %v1758
          %1823 = vst [vmem:[#allocation2 + $0xa8] sm:$0xff] %v1759
          %1824 = vst [vmem:[#allocation2 + $0xb0] sm:$0xff] %v1760
          %1825 = vst [vmem:[#allocation2 + $0xb8] sm:$0xff] %v1761
          %1826 = vst [vmem:[#allocation2 + $0xc0] sm:$0xff] %v1762
          %1827 = vst [vmem:[#allocation2 + $0xc8] sm:$0xff] %v1763
          %1828 = vst [vmem:[#allocation2 + $0xd0] sm:$0xff] %v1764
          %1829 = vst [vmem:[#allocation2 + $0xd8] sm:$0xff] %v1765
          %1830 = vst [vmem:[#allocation2 + $0xe0] sm:$0xff] %v1766
          %1831 = vst [vmem:[#allocation2 + $0xe8] sm:$0xff] %v1767
          %1832 = vst [vmem:[#allocation2 + $0xf0] sm:$0xff] %v1768
          %1833 = vst [vmem:[#allocation2 + $0xf8] sm:$0xff] %v1769
          %1834 = vst [vmem:[#allocation2 + $0x100] sm:$0xff] %v1770
          %1835 = vst [vmem:[#allocation2 + $0x108] sm:$0xff] %v1771
          %1836 = vst [vmem:[#allocation2 + $0x110] sm:$0xff] %v1772
          %1837 = vst [vmem:[#allocation2 + $0x118] sm:$0xff] %v1773
          %1838 = vst [vmem:[#allocation2 + $0x120] sm:$0xff] %v1774
          %1839 = vst [vmem:[#allocation2 + $0x128] sm:$0xff] %v1775
          %1840 = vst [vmem:[#allocation2 + $0x130] sm:$0xff] %v1776
          %1841 = vst [vmem:[#allocation2 + $0x138] sm:$0xff] %v1777
          %1842 = vst [vmem:[#allocation2 + $0x140] sm:$0xff] %v1778
          %1843 = vst [vmem:[#allocation2 + $0x148] sm:$0xff] %v1779
          %1844 = vst [vmem:[#allocation2 + $0x150] sm:$0xff] %v1780
          %1845 = vst [vmem:[#allocation2 + $0x158] sm:$0xff] %v1781
          %1846 = vst [vmem:[#allocation2 + $0x160] sm:$0xff] %v1782
          %1847 = vst [vmem:[#allocation2 + $0x168] sm:$0xff] %v1783
          %1848 = vst [vmem:[#allocation2 + $0x170] sm:$0xff] %v1784
          %1849 = vst [vmem:[#allocation2 + $0x178] sm:$0xff] %v1785
          %1850 = vst [vmem:[#allocation2 + $0x180] sm:$0xff] %v1786
          %1851 = vst [vmem:[#allocation2 + $0x188] sm:$0xff] %v1787
          %1852 = vst [vmem:[#allocation2 + $0x190] sm:$0xff] %v1788
          %1853 = vst [vmem:[#allocation2 + $0x198] sm:$0xff] %v1789
          %1854 = vst [vmem:[#allocation2 + $0x1a0] sm:$0xff] %v1790
          %1855 = vst [vmem:[#allocation2 + $0x1a8] sm:$0xff] %v1791
          %1856 = vst [vmem:[#allocation2 + $0x1b0] sm:$0xff] %v1792
          %1857 = vst [vmem:[#allocation2 + $0x1b8] sm:$0xff] %v1793
          %1858 = vst [vmem:[#allocation2 + $0x1c0] sm:$0xff] %v1794
          %1859 = vst [vmem:[#allocation2 + $0x1c8] sm:$0xff] %v1795
          %1860 = vst [vmem:[#allocation2 + $0x1d0] sm:$0xff] %v1796
          %1861 = vst [vmem:[#allocation2 + $0x1d8] sm:$0xff] %v1797
          %1862 = vst [vmem:[#allocation2 + $0x1e0] sm:$0xff] %v1798
          %1863 = vst [vmem:[#allocation2 + $0x1e8] sm:$0xff] %v1799
          %1864 = vst [vmem:[#allocation2 + $0x1f0] sm:$0xff] %v1800
          %1865 = vst [vmem:[#allocation2 + $0x1f8] sm:$0xff] %v1801
        $region102: #{gcn_res_forward.14} parent=85 // pred_fallthru
          _
        %p1866 = scmp.eq.s32.totalorder %s42, 2
        // Predicated region
        $region103: #{gcn_res_forward.14} parent=85 // pred_check
          %p1867 = pneg %p1866
        $region104: #{gcn_res_forward.14} parent=85 // pred_check_branch
          %1869 = sbr.rel (%p1867) target = $region106
        $region105: #{gcn_res_forward.14} parent=85 // pred_region
          %v1870 = vld [vmem:[#allocation2] sm:$0xff]
          %v1871 = vld [vmem:[#allocation2 + $0x8] sm:$0xff]
          %v1872 = vld [vmem:[#allocation2 + $0x10] sm:$0xff]
          %v1873 = vld [vmem:[#allocation2 + $0x18] sm:$0xff]
          %v1874 = vld [vmem:[#allocation2 + $0x20] sm:$0xff]
          %v1875 = vld [vmem:[#allocation2 + $0x28] sm:$0xff]
          %v1876 = vld [vmem:[#allocation2 + $0x30] sm:$0xff]
          %v1877 = vld [vmem:[#allocation2 + $0x38] sm:$0xff]
          %v1878 = vld [vmem:[#allocation2 + $0x40] sm:$0xff]
          %v1879 = vld [vmem:[#allocation2 + $0x48] sm:$0xff]
          %v1880 = vld [vmem:[#allocation2 + $0x50] sm:$0xff]
          %v1881 = vld [vmem:[#allocation2 + $0x58] sm:$0xff]
          %v1882 = vld [vmem:[#allocation2 + $0x60] sm:$0xff]
          %v1883 = vld [vmem:[#allocation2 + $0x68] sm:$0xff]
          %v1884 = vld [vmem:[#allocation2 + $0x70] sm:$0xff]
          %v1885 = vld [vmem:[#allocation2 + $0x78] sm:$0xff]
          %v1886 = vld [vmem:[#allocation2 + $0x80] sm:$0xff]
          %v1887 = vld [vmem:[#allocation2 + $0x88] sm:$0xff]
          %v1888 = vld [vmem:[#allocation2 + $0x90] sm:$0xff]
          %v1889 = vld [vmem:[#allocation2 + $0x98] sm:$0xff]
          %v1890 = vld [vmem:[#allocation2 + $0xa0] sm:$0xff]
          %v1891 = vld [vmem:[#allocation2 + $0xa8] sm:$0xff]
          %v1892 = vld [vmem:[#allocation2 + $0xb0] sm:$0xff]
          %v1893 = vld [vmem:[#allocation2 + $0xb8] sm:$0xff]
          %v1894 = vld [vmem:[#allocation2 + $0xc0] sm:$0xff]
          %v1895 = vld [vmem:[#allocation2 + $0xc8] sm:$0xff]
          %v1896 = vld [vmem:[#allocation2 + $0xd0] sm:$0xff]
          %v1897 = vld [vmem:[#allocation2 + $0xd8] sm:$0xff]
          %v1898 = vld [vmem:[#allocation2 + $0xe0] sm:$0xff]
          %v1899 = vld [vmem:[#allocation2 + $0xe8] sm:$0xff]
          %v1900 = vld [vmem:[#allocation2 + $0xf0] sm:$0xff]
          %v1901 = vld [vmem:[#allocation2 + $0xf8] sm:$0xff]
          %v1902 = vld [vmem:[#allocation2 + $0x100] sm:$0xff]
          %v1903 = vld [vmem:[#allocation2 + $0x108] sm:$0xff]
          %v1904 = vld [vmem:[#allocation2 + $0x110] sm:$0xff]
          %v1905 = vld [vmem:[#allocation2 + $0x118] sm:$0xff]
          %v1906 = vld [vmem:[#allocation2 + $0x120] sm:$0xff]
          %v1907 = vld [vmem:[#allocation2 + $0x128] sm:$0xff]
          %v1908 = vld [vmem:[#allocation2 + $0x130] sm:$0xff]
          %v1909 = vld [vmem:[#allocation2 + $0x138] sm:$0xff]
          %v1910 = vld [vmem:[#allocation2 + $0x140] sm:$0xff]
          %v1911 = vld [vmem:[#allocation2 + $0x148] sm:$0xff]
          %v1912 = vld [vmem:[#allocation2 + $0x150] sm:$0xff]
          %v1913 = vld [vmem:[#allocation2 + $0x158] sm:$0xff]
          %v1914 = vld [vmem:[#allocation2 + $0x160] sm:$0xff]
          %v1915 = vld [vmem:[#allocation2 + $0x168] sm:$0xff]
          %v1916 = vld [vmem:[#allocation2 + $0x170] sm:$0xff]
          %v1917 = vld [vmem:[#allocation2 + $0x178] sm:$0xff]
          %v1918 = vld [vmem:[#allocation2 + $0x180] sm:$0xff]
          %v1919 = vld [vmem:[#allocation2 + $0x188] sm:$0xff]
          %v1920 = vld [vmem:[#allocation2 + $0x190] sm:$0xff]
          %v1921 = vld [vmem:[#allocation2 + $0x198] sm:$0xff]
          %v1922 = vld [vmem:[#allocation2 + $0x1a0] sm:$0xff]
          %v1923 = vld [vmem:[#allocation2 + $0x1a8] sm:$0xff]
          %v1924 = vld [vmem:[#allocation2 + $0x1b0] sm:$0xff]
          %v1925 = vld [vmem:[#allocation2 + $0x1b8] sm:$0xff]
          %v1926 = vld [vmem:[#allocation2 + $0x1c0] sm:$0xff]
          %v1927 = vld [vmem:[#allocation2 + $0x1c8] sm:$0xff]
          %v1928 = vld [vmem:[#allocation2 + $0x1d0] sm:$0xff]
          %v1929 = vld [vmem:[#allocation2 + $0x1d8] sm:$0xff]
          %v1930 = vld [vmem:[#allocation2 + $0x1e0] sm:$0xff]
          %v1931 = vld [vmem:[#allocation2 + $0x1e8] sm:$0xff]
          %v1932 = vld [vmem:[#allocation2 + $0x1f0] sm:$0xff]
          %v1933 = vld [vmem:[#allocation2 + $0x1f8] sm:$0xff]
          %v1934 = vpack.c.bf16 %v1871, %v1870
          %v1935 = vpack.c.bf16 %v1873, %v1872
          %v1936 = vpack.c.bf16 %v1875, %v1874
          %v1937 = vpack.c.bf16 %v1877, %v1876
          %v1938 = vpack.c.bf16 %v1879, %v1878
          %v1939 = vpack.c.bf16 %v1881, %v1880
          %v1940 = vpack.c.bf16 %v1883, %v1882
          %v1941 = vpack.c.bf16 %v1885, %v1884
          %v1942 = vpack.c.bf16 %v1887, %v1886
          %v1943 = vpack.c.bf16 %v1889, %v1888
          %v1944 = vpack.c.bf16 %v1891, %v1890
          %v1945 = vpack.c.bf16 %v1893, %v1892
          %v1946 = vpack.c.bf16 %v1895, %v1894
          %v1947 = vpack.c.bf16 %v1897, %v1896
          %v1948 = vpack.c.bf16 %v1899, %v1898
          %v1949 = vpack.c.bf16 %v1901, %v1900
          %v1950 = vpack.c.bf16 %v1903, %v1902
          %v1951 = vpack.c.bf16 %v1905, %v1904
          %v1952 = vpack.c.bf16 %v1907, %v1906
          %v1953 = vpack.c.bf16 %v1909, %v1908
          %v1954 = vpack.c.bf16 %v1911, %v1910
          %v1955 = vpack.c.bf16 %v1913, %v1912
          %v1956 = vpack.c.bf16 %v1915, %v1914
          %v1957 = vpack.c.bf16 %v1917, %v1916
          %v1958 = vpack.c.bf16 %v1919, %v1918
          %v1959 = vpack.c.bf16 %v1921, %v1920
          %v1960 = vpack.c.bf16 %v1923, %v1922
          %v1961 = vpack.c.bf16 %v1925, %v1924
          %v1962 = vpack.c.bf16 %v1927, %v1926
          %v1963 = vpack.c.bf16 %v1929, %v1928
          %v1964 = vpack.c.bf16 %v1931, %v1930
          %v1965 = vpack.c.bf16 %v1933, %v1932
          %v1966 = vld [vmem:[%s8] sm:$0xf]
          %v1967 = vld [vmem:[%s8 + $0x4] sm:$0xf]
          %v1968 = vld [vmem:[%s8 + $0x8] sm:$0xf]
          %v1969 = vld [vmem:[%s8 + $0xc] sm:$0xf]
          %v1970 = vld [vmem:[%s8 + $0x10] sm:$0xf]
          %v1971 = vld [vmem:[%s8 + $0x14] sm:$0xf]
          %v1972 = vld [vmem:[%s8 + $0x18] sm:$0xf]
          %v1973 = vld [vmem:[%s8 + $0x1c] sm:$0xf]
          %v1974 = vld [vmem:[%s8 + $0x20] sm:$0xf]
          %v1975 = vld [vmem:[%s8 + $0x24] sm:$0xf]
          %v1976 = vld [vmem:[%s8 + $0x28] sm:$0xf]
          %v1977 = vld [vmem:[%s8 + $0x2c] sm:$0xf]
          %v1978 = vld [vmem:[%s8 + $0x30] sm:$0xf]
          %v1979 = vld [vmem:[%s8 + $0x34] sm:$0xf]
          %v1980 = vld [vmem:[%s8 + $0x38] sm:$0xf]
          %v1981 = vld [vmem:[%s8 + $0x3c] sm:$0xf]
          %v1982 = vld [vmem:[%s9] sm:$0x1]
          %v1984 = vlaneseq
          %v1985 = vshrl.u32 %v1984, 7
          %v1986 = vsub.s32 0, %v1985
          %v1987 = vrot.slane %v1982, %v1986
          %v2005 = vunpack.c.l.b16 %v1966
          %v2006 = vunpack.c.l.b16 %v1967
          %v2007 = vunpack.c.l.b16 %v1968
          %v2008 = vunpack.c.l.b16 %v1969
          %v2009 = vunpack.c.l.b16 %v1970
          %v2010 = vunpack.c.l.b16 %v1971
          %v2011 = vunpack.c.l.b16 %v1972
          %v2012 = vunpack.c.l.b16 %v1973
          %v2013 = vunpack.c.l.b16 %v1974
          %v2014 = vunpack.c.l.b16 %v1975
          %v2015 = vunpack.c.l.b16 %v1976
          %v2016 = vunpack.c.l.b16 %v1977
          %v2017 = vunpack.c.l.b16 %v1978
          %v2018 = vunpack.c.l.b16 %v1979
          %v2019 = vunpack.c.l.b16 %v1980
          %v2020 = vunpack.c.l.b16 %v1981
          %v2021 = vpack.c.b16 %v2006, %v2005
          %v2022 = vpack.c.b16 %v2008, %v2007
          %v2023 = vpack.c.b16 %v2010, %v2009
          %v2024 = vpack.c.b16 %v2012, %v2011
          %v2025 = vpack.c.b16 %v2014, %v2013
          %v2026 = vpack.c.b16 %v2016, %v2015
          %v2027 = vpack.c.b16 %v2018, %v2017
          %v2028 = vpack.c.b16 %v2020, %v2019
          %2037 = vmatprep.subr.bf16.mxu0 0
          %2038 = vmatpush1.bf16.msra.mxu0 %v2021
          %2039 = vmatprep.subr.bf16.mxu0 0
          %2040 = vmatpush1.bf16.msra.mxu0 %v2022
          %2041 = vmatprep.subr.bf16.mxu0 0
          %2042 = vmatpush1.bf16.msra.mxu0 %v2023
          %2043 = vmatprep.subr.bf16.mxu0 0
          %2044 = vmatpush1.bf16.msra.mxu0 %v2024
          %2045 = vmatprep.subr.bf16.mxu0 0
          %2046 = vmatpush1.bf16.msra.mxu0 %v2025
          %2047 = vmatprep.subr.bf16.mxu0 0
          %2048 = vmatpush1.bf16.msra.mxu0 %v2026
          %2049 = vmatprep.subr.bf16.mxu0 0
          %2050 = vmatpush1.bf16.msra.mxu0 %v2027
          %2051 = vmatprep.subr.bf16.mxu0 0
          %2052 = vmatpush1.bf16.msra.mxu0 %v2028
          %2053 = vmatprep.subr.bf16.mxu0 0
          %2054 = vmatpush1.bf16.msra.mxu0 0
          %2055 = vmatprep.subr.bf16.mxu0 0
          %2056 = vmatpush1.bf16.msra.mxu0 0
          %2057 = vmatprep.subr.bf16.mxu0 0
          %2058 = vmatpush1.bf16.msra.mxu0 0
          %2059 = vmatprep.subr.bf16.mxu0 0
          %2060 = vmatpush1.bf16.msra.mxu0 0
          %2061 = vmatprep.subr.bf16.mxu0 0
          %2062 = vmatpush1.bf16.msra.mxu0 0
          %2063 = vmatprep.subr.bf16.mxu0 0
          %2064 = vmatpush1.bf16.msra.mxu0 0
          %2065 = vmatprep.subr.bf16.mxu0 0
          %2066 = vmatpush1.bf16.msra.mxu0 0
          %2067 = vmatprep.subr.bf16.mxu0 0
          %2068 = vmatpush1.bf16.msra.mxu0 0
          %2069 = vmatprep.mubr.bf16.mxu0 0
          %2070 = vmatmul.mubr.bf16.gmra.mrb[0].mxu0 %v1934
          %v2071 = vpop.f32.mrb[0].mxu0
          %v2072 = vadd.f32 %v1987, %v2071
          %v2073 = vpop.f32.mrb[0].mxu0
          %v2074 = vpop.f32.mrb[0].mxu0
          %v2075 = vadd.f32 %v1987, %v2074
          %v2076 = vpop.f32.mrb[0].mxu0
          %2077 = vmatprep.mubr.bf16.mxu0 0
          %2078 = vmatmul.mubr.bf16.gmra.mrb[0].mxu0 %v1935
          %v2079 = vpop.f32.mrb[0].mxu0
          %v2080 = vadd.f32 %v1987, %v2079
          %v2081 = vpop.f32.mrb[0].mxu0
          %v2082 = vpop.f32.mrb[0].mxu0
          %v2083 = vadd.f32 %v1987, %v2082
          %v2084 = vpop.f32.mrb[0].mxu0
          %2085 = vmatprep.mubr.bf16.mxu0 0
          %2086 = vmatmul.mubr.bf16.gmra.mrb[0].mxu0 %v1936
          %v2087 = vpop.f32.mrb[0].mxu0
          %v2088 = vadd.f32 %v1987, %v2087
          %v2089 = vpop.f32.mrb[0].mxu0
          %v2090 = vpop.f32.mrb[0].mxu0
          %v2091 = vadd.f32 %v1987, %v2090
          %v2092 = vpop.f32.mrb[0].mxu0
          %2093 = vmatprep.mubr.bf16.mxu0 0
          %2094 = vmatmul.mubr.bf16.gmra.mrb[0].mxu0 %v1937
          %v2095 = vpop.f32.mrb[0].mxu0
          %v2096 = vadd.f32 %v1987, %v2095
          %v2097 = vpop.f32.mrb[0].mxu0
          %v2098 = vpop.f32.mrb[0].mxu0
          %v2099 = vadd.f32 %v1987, %v2098
          %v2100 = vpop.f32.mrb[0].mxu0
          %2101 = vmatprep.mubr.bf16.mxu0 0
          %2102 = vmatmul.mubr.bf16.gmra.mrb[0].mxu0 %v1938
          %v2103 = vpop.f32.mrb[0].mxu0
          %v2104 = vadd.f32 %v1987, %v2103
          %v2105 = vpop.f32.mrb[0].mxu0
          %v2106 = vpop.f32.mrb[0].mxu0
          %v2107 = vadd.f32 %v1987, %v2106
          %v2108 = vpop.f32.mrb[0].mxu0
          %2109 = vmatprep.mubr.bf16.mxu0 0
          %2110 = vmatmul.mubr.bf16.gmra.mrb[0].mxu0 %v1939
          %v2111 = vpop.f32.mrb[0].mxu0
          %v2112 = vadd.f32 %v1987, %v2111
          %v2113 = vpop.f32.mrb[0].mxu0
          %v2114 = vpop.f32.mrb[0].mxu0
          %v2115 = vadd.f32 %v1987, %v2114
          %v2116 = vpop.f32.mrb[0].mxu0
          %2117 = vmatprep.mubr.bf16.mxu0 0
          %2118 = vmatmul.mubr.bf16.gmra.mrb[0].mxu0 %v1940
          %v2119 = vpop.f32.mrb[0].mxu0
          %v2120 = vadd.f32 %v1987, %v2119
          %v2121 = vpop.f32.mrb[0].mxu0
          %v2122 = vpop.f32.mrb[0].mxu0
          %v2123 = vadd.f32 %v1987, %v2122
          %v2124 = vpop.f32.mrb[0].mxu0
          %2125 = vmatprep.mubr.bf16.mxu0 0
          %2126 = vmatmul.mubr.bf16.gmra.mrb[0].mxu0 %v1941
          %v2127 = vpop.f32.mrb[0].mxu0
          %v2128 = vadd.f32 %v1987, %v2127
          %v2129 = vpop.f32.mrb[0].mxu0
          %v2130 = vpop.f32.mrb[0].mxu0
          %v2131 = vadd.f32 %v1987, %v2130
          %v2132 = vpop.f32.mrb[0].mxu0
          %2133 = vmatprep.mubr.bf16.mxu0 0
          %2134 = vmatmul.mubr.bf16.gmra.mrb[0].mxu0 %v1942
          %v2135 = vpop.f32.mrb[0].mxu0
          %v2136 = vadd.f32 %v1987, %v2135
          %v2137 = vpop.f32.mrb[0].mxu0
          %v2138 = vpop.f32.mrb[0].mxu0
          %v2139 = vadd.f32 %v1987, %v2138
          %v2140 = vpop.f32.mrb[0].mxu0
          %2141 = vmatprep.mubr.bf16.mxu0 0
          %2142 = vmatmul.mubr.bf16.gmra.mrb[0].mxu0 %v1943
          %v2143 = vpop.f32.mrb[0].mxu0
          %v2144 = vadd.f32 %v1987, %v2143
          %v2145 = vpop.f32.mrb[0].mxu0
          %v2146 = vpop.f32.mrb[0].mxu0
          %v2147 = vadd.f32 %v1987, %v2146
          %v2148 = vpop.f32.mrb[0].mxu0
          %2149 = vmatprep.mubr.bf16.mxu0 0
          %2150 = vmatmul.mubr.bf16.gmra.mrb[0].mxu0 %v1944
          %v2151 = vpop.f32.mrb[0].mxu0
          %v2152 = vadd.f32 %v1987, %v2151
          %v2153 = vpop.f32.mrb[0].mxu0
          %v2154 = vpop.f32.mrb[0].mxu0
          %v2155 = vadd.f32 %v1987, %v2154
          %v2156 = vpop.f32.mrb[0].mxu0
          %2157 = vmatprep.mubr.bf16.mxu0 0
          %2158 = vmatmul.mubr.bf16.gmra.mrb[0].mxu0 %v1945
          %v2159 = vpop.f32.mrb[0].mxu0
          %v2160 = vadd.f32 %v1987, %v2159
          %v2161 = vpop.f32.mrb[0].mxu0
          %v2162 = vpop.f32.mrb[0].mxu0
          %v2163 = vadd.f32 %v1987, %v2162
          %v2164 = vpop.f32.mrb[0].mxu0
          %2165 = vmatprep.mubr.bf16.mxu0 0
          %2166 = vmatmul.mubr.bf16.gmra.mrb[0].mxu0 %v1946
          %v2167 = vpop.f32.mrb[0].mxu0
          %v2168 = vadd.f32 %v1987, %v2167
          %v2169 = vpop.f32.mrb[0].mxu0
          %v2170 = vpop.f32.mrb[0].mxu0
          %v2171 = vadd.f32 %v1987, %v2170
          %v2172 = vpop.f32.mrb[0].mxu0
          %2173 = vmatprep.mubr.bf16.mxu0 0
          %2174 = vmatmul.mubr.bf16.gmra.mrb[0].mxu0 %v1947
          %v2175 = vpop.f32.mrb[0].mxu0
          %v2176 = vadd.f32 %v1987, %v2175
          %v2177 = vpop.f32.mrb[0].mxu0
          %v2178 = vpop.f32.mrb[0].mxu0
          %v2179 = vadd.f32 %v1987, %v2178
          %v2180 = vpop.f32.mrb[0].mxu0
          %2181 = vmatprep.mubr.bf16.mxu0 0
          %2182 = vmatmul.mubr.bf16.gmra.mrb[0].mxu0 %v1948
          %v2183 = vpop.f32.mrb[0].mxu0
          %v2184 = vadd.f32 %v1987, %v2183
          %v2185 = vpop.f32.mrb[0].mxu0
          %v2186 = vpop.f32.mrb[0].mxu0
          %v2187 = vadd.f32 %v1987, %v2186
          %v2188 = vpop.f32.mrb[0].mxu0
          %2189 = vmatprep.mubr.bf16.mxu0 0
          %2190 = vmatmul.mubr.bf16.gmra.mrb[0].mxu0 %v1949
          %v2191 = vpop.f32.mrb[0].mxu0
          %v2192 = vadd.f32 %v1987, %v2191
          %v2193 = vpop.f32.mrb[0].mxu0
          %v2194 = vpop.f32.mrb[0].mxu0
          %v2195 = vadd.f32 %v1987, %v2194
          %v2196 = vpop.f32.mrb[0].mxu0
          %2197 = vmatprep.mubr.bf16.mxu0 0
          %2198 = vmatmul.mubr.bf16.gmra.mrb[0].mxu0 %v1950
          %v2199 = vpop.f32.mrb[0].mxu0
          %v2200 = vadd.f32 %v1987, %v2199
          %v2201 = vpop.f32.mrb[0].mxu0
          %v2202 = vpop.f32.mrb[0].mxu0
          %v2203 = vadd.f32 %v1987, %v2202
          %v2204 = vpop.f32.mrb[0].mxu0
          %2205 = vmatprep.mubr.bf16.mxu0 0
          %2206 = vmatmul.mubr.bf16.gmra.mrb[0].mxu0 %v1951
          %v2207 = vpop.f32.mrb[0].mxu0
          %v2208 = vadd.f32 %v1987, %v2207
          %v2209 = vpop.f32.mrb[0].mxu0
          %v2210 = vpop.f32.mrb[0].mxu0
          %v2211 = vadd.f32 %v1987, %v2210
          %v2212 = vpop.f32.mrb[0].mxu0
          %2213 = vmatprep.mubr.bf16.mxu0 0
          %2214 = vmatmul.mubr.bf16.gmra.mrb[0].mxu0 %v1952
          %v2215 = vpop.f32.mrb[0].mxu0
          %v2216 = vadd.f32 %v1987, %v2215
          %v2217 = vpop.f32.mrb[0].mxu0
          %v2218 = vpop.f32.mrb[0].mxu0
          %v2219 = vadd.f32 %v1987, %v2218
          %v2220 = vpop.f32.mrb[0].mxu0
          %2221 = vmatprep.mubr.bf16.mxu0 0
          %2222 = vmatmul.mubr.bf16.gmra.mrb[0].mxu0 %v1953
          %v2223 = vpop.f32.mrb[0].mxu0
          %v2224 = vadd.f32 %v1987, %v2223
          %v2225 = vpop.f32.mrb[0].mxu0
          %v2226 = vpop.f32.mrb[0].mxu0
          %v2227 = vadd.f32 %v1987, %v2226
          %v2228 = vpop.f32.mrb[0].mxu0
          %2229 = vmatprep.mubr.bf16.mxu0 0
          %2230 = vmatmul.mubr.bf16.gmra.mrb[0].mxu0 %v1954
          %v2231 = vpop.f32.mrb[0].mxu0
          %v2232 = vadd.f32 %v1987, %v2231
          %v2233 = vpop.f32.mrb[0].mxu0
          %v2234 = vpop.f32.mrb[0].mxu0
          %v2235 = vadd.f32 %v1987, %v2234
          %v2236 = vpop.f32.mrb[0].mxu0
          %2237 = vmatprep.mubr.bf16.mxu0 0
          %2238 = vmatmul.mubr.bf16.gmra.mrb[0].mxu0 %v1955
          %v2239 = vpop.f32.mrb[0].mxu0
          %v2240 = vadd.f32 %v1987, %v2239
          %v2241 = vpop.f32.mrb[0].mxu0
          %v2242 = vpop.f32.mrb[0].mxu0
          %v2243 = vadd.f32 %v1987, %v2242
          %v2244 = vpop.f32.mrb[0].mxu0
          %2245 = vmatprep.mubr.bf16.mxu0 0
          %2246 = vmatmul.mubr.bf16.gmra.mrb[0].mxu0 %v1956
          %v2247 = vpop.f32.mrb[0].mxu0
          %v2248 = vadd.f32 %v1987, %v2247
          %v2249 = vpop.f32.mrb[0].mxu0
          %v2250 = vpop.f32.mrb[0].mxu0
          %v2251 = vadd.f32 %v1987, %v2250
          %v2252 = vpop.f32.mrb[0].mxu0
          %2253 = vmatprep.mubr.bf16.mxu0 0
          %2254 = vmatmul.mubr.bf16.gmra.mrb[0].mxu0 %v1957
          %v2255 = vpop.f32.mrb[0].mxu0
          %v2256 = vadd.f32 %v1987, %v2255
          %v2257 = vpop.f32.mrb[0].mxu0
          %v2258 = vpop.f32.mrb[0].mxu0
          %v2259 = vadd.f32 %v1987, %v2258
          %v2260 = vpop.f32.mrb[0].mxu0
          %2261 = vmatprep.mubr.bf16.mxu0 0
          %2262 = vmatmul.mubr.bf16.gmra.mrb[0].mxu0 %v1958
          %v2263 = vpop.f32.mrb[0].mxu0
          %v2264 = vadd.f32 %v1987, %v2263
          %v2265 = vpop.f32.mrb[0].mxu0
          %v2266 = vpop.f32.mrb[0].mxu0
          %v2267 = vadd.f32 %v1987, %v2266
          %v2268 = vpop.f32.mrb[0].mxu0
          %2269 = vmatprep.mubr.bf16.mxu0 0
          %2270 = vmatmul.mubr.bf16.gmra.mrb[0].mxu0 %v1959
          %v2271 = vpop.f32.mrb[0].mxu0
          %v2272 = vadd.f32 %v1987, %v2271
          %v2273 = vpop.f32.mrb[0].mxu0
          %v2274 = vpop.f32.mrb[0].mxu0
          %v2275 = vadd.f32 %v1987, %v2274
          %v2276 = vpop.f32.mrb[0].mxu0
          %2277 = vmatprep.mubr.bf16.mxu0 0
          %2278 = vmatmul.mubr.bf16.gmra.mrb[0].mxu0 %v1960
          %v2279 = vpop.f32.mrb[0].mxu0
          %v2280 = vadd.f32 %v1987, %v2279
          %v2281 = vpop.f32.mrb[0].mxu0
          %v2282 = vpop.f32.mrb[0].mxu0
          %v2283 = vadd.f32 %v1987, %v2282
          %v2284 = vpop.f32.mrb[0].mxu0
          %2285 = vmatprep.mubr.bf16.mxu0 0
          %2286 = vmatmul.mubr.bf16.gmra.mrb[0].mxu0 %v1961
          %v2287 = vpop.f32.mrb[0].mxu0
          %v2288 = vadd.f32 %v1987, %v2287
          %v2289 = vpop.f32.mrb[0].mxu0
          %v2290 = vpop.f32.mrb[0].mxu0
          %v2291 = vadd.f32 %v1987, %v2290
          %v2292 = vpop.f32.mrb[0].mxu0
          %2293 = vmatprep.mubr.bf16.mxu0 0
          %2294 = vmatmul.mubr.bf16.gmra.mrb[0].mxu0 %v1962
          %v2295 = vpop.f32.mrb[0].mxu0
          %v2296 = vadd.f32 %v1987, %v2295
          %v2297 = vpop.f32.mrb[0].mxu0
          %v2298 = vpop.f32.mrb[0].mxu0
          %v2299 = vadd.f32 %v1987, %v2298
          %v2300 = vpop.f32.mrb[0].mxu0
          %2301 = vmatprep.mubr.bf16.mxu0 0
          %2302 = vmatmul.mubr.bf16.gmra.mrb[0].mxu0 %v1963
          %v2303 = vpop.f32.mrb[0].mxu0
          %v2304 = vadd.f32 %v1987, %v2303
          %v2305 = vpop.f32.mrb[0].mxu0
          %v2306 = vpop.f32.mrb[0].mxu0
          %v2307 = vadd.f32 %v1987, %v2306
          %v2308 = vpop.f32.mrb[0].mxu0
          %2309 = vmatprep.mubr.bf16.mxu0 0
          %2310 = vmatmul.mubr.bf16.gmra.mrb[0].mxu0 %v1964
          %v2311 = vpop.f32.mrb[0].mxu0
          %v2312 = vadd.f32 %v1987, %v2311
          %v2313 = vpop.f32.mrb[0].mxu0
          %v2314 = vpop.f32.mrb[0].mxu0
          %v2315 = vadd.f32 %v1987, %v2314
          %v2316 = vpop.f32.mrb[0].mxu0
          %2317 = vmatprep.mubr.bf16.mxu0 0
          %2318 = vmatmul.mubr.bf16.gmra.mrb[0].mxu0 %v1965
          %v2319 = vpop.f32.mrb[0].mxu0
          %v2320 = vadd.f32 %v1987, %v2319
          %v2321 = vpop.f32.mrb[0].mxu0
          %v2322 = vpop.f32.mrb[0].mxu0
          %v2323 = vadd.f32 %v1987, %v2322
          %v2324 = vpop.f32.mrb[0].mxu0
          %2325 = vdwg.mxu0
          %v2326 = vmax.f32 %v2072, 0.0
          %v2327 = vmax.f32 %v2075, 0.0
          %v2328 = vmax.f32 %v2080, 0.0
          %v2329 = vmax.f32 %v2083, 0.0
          %v2330 = vmax.f32 %v2088, 0.0
          %v2331 = vmax.f32 %v2091, 0.0
          %v2332 = vmax.f32 %v2096, 0.0
          %v2333 = vmax.f32 %v2099, 0.0
          %v2334 = vmax.f32 %v2104, 0.0
          %v2335 = vmax.f32 %v2107, 0.0
          %v2336 = vmax.f32 %v2112, 0.0
          %v2337 = vmax.f32 %v2115, 0.0
          %v2338 = vmax.f32 %v2120, 0.0
          %v2339 = vmax.f32 %v2123, 0.0
          %v2340 = vmax.f32 %v2128, 0.0
          %v2341 = vmax.f32 %v2131, 0.0
          %v2342 = vmax.f32 %v2136, 0.0
          %v2343 = vmax.f32 %v2139, 0.0
          %v2344 = vmax.f32 %v2144, 0.0
          %v2345 = vmax.f32 %v2147, 0.0
          %v2346 = vmax.f32 %v2152, 0.0
          %v2347 = vmax.f32 %v2155, 0.0
          %v2348 = vmax.f32 %v2160, 0.0
          %v2349 = vmax.f32 %v2163, 0.0
          %v2350 = vmax.f32 %v2168, 0.0
          %v2351 = vmax.f32 %v2171, 0.0
          %v2352 = vmax.f32 %v2176, 0.0
          %v2353 = vmax.f32 %v2179, 0.0
          %v2354 = vmax.f32 %v2184, 0.0
          %v2355 = vmax.f32 %v2187, 0.0
          %v2356 = vmax.f32 %v2192, 0.0
          %v2357 = vmax.f32 %v2195, 0.0
          %v2358 = vmax.f32 %v2200, 0.0
          %v2359 = vmax.f32 %v2203, 0.0
          %v2360 = vmax.f32 %v2208, 0.0
          %v2361 = vmax.f32 %v2211, 0.0
          %v2362 = vmax.f32 %v2216, 0.0
          %v2363 = vmax.f32 %v2219, 0.0
          %v2364 = vmax.f32 %v2224, 0.0
          %v2365 = vmax.f32 %v2227, 0.0
          %v2366 = vmax.f32 %v2232, 0.0
          %v2367 = vmax.f32 %v2235, 0.0
          %v2368 = vmax.f32 %v2240, 0.0
          %v2369 = vmax.f32 %v2243, 0.0
          %v2370 = vmax.f32 %v2248, 0.0
          %v2371 = vmax.f32 %v2251, 0.0
          %v2372 = vmax.f32 %v2256, 0.0
          %v2373 = vmax.f32 %v2259, 0.0
          %v2374 = vmax.f32 %v2264, 0.0
          %v2375 = vmax.f32 %v2267, 0.0
          %v2376 = vmax.f32 %v2272, 0.0
          %v2377 = vmax.f32 %v2275, 0.0
          %v2378 = vmax.f32 %v2280, 0.0
          %v2379 = vmax.f32 %v2283, 0.0
          %v2380 = vmax.f32 %v2288, 0.0
          %v2381 = vmax.f32 %v2291, 0.0
          %v2382 = vmax.f32 %v2296, 0.0
          %v2383 = vmax.f32 %v2299, 0.0
          %v2384 = vmax.f32 %v2304, 0.0
          %v2385 = vmax.f32 %v2307, 0.0
          %v2386 = vmax.f32 %v2312, 0.0
          %v2387 = vmax.f32 %v2315, 0.0
          %v2388 = vmax.f32 %v2320, 0.0
          %v2389 = vmax.f32 %v2323, 0.0
          %s2390 = sld [smem:[#allocation6]]
          %v2391 = vld [vmem:[%s784] sm:$0xf]
          %v2392 = vld [vmem:[%s784 + $0x4] sm:$0xf]
          %v2393 = vld [vmem:[%s784 + $0x8] sm:$0xf]
          %v2394 = vld [vmem:[%s784 + $0xc] sm:$0xf]
          %v2395 = vld [vmem:[%s784 + $0x10] sm:$0xf]
          %v2396 = vld [vmem:[%s784 + $0x14] sm:$0xf]
          %v2397 = vld [vmem:[%s784 + $0x18] sm:$0xf]
          %v2398 = vld [vmem:[%s784 + $0x1c] sm:$0xf]
          %v2399 = vld [vmem:[%s784 + $0x20] sm:$0xf]
          %v2400 = vld [vmem:[%s784 + $0x24] sm:$0xf]
          %v2401 = vld [vmem:[%s784 + $0x28] sm:$0xf]
          %v2402 = vld [vmem:[%s784 + $0x2c] sm:$0xf]
          %v2403 = vld [vmem:[%s784 + $0x30] sm:$0xf]
          %v2404 = vld [vmem:[%s784 + $0x34] sm:$0xf]
          %v2405 = vld [vmem:[%s784 + $0x38] sm:$0xf]
          %v2406 = vld [vmem:[%s784 + $0x3c] sm:$0xf]
          %v2407 = vld [vmem:[%s784 + $0x40] sm:$0xf]
          %v2408 = vld [vmem:[%s784 + $0x44] sm:$0xf]
          %v2409 = vld [vmem:[%s784 + $0x48] sm:$0xf]
          %v2410 = vld [vmem:[%s784 + $0x4c] sm:$0xf]
          %v2411 = vld [vmem:[%s784 + $0x50] sm:$0xf]
          %v2412 = vld [vmem:[%s784 + $0x54] sm:$0xf]
          %v2413 = vld [vmem:[%s784 + $0x58] sm:$0xf]
          %v2414 = vld [vmem:[%s784 + $0x5c] sm:$0xf]
          %v2415 = vld [vmem:[%s784 + $0x60] sm:$0xf]
          %v2416 = vld [vmem:[%s784 + $0x64] sm:$0xf]
          %v2417 = vld [vmem:[%s784 + $0x68] sm:$0xf]
          %v2418 = vld [vmem:[%s784 + $0x6c] sm:$0xf]
          %v2419 = vld [vmem:[%s784 + $0x70] sm:$0xf]
          %v2420 = vld [vmem:[%s784 + $0x74] sm:$0xf]
          %v2421 = vld [vmem:[%s784 + $0x78] sm:$0xf]
          %v2422 = vld [vmem:[%s784 + $0x7c] sm:$0xf]
          %v2423 = vld [vmem:[%s784 + $0x80] sm:$0xf]
          %v2424 = vld [vmem:[%s784 + $0x84] sm:$0xf]
          %v2425 = vld [vmem:[%s784 + $0x88] sm:$0xf]
          %v2426 = vld [vmem:[%s784 + $0x8c] sm:$0xf]
          %v2427 = vld [vmem:[%s784 + $0x90] sm:$0xf]
          %v2428 = vld [vmem:[%s784 + $0x94] sm:$0xf]
          %v2429 = vld [vmem:[%s784 + $0x98] sm:$0xf]
          %v2430 = vld [vmem:[%s784 + $0x9c] sm:$0xf]
          %v2431 = vld [vmem:[%s784 + $0xa0] sm:$0xf]
          %v2432 = vld [vmem:[%s784 + $0xa4] sm:$0xf]
          %v2433 = vld [vmem:[%s784 + $0xa8] sm:$0xf]
          %v2434 = vld [vmem:[%s784 + $0xac] sm:$0xf]
          %v2435 = vld [vmem:[%s784 + $0xb0] sm:$0xf]
          %v2436 = vld [vmem:[%s784 + $0xb4] sm:$0xf]
          %v2437 = vld [vmem:[%s784 + $0xb8] sm:$0xf]
          %v2438 = vld [vmem:[%s784 + $0xbc] sm:$0xf]
          %v2439 = vld [vmem:[%s784 + $0xc0] sm:$0xf]
          %v2440 = vld [vmem:[%s784 + $0xc4] sm:$0xf]
          %v2441 = vld [vmem:[%s784 + $0xc8] sm:$0xf]
          %v2442 = vld [vmem:[%s784 + $0xcc] sm:$0xf]
          %v2443 = vld [vmem:[%s784 + $0xd0] sm:$0xf]
          %v2444 = vld [vmem:[%s784 + $0xd4] sm:$0xf]
          %v2445 = vld [vmem:[%s784 + $0xd8] sm:$0xf]
          %v2446 = vld [vmem:[%s784 + $0xdc] sm:$0xf]
          %v2447 = vld [vmem:[%s784 + $0xe0] sm:$0xf]
          %v2448 = vld [vmem:[%s784 + $0xe4] sm:$0xf]
          %v2449 = vld [vmem:[%s784 + $0xe8] sm:$0xf]
          %v2450 = vld [vmem:[%s784 + $0xec] sm:$0xf]
          %v2451 = vld [vmem:[%s784 + $0xf0] sm:$0xf]
          %v2452 = vld [vmem:[%s784 + $0xf4] sm:$0xf]
          %v2453 = vld [vmem:[%s784 + $0xf8] sm:$0xf]
          %v2454 = vld [vmem:[%s784 + $0xfc] sm:$0xf]
          %v2455 = vunpack.c.l.bf16 %v2391
          %v2456 = vunpack.c.l.bf16 %v2392
          %v2457 = vunpack.c.l.bf16 %v2393
          %v2458 = vunpack.c.l.bf16 %v2394
          %v2459 = vunpack.c.l.bf16 %v2395
          %v2460 = vunpack.c.l.bf16 %v2396
          %v2461 = vunpack.c.l.bf16 %v2397
          %v2462 = vunpack.c.l.bf16 %v2398
          %v2463 = vunpack.c.l.bf16 %v2399
          %v2464 = vunpack.c.l.bf16 %v2400
          %v2465 = vunpack.c.l.bf16 %v2401
          %v2466 = vunpack.c.l.bf16 %v2402
          %v2467 = vunpack.c.l.bf16 %v2403
          %v2468 = vunpack.c.l.bf16 %v2404
          %v2469 = vunpack.c.l.bf16 %v2405
          %v2470 = vunpack.c.l.bf16 %v2406
          %v2471 = vunpack.c.l.bf16 %v2407
          %v2472 = vunpack.c.l.bf16 %v2408
          %v2473 = vunpack.c.l.bf16 %v2409
          %v2474 = vunpack.c.l.bf16 %v2410
          %v2475 = vunpack.c.l.bf16 %v2411
          %v2476 = vunpack.c.l.bf16 %v2412
          %v2477 = vunpack.c.l.bf16 %v2413
          %v2478 = vunpack.c.l.bf16 %v2414
          %v2479 = vunpack.c.l.bf16 %v2415
          %v2480 = vunpack.c.l.bf16 %v2416
          %v2481 = vunpack.c.l.bf16 %v2417
          %v2482 = vunpack.c.l.bf16 %v2418
          %v2483 = vunpack.c.l.bf16 %v2419
          %v2484 = vunpack.c.l.bf16 %v2420
          %v2485 = vunpack.c.l.bf16 %v2421
          %v2486 = vunpack.c.l.bf16 %v2422
          %v2487 = vunpack.c.l.bf16 %v2423
          %v2488 = vunpack.c.l.bf16 %v2424
          %v2489 = vunpack.c.l.bf16 %v2425
          %v2490 = vunpack.c.l.bf16 %v2426
          %v2491 = vunpack.c.l.bf16 %v2427
          %v2492 = vunpack.c.l.bf16 %v2428
          %v2493 = vunpack.c.l.bf16 %v2429
          %v2494 = vunpack.c.l.bf16 %v2430
          %v2495 = vunpack.c.l.bf16 %v2431
          %v2496 = vunpack.c.l.bf16 %v2432
          %v2497 = vunpack.c.l.bf16 %v2433
          %v2498 = vunpack.c.l.bf16 %v2434
          %v2499 = vunpack.c.l.bf16 %v2435
          %v2500 = vunpack.c.l.bf16 %v2436
          %v2501 = vunpack.c.l.bf16 %v2437
          %v2502 = vunpack.c.l.bf16 %v2438
          %v2503 = vunpack.c.l.bf16 %v2439
          %v2504 = vunpack.c.l.bf16 %v2440
          %v2505 = vunpack.c.l.bf16 %v2441
          %v2506 = vunpack.c.l.bf16 %v2442
          %v2507 = vunpack.c.l.bf16 %v2443
          %v2508 = vunpack.c.l.bf16 %v2444
          %v2509 = vunpack.c.l.bf16 %v2445
          %v2510 = vunpack.c.l.bf16 %v2446
          %v2511 = vunpack.c.l.bf16 %v2447
          %v2512 = vunpack.c.l.bf16 %v2448
          %v2513 = vunpack.c.l.bf16 %v2449
          %v2514 = vunpack.c.l.bf16 %v2450
          %v2515 = vunpack.c.l.bf16 %v2451
          %v2516 = vunpack.c.l.bf16 %v2452
          %v2517 = vunpack.c.l.bf16 %v2453
          %v2518 = vunpack.c.l.bf16 %v2454
          %v2519 = vstv %s2390
          %v2520 = vmul.f32 %v2519, %v2455
          %v2521 = vmul.f32 %v2519, %v2456
          %v2522 = vmul.f32 %v2519, %v2457
          %v2523 = vmul.f32 %v2519, %v2458
          %v2524 = vmul.f32 %v2519, %v2459
          %v2525 = vmul.f32 %v2519, %v2460
          %v2526 = vmul.f32 %v2519, %v2461
          %v2527 = vmul.f32 %v2519, %v2462
          %v2528 = vmul.f32 %v2519, %v2463
          %v2529 = vmul.f32 %v2519, %v2464
          %v2530 = vmul.f32 %v2519, %v2465
          %v2531 = vmul.f32 %v2519, %v2466
          %v2532 = vmul.f32 %v2519, %v2467
          %v2533 = vmul.f32 %v2519, %v2468
          %v2534 = vmul.f32 %v2519, %v2469
          %v2535 = vmul.f32 %v2519, %v2470
          %v2536 = vmul.f32 %v2519, %v2471
          %v2537 = vmul.f32 %v2519, %v2472
          %v2538 = vmul.f32 %v2519, %v2473
          %v2539 = vmul.f32 %v2519, %v2474
          %v2540 = vmul.f32 %v2519, %v2475
          %v2541 = vmul.f32 %v2519, %v2476
          %v2542 = vmul.f32 %v2519, %v2477
          %v2543 = vmul.f32 %v2519, %v2478
          %v2544 = vmul.f32 %v2519, %v2479
          %v2545 = vmul.f32 %v2519, %v2480
          %v2546 = vmul.f32 %v2519, %v2481
          %v2547 = vmul.f32 %v2519, %v2482
          %v2548 = vmul.f32 %v2519, %v2483
          %v2549 = vmul.f32 %v2519, %v2484
          %v2550 = vmul.f32 %v2519, %v2485
          %v2551 = vmul.f32 %v2519, %v2486
          %v2552 = vmul.f32 %v2519, %v2487
          %v2553 = vmul.f32 %v2519, %v2488
          %v2554 = vmul.f32 %v2519, %v2489
          %v2555 = vmul.f32 %v2519, %v2490
          %v2556 = vmul.f32 %v2519, %v2491
          %v2557 = vmul.f32 %v2519, %v2492
          %v2558 = vmul.f32 %v2519, %v2493
          %v2559 = vmul.f32 %v2519, %v2494
          %v2560 = vmul.f32 %v2519, %v2495
          %v2561 = vmul.f32 %v2519, %v2496
          %v2562 = vmul.f32 %v2519, %v2497
          %v2563 = vmul.f32 %v2519, %v2498
          %v2564 = vmul.f32 %v2519, %v2499
          %v2565 = vmul.f32 %v2519, %v2500
          %v2566 = vmul.f32 %v2519, %v2501
          %v2567 = vmul.f32 %v2519, %v2502
          %v2568 = vmul.f32 %v2519, %v2503
          %v2569 = vmul.f32 %v2519, %v2504
          %v2570 = vmul.f32 %v2519, %v2505
          %v2571 = vmul.f32 %v2519, %v2506
          %v2572 = vmul.f32 %v2519, %v2507
          %v2573 = vmul.f32 %v2519, %v2508
          %v2574 = vmul.f32 %v2519, %v2509
          %v2575 = vmul.f32 %v2519, %v2510
          %v2576 = vmul.f32 %v2519, %v2511
          %v2577 = vmul.f32 %v2519, %v2512
          %v2578 = vmul.f32 %v2519, %v2513
          %v2579 = vmul.f32 %v2519, %v2514
          %v2580 = vmul.f32 %v2519, %v2515
          %v2581 = vmul.f32 %v2519, %v2516
          %v2582 = vmul.f32 %v2519, %v2517
          %v2583 = vmul.f32 %v2519, %v2518
          %v2584 = vadd.f32 %v2326, %v2520
          %v2585 = vadd.f32 %v2327, %v2521
          %v2586 = vadd.f32 %v2328, %v2522
          %v2587 = vadd.f32 %v2329, %v2523
          %v2588 = vadd.f32 %v2330, %v2524
          %v2589 = vadd.f32 %v2331, %v2525
          %v2590 = vadd.f32 %v2332, %v2526
          %v2591 = vadd.f32 %v2333, %v2527
          %v2592 = vadd.f32 %v2334, %v2528
          %v2593 = vadd.f32 %v2335, %v2529
          %v2594 = vadd.f32 %v2336, %v2530
          %v2595 = vadd.f32 %v2337, %v2531
          %v2596 = vadd.f32 %v2338, %v2532
          %v2597 = vadd.f32 %v2339, %v2533
          %v2598 = vadd.f32 %v2340, %v2534
          %v2599 = vadd.f32 %v2341, %v2535
          %v2600 = vadd.f32 %v2342, %v2536
          %v2601 = vadd.f32 %v2343, %v2537
          %v2602 = vadd.f32 %v2344, %v2538
          %v2603 = vadd.f32 %v2345, %v2539
          %v2604 = vadd.f32 %v2346, %v2540
          %v2605 = vadd.f32 %v2347, %v2541
          %v2606 = vadd.f32 %v2348, %v2542
          %v2607 = vadd.f32 %v2349, %v2543
          %v2608 = vadd.f32 %v2350, %v2544
          %v2609 = vadd.f32 %v2351, %v2545
          %v2610 = vadd.f32 %v2352, %v2546
          %v2611 = vadd.f32 %v2353, %v2547
          %v2612 = vadd.f32 %v2354, %v2548
          %v2613 = vadd.f32 %v2355, %v2549
          %v2614 = vadd.f32 %v2356, %v2550
          %v2615 = vadd.f32 %v2357, %v2551
          %v2616 = vadd.f32 %v2358, %v2552
          %v2617 = vadd.f32 %v2359, %v2553
          %v2618 = vadd.f32 %v2360, %v2554
          %v2619 = vadd.f32 %v2361, %v2555
          %v2620 = vadd.f32 %v2362, %v2556
          %v2621 = vadd.f32 %v2363, %v2557
          %v2622 = vadd.f32 %v2364, %v2558
          %v2623 = vadd.f32 %v2365, %v2559
          %v2624 = vadd.f32 %v2366, %v2560
          %v2625 = vadd.f32 %v2367, %v2561
          %v2626 = vadd.f32 %v2368, %v2562
          %v2627 = vadd.f32 %v2369, %v2563
          %v2628 = vadd.f32 %v2370, %v2564
          %v2629 = vadd.f32 %v2371, %v2565
          %v2630 = vadd.f32 %v2372, %v2566
          %v2631 = vadd.f32 %v2373, %v2567
          %v2632 = vadd.f32 %v2374, %v2568
          %v2633 = vadd.f32 %v2375, %v2569
          %v2634 = vadd.f32 %v2376, %v2570
          %v2635 = vadd.f32 %v2377, %v2571
          %v2636 = vadd.f32 %v2378, %v2572
          %v2637 = vadd.f32 %v2379, %v2573
          %v2638 = vadd.f32 %v2380, %v2574
          %v2639 = vadd.f32 %v2381, %v2575
          %v2640 = vadd.f32 %v2382, %v2576
          %v2641 = vadd.f32 %v2383, %v2577
          %v2642 = vadd.f32 %v2384, %v2578
          %v2643 = vadd.f32 %v2385, %v2579
          %v2644 = vadd.f32 %v2386, %v2580
          %v2645 = vadd.f32 %v2387, %v2581
          %v2646 = vadd.f32 %v2388, %v2582
          %v2647 = vadd.f32 %v2389, %v2583
          %s2648 = sld [smem:[#allocation6 + $0x1]]
          %v2649 = vld [vmem:[%s778] sm:$0xf]
          %v2650 = vld [vmem:[%s778 + $0x4] sm:$0xf]
          %v2651 = vld [vmem:[%s778 + $0x8] sm:$0xf]
          %v2652 = vld [vmem:[%s778 + $0xc] sm:$0xf]
          %v2653 = vld [vmem:[%s778 + $0x10] sm:$0xf]
          %v2654 = vld [vmem:[%s778 + $0x14] sm:$0xf]
          %v2655 = vld [vmem:[%s778 + $0x18] sm:$0xf]
          %v2656 = vld [vmem:[%s778 + $0x1c] sm:$0xf]
          %v2657 = vld [vmem:[%s778 + $0x20] sm:$0xf]
          %v2658 = vld [vmem:[%s778 + $0x24] sm:$0xf]
          %v2659 = vld [vmem:[%s778 + $0x28] sm:$0xf]
          %v2660 = vld [vmem:[%s778 + $0x2c] sm:$0xf]
          %v2661 = vld [vmem:[%s778 + $0x30] sm:$0xf]
          %v2662 = vld [vmem:[%s778 + $0x34] sm:$0xf]
          %v2663 = vld [vmem:[%s778 + $0x38] sm:$0xf]
          %v2664 = vld [vmem:[%s778 + $0x3c] sm:$0xf]
          %v2665 = vld [vmem:[%s778 + $0x40] sm:$0xf]
          %v2666 = vld [vmem:[%s778 + $0x44] sm:$0xf]
          %v2667 = vld [vmem:[%s778 + $0x48] sm:$0xf]
          %v2668 = vld [vmem:[%s778 + $0x4c] sm:$0xf]
          %v2669 = vld [vmem:[%s778 + $0x50] sm:$0xf]
          %v2670 = vld [vmem:[%s778 + $0x54] sm:$0xf]
          %v2671 = vld [vmem:[%s778 + $0x58] sm:$0xf]
          %v2672 = vld [vmem:[%s778 + $0x5c] sm:$0xf]
          %v2673 = vld [vmem:[%s778 + $0x60] sm:$0xf]
          %v2674 = vld [vmem:[%s778 + $0x64] sm:$0xf]
          %v2675 = vld [vmem:[%s778 + $0x68] sm:$0xf]
          %v2676 = vld [vmem:[%s778 + $0x6c] sm:$0xf]
          %v2677 = vld [vmem:[%s778 + $0x70] sm:$0xf]
          %v2678 = vld [vmem:[%s778 + $0x74] sm:$0xf]
          %v2679 = vld [vmem:[%s778 + $0x78] sm:$0xf]
          %v2680 = vld [vmem:[%s778 + $0x7c] sm:$0xf]
          %v2681 = vld [vmem:[%s778 + $0x80] sm:$0xf]
          %v2682 = vld [vmem:[%s778 + $0x84] sm:$0xf]
          %v2683 = vld [vmem:[%s778 + $0x88] sm:$0xf]
          %v2684 = vld [vmem:[%s778 + $0x8c] sm:$0xf]
          %v2685 = vld [vmem:[%s778 + $0x90] sm:$0xf]
          %v2686 = vld [vmem:[%s778 + $0x94] sm:$0xf]
          %v2687 = vld [vmem:[%s778 + $0x98] sm:$0xf]
          %v2688 = vld [vmem:[%s778 + $0x9c] sm:$0xf]
          %v2689 = vld [vmem:[%s778 + $0xa0] sm:$0xf]
          %v2690 = vld [vmem:[%s778 + $0xa4] sm:$0xf]
          %v2691 = vld [vmem:[%s778 + $0xa8] sm:$0xf]
          %v2692 = vld [vmem:[%s778 + $0xac] sm:$0xf]
          %v2693 = vld [vmem:[%s778 + $0xb0] sm:$0xf]
          %v2694 = vld [vmem:[%s778 + $0xb4] sm:$0xf]
          %v2695 = vld [vmem:[%s778 + $0xb8] sm:$0xf]
          %v2696 = vld [vmem:[%s778 + $0xbc] sm:$0xf]
          %v2697 = vld [vmem:[%s778 + $0xc0] sm:$0xf]
          %v2698 = vld [vmem:[%s778 + $0xc4] sm:$0xf]
          %v2699 = vld [vmem:[%s778 + $0xc8] sm:$0xf]
          %v2700 = vld [vmem:[%s778 + $0xcc] sm:$0xf]
          %v2701 = vld [vmem:[%s778 + $0xd0] sm:$0xf]
          %v2702 = vld [vmem:[%s778 + $0xd4] sm:$0xf]
          %v2703 = vld [vmem:[%s778 + $0xd8] sm:$0xf]
          %v2704 = vld [vmem:[%s778 + $0xdc] sm:$0xf]
          %v2705 = vld [vmem:[%s778 + $0xe0] sm:$0xf]
          %v2706 = vld [vmem:[%s778 + $0xe4] sm:$0xf]
          %v2707 = vld [vmem:[%s778 + $0xe8] sm:$0xf]
          %v2708 = vld [vmem:[%s778 + $0xec] sm:$0xf]
          %v2709 = vld [vmem:[%s778 + $0xf0] sm:$0xf]
          %v2710 = vld [vmem:[%s778 + $0xf4] sm:$0xf]
          %v2711 = vld [vmem:[%s778 + $0xf8] sm:$0xf]
          %v2712 = vld [vmem:[%s778 + $0xfc] sm:$0xf]
          %v2713 = vunpack.c.l.bf16 %v2649
          %v2714 = vunpack.c.l.bf16 %v2650
          %v2715 = vunpack.c.l.bf16 %v2651
          %v2716 = vunpack.c.l.bf16 %v2652
          %v2717 = vunpack.c.l.bf16 %v2653
          %v2718 = vunpack.c.l.bf16 %v2654
          %v2719 = vunpack.c.l.bf16 %v2655
          %v2720 = vunpack.c.l.bf16 %v2656
          %v2721 = vunpack.c.l.bf16 %v2657
          %v2722 = vunpack.c.l.bf16 %v2658
          %v2723 = vunpack.c.l.bf16 %v2659
          %v2724 = vunpack.c.l.bf16 %v2660
          %v2725 = vunpack.c.l.bf16 %v2661
          %v2726 = vunpack.c.l.bf16 %v2662
          %v2727 = vunpack.c.l.bf16 %v2663
          %v2728 = vunpack.c.l.bf16 %v2664
          %v2729 = vunpack.c.l.bf16 %v2665
          %v2730 = vunpack.c.l.bf16 %v2666
          %v2731 = vunpack.c.l.bf16 %v2667
          %v2732 = vunpack.c.l.bf16 %v2668
          %v2733 = vunpack.c.l.bf16 %v2669
          %v2734 = vunpack.c.l.bf16 %v2670
          %v2735 = vunpack.c.l.bf16 %v2671
          %v2736 = vunpack.c.l.bf16 %v2672
          %v2737 = vunpack.c.l.bf16 %v2673
          %v2738 = vunpack.c.l.bf16 %v2674
          %v2739 = vunpack.c.l.bf16 %v2675
          %v2740 = vunpack.c.l.bf16 %v2676
          %v2741 = vunpack.c.l.bf16 %v2677
          %v2742 = vunpack.c.l.bf16 %v2678
          %v2743 = vunpack.c.l.bf16 %v2679
          %v2744 = vunpack.c.l.bf16 %v2680
          %v2745 = vunpack.c.l.bf16 %v2681
          %v2746 = vunpack.c.l.bf16 %v2682
          %v2747 = vunpack.c.l.bf16 %v2683
          %v2748 = vunpack.c.l.bf16 %v2684
          %v2749 = vunpack.c.l.bf16 %v2685
          %v2750 = vunpack.c.l.bf16 %v2686
          %v2751 = vunpack.c.l.bf16 %v2687
          %v2752 = vunpack.c.l.bf16 %v2688
          %v2753 = vunpack.c.l.bf16 %v2689
          %v2754 = vunpack.c.l.bf16 %v2690
          %v2755 = vunpack.c.l.bf16 %v2691
          %v2756 = vunpack.c.l.bf16 %v2692
          %v2757 = vunpack.c.l.bf16 %v2693
          %v2758 = vunpack.c.l.bf16 %v2694
          %v2759 = vunpack.c.l.bf16 %v2695
          %v2760 = vunpack.c.l.bf16 %v2696
          %v2761 = vunpack.c.l.bf16 %v2697
          %v2762 = vunpack.c.l.bf16 %v2698
          %v2763 = vunpack.c.l.bf16 %v2699
          %v2764 = vunpack.c.l.bf16 %v2700
          %v2765 = vunpack.c.l.bf16 %v2701
          %v2766 = vunpack.c.l.bf16 %v2702
          %v2767 = vunpack.c.l.bf16 %v2703
          %v2768 = vunpack.c.l.bf16 %v2704
          %v2769 = vunpack.c.l.bf16 %v2705
          %v2770 = vunpack.c.l.bf16 %v2706
          %v2771 = vunpack.c.l.bf16 %v2707
          %v2772 = vunpack.c.l.bf16 %v2708
          %v2773 = vunpack.c.l.bf16 %v2709
          %v2774 = vunpack.c.l.bf16 %v2710
          %v2775 = vunpack.c.l.bf16 %v2711
          %v2776 = vunpack.c.l.bf16 %v2712
          %v2777 = vstv %s2648
          %v2778 = vmul.f32 %v2777, %v2713
          %v2779 = vmul.f32 %v2777, %v2714
          %v2780 = vmul.f32 %v2777, %v2715
          %v2781 = vmul.f32 %v2777, %v2716
          %v2782 = vmul.f32 %v2777, %v2717
          %v2783 = vmul.f32 %v2777, %v2718
          %v2784 = vmul.f32 %v2777, %v2719
          %v2785 = vmul.f32 %v2777, %v2720
          %v2786 = vmul.f32 %v2777, %v2721
          %v2787 = vmul.f32 %v2777, %v2722
          %v2788 = vmul.f32 %v2777, %v2723
          %v2789 = vmul.f32 %v2777, %v2724
          %v2790 = vmul.f32 %v2777, %v2725
          %v2791 = vmul.f32 %v2777, %v2726
          %v2792 = vmul.f32 %v2777, %v2727
          %v2793 = vmul.f32 %v2777, %v2728
          %v2794 = vmul.f32 %v2777, %v2729
          %v2795 = vmul.f32 %v2777, %v2730
          %v2796 = vmul.f32 %v2777, %v2731
          %v2797 = vmul.f32 %v2777, %v2732
          %v2798 = vmul.f32 %v2777, %v2733
          %v2799 = vmul.f32 %v2777, %v2734
          %v2800 = vmul.f32 %v2777, %v2735
          %v2801 = vmul.f32 %v2777, %v2736
          %v2802 = vmul.f32 %v2777, %v2737
          %v2803 = vmul.f32 %v2777, %v2738
          %v2804 = vmul.f32 %v2777, %v2739
          %v2805 = vmul.f32 %v2777, %v2740
          %v2806 = vmul.f32 %v2777, %v2741
          %v2807 = vmul.f32 %v2777, %v2742
          %v2808 = vmul.f32 %v2777, %v2743
          %v2809 = vmul.f32 %v2777, %v2744
          %v2810 = vmul.f32 %v2777, %v2745
          %v2811 = vmul.f32 %v2777, %v2746
          %v2812 = vmul.f32 %v2777, %v2747
          %v2813 = vmul.f32 %v2777, %v2748
          %v2814 = vmul.f32 %v2777, %v2749
          %v2815 = vmul.f32 %v2777, %v2750
          %v2816 = vmul.f32 %v2777, %v2751
          %v2817 = vmul.f32 %v2777, %v2752
          %v2818 = vmul.f32 %v2777, %v2753
          %v2819 = vmul.f32 %v2777, %v2754
          %v2820 = vmul.f32 %v2777, %v2755
          %v2821 = vmul.f32 %v2777, %v2756
          %v2822 = vmul.f32 %v2777, %v2757
          %v2823 = vmul.f32 %v2777, %v2758
          %v2824 = vmul.f32 %v2777, %v2759
          %v2825 = vmul.f32 %v2777, %v2760
          %v2826 = vmul.f32 %v2777, %v2761
          %v2827 = vmul.f32 %v2777, %v2762
          %v2828 = vmul.f32 %v2777, %v2763
          %v2829 = vmul.f32 %v2777, %v2764
          %v2830 = vmul.f32 %v2777, %v2765
          %v2831 = vmul.f32 %v2777, %v2766
          %v2832 = vmul.f32 %v2777, %v2767
          %v2833 = vmul.f32 %v2777, %v2768
          %v2834 = vmul.f32 %v2777, %v2769
          %v2835 = vmul.f32 %v2777, %v2770
          %v2836 = vmul.f32 %v2777, %v2771
          %v2837 = vmul.f32 %v2777, %v2772
          %v2838 = vmul.f32 %v2777, %v2773
          %v2839 = vmul.f32 %v2777, %v2774
          %v2840 = vmul.f32 %v2777, %v2775
          %v2841 = vmul.f32 %v2777, %v2776
          %v2842 = vadd.f32 %v2584, %v2778
          %v2843 = vadd.f32 %v2585, %v2779
          %v2844 = vadd.f32 %v2586, %v2780
          %v2845 = vadd.f32 %v2587, %v2781
          %v2846 = vadd.f32 %v2588, %v2782
          %v2847 = vadd.f32 %v2589, %v2783
          %v2848 = vadd.f32 %v2590, %v2784
          %v2849 = vadd.f32 %v2591, %v2785
          %v2850 = vadd.f32 %v2592, %v2786
          %v2851 = vadd.f32 %v2593, %v2787
          %v2852 = vadd.f32 %v2594, %v2788
          %v2853 = vadd.f32 %v2595, %v2789
          %v2854 = vadd.f32 %v2596, %v2790
          %v2855 = vadd.f32 %v2597, %v2791
          %v2856 = vadd.f32 %v2598, %v2792
          %v2857 = vadd.f32 %v2599, %v2793
          %v2858 = vadd.f32 %v2600, %v2794
          %v2859 = vadd.f32 %v2601, %v2795
          %v2860 = vadd.f32 %v2602, %v2796
          %v2861 = vadd.f32 %v2603, %v2797
          %v2862 = vadd.f32 %v2604, %v2798
          %v2863 = vadd.f32 %v2605, %v2799
          %v2864 = vadd.f32 %v2606, %v2800
          %v2865 = vadd.f32 %v2607, %v2801
          %v2866 = vadd.f32 %v2608, %v2802
          %v2867 = vadd.f32 %v2609, %v2803
          %v2868 = vadd.f32 %v2610, %v2804
          %v2869 = vadd.f32 %v2611, %v2805
          %v2870 = vadd.f32 %v2612, %v2806
          %v2871 = vadd.f32 %v2613, %v2807
          %v2872 = vadd.f32 %v2614, %v2808
          %v2873 = vadd.f32 %v2615, %v2809
          %v2874 = vadd.f32 %v2616, %v2810
          %v2875 = vadd.f32 %v2617, %v2811
          %v2876 = vadd.f32 %v2618, %v2812
          %v2877 = vadd.f32 %v2619, %v2813
          %v2878 = vadd.f32 %v2620, %v2814
          %v2879 = vadd.f32 %v2621, %v2815
          %v2880 = vadd.f32 %v2622, %v2816
          %v2881 = vadd.f32 %v2623, %v2817
          %v2882 = vadd.f32 %v2624, %v2818
          %v2883 = vadd.f32 %v2625, %v2819
          %v2884 = vadd.f32 %v2626, %v2820
          %v2885 = vadd.f32 %v2627, %v2821
          %v2886 = vadd.f32 %v2628, %v2822
          %v2887 = vadd.f32 %v2629, %v2823
          %v2888 = vadd.f32 %v2630, %v2824
          %v2889 = vadd.f32 %v2631, %v2825
          %v2890 = vadd.f32 %v2632, %v2826
          %v2891 = vadd.f32 %v2633, %v2827
          %v2892 = vadd.f32 %v2634, %v2828
          %v2893 = vadd.f32 %v2635, %v2829
          %v2894 = vadd.f32 %v2636, %v2830
          %v2895 = vadd.f32 %v2637, %v2831
          %v2896 = vadd.f32 %v2638, %v2832
          %v2897 = vadd.f32 %v2639, %v2833
          %v2898 = vadd.f32 %v2640, %v2834
          %v2899 = vadd.f32 %v2641, %v2835
          %v2900 = vadd.f32 %v2642, %v2836
          %v2901 = vadd.f32 %v2643, %v2837
          %v2902 = vadd.f32 %v2644, %v2838
          %v2903 = vadd.f32 %v2645, %v2839
          %v2904 = vadd.f32 %v2646, %v2840
          %v2905 = vadd.f32 %v2647, %v2841
          %v2906 = vpack.c.bf16 %v2843, %v2842
          %v2907 = vpack.c.bf16 %v2845, %v2844
          %v2908 = vpack.c.bf16 %v2847, %v2846
          %v2909 = vpack.c.bf16 %v2849, %v2848
          %v2910 = vpack.c.bf16 %v2851, %v2850
          %v2911 = vpack.c.bf16 %v2853, %v2852
          %v2912 = vpack.c.bf16 %v2855, %v2854
          %v2913 = vpack.c.bf16 %v2857, %v2856
          %v2914 = vpack.c.bf16 %v2859, %v2858
          %v2915 = vpack.c.bf16 %v2861, %v2860
          %v2916 = vpack.c.bf16 %v2863, %v2862
          %v2917 = vpack.c.bf16 %v2865, %v2864
          %v2918 = vpack.c.bf16 %v2867, %v2866
          %v2919 = vpack.c.bf16 %v2869, %v2868
          %v2920 = vpack.c.bf16 %v2871, %v2870
          %v2921 = vpack.c.bf16 %v2873, %v2872
          %v2922 = vpack.c.bf16 %v2875, %v2874
          %v2923 = vpack.c.bf16 %v2877, %v2876
          %v2924 = vpack.c.bf16 %v2879, %v2878
          %v2925 = vpack.c.bf16 %v2881, %v2880
          %v2926 = vpack.c.bf16 %v2883, %v2882
          %v2927 = vpack.c.bf16 %v2885, %v2884
          %v2928 = vpack.c.bf16 %v2887, %v2886
          %v2929 = vpack.c.bf16 %v2889, %v2888
          %v2930 = vpack.c.bf16 %v2891, %v2890
          %v2931 = vpack.c.bf16 %v2893, %v2892
          %v2932 = vpack.c.bf16 %v2895, %v2894
          %v2933 = vpack.c.bf16 %v2897, %v2896
          %v2934 = vpack.c.bf16 %v2899, %v2898
          %v2935 = vpack.c.bf16 %v2901, %v2900
          %v2936 = vpack.c.bf16 %v2903, %v2902
          %v2937 = vpack.c.bf16 %v2905, %v2904
          %v2970 = vunpack.c.l.b16 %v2906
          %v2971 = vunpack.c.h.b16 %v2906
          %v2972 = vunpack.c.l.b16 %v2907
          %v2973 = vunpack.c.h.b16 %v2907
          %v2974 = vunpack.c.l.b16 %v2908
          %v2975 = vunpack.c.h.b16 %v2908
          %v2976 = vunpack.c.l.b16 %v2909
          %v2977 = vunpack.c.h.b16 %v2909
          %v2978 = vunpack.c.l.b16 %v2910
          %v2979 = vunpack.c.h.b16 %v2910
          %v2980 = vunpack.c.l.b16 %v2911
          %v2981 = vunpack.c.h.b16 %v2911
          %v2982 = vunpack.c.l.b16 %v2912
          %v2983 = vunpack.c.h.b16 %v2912
          %v2984 = vunpack.c.l.b16 %v2913
          %v2985 = vunpack.c.h.b16 %v2913
          %v2986 = vunpack.c.l.b16 %v2914
          %v2987 = vunpack.c.h.b16 %v2914
          %v2988 = vunpack.c.l.b16 %v2915
          %v2989 = vunpack.c.h.b16 %v2915
          %v2990 = vunpack.c.l.b16 %v2916
          %v2991 = vunpack.c.h.b16 %v2916
          %v2992 = vunpack.c.l.b16 %v2917
          %v2993 = vunpack.c.h.b16 %v2917
          %v2994 = vunpack.c.l.b16 %v2918
          %v2995 = vunpack.c.h.b16 %v2918
          %v2996 = vunpack.c.l.b16 %v2919
          %v2997 = vunpack.c.h.b16 %v2919
          %v2998 = vunpack.c.l.b16 %v2920
          %v2999 = vunpack.c.h.b16 %v2920
          %v3000 = vunpack.c.l.b16 %v2921
          %v3001 = vunpack.c.h.b16 %v2921
          %v3002 = vunpack.c.l.b16 %v2922
          %v3003 = vunpack.c.h.b16 %v2922
          %v3004 = vunpack.c.l.b16 %v2923
          %v3005 = vunpack.c.h.b16 %v2923
          %v3006 = vunpack.c.l.b16 %v2924
          %v3007 = vunpack.c.h.b16 %v2924
          %v3008 = vunpack.c.l.b16 %v2925
          %v3009 = vunpack.c.h.b16 %v2925
          %v3010 = vunpack.c.l.b16 %v2926
          %v3011 = vunpack.c.h.b16 %v2926
          %v3012 = vunpack.c.l.b16 %v2927
          %v3013 = vunpack.c.h.b16 %v2927
          %v3014 = vunpack.c.l.b16 %v2928
          %v3015 = vunpack.c.h.b16 %v2928
          %v3016 = vunpack.c.l.b16 %v2929
          %v3017 = vunpack.c.h.b16 %v2929
          %v3018 = vunpack.c.l.b16 %v2930
          %v3019 = vunpack.c.h.b16 %v2930
          %v3020 = vunpack.c.l.b16 %v2931
          %v3021 = vunpack.c.h.b16 %v2931
          %v3022 = vunpack.c.l.b16 %v2932
          %v3023 = vunpack.c.h.b16 %v2932
          %v3024 = vunpack.c.l.b16 %v2933
          %v3025 = vunpack.c.h.b16 %v2933
          %v3026 = vunpack.c.l.b16 %v2934
          %v3027 = vunpack.c.h.b16 %v2934
          %v3028 = vunpack.c.l.b16 %v2935
          %v3029 = vunpack.c.h.b16 %v2935
          %v3030 = vunpack.c.l.b16 %v2936
          %v3031 = vunpack.c.h.b16 %v2936
          %v3032 = vunpack.c.l.b16 %v2937
          %v3033 = vunpack.c.h.b16 %v2937
          %v3034 = vpack.c.b16 %v2970, %v2970
          %v3035 = vpack.c.b16 %v2971, %v2971
          %v3036 = vpack.c.b16 %v2972, %v2972
          %v3037 = vpack.c.b16 %v2973, %v2973
          %v3038 = vpack.c.b16 %v2974, %v2974
          %v3039 = vpack.c.b16 %v2975, %v2975
          %v3040 = vpack.c.b16 %v2976, %v2976
          %v3041 = vpack.c.b16 %v2977, %v2977
          %v3042 = vpack.c.b16 %v2978, %v2978
          %v3043 = vpack.c.b16 %v2979, %v2979
          %v3044 = vpack.c.b16 %v2980, %v2980
          %v3045 = vpack.c.b16 %v2981, %v2981
          %v3046 = vpack.c.b16 %v2982, %v2982
          %v3047 = vpack.c.b16 %v2983, %v2983
          %v3048 = vpack.c.b16 %v2984, %v2984
          %v3049 = vpack.c.b16 %v2985, %v2985
          %v3050 = vpack.c.b16 %v2986, %v2986
          %v3051 = vpack.c.b16 %v2987, %v2987
          %v3052 = vpack.c.b16 %v2988, %v2988
          %v3053 = vpack.c.b16 %v2989, %v2989
          %v3054 = vpack.c.b16 %v2990, %v2990
          %v3055 = vpack.c.b16 %v2991, %v2991
          %v3056 = vpack.c.b16 %v2992, %v2992
          %v3057 = vpack.c.b16 %v2993, %v2993
          %v3058 = vpack.c.b16 %v2994, %v2994
          %v3059 = vpack.c.b16 %v2995, %v2995
          %v3060 = vpack.c.b16 %v2996, %v2996
          %v3061 = vpack.c.b16 %v2997, %v2997
          %v3062 = vpack.c.b16 %v2998, %v2998
          %v3063 = vpack.c.b16 %v2999, %v2999
          %v3064 = vpack.c.b16 %v3000, %v3000
          %v3065 = vpack.c.b16 %v3001, %v3001
          %v3066 = vpack.c.b16 %v3002, %v3002
          %v3067 = vpack.c.b16 %v3003, %v3003
          %v3068 = vpack.c.b16 %v3004, %v3004
          %v3069 = vpack.c.b16 %v3005, %v3005
          %v3070 = vpack.c.b16 %v3006, %v3006
          %v3071 = vpack.c.b16 %v3007, %v3007
          %v3072 = vpack.c.b16 %v3008, %v3008
          %v3073 = vpack.c.b16 %v3009, %v3009
          %v3074 = vpack.c.b16 %v3010, %v3010
          %v3075 = vpack.c.b16 %v3011, %v3011
          %v3076 = vpack.c.b16 %v3012, %v3012
          %v3077 = vpack.c.b16 %v3013, %v3013
          %v3078 = vpack.c.b16 %v3014, %v3014
          %v3079 = vpack.c.b16 %v3015, %v3015
          %v3080 = vpack.c.b16 %v3016, %v3016
          %v3081 = vpack.c.b16 %v3017, %v3017
          %v3082 = vpack.c.b16 %v3018, %v3018
          %v3083 = vpack.c.b16 %v3019, %v3019
          %v3084 = vpack.c.b16 %v3020, %v3020
          %v3085 = vpack.c.b16 %v3021, %v3021
          %v3086 = vpack.c.b16 %v3022, %v3022
          %v3087 = vpack.c.b16 %v3023, %v3023
          %v3088 = vpack.c.b16 %v3024, %v3024
          %v3089 = vpack.c.b16 %v3025, %v3025
          %v3090 = vpack.c.b16 %v3026, %v3026
          %v3091 = vpack.c.b16 %v3027, %v3027
          %v3092 = vpack.c.b16 %v3028, %v3028
          %v3093 = vpack.c.b16 %v3029, %v3029
          %v3094 = vpack.c.b16 %v3030, %v3030
          %v3095 = vpack.c.b16 %v3031, %v3031
          %v3096 = vpack.c.b16 %v3032, %v3032
          %v3097 = vpack.c.b16 %v3033, %v3033
          %3162 = vst [vmem:[%s749] sm:$0xf] %v3034
          %3163 = vst [vmem:[%s749 + $0x4] sm:$0xf] %v3035
          %3164 = vst [vmem:[%s749 + $0x8] sm:$0xf] %v3036
          %3165 = vst [vmem:[%s749 + $0xc] sm:$0xf] %v3037
          %3166 = vst [vmem:[%s749 + $0x10] sm:$0xf] %v3038
          %3167 = vst [vmem:[%s749 + $0x14] sm:$0xf] %v3039
          %3168 = vst [vmem:[%s749 + $0x18] sm:$0xf] %v3040
          %3169 = vst [vmem:[%s749 + $0x1c] sm:$0xf] %v3041
          %3170 = vst [vmem:[%s749 + $0x20] sm:$0xf] %v3042
          %3171 = vst [vmem:[%s749 + $0x24] sm:$0xf] %v3043
          %3172 = vst [vmem:[%s749 + $0x28] sm:$0xf] %v3044
          %3173 = vst [vmem:[%s749 + $0x2c] sm:$0xf] %v3045
          %3174 = vst [vmem:[%s749 + $0x30] sm:$0xf] %v3046
          %3175 = vst [vmem:[%s749 + $0x34] sm:$0xf] %v3047
          %3176 = vst [vmem:[%s749 + $0x38] sm:$0xf] %v3048
          %3177 = vst [vmem:[%s749 + $0x3c] sm:$0xf] %v3049
          %3178 = vst [vmem:[%s749 + $0x40] sm:$0xf] %v3050
          %3179 = vst [vmem:[%s749 + $0x44] sm:$0xf] %v3051
          %3180 = vst [vmem:[%s749 + $0x48] sm:$0xf] %v3052
          %3181 = vst [vmem:[%s749 + $0x4c] sm:$0xf] %v3053
          %3182 = vst [vmem:[%s749 + $0x50] sm:$0xf] %v3054
          %3183 = vst [vmem:[%s749 + $0x54] sm:$0xf] %v3055
          %3184 = vst [vmem:[%s749 + $0x58] sm:$0xf] %v3056
          %3185 = vst [vmem:[%s749 + $0x5c] sm:$0xf] %v3057
          %3186 = vst [vmem:[%s749 + $0x60] sm:$0xf] %v3058
          %3187 = vst [vmem:[%s749 + $0x64] sm:$0xf] %v3059
          %3188 = vst [vmem:[%s749 + $0x68] sm:$0xf] %v3060
          %3189 = vst [vmem:[%s749 + $0x6c] sm:$0xf] %v3061
          %3190 = vst [vmem:[%s749 + $0x70] sm:$0xf] %v3062
          %3191 = vst [vmem:[%s749 + $0x74] sm:$0xf] %v3063
          %3192 = vst [vmem:[%s749 + $0x78] sm:$0xf] %v3064
          %3193 = vst [vmem:[%s749 + $0x7c] sm:$0xf] %v3065
          %3194 = vst [vmem:[%s749 + $0x80] sm:$0xf] %v3066
          %3195 = vst [vmem:[%s749 + $0x84] sm:$0xf] %v3067
          %3196 = vst [vmem:[%s749 + $0x88] sm:$0xf] %v3068
          %3197 = vst [vmem:[%s749 + $0x8c] sm:$0xf] %v3069
          %3198 = vst [vmem:[%s749 + $0x90] sm:$0xf] %v3070
          %3199 = vst [vmem:[%s749 + $0x94] sm:$0xf] %v3071
          %3200 = vst [vmem:[%s749 + $0x98] sm:$0xf] %v3072
          %3201 = vst [vmem:[%s749 + $0x9c] sm:$0xf] %v3073
          %3202 = vst [vmem:[%s749 + $0xa0] sm:$0xf] %v3074
          %3203 = vst [vmem:[%s749 + $0xa4] sm:$0xf] %v3075
          %3204 = vst [vmem:[%s749 + $0xa8] sm:$0xf] %v3076
          %3205 = vst [vmem:[%s749 + $0xac] sm:$0xf] %v3077
          %3206 = vst [vmem:[%s749 + $0xb0] sm:$0xf] %v3078
          %3207 = vst [vmem:[%s749 + $0xb4] sm:$0xf] %v3079
          %3208 = vst [vmem:[%s749 + $0xb8] sm:$0xf] %v3080
          %3209 = vst [vmem:[%s749 + $0xbc] sm:$0xf] %v3081
          %3210 = vst [vmem:[%s749 + $0xc0] sm:$0xf] %v3082
          %3211 = vst [vmem:[%s749 + $0xc4] sm:$0xf] %v3083
          %3212 = vst [vmem:[%s749 + $0xc8] sm:$0xf] %v3084
          %3213 = vst [vmem:[%s749 + $0xcc] sm:$0xf] %v3085
          %3214 = vst [vmem:[%s749 + $0xd0] sm:$0xf] %v3086
          %3215 = vst [vmem:[%s749 + $0xd4] sm:$0xf] %v3087
          %3216 = vst [vmem:[%s749 + $0xd8] sm:$0xf] %v3088
          %3217 = vst [vmem:[%s749 + $0xdc] sm:$0xf] %v3089
          %3218 = vst [vmem:[%s749 + $0xe0] sm:$0xf] %v3090
          %3219 = vst [vmem:[%s749 + $0xe4] sm:$0xf] %v3091
          %3220 = vst [vmem:[%s749 + $0xe8] sm:$0xf] %v3092
          %3221 = vst [vmem:[%s749 + $0xec] sm:$0xf] %v3093
          %3222 = vst [vmem:[%s749 + $0xf0] sm:$0xf] %v3094
          %3223 = vst [vmem:[%s749 + $0xf4] sm:$0xf] %v3095
          %3224 = vst [vmem:[%s749 + $0xf8] sm:$0xf] %v3096
          %3225 = vst [vmem:[%s749 + $0xfc] sm:$0xf] %v3097
          %v3226 = vld [vmem:[%s790] sm:$0xff]
          %v3227 = vld [vmem:[%s790 + $0x8] sm:$0xff]
          %v3228 = vld [vmem:[%s790 + $0x10] sm:$0xff]
          %v3229 = vld [vmem:[%s790 + $0x18] sm:$0xff]
          %v3230 = vld [vmem:[%s790 + $0x20] sm:$0xff]
          %v3231 = vld [vmem:[%s790 + $0x28] sm:$0xff]
          %v3232 = vld [vmem:[%s790 + $0x30] sm:$0xff]
          %v3233 = vld [vmem:[%s790 + $0x38] sm:$0xff]
          %v3234 = vld [vmem:[%s790 + $0x40] sm:$0xff]
          %v3235 = vld [vmem:[%s790 + $0x48] sm:$0xff]
          %v3236 = vld [vmem:[%s790 + $0x50] sm:$0xff]
          %v3237 = vld [vmem:[%s790 + $0x58] sm:$0xff]
          %v3238 = vld [vmem:[%s790 + $0x60] sm:$0xff]
          %v3239 = vld [vmem:[%s790 + $0x68] sm:$0xff]
          %v3240 = vld [vmem:[%s790 + $0x70] sm:$0xff]
          %v3241 = vld [vmem:[%s790 + $0x78] sm:$0xff]
          %v3242 = vld [vmem:[%s790 + $0x80] sm:$0xff]
          %v3243 = vld [vmem:[%s790 + $0x88] sm:$0xff]
          %v3244 = vld [vmem:[%s790 + $0x90] sm:$0xff]
          %v3245 = vld [vmem:[%s790 + $0x98] sm:$0xff]
          %v3246 = vld [vmem:[%s790 + $0xa0] sm:$0xff]
          %v3247 = vld [vmem:[%s790 + $0xa8] sm:$0xff]
          %v3248 = vld [vmem:[%s790 + $0xb0] sm:$0xff]
          %v3249 = vld [vmem:[%s790 + $0xb8] sm:$0xff]
          %v3250 = vld [vmem:[%s790 + $0xc0] sm:$0xff]
          %v3251 = vld [vmem:[%s790 + $0xc8] sm:$0xff]
          %v3252 = vld [vmem:[%s790 + $0xd0] sm:$0xff]
          %v3253 = vld [vmem:[%s790 + $0xd8] sm:$0xff]
          %v3254 = vld [vmem:[%s790 + $0xe0] sm:$0xff]
          %v3255 = vld [vmem:[%s790 + $0xe8] sm:$0xff]
          %v3256 = vld [vmem:[%s790 + $0xf0] sm:$0xff]
          %v3257 = vld [vmem:[%s790 + $0xf8] sm:$0xff]
          %v3258 = vld [vmem:[%s790 + $0x100] sm:$0xff]
          %v3259 = vld [vmem:[%s790 + $0x108] sm:$0xff]
          %v3260 = vld [vmem:[%s790 + $0x110] sm:$0xff]
          %v3261 = vld [vmem:[%s790 + $0x118] sm:$0xff]
          %v3262 = vld [vmem:[%s790 + $0x120] sm:$0xff]
          %v3263 = vld [vmem:[%s790 + $0x128] sm:$0xff]
          %v3264 = vld [vmem:[%s790 + $0x130] sm:$0xff]
          %v3265 = vld [vmem:[%s790 + $0x138] sm:$0xff]
          %v3266 = vld [vmem:[%s790 + $0x140] sm:$0xff]
          %v3267 = vld [vmem:[%s790 + $0x148] sm:$0xff]
          %v3268 = vld [vmem:[%s790 + $0x150] sm:$0xff]
          %v3269 = vld [vmem:[%s790 + $0x158] sm:$0xff]
          %v3270 = vld [vmem:[%s790 + $0x160] sm:$0xff]
          %v3271 = vld [vmem:[%s790 + $0x168] sm:$0xff]
          %v3272 = vld [vmem:[%s790 + $0x170] sm:$0xff]
          %v3273 = vld [vmem:[%s790 + $0x178] sm:$0xff]
          %v3274 = vld [vmem:[%s790 + $0x180] sm:$0xff]
          %v3275 = vld [vmem:[%s790 + $0x188] sm:$0xff]
          %v3276 = vld [vmem:[%s790 + $0x190] sm:$0xff]
          %v3277 = vld [vmem:[%s790 + $0x198] sm:$0xff]
          %v3278 = vld [vmem:[%s790 + $0x1a0] sm:$0xff]
          %v3279 = vld [vmem:[%s790 + $0x1a8] sm:$0xff]
          %v3280 = vld [vmem:[%s790 + $0x1b0] sm:$0xff]
          %v3281 = vld [vmem:[%s790 + $0x1b8] sm:$0xff]
          %v3282 = vld [vmem:[%s790 + $0x1c0] sm:$0xff]
          %v3283 = vld [vmem:[%s790 + $0x1c8] sm:$0xff]
          %v3284 = vld [vmem:[%s790 + $0x1d0] sm:$0xff]
          %v3285 = vld [vmem:[%s790 + $0x1d8] sm:$0xff]
          %v3286 = vld [vmem:[%s790 + $0x1e0] sm:$0xff]
          %v3287 = vld [vmem:[%s790 + $0x1e8] sm:$0xff]
          %v3288 = vld [vmem:[%s790 + $0x1f0] sm:$0xff]
          %v3289 = vld [vmem:[%s790 + $0x1f8] sm:$0xff]
          %s3290 = sld [smem:[#allocation6 + $0x2]]
          %v3291 = vstv %s3290
          %v3292 = vmul.f32 %v3291, %v2842
          %v3293 = vmul.f32 %v3291, %v2843
          %v3294 = vmul.f32 %v3291, %v2844
          %v3295 = vmul.f32 %v3291, %v2845
          %v3296 = vmul.f32 %v3291, %v2846
          %v3297 = vmul.f32 %v3291, %v2847
          %v3298 = vmul.f32 %v3291, %v2848
          %v3299 = vmul.f32 %v3291, %v2849
          %v3300 = vmul.f32 %v3291, %v2850
          %v3301 = vmul.f32 %v3291, %v2851
          %v3302 = vmul.f32 %v3291, %v2852
          %v3303 = vmul.f32 %v3291, %v2853
          %v3304 = vmul.f32 %v3291, %v2854
          %v3305 = vmul.f32 %v3291, %v2855
          %v3306 = vmul.f32 %v3291, %v2856
          %v3307 = vmul.f32 %v3291, %v2857
          %v3308 = vmul.f32 %v3291, %v2858
          %v3309 = vmul.f32 %v3291, %v2859
          %v3310 = vmul.f32 %v3291, %v2860
          %v3311 = vmul.f32 %v3291, %v2861
          %v3312 = vmul.f32 %v3291, %v2862
          %v3313 = vmul.f32 %v3291, %v2863
          %v3314 = vmul.f32 %v3291, %v2864
          %v3315 = vmul.f32 %v3291, %v2865
          %v3316 = vmul.f32 %v3291, %v2866
          %v3317 = vmul.f32 %v3291, %v2867
          %v3318 = vmul.f32 %v3291, %v2868
          %v3319 = vmul.f32 %v3291, %v2869
          %v3320 = vmul.f32 %v3291, %v2870
          %v3321 = vmul.f32 %v3291, %v2871
          %v3322 = vmul.f32 %v3291, %v2872
          %v3323 = vmul.f32 %v3291, %v2873
          %v3324 = vmul.f32 %v3291, %v2874
          %v3325 = vmul.f32 %v3291, %v2875
          %v3326 = vmul.f32 %v3291, %v2876
          %v3327 = vmul.f32 %v3291, %v2877
          %v3328 = vmul.f32 %v3291, %v2878
          %v3329 = vmul.f32 %v3291, %v2879
          %v3330 = vmul.f32 %v3291, %v2880
          %v3331 = vmul.f32 %v3291, %v2881
          %v3332 = vmul.f32 %v3291, %v2882
          %v3333 = vmul.f32 %v3291, %v2883
          %v3334 = vmul.f32 %v3291, %v2884
          %v3335 = vmul.f32 %v3291, %v2885
          %v3336 = vmul.f32 %v3291, %v2886
          %v3337 = vmul.f32 %v3291, %v2887
          %v3338 = vmul.f32 %v3291, %v2888
          %v3339 = vmul.f32 %v3291, %v2889
          %v3340 = vmul.f32 %v3291, %v2890
          %v3341 = vmul.f32 %v3291, %v2891
          %v3342 = vmul.f32 %v3291, %v2892
          %v3343 = vmul.f32 %v3291, %v2893
          %v3344 = vmul.f32 %v3291, %v2894
          %v3345 = vmul.f32 %v3291, %v2895
          %v3346 = vmul.f32 %v3291, %v2896
          %v3347 = vmul.f32 %v3291, %v2897
          %v3348 = vmul.f32 %v3291, %v2898
          %v3349 = vmul.f32 %v3291, %v2899
          %v3350 = vmul.f32 %v3291, %v2900
          %v3351 = vmul.f32 %v3291, %v2901
          %v3352 = vmul.f32 %v3291, %v2902
          %v3353 = vmul.f32 %v3291, %v2903
          %v3354 = vmul.f32 %v3291, %v2904
          %v3355 = vmul.f32 %v3291, %v2905
          %v3356 = vadd.f32 %v3226, %v3292
          %v3357 = vadd.f32 %v3227, %v3293
          %v3358 = vadd.f32 %v3228, %v3294
          %v3359 = vadd.f32 %v3229, %v3295
          %v3360 = vadd.f32 %v3230, %v3296
          %v3361 = vadd.f32 %v3231, %v3297
          %v3362 = vadd.f32 %v3232, %v3298
          %v3363 = vadd.f32 %v3233, %v3299
          %v3364 = vadd.f32 %v3234, %v3300
          %v3365 = vadd.f32 %v3235, %v3301
          %v3366 = vadd.f32 %v3236, %v3302
          %v3367 = vadd.f32 %v3237, %v3303
          %v3368 = vadd.f32 %v3238, %v3304
          %v3369 = vadd.f32 %v3239, %v3305
          %v3370 = vadd.f32 %v3240, %v3306
          %v3371 = vadd.f32 %v3241, %v3307
          %v3372 = vadd.f32 %v3242, %v3308
          %v3373 = vadd.f32 %v3243, %v3309
          %v3374 = vadd.f32 %v3244, %v3310
          %v3375 = vadd.f32 %v3245, %v3311
          %v3376 = vadd.f32 %v3246, %v3312
          %v3377 = vadd.f32 %v3247, %v3313
          %v3378 = vadd.f32 %v3248, %v3314
          %v3379 = vadd.f32 %v3249, %v3315
          %v3380 = vadd.f32 %v3250, %v3316
          %v3381 = vadd.f32 %v3251, %v3317
          %v3382 = vadd.f32 %v3252, %v3318
          %v3383 = vadd.f32 %v3253, %v3319
          %v3384 = vadd.f32 %v3254, %v3320
          %v3385 = vadd.f32 %v3255, %v3321
          %v3386 = vadd.f32 %v3256, %v3322
          %v3387 = vadd.f32 %v3257, %v3323
          %v3388 = vadd.f32 %v3258, %v3324
          %v3389 = vadd.f32 %v3259, %v3325
          %v3390 = vadd.f32 %v3260, %v3326
          %v3391 = vadd.f32 %v3261, %v3327
          %v3392 = vadd.f32 %v3262, %v3328
          %v3393 = vadd.f32 %v3263, %v3329
          %v3394 = vadd.f32 %v3264, %v3330
          %v3395 = vadd.f32 %v3265, %v3331
          %v3396 = vadd.f32 %v3266, %v3332
          %v3397 = vadd.f32 %v3267, %v3333
          %v3398 = vadd.f32 %v3268, %v3334
          %v3399 = vadd.f32 %v3269, %v3335
          %v3400 = vadd.f32 %v3270, %v3336
          %v3401 = vadd.f32 %v3271, %v3337
          %v3402 = vadd.f32 %v3272, %v3338
          %v3403 = vadd.f32 %v3273, %v3339
          %v3404 = vadd.f32 %v3274, %v3340
          %v3405 = vadd.f32 %v3275, %v3341
          %v3406 = vadd.f32 %v3276, %v3342
          %v3407 = vadd.f32 %v3277, %v3343
          %v3408 = vadd.f32 %v3278, %v3344
          %v3409 = vadd.f32 %v3279, %v3345
          %v3410 = vadd.f32 %v3280, %v3346
          %v3411 = vadd.f32 %v3281, %v3347
          %v3412 = vadd.f32 %v3282, %v3348
          %v3413 = vadd.f32 %v3283, %v3349
          %v3414 = vadd.f32 %v3284, %v3350
          %v3415 = vadd.f32 %v3285, %v3351
          %v3416 = vadd.f32 %v3286, %v3352
          %v3417 = vadd.f32 %v3287, %v3353
          %v3418 = vadd.f32 %v3288, %v3354
          %v3419 = vadd.f32 %v3289, %v3355
          %3420 = vst [vmem:[%s797] sm:$0xff] %v3356
          %3421 = vst [vmem:[%s797 + $0x8] sm:$0xff] %v3357
          %3422 = vst [vmem:[%s797 + $0x10] sm:$0xff] %v3358
          %3423 = vst [vmem:[%s797 + $0x18] sm:$0xff] %v3359
          %3424 = vst [vmem:[%s797 + $0x20] sm:$0xff] %v3360
          %3425 = vst [vmem:[%s797 + $0x28] sm:$0xff] %v3361
          %3426 = vst [vmem:[%s797 + $0x30] sm:$0xff] %v3362
          %3427 = vst [vmem:[%s797 + $0x38] sm:$0xff] %v3363
          %3428 = vst [vmem:[%s797 + $0x40] sm:$0xff] %v3364
          %3429 = vst [vmem:[%s797 + $0x48] sm:$0xff] %v3365
          %3430 = vst [vmem:[%s797 + $0x50] sm:$0xff] %v3366
          %3431 = vst [vmem:[%s797 + $0x58] sm:$0xff] %v3367
          %3432 = vst [vmem:[%s797 + $0x60] sm:$0xff] %v3368
          %3433 = vst [vmem:[%s797 + $0x68] sm:$0xff] %v3369
          %3434 = vst [vmem:[%s797 + $0x70] sm:$0xff] %v3370
          %3435 = vst [vmem:[%s797 + $0x78] sm:$0xff] %v3371
          %3436 = vst [vmem:[%s797 + $0x80] sm:$0xff] %v3372
          %3437 = vst [vmem:[%s797 + $0x88] sm:$0xff] %v3373
          %3438 = vst [vmem:[%s797 + $0x90] sm:$0xff] %v3374
          %3439 = vst [vmem:[%s797 + $0x98] sm:$0xff] %v3375
          %3440 = vst [vmem:[%s797 + $0xa0] sm:$0xff] %v3376
          %3441 = vst [vmem:[%s797 + $0xa8] sm:$0xff] %v3377
          %3442 = vst [vmem:[%s797 + $0xb0] sm:$0xff] %v3378
          %3443 = vst [vmem:[%s797 + $0xb8] sm:$0xff] %v3379
          %3444 = vst [vmem:[%s797 + $0xc0] sm:$0xff] %v3380
          %3445 = vst [vmem:[%s797 + $0xc8] sm:$0xff] %v3381
          %3446 = vst [vmem:[%s797 + $0xd0] sm:$0xff] %v3382
          %3447 = vst [vmem:[%s797 + $0xd8] sm:$0xff] %v3383
          %3448 = vst [vmem:[%s797 + $0xe0] sm:$0xff] %v3384
          %3449 = vst [vmem:[%s797 + $0xe8] sm:$0xff] %v3385
          %3450 = vst [vmem:[%s797 + $0xf0] sm:$0xff] %v3386
          %3451 = vst [vmem:[%s797 + $0xf8] sm:$0xff] %v3387
          %3452 = vst [vmem:[%s797 + $0x100] sm:$0xff] %v3388
          %3453 = vst [vmem:[%s797 + $0x108] sm:$0xff] %v3389
          %3454 = vst [vmem:[%s797 + $0x110] sm:$0xff] %v3390
          %3455 = vst [vmem:[%s797 + $0x118] sm:$0xff] %v3391
          %3456 = vst [vmem:[%s797 + $0x120] sm:$0xff] %v3392
          %3457 = vst [vmem:[%s797 + $0x128] sm:$0xff] %v3393
          %3458 = vst [vmem:[%s797 + $0x130] sm:$0xff] %v3394
          %3459 = vst [vmem:[%s797 + $0x138] sm:$0xff] %v3395
          %3460 = vst [vmem:[%s797 + $0x140] sm:$0xff] %v3396
          %3461 = vst [vmem:[%s797 + $0x148] sm:$0xff] %v3397
          %3462 = vst [vmem:[%s797 + $0x150] sm:$0xff] %v3398
          %3463 = vst [vmem:[%s797 + $0x158] sm:$0xff] %v3399
          %3464 = vst [vmem:[%s797 + $0x160] sm:$0xff] %v3400
          %3465 = vst [vmem:[%s797 + $0x168] sm:$0xff] %v3401
          %3466 = vst [vmem:[%s797 + $0x170] sm:$0xff] %v3402
          %3467 = vst [vmem:[%s797 + $0x178] sm:$0xff] %v3403
          %3468 = vst [vmem:[%s797 + $0x180] sm:$0xff] %v3404
          %3469 = vst [vmem:[%s797 + $0x188] sm:$0xff] %v3405
          %3470 = vst [vmem:[%s797 + $0x190] sm:$0xff] %v3406
          %3471 = vst [vmem:[%s797 + $0x198] sm:$0xff] %v3407
          %3472 = vst [vmem:[%s797 + $0x1a0] sm:$0xff] %v3408
          %3473 = vst [vmem:[%s797 + $0x1a8] sm:$0xff] %v3409
          %3474 = vst [vmem:[%s797 + $0x1b0] sm:$0xff] %v3410
          %3475 = vst [vmem:[%s797 + $0x1b8] sm:$0xff] %v3411
          %3476 = vst [vmem:[%s797 + $0x1c0] sm:$0xff] %v3412
          %3477 = vst [vmem:[%s797 + $0x1c8] sm:$0xff] %v3413
          %3478 = vst [vmem:[%s797 + $0x1d0] sm:$0xff] %v3414
          %3479 = vst [vmem:[%s797 + $0x1d8] sm:$0xff] %v3415
          %3480 = vst [vmem:[%s797 + $0x1e0] sm:$0xff] %v3416
          %3481 = vst [vmem:[%s797 + $0x1e8] sm:$0xff] %v3417
          %3482 = vst [vmem:[%s797 + $0x1f0] sm:$0xff] %v3418
          %3483 = vst [vmem:[%s797 + $0x1f8] sm:$0xff] %v3419
        $region106: #{gcn_res_forward.14} parent=85 // pred_fallthru
          _
        %s3484 = sand.u32 %s264, 1
        %s3485 = scalar_lea.sflag [#allocation7], %s3484
        %s3486 = sand.u32 %s264, 1
        %s3487 = smul.addr %s3486, 256
        %s3488 = scalar_lea.vmem [#allocation10], %s3487
        %s3489 = smul.u32 64, %s41
        %p3490 = scmp.lt.s32.totalorder %s3489, 127
        %s3491 = scalar_select %p3490, %s3489, 127
        %s3492 = smul.addr %s3491, 8
        %s3493 = scalar_lea.vmem %s11, %s3492
        // Predicated region
        $region107: #{gcn_res_forward.14} parent=85 // pred_check
          %p3494 = pneg %p274
        $region108: #{gcn_res_forward.14} parent=85 // pred_check_branch
          %3496 = sbr.rel (%p3494) target = $region110
        $region109: #{gcn_res_forward.14} parent=85 // pred_region
          %s3497 = smul.u32 64, %s41
          %s3499 = ssub.s32 4096, 4096
          %3500 = vsyncadd %s3485, %s3499
          %s3501 = smul.addr %s3497, 64
          %s3502 = scalar_lea.hbm %s10, %s3501
          %s3503 = sshll.u32 %s3488, 4
          %s3504 = int_to_ptr.vmem [resolvable:$true] %s3503
          %3509 = dma.vmem_to_hbm [thread:$0]  %s3504, 4096, %s3502, %s3485, 64, 64, 4
        $region110: #{gcn_res_forward.14} parent=85 // pred_fallthru
          _
        // Predicated region
        $region111: #{gcn_res_forward.14} parent=85 // pred_check
          %p3510 = pneg %p300
        $region112: #{gcn_res_forward.14} parent=85 // pred_check_branch
          %3512 = sbr.rel (%p3510) target = $region114
        $region113: #{gcn_res_forward.14} parent=85 // pred_region
          %s3513 = smul.u32 64, %s41
        $region114: #{gcn_res_forward.14} parent=85 // pred_fallthru
          _
      $region86: #{gcn_res_forward.14} parent=5 // pred_fallthru
        _
      %p3514 = scmp.le.s32.totalorder 2, %s32
      // Predicated region
      $region115: #{gcn_res_forward.14} parent=5 // pred_check
        %p3515 = pneg %p3514
      $region116: #{gcn_res_forward.14} parent=5 // pred_check_branch
        %3517 = sbr.rel (%p3515) target = $region118
      $region117: #{gcn_res_forward.14} parent=5 // pred_region
        %s3518 = ssub.s32 %s32, 2
        // Predicated region
        $region119: #{gcn_res_forward.14} parent=117 // pred_check
          %p3519 = pneg %p280
        $region120: #{gcn_res_forward.14} parent=117 // pred_check_branch
          %3521 = sbr.rel (%p3519) target = $region122
        $region121: #{gcn_res_forward.14} parent=117 // pred_region
          %s3522 = sand.u32 %s265, 1
          %s3523 = scalar_lea.sflag [#allocation7], %s3522
          %s3524 = sand.u32 %s265, 1
          %s3525 = smul.addr %s3524, 256
          %s3526 = scalar_lea.vmem [#allocation10], %s3525
          %3527 = dma.done %s3523, 4096
        $region122: #{gcn_res_forward.14} parent=117 // pred_fallthru
          _
        // Predicated region
        $region123: #{gcn_res_forward.14} parent=117 // pred_check
          %p3528 = pneg %p306
        $region124: #{gcn_res_forward.14} parent=117 // pred_check_branch
          %3530 = sbr.rel (%p3528) target = $region126
        $region125: #{gcn_res_forward.14} parent=117 // pred_region
          %s3531 = smul.u32 64, %s43
          %p3532 = scmp.lt.s32.totalorder %s3531, 127
          %s3533 = scalar_select %p3532, %s3531, 127
          %s3534 = smul.addr %s3533, 8
          %s3535 = scalar_lea.vmem %s11, %s3534
        $region126: #{gcn_res_forward.14} parent=117 // pred_fallthru
          _
      $region118: #{gcn_res_forward.14} parent=5 // pred_fallthru
        _
    $region6: #{gcn_res_forward.14} parent=1 // loop_footer
      %s36 = sadd.s32 1, %s32
    $region7: #{gcn_res_forward.14} parent=1 // loop_footer_branch
      %31 = sbr.rel target = $region3
    $region8: #{gcn_res_forward.14} parent=1 // loop_exit
      _
    %3536 = vsyncpa [#allocation7], 1
    %s3537 = scalar_lea.sflag [#allocation7], 1
    %3538 = vsyncpa %s3537, 1
    %3539 = vsyncpa [#allocation8], 1
    %s3540 = scalar_lea.sflag [#allocation8], 1
    %3541 = vsyncpa %s3540, 1

</llo_original>
